<compile_context>
chip_gen: v5e
topology: v5e:2x2
jax: 0.10.0
libtpu: 0.0.40
codegen_flags: <defaults>
</compile_context>

<pallas_src>
import jax
import jax.numpy as jnp
from jax.experimental import pallas as pl
from jax.experimental.pallas import tpu as pltpu


# ----------------------------------------------------------------------------
# In-kernel helpers (operate on values; activations stay in vregs / VMEM)
# ----------------------------------------------------------------------------
def _conv_bn_relu(a, w_col, scale, shift, mask):
    """Conv1d(padding=K//2) + folded BN + ReLU as im2col + ONE bf16 MXU matmul.

    a: (M, Cin) f32 with M = TB*L; w_col: (K*Cin, Cout) bf16 (row k*Cin+ci);
    scale/shift: (1, Cout) f32; mask: (M, K) f32 {0,1} precomputed in the wrapper —
    zeroes taps that fall outside their own length-L sequence (zero padding AND
    cross-batch-element leakage of the flattened roll).
    """
    M, cin = a.shape
    K = w_col.shape[0] // cin
    pad = K // 2
    cols = []
    for k in range(K):
        delta = k - pad                                          # source row = r + delta
        if delta == 0:
            cols.append(a.astype(jnp.bfloat16))
        else:
            rolled = pltpu.roll(a, shift=(-delta) % M, axis=0)   # rolled[r] = a[(r+delta) % M]
            cols.append((rolled * mask[:, k:k + 1]).astype(jnp.bfloat16))
    x = jnp.concatenate(cols, axis=1)                            # (M, K*Cin) bf16 im2col
    y = jnp.dot(x, w_col, preferred_element_type=jnp.float32)    # (M, Cout), f32 accumulation
    return jnp.maximum(y * scale + shift, 0.0)


def _pool2(y, sel):
    """MaxPool1d(kernel=2, stride=2) along rows.  y: (M, C) f32, sel: (M//2, M) bf16.

    max(y[r], y[r+1]) via an XLU roll, then even-row compaction via the precomputed
    one-hot bf16 selection matmul (exact; rows M-1 / odd rows wrapping across batch
    elements are never selected since L is even).
    """
    M = y.shape[0]
    m = jnp.maximum(y, pltpu.roll(y, shift=M - 1, axis=0))       # m[r] = max(y[r], y[r+1])
    return jnp.dot(sel, m.astype(jnp.bfloat16), preferred_element_type=jnp.float32)


def _make_fused_kernel(n_blocks):
    """Fused forward: n conv/BN/ReLU/pool blocks (MXU) -> avg-pool + MLP head."""

    def kernel(*refs):
        x_ref = refs[0]
        blk = [refs[1 + 5 * i: 6 + 5 * i] for i in range(n_blocks)]
        avg_ref, wh1_ref, bh1_ref, wh2_ref, bh2_ref, out_ref = refs[1 + 5 * n_blocks:]

        a = x_ref[...]                                           # (TB*L0, 1) f32
        for w_ref, s_ref, t_ref, m_ref, sel_ref in blk:
            y = _conv_bn_relu(a, w_ref[...], s_ref[...], t_ref[...], m_ref[...])
            a = _pool2(y, sel_ref[...])

        # ---- head: AdaptiveAvgPool1d(1) + Linear + ReLU + Linear ---------------
        feat = jnp.dot(avg_ref[...], a.astype(jnp.bfloat16),
                       preferred_element_type=jnp.float32)       # (TB, C_last)
        h = jnp.dot(feat.astype(jnp.bfloat16), wh1_ref[...],
                    preferred_element_type=jnp.float32) + bh1_ref[...]
        h = jnp.maximum(h, 0.0)
        logits = jnp.dot(h.astype(jnp.bfloat16), wh2_ref[...],
                         preferred_element_type=jnp.float32) + bh2_ref[...]
        out_ref[...] = logits.astype(out_ref.dtype)

    return kernel


# ----------------------------------------------------------------------------
# Grid-invariant constants (built once in the wrapper, VMEM-resident in-kernel)
# ----------------------------------------------------------------------------
def _w_spec(shape):
    """Whole-array, grid-invariant block (stays VMEM-resident, no re-DMA)."""
    return pl.BlockSpec(shape, lambda *_: (0,) * len(shape))


def _tap_mask(tb, L, K):
    """(tb*L, K) f32 {0,1}: tap k of row r valid iff it stays inside its own sequence."""
    pad = K // 2
    pos = jnp.arange(tb * L) % L
    cols = [((pos + (k - pad) >= 0) & (pos + (k - pad) < L)) for k in range(K)]
    return jnp.stack(cols, axis=1).astype(jnp.float32)


def _pool_sel(M):
    """(M//2, M) bf16 one-hot selector of even rows (MaxPool stride-2 compaction)."""
    r = jnp.arange(M // 2)[:, None]
    c = jnp.arange(M)[None, :]
    return (c == 2 * r).astype(jnp.bfloat16)


def _avg_mat(tb, L_last):
    """(tb, tb*L_last) bf16 per-element averaging matrix (AdaptiveAvgPool1d(1))."""
    r = jnp.arange(tb * L_last)[None, :] // L_last
    b = jnp.arange(tb)[:, None]
    return ((r == b).astype(jnp.float32) / L_last).astype(jnp.bfloat16)


# ----------------------------------------------------------------------------
# Wrapper: weight folding + pallas_call with a batch-tiled grid
# ----------------------------------------------------------------------------
def cnn_classifier_forward(x, params, tb=8):
    """Equivalent of CNNClassifier.forward (inference) for 2-D input x: (B, input_dim)."""
    blocks = params['blocks']
    n_blocks = len(blocks)
    B, L0 = x.shape
    assert L0 % (2 ** n_blocks) == 0, "input_dim must be divisible by 2**n_blocks"

    TB = max(1, min(tb, B))                    # batch tile; cap per v7x VMEM if raised
    B_pad = -(-B // TB) * TB
    steps = B_pad // TB
    xp = x.astype(jnp.float32)
    if B_pad != B:
        xp = jnp.pad(xp, ((0, B_pad - B), (0, 0)))
    x_flat = xp.reshape(B_pad * L0, 1)         # rows = batch*seq (sublanes), 1 channel lane

    args = [x_flat]
    in_specs = [pl.BlockSpec((TB * L0, 1), lambda b: (b, 0))]

    flops_step = 0
    L, cin = L0, 1
    for blk in blocks:
        K, ci, cout = blk['w'].shape
        assert ci == cin
        M = TB * L
        wcol = blk['w'].reshape(K * ci, cout).astype(jnp.bfloat16)   # im2col-folded taps
        scale = blk['scale'].reshape(1, cout).astype(jnp.float32)
        shift = blk['shift'].reshape(1, cout).astype(jnp.float32)
        mask = _tap_mask(TB, L, K)
        sel = _pool_sel(M)
        args += [wcol, scale, shift, mask, sel]
        in_specs += [_w_spec(wcol.shape), _w_spec(scale.shape), _w_spec(shift.shape),
                     _w_spec(mask.shape), _w_spec(sel.shape)]
        flops_step += 2 * M * (K * ci) * cout + 2 * (M // 2) * M * cout
        L //= 2
        cin = cout

    C_last, M_last = cin, TB * L
    avg = _avg_mat(TB, L)
    wh1 = params['w1'].astype(jnp.bfloat16)
    bh1 = params['b1'].reshape(1, -1).astype(jnp.float32)
    hidden, out_dim = params['w2'].shape
    out_pad = -(-out_dim // 128) * 128                                # lane-dense output slab
    wh2 = jnp.pad(params['w2'], ((0, 0), (0, out_pad - out_dim))).astype(jnp.bfloat16)
    bh2 = jnp.pad(params['b2'], (0, out_pad - out_dim)).reshape(1, -1).astype(jnp.float32)
    args += [avg, wh1, bh1, wh2, bh2]
    in_specs += [_w_spec(avg.shape), _w_spec(wh1.shape), _w_spec(bh1.shape),
                 _w_spec(wh2.shape), _w_spec(bh2.shape)]

    flops_step += 2 * TB * M_last * C_last
    flops_step += 2 * TB * C_last * hidden + 2 * TB * hidden * out_pad
    flops = steps * flops_step
    bytes_accessed = sum(int(a.size) * a.dtype.itemsize for a in args) + B_pad * out_pad * 4

    out = pl.pallas_call(
        _make_fused_kernel(n_blocks),
        grid=(steps,),                                     # TB batch elements per grid step
        in_specs=in_specs,
        out_specs=pl.BlockSpec((TB, out_pad), lambda b: (b, 0)),
        out_shape=jax.ShapeDtypeStruct((B_pad, out_pad), jnp.float32),
        compiler_params=pltpu.CompilerParams(
            dimension_semantics=("parallel",)),            # megacore split on v7x
        cost_estimate=pl.CostEstimate(flops=int(flops), transcendentals=0,
                                      bytes_accessed=int(bytes_accessed)),
    )(*args)
    return out[:B, :out_dim]


# ----------------------------------------------------------------------------
# Deterministic parameter initialization (shapes from CNNClassifier.__init__ defaults)
# ----------------------------------------------------------------------------
def init_params(key, output_dim,
                num_filters=(64, 128, 256), kernel_sizes=(3, 5, 7), eps=1e-5):
    n = len(num_filters)
    keys = jax.random.split(key, 6 * n + 4)
    it = iter(keys)
    blocks = []
    in_ch = 1
    for cout, K in zip(num_filters, kernel_sizes):
        w = 0.05 * jax.random.normal(next(it), (K, in_ch, cout), jnp.float32)
        b = 0.05 * jax.random.normal(next(it), (cout,), jnp.float32)
        gamma = 1.0 + 0.1 * jax.random.normal(next(it), (cout,), jnp.float32)
        beta = 0.1 * jax.random.normal(next(it), (cout,), jnp.float32)
        rmean = 0.1 * jax.random.normal(next(it), (cout,), jnp.float32)
        rvar = jax.random.uniform(next(it), (cout,), jnp.float32, 0.5, 1.5)
        scale = gamma / jnp.sqrt(rvar + eps)           # BN (eval) folded with conv bias
        shift = beta + scale * (b - rmean)
        blocks.append({'w': w, 'scale': scale, 'shift': shift})
        in_ch = cout
    hidden = num_filters[-1] // 2
    w1 = 0.05 * jax.random.normal(next(it), (num_filters[-1], hidden), jnp.float32)
    b1 = 0.05 * jax.random.normal(next(it), (hidden,), jnp.float32)
    w2 = 0.05 * jax.random.normal(next(it), (hidden, output_dim), jnp.float32)
    b2 = 0.05 * jax.random.normal(next(it), (output_dim,), jnp.float32)
    return {'blocks': blocks, 'w1': w1, 'b1': b1, 'w2': w2, 'b2': b2}


# ----------------------------------------------------------------------------
# Pure-JAX f32 reference (mirrors PyTorch forward semantics at inference)
# ----------------------------------------------------------------------------
def reference_forward(x, params):
    a = x[:, :, None].astype(jnp.float32)
    for blk in params['blocks']:
        w, scale, shift = blk['w'], blk['scale'], blk['shift']
        K = w.shape[0]
        pad = K // 2
        L = a.shape[1]
        ap = jnp.pad(a, ((0, 0), (pad, pad), (0, 0)))
        conv = sum(jnp.einsum('blc,cf->blf', ap[:, k:k + L, :], w[k]) for k in range(K))
        y = jnp.maximum(conv * scale[None, None, :] + shift[None, None, :], 0.0)
        a = jnp.maximum(y[:, 0::2, :], y[:, 1::2, :])          # MaxPool1d(2)
    feat = a.mean(axis=1)                                      # AdaptiveAvgPool1d(1)
    h = jnp.maximum(feat @ params['w1'] + params['b1'], 0.0)
    return h @ params['w2'] + params['b2']


# ----------------------------------------------------------------------------
if __name__ == "__main__":
    B, INPUT_DIM, OUTPUT_DIM = 16, 64, 6    # input_dim divisible by 2^3 for the 3 pools
    key = jax.random.PRNGKey(0)
    k_x, k_p = jax.random.split(key)
    x = jax.random.normal(k_x, (B, INPUT_DIM), jnp.float32)
    params = init_params(k_p, OUTPUT_DIM)

    fwd = jax.jit(cnn_classifier_forward)
    out = jax.block_until_ready(fwd(x, params))
    ref = reference_forward(x, params)

    assert out.shape == (B, OUTPUT_DIM), out.shape
    # bf16 MXU operands (f32 accumulation) vs. a pure-f32 reference -> loosened tolerance.
    assert jnp.allclose(out, ref, atol=3e-2, rtol=3e-2), (out, ref)
    print("KERNEL_OK")
</pallas_src>

<mosaic_0001>
module attributes {stable_mosaic.version = 11 : i64} {
  func.func @kernel(%arg0: i32, %arg1: memref<512x1xf32, #tpu.memory_space<vmem>>, %arg2: memref<3x64xbf16, #tpu.memory_space<vmem>>, %arg3: memref<1x64xf32, #tpu.memory_space<vmem>>, %arg4: memref<1x64xf32, #tpu.memory_space<vmem>>, %arg5: memref<512x3xf32, #tpu.memory_space<vmem>>, %arg6: memref<256x512xbf16, #tpu.memory_space<vmem>>, %arg7: memref<320x128xbf16, #tpu.memory_space<vmem>>, %arg8: memref<1x128xf32, #tpu.memory_space<vmem>>, %arg9: memref<1x128xf32, #tpu.memory_space<vmem>>, %arg10: memref<256x5xf32, #tpu.memory_space<vmem>>, %arg11: memref<128x256xbf16, #tpu.memory_space<vmem>>, %arg12: memref<896x256xbf16, #tpu.memory_space<vmem>>, %arg13: memref<1x256xf32, #tpu.memory_space<vmem>>, %arg14: memref<1x256xf32, #tpu.memory_space<vmem>>, %arg15: memref<128x7xf32, #tpu.memory_space<vmem>>, %arg16: memref<64x128xbf16, #tpu.memory_space<vmem>>, %arg17: memref<8x64xbf16, #tpu.memory_space<vmem>>, %arg18: memref<256x128xbf16, #tpu.memory_space<vmem>>, %arg19: memref<1x128xf32, #tpu.memory_space<vmem>>, %arg20: memref<128x128xbf16, #tpu.memory_space<vmem>>, %arg21: memref<1x128xf32, #tpu.memory_space<vmem>>, %arg22: memref<8x128xf32, #tpu.memory_space<vmem>>) attributes {dimension_semantics = [#tpu.dimension_semantics<parallel>], iteration_bounds = array<i64: 2>, scalar_prefetch = 0 : i64, scratch_operands = 0 : i64, tpu.core_type = #tpu.core_type<tc>, window_params = [{transform_indices = @transform_0, window_bounds = array<i64: 512, 1>}, {pipeline_mode = #tpu.pipeline_mode<synchronous>, transform_indices = @transform_1, window_bounds = array<i64: 3, 64>}, {pipeline_mode = #tpu.pipeline_mode<synchronous>, transform_indices = @transform_2, window_bounds = array<i64: 1, 64>}, {pipeline_mode = #tpu.pipeline_mode<synchronous>, transform_indices = @transform_3, window_bounds = array<i64: 1, 64>}, {pipeline_mode = #tpu.pipeline_mode<synchronous>, transform_indices = @transform_4, window_bounds = array<i64: 512, 3>}, {pipeline_mode = #tpu.pipeline_mode<synchronous>, transform_indices = @transform_5, window_bounds = array<i64: 256, 512>}, {pipeline_mode = #tpu.pipeline_mode<synchronous>, transform_indices = @transform_6, window_bounds = array<i64: 320, 128>}, {pipeline_mode = #tpu.pipeline_mode<synchronous>, transform_indices = @transform_7, window_bounds = array<i64: 1, 128>}, {pipeline_mode = #tpu.pipeline_mode<synchronous>, transform_indices = @transform_8, window_bounds = array<i64: 1, 128>}, {pipeline_mode = #tpu.pipeline_mode<synchronous>, transform_indices = @transform_9, window_bounds = array<i64: 256, 5>}, {pipeline_mode = #tpu.pipeline_mode<synchronous>, transform_indices = @transform_10, window_bounds = array<i64: 128, 256>}, {pipeline_mode = #tpu.pipeline_mode<synchronous>, transform_indices = @transform_11, window_bounds = array<i64: 896, 256>}, {pipeline_mode = #tpu.pipeline_mode<synchronous>, transform_indices = @transform_12, window_bounds = array<i64: 1, 256>}, {pipeline_mode = #tpu.pipeline_mode<synchronous>, transform_indices = @transform_13, window_bounds = array<i64: 1, 256>}, {pipeline_mode = #tpu.pipeline_mode<synchronous>, transform_indices = @transform_14, window_bounds = array<i64: 128, 7>}, {pipeline_mode = #tpu.pipeline_mode<synchronous>, transform_indices = @transform_15, window_bounds = array<i64: 64, 128>}, {pipeline_mode = #tpu.pipeline_mode<synchronous>, transform_indices = @transform_16, window_bounds = array<i64: 8, 64>}, {pipeline_mode = #tpu.pipeline_mode<synchronous>, transform_indices = @transform_17, window_bounds = array<i64: 256, 128>}, {pipeline_mode = #tpu.pipeline_mode<synchronous>, transform_indices = @transform_18, window_bounds = array<i64: 1, 128>}, {pipeline_mode = #tpu.pipeline_mode<synchronous>, transform_indices = @transform_19, window_bounds = array<i64: 128, 128>}, {pipeline_mode = #tpu.pipeline_mode<synchronous>, transform_indices = @transform_20, window_bounds = array<i64: 1, 128>}, {transform_indices = @transform_21, window_bounds = array<i64: 8, 128>}]} {
    %c0 = arith.constant 0 : index
    %c0_0 = arith.constant 0 : index
    %0 = vector.load %arg1[%c0, %c0_0] : memref<512x1xf32, #tpu.memory_space<vmem>>, vector<512x1xf32>
    %c0_1 = arith.constant 0 : index
    %c0_2 = arith.constant 0 : index
    %1 = vector.load %arg2[%c0_1, %c0_2] : memref<3x64xbf16, #tpu.memory_space<vmem>>, vector<3x64xbf16>
    %c0_3 = arith.constant 0 : index
    %c0_4 = arith.constant 0 : index
    %2 = vector.load %arg3[%c0_3, %c0_4] : memref<1x64xf32, #tpu.memory_space<vmem>>, vector<1x64xf32>
    %c0_5 = arith.constant 0 : index
    %c0_6 = arith.constant 0 : index
    %3 = vector.load %arg4[%c0_5, %c0_6] : memref<1x64xf32, #tpu.memory_space<vmem>>, vector<1x64xf32>
    %c0_7 = arith.constant 0 : index
    %c0_8 = arith.constant 0 : index
    %4 = vector.load %arg5[%c0_7, %c0_8] : memref<512x3xf32, #tpu.memory_space<vmem>>, vector<512x3xf32>
    %c1_i32 = arith.constant 1 : i32
    %5 = tpu.dynamic_rotate %0 by %c1_i32 dim 0 : vector<512x1xf32>, i32 -> vector<512x1xf32>
    %6 = vector.extract_strided_slice %4 {offsets = [0, 0], sizes = [512, 1], strides = [1, 1]} : vector<512x3xf32> to vector<512x1xf32>
    %7 = arith.mulf %5, %6 : vector<512x1xf32>
    %8 = arith.truncf %7 : vector<512x1xf32> to vector<512x1xbf16>
    %9 = arith.truncf %0 : vector<512x1xf32> to vector<512x1xbf16>
    %c511_i32 = arith.constant 511 : i32
    %10 = tpu.dynamic_rotate %0 by %c511_i32 dim 0 : vector<512x1xf32>, i32 -> vector<512x1xf32>
    %11 = vector.extract_strided_slice %4 {offsets = [0, 2], sizes = [512, 1], strides = [1, 1]} : vector<512x3xf32> to vector<512x1xf32>
    %12 = arith.mulf %10, %11 : vector<512x1xf32>
    %13 = arith.truncf %12 : vector<512x1xf32> to vector<512x1xbf16>
    %14 = tpu.concatenate %8, %9, %13 in 1 : vector<512x1xbf16>, vector<512x1xbf16>, vector<512x1xbf16> -> vector<512x3xbf16>
    %cst = arith.constant dense<0.000000e+00> : vector<512x64xf32>
    %15 = tpu.matmul %14, %1, %cst {dimension_numbers = #tpu.dot_dimension_numbers<[1], [0], [0], [1], [0, 0, 1, 1], [], []>} : vector<512x3xbf16>, vector<3x64xbf16>, vector<512x64xf32> -> vector<512x64xf32>
    %16 = vector.broadcast %2 : vector<1x64xf32> to vector<512x64xf32>
    %17 = arith.mulf %15, %16 : vector<512x64xf32>
    %18 = vector.broadcast %3 : vector<1x64xf32> to vector<512x64xf32>
    %19 = arith.addf %17, %18 : vector<512x64xf32>
    %cst_9 = arith.constant 0.000000e+00 : f32
    %20 = vector.broadcast %cst_9 : f32 to vector<512x64xf32>
    %21 = arith.maximumf %19, %20 : vector<512x64xf32>
    %c0_10 = arith.constant 0 : index
    %c0_11 = arith.constant 0 : index
    %22 = vector.load %arg6[%c0_10, %c0_11] : memref<256x512xbf16, #tpu.memory_space<vmem>>, vector<256x512xbf16>
    %c511_i32_12 = arith.constant 511 : i32
    %23 = tpu.dynamic_rotate %21 by %c511_i32_12 dim 0 : vector<512x64xf32>, i32 -> vector<512x64xf32>
    %24 = arith.maximumf %21, %23 : vector<512x64xf32>
    %25 = arith.truncf %24 : vector<512x64xf32> to vector<512x64xbf16>
    %cst_13 = arith.constant dense<0.000000e+00> : vector<256x64xf32>
    %26 = tpu.matmul %22, %25, %cst_13 {dimension_numbers = #tpu.dot_dimension_numbers<[1], [0], [0], [1], [0, 0, 1, 1], [], []>} : vector<256x512xbf16>, vector<512x64xbf16>, vector<256x64xf32> -> vector<256x64xf32>
    %c0_14 = arith.constant 0 : index
    %c0_15 = arith.constant 0 : index
    %27 = vector.load %arg7[%c0_14, %c0_15] : memref<320x128xbf16, #tpu.memory_space<vmem>>, vector<320x128xbf16>
    %c0_16 = arith.constant 0 : index
    %c0_17 = arith.constant 0 : index
    %28 = vector.load %arg8[%c0_16, %c0_17] : memref<1x128xf32, #tpu.memory_space<vmem>>, vector<1x128xf32>
    %c0_18 = arith.constant 0 : index
    %c0_19 = arith.constant 0 : index
    %29 = vector.load %arg9[%c0_18, %c0_19] : memref<1x128xf32, #tpu.memory_space<vmem>>, vector<1x128xf32>
    %c0_20 = arith.constant 0 : index
    %c0_21 = arith.constant 0 : index
    %30 = vector.load %arg10[%c0_20, %c0_21] : memref<256x5xf32, #tpu.memory_space<vmem>>, vector<256x5xf32>
    %c2_i32 = arith.constant 2 : i32
    %31 = tpu.dynamic_rotate %26 by %c2_i32 dim 0 : vector<256x64xf32>, i32 -> vector<256x64xf32>
    %32 = vector.extract_strided_slice %30 {offsets = [0, 0], sizes = [256, 1], strides = [1, 1]} : vector<256x5xf32> to vector<256x1xf32>
    %33 = vector.broadcast %32 : vector<256x1xf32> to vector<256x64xf32>
    %34 = arith.mulf %31, %33 : vector<256x64xf32>
    %35 = arith.truncf %34 : vector<256x64xf32> to vector<256x64xbf16>
    %c1_i32_22 = arith.constant 1 : i32
    %36 = tpu.dynamic_rotate %26 by %c1_i32_22 dim 0 : vector<256x64xf32>, i32 -> vector<256x64xf32>
    %37 = vector.extract_strided_slice %30 {offsets = [0, 1], sizes = [256, 1], strides = [1, 1]} : vector<256x5xf32> to vector<256x1xf32>
    %38 = vector.broadcast %37 : vector<256x1xf32> to vector<256x64xf32>
    %39 = arith.mulf %36, %38 : vector<256x64xf32>
    %40 = arith.truncf %39 : vector<256x64xf32> to vector<256x64xbf16>
    %41 = arith.truncf %26 : vector<256x64xf32> to vector<256x64xbf16>
    %c255_i32 = arith.constant 255 : i32
    %42 = tpu.dynamic_rotate %26 by %c255_i32 dim 0 : vector<256x64xf32>, i32 -> vector<256x64xf32>
    %43 = vector.extract_strided_slice %30 {offsets = [0, 3], sizes = [256, 1], strides = [1, 1]} : vector<256x5xf32> to vector<256x1xf32>
    %44 = vector.broadcast %43 : vector<256x1xf32> to vector<256x64xf32>
    %45 = arith.mulf %42, %44 : vector<256x64xf32>
    %46 = arith.truncf %45 : vector<256x64xf32> to vector<256x64xbf16>
    %c254_i32 = arith.constant 254 : i32
    %47 = tpu.dynamic_rotate %26 by %c254_i32 dim 0 : vector<256x64xf32>, i32 -> vector<256x64xf32>
    %48 = vector.extract_strided_slice %30 {offsets = [0, 4], sizes = [256, 1], strides = [1, 1]} : vector<256x5xf32> to vector<256x1xf32>
    %49 = vector.broadcast %48 : vector<256x1xf32> to vector<256x64xf32>
    %50 = arith.mulf %47, %49 : vector<256x64xf32>
    %51 = arith.truncf %50 : vector<256x64xf32> to vector<256x64xbf16>
    %52 = tpu.concatenate %35, %40, %41, %46, %51 in 1 : vector<256x64xbf16>, vector<256x64xbf16>, vector<256x64xbf16>, vector<256x64xbf16>, vector<256x64xbf16> -> vector<256x320xbf16>
    %cst_23 = arith.constant dense<0.000000e+00> : vector<256x128xf32>
    %53 = tpu.matmul %52, %27, %cst_23 {dimension_numbers = #tpu.dot_dimension_numbers<[1], [0], [0], [1], [0, 0, 1, 1], [], []>} : vector<256x320xbf16>, vector<320x128xbf16>, vector<256x128xf32> -> vector<256x128xf32>
    %54 = vector.broadcast %28 : vector<1x128xf32> to vector<256x128xf32>
    %55 = arith.mulf %53, %54 : vector<256x128xf32>
    %56 = vector.broadcast %29 : vector<1x128xf32> to vector<256x128xf32>
    %57 = arith.addf %55, %56 : vector<256x128xf32>
    %cst_24 = arith.constant 0.000000e+00 : f32
    %58 = vector.broadcast %cst_24 : f32 to vector<256x128xf32>
    %59 = arith.maximumf %57, %58 : vector<256x128xf32>
    %c0_25 = arith.constant 0 : index
    %c0_26 = arith.constant 0 : index
    %60 = vector.load %arg11[%c0_25, %c0_26] : memref<128x256xbf16, #tpu.memory_space<vmem>>, vector<128x256xbf16>
    %c255_i32_27 = arith.constant 255 : i32
    %61 = tpu.dynamic_rotate %59 by %c255_i32_27 dim 0 : vector<256x128xf32>, i32 -> vector<256x128xf32>
    %62 = arith.maximumf %59, %61 : vector<256x128xf32>
    %63 = arith.truncf %62 : vector<256x128xf32> to vector<256x128xbf16>
    %cst_28 = arith.constant dense<0.000000e+00> : vector<128x128xf32>
    %64 = tpu.matmul %60, %63, %cst_28 {dimension_numbers = #tpu.dot_dimension_numbers<[1], [0], [0], [1], [0, 0, 1, 1], [], []>} : vector<128x256xbf16>, vector<256x128xbf16>, vector<128x128xf32> -> vector<128x128xf32>
    %c0_29 = arith.constant 0 : index
    %c0_30 = arith.constant 0 : index
    %65 = vector.load %arg12[%c0_29, %c0_30] : memref<896x256xbf16, #tpu.memory_space<vmem>>, vector<896x256xbf16>
    %c0_31 = arith.constant 0 : index
    %c0_32 = arith.constant 0 : index
    %66 = vector.load %arg13[%c0_31, %c0_32] : memref<1x256xf32, #tpu.memory_space<vmem>>, vector<1x256xf32>
    %c0_33 = arith.constant 0 : index
    %c0_34 = arith.constant 0 : index
    %67 = vector.load %arg14[%c0_33, %c0_34] : memref<1x256xf32, #tpu.memory_space<vmem>>, vector<1x256xf32>
    %c0_35 = arith.constant 0 : index
    %c0_36 = arith.constant 0 : index
    %68 = vector.load %arg15[%c0_35, %c0_36] : memref<128x7xf32, #tpu.memory_space<vmem>>, vector<128x7xf32>
    %c3_i32 = arith.constant 3 : i32
    %69 = tpu.dynamic_rotate %64 by %c3_i32 dim 0 : vector<128x128xf32>, i32 -> vector<128x128xf32>
    %70 = vector.extract_strided_slice %68 {offsets = [0, 0], sizes = [128, 1], strides = [1, 1]} : vector<128x7xf32> to vector<128x1xf32>
    %71 = vector.broadcast %70 : vector<128x1xf32> to vector<128x128xf32>
    %72 = arith.mulf %69, %71 : vector<128x128xf32>
    %73 = arith.truncf %72 : vector<128x128xf32> to vector<128x128xbf16>
    %c2_i32_37 = arith.constant 2 : i32
    %74 = tpu.dynamic_rotate %64 by %c2_i32_37 dim 0 : vector<128x128xf32>, i32 -> vector<128x128xf32>
    %75 = vector.extract_strided_slice %68 {offsets = [0, 1], sizes = [128, 1], strides = [1, 1]} : vector<128x7xf32> to vector<128x1xf32>
    %76 = vector.broadcast %75 : vector<128x1xf32> to vector<128x128xf32>
    %77 = arith.mulf %74, %76 : vector<128x128xf32>
    %78 = arith.truncf %77 : vector<128x128xf32> to vector<128x128xbf16>
    %c1_i32_38 = arith.constant 1 : i32
    %79 = tpu.dynamic_rotate %64 by %c1_i32_38 dim 0 : vector<128x128xf32>, i32 -> vector<128x128xf32>
    %80 = vector.extract_strided_slice %68 {offsets = [0, 2], sizes = [128, 1], strides = [1, 1]} : vector<128x7xf32> to vector<128x1xf32>
    %81 = vector.broadcast %80 : vector<128x1xf32> to vector<128x128xf32>
    %82 = arith.mulf %79, %81 : vector<128x128xf32>
    %83 = arith.truncf %82 : vector<128x128xf32> to vector<128x128xbf16>
    %84 = arith.truncf %64 : vector<128x128xf32> to vector<128x128xbf16>
    %c127_i32 = arith.constant 127 : i32
    %85 = tpu.dynamic_rotate %64 by %c127_i32 dim 0 : vector<128x128xf32>, i32 -> vector<128x128xf32>
    %86 = vector.extract_strided_slice %68 {offsets = [0, 4], sizes = [128, 1], strides = [1, 1]} : vector<128x7xf32> to vector<128x1xf32>
    %87 = vector.broadcast %86 : vector<128x1xf32> to vector<128x128xf32>
    %88 = arith.mulf %85, %87 : vector<128x128xf32>
    %89 = arith.truncf %88 : vector<128x128xf32> to vector<128x128xbf16>
    %c126_i32 = arith.constant 126 : i32
    %90 = tpu.dynamic_rotate %64 by %c126_i32 dim 0 : vector<128x128xf32>, i32 -> vector<128x128xf32>
    %91 = vector.extract_strided_slice %68 {offsets = [0, 5], sizes = [128, 1], strides = [1, 1]} : vector<128x7xf32> to vector<128x1xf32>
    %92 = vector.broadcast %91 : vector<128x1xf32> to vector<128x128xf32>
    %93 = arith.mulf %90, %92 : vector<128x128xf32>
    %94 = arith.truncf %93 : vector<128x128xf32> to vector<128x128xbf16>
    %c125_i32 = arith.constant 125 : i32
    %95 = tpu.dynamic_rotate %64 by %c125_i32 dim 0 : vector<128x128xf32>, i32 -> vector<128x128xf32>
    %96 = vector.extract_strided_slice %68 {offsets = [0, 6], sizes = [128, 1], strides = [1, 1]} : vector<128x7xf32> to vector<128x1xf32>
    %97 = vector.broadcast %96 : vector<128x1xf32> to vector<128x128xf32>
    %98 = arith.mulf %95, %97 : vector<128x128xf32>
    %99 = arith.truncf %98 : vector<128x128xf32> to vector<128x128xbf16>
    %100 = tpu.concatenate %73, %78, %83, %84, %89, %94, %99 in 1 : vector<128x128xbf16>, vector<128x128xbf16>, vector<128x128xbf16>, vector<128x128xbf16>, vector<128x128xbf16>, vector<128x128xbf16>, vector<128x128xbf16> -> vector<128x896xbf16>
    %cst_39 = arith.constant dense<0.000000e+00> : vector<128x256xf32>
    %101 = tpu.matmul %100, %65, %cst_39 {dimension_numbers = #tpu.dot_dimension_numbers<[1], [0], [0], [1], [0, 0, 1, 1], [], []>} : vector<128x896xbf16>, vector<896x256xbf16>, vector<128x256xf32> -> vector<128x256xf32>
    %102 = vector.broadcast %66 : vector<1x256xf32> to vector<128x256xf32>
    %103 = arith.mulf %101, %102 : vector<128x256xf32>
    %104 = vector.broadcast %67 : vector<1x256xf32> to vector<128x256xf32>
    %105 = arith.addf %103, %104 : vector<128x256xf32>
    %cst_40 = arith.constant 0.000000e+00 : f32
    %106 = vector.broadcast %cst_40 : f32 to vector<128x256xf32>
    %107 = arith.maximumf %105, %106 : vector<128x256xf32>
    %c0_41 = arith.constant 0 : index
    %c0_42 = arith.constant 0 : index
    %108 = vector.load %arg16[%c0_41, %c0_42] : memref<64x128xbf16, #tpu.memory_space<vmem>>, vector<64x128xbf16>
    %c127_i32_43 = arith.constant 127 : i32
    %109 = tpu.dynamic_rotate %107 by %c127_i32_43 dim 0 : vector<128x256xf32>, i32 -> vector<128x256xf32>
    %110 = arith.maximumf %107, %109 : vector<128x256xf32>
    %111 = arith.truncf %110 : vector<128x256xf32> to vector<128x256xbf16>
    %cst_44 = arith.constant dense<0.000000e+00> : vector<64x256xf32>
    %112 = tpu.matmul %108, %111, %cst_44 {dimension_numbers = #tpu.dot_dimension_numbers<[1], [0], [0], [1], [0, 0, 1, 1], [], []>} : vector<64x128xbf16>, vector<128x256xbf16>, vector<64x256xf32> -> vector<64x256xf32>
    %c0_45 = arith.constant 0 : index
    %c0_46 = arith.constant 0 : index
    %113 = vector.load %arg17[%c0_45, %c0_46] : memref<8x64xbf16, #tpu.memory_space<vmem>>, vector<8x64xbf16>
    %114 = arith.truncf %112 : vector<64x256xf32> to vector<64x256xbf16>
    %cst_47 = arith.constant dense<0.000000e+00> : vector<8x256xf32>
    %115 = tpu.matmul %113, %114, %cst_47 {dimension_numbers = #tpu.dot_dimension_numbers<[1], [0], [0], [1], [0, 0, 1, 1], [], []>} : vector<8x64xbf16>, vector<64x256xbf16>, vector<8x256xf32> -> vector<8x256xf32>
    %116 = arith.truncf %115 : vector<8x256xf32> to vector<8x256xbf16>
    %c0_48 = arith.constant 0 : index
    %c0_49 = arith.constant 0 : index
    %117 = vector.load %arg18[%c0_48, %c0_49] : memref<256x128xbf16, #tpu.memory_space<vmem>>, vector<256x128xbf16>
    %cst_50 = arith.constant dense<0.000000e+00> : vector<8x128xf32>
    %118 = tpu.matmul %116, %117, %cst_50 {dimension_numbers = #tpu.dot_dimension_numbers<[1], [0], [0], [1], [0, 0, 1, 1], [], []>} : vector<8x256xbf16>, vector<256x128xbf16>, vector<8x128xf32> -> vector<8x128xf32>
    %c0_51 = arith.constant 0 : index
    %c0_52 = arith.constant 0 : index
    %119 = vector.load %arg19[%c0_51, %c0_52] : memref<1x128xf32, #tpu.memory_space<vmem>>, vector<1x128xf32>
    %120 = vector.broadcast %119 : vector<1x128xf32> to vector<8x128xf32>
    %121 = arith.addf %118, %120 : vector<8x128xf32>
    %cst_53 = arith.constant 0.000000e+00 : f32
    %122 = vector.broadcast %cst_53 : f32 to vector<8x128xf32>
    %123 = arith.maximumf %121, %122 : vector<8x128xf32>
    %124 = arith.truncf %123 : vector<8x128xf32> to vector<8x128xbf16>
    %c0_54 = arith.constant 0 : index
    %c0_55 = arith.constant 0 : index
    %125 = vector.load %arg20[%c0_54, %c0_55] : memref<128x128xbf16, #tpu.memory_space<vmem>>, vector<128x128xbf16>
    %cst_56 = arith.constant dense<0.000000e+00> : vector<8x128xf32>
    %126 = tpu.matmul %124, %125, %cst_56 {dimension_numbers = #tpu.dot_dimension_numbers<[1], [0], [0], [1], [0, 0, 1, 1], [], []>} : vector<8x128xbf16>, vector<128x128xbf16>, vector<8x128xf32> -> vector<8x128xf32>
    %c0_57 = arith.constant 0 : index
    %c0_58 = arith.constant 0 : index
    %127 = vector.load %arg21[%c0_57, %c0_58] : memref<1x128xf32, #tpu.memory_space<vmem>>, vector<1x128xf32>
    %128 = vector.broadcast %127 : vector<1x128xf32> to vector<8x128xf32>
    %129 = arith.addf %126, %128 : vector<8x128xf32>
    %c0_59 = arith.constant 0 : index
    %c0_60 = arith.constant 0 : index
    %130 = vector.load %arg22[%c0_59, %c0_60] : memref<8x128xf32, #tpu.memory_space<vmem>>, vector<8x128xf32>
    tpu.vector_store %arg22[%c0_59, %c0_60], %129 {strides = array<i32>} : memref<8x128xf32, #tpu.memory_space<vmem>>, vector<8x128xf32>,
    return
  }
  func.func @transform_0(%arg0: i32) -> (i32, i32) {
    %c0_i32 = arith.constant 0 : i32
    %c0_i32_0 = arith.constant 0 : i32
    return %arg0, %c0_i32 : i32, i32
  }
  func.func @transform_1(%arg0: i32) -> (i32, i32) {
    %c0_i32 = arith.constant 0 : i32
    %c0_i32_0 = arith.constant 0 : i32
    %c0_i32_1 = arith.constant 0 : i32
    return %c0_i32, %c0_i32_0 : i32, i32
  }
  func.func @transform_2(%arg0: i32) -> (i32, i32) {
    %c0_i32 = arith.constant 0 : i32
    %c0_i32_0 = arith.constant 0 : i32
    %c0_i32_1 = arith.constant 0 : i32
    return %c0_i32, %c0_i32_0 : i32, i32
  }
  func.func @transform_3(%arg0: i32) -> (i32, i32) {
    %c0_i32 = arith.constant 0 : i32
    %c0_i32_0 = arith.constant 0 : i32
    %c0_i32_1 = arith.constant 0 : i32
    return %c0_i32, %c0_i32_0 : i32, i32
  }
  func.func @transform_4(%arg0: i32) -> (i32, i32) {
    %c0_i32 = arith.constant 0 : i32
    %c0_i32_0 = arith.constant 0 : i32
    %c0_i32_1 = arith.constant 0 : i32
    return %c0_i32, %c0_i32_0 : i32, i32
  }
  func.func @transform_5(%arg0: i32) -> (i32, i32) {
    %c0_i32 = arith.constant 0 : i32
    %c0_i32_0 = arith.constant 0 : i32
    %c0_i32_1 = arith.constant 0 : i32
    return %c0_i32, %c0_i32_0 : i32, i32
  }
  func.func @transform_6(%arg0: i32) -> (i32, i32) {
    %c0_i32 = arith.constant 0 : i32
    %c0_i32_0 = arith.constant 0 : i32
    %c0_i32_1 = arith.constant 0 : i32
    return %c0_i32, %c0_i32_0 : i32, i32
  }
  func.func @transform_7(%arg0: i32) -> (i32, i32) {
    %c0_i32 = arith.constant 0 : i32
    %c0_i32_0 = arith.constant 0 : i32
    %c0_i32_1 = arith.constant 0 : i32
    return %c0_i32, %c0_i32_0 : i32, i32
  }
  func.func @transform_8(%arg0: i32) -> (i32, i32) {
    %c0_i32 = arith.constant 0 : i32
    %c0_i32_0 = arith.constant 0 : i32
    %c0_i32_1 = arith.constant 0 : i32
    return %c0_i32, %c0_i32_0 : i32, i32
  }
  func.func @transform_9(%arg0: i32) -> (i32, i32) {
    %c0_i32 = arith.constant 0 : i32
    %c0_i32_0 = arith.constant 0 : i32
    %c0_i32_1 = arith.constant 0 : i32
    return %c0_i32, %c0_i32_0 : i32, i32
  }
  func.func @transform_10(%arg0: i32) -> (i32, i32) {
    %c0_i32 = arith.constant 0 : i32
    %c0_i32_0 = arith.constant 0 : i32
    %c0_i32_1 = arith.constant 0 : i32
    return %c0_i32, %c0_i32_0 : i32, i32
  }
  func.func @transform_11(%arg0: i32) -> (i32, i32) {
    %c0_i32 = arith.constant 0 : i32
    %c0_i32_0 = arith.constant 0 : i32
    %c0_i32_1 = arith.constant 0 : i32
    return %c0_i32, %c0_i32_0 : i32, i32
  }
  func.func @transform_12(%arg0: i32) -> (i32, i32) {
    %c0_i32 = arith.constant 0 : i32
    %c0_i32_0 = arith.constant 0 : i32
    %c0_i32_1 = arith.constant 0 : i32
    return %c0_i32, %c0_i32_0 : i32, i32
  }
  func.func @transform_13(%arg0: i32) -> (i32, i32) {
    %c0_i32 = arith.constant 0 : i32
    %c0_i32_0 = arith.constant 0 : i32
    %c0_i32_1 = arith.constant 0 : i32
    return %c0_i32, %c0_i32_0 : i32, i32
  }
  func.func @transform_14(%arg0: i32) -> (i32, i32) {
    %c0_i32 = arith.constant 0 : i32
    %c0_i32_0 = arith.constant 0 : i32
    %c0_i32_1 = arith.constant 0 : i32
    return %c0_i32, %c0_i32_0 : i32, i32
  }
  func.func @transform_15(%arg0: i32) -> (i32, i32) {
    %c0_i32 = arith.constant 0 : i32
    %c0_i32_0 = arith.constant 0 : i32
    %c0_i32_1 = arith.constant 0 : i32
    return %c0_i32, %c0_i32_0 : i32, i32
  }
  func.func @transform_16(%arg0: i32) -> (i32, i32) {
    %c0_i32 = arith.constant 0 : i32
    %c0_i32_0 = arith.constant 0 : i32
    %c0_i32_1 = arith.constant 0 : i32
    return %c0_i32, %c0_i32_0 : i32, i32
  }
  func.func @transform_17(%arg0: i32) -> (i32, i32) {
    %c0_i32 = arith.constant 0 : i32
    %c0_i32_0 = arith.constant 0 : i32
    %c0_i32_1 = arith.constant 0 : i32
    return %c0_i32, %c0_i32_0 : i32, i32
  }
  func.func @transform_18(%arg0: i32) -> (i32, i32) {
    %c0_i32 = arith.constant 0 : i32
    %c0_i32_0 = arith.constant 0 : i32
    %c0_i32_1 = arith.constant 0 : i32
    return %c0_i32, %c0_i32_0 : i32, i32
  }
  func.func @transform_19(%arg0: i32) -> (i32, i32) {
    %c0_i32 = arith.constant 0 : i32
    %c0_i32_0 = arith.constant 0 : i32
    %c0_i32_1 = arith.constant 0 : i32
    return %c0_i32, %c0_i32_0 : i32, i32
  }
  func.func @transform_20(%arg0: i32) -> (i32, i32) {
    %c0_i32 = arith.constant 0 : i32
    %c0_i32_0 = arith.constant 0 : i32
    %c0_i32_1 = arith.constant 0 : i32
    return %c0_i32, %c0_i32_0 : i32, i32
  }
  func.func @transform_21(%arg0: i32) -> (i32, i32) {
    %c0_i32 = arith.constant 0 : i32
    %c0_i32_0 = arith.constant 0 : i32
    return %arg0, %c0_i32 : i32, i32
  }
}

</mosaic_0001>

<llo_original>
// kernel: cnn_classifier_forward.1
$region0: #{cnn_classifier_forward.1}
  #allocation0 [shape = 'u32[]', space=smem, size = 0x4, offset = 0x4, fixed_abs, tag = 'smem constant byte address 0x4 - core index']
  #allocation1 [shape = 'u32[72,128]{1,0:T(1,128)}', space=vmem, size = 0x9000, scoped, tag = 'internal scratch']
  %s0 = inlined_call_operand.vmem [shape: f32[1024,1], index: 0, kind: input, shape index: {}]
  %s1 = inlined_call_operand.vmem [shape: bf16[3,64], index: 1, kind: input, shape index: {}]
  %s2 = inlined_call_operand.vmem [shape: f32[1,64], index: 2, kind: input, shape index: {}]
  %s3 = inlined_call_operand.vmem [shape: f32[1,64], index: 3, kind: input, shape index: {}]
  %s4 = inlined_call_operand.vmem [shape: f32[512,3], index: 4, kind: input, shape index: {}]
  %s5 = inlined_call_operand.vmem [shape: bf16[256,512], index: 5, kind: input, shape index: {}]
  %s6 = inlined_call_operand.vmem [shape: bf16[320,128], index: 6, kind: input, shape index: {}]
  %s7 = inlined_call_operand.vmem [shape: f32[1,128], index: 7, kind: input, shape index: {}]
  %s8 = inlined_call_operand.vmem [shape: f32[1,128], index: 8, kind: input, shape index: {}]
  %s9 = inlined_call_operand.vmem [shape: f32[256,5], index: 9, kind: input, shape index: {}]
  %s10 = inlined_call_operand.vmem [shape: bf16[128,256], index: 10, kind: input, shape index: {}]
  %s11 = inlined_call_operand.vmem [shape: bf16[896,256], index: 11, kind: input, shape index: {}]
  %s12 = inlined_call_operand.vmem [shape: f32[1,256], index: 12, kind: input, shape index: {}]
  %s13 = inlined_call_operand.vmem [shape: f32[1,256], index: 13, kind: input, shape index: {}]
  %s14 = inlined_call_operand.vmem [shape: f32[128,7], index: 14, kind: input, shape index: {}]
  %s15 = inlined_call_operand.vmem [shape: bf16[64,128], index: 15, kind: input, shape index: {}]
  %s16 = inlined_call_operand.vmem [shape: bf16[8,64], index: 16, kind: input, shape index: {}]
  %s17 = inlined_call_operand.vmem [shape: bf16[256,128], index: 17, kind: input, shape index: {}]
  %s18 = inlined_call_operand.vmem [shape: f32[1,128], index: 18, kind: input, shape index: {}]
  %s19 = inlined_call_operand.vmem [shape: bf16[128,128], index: 19, kind: input, shape index: {}]
  %s20 = inlined_call_operand.vmem [shape: f32[1,128], index: 20, kind: input, shape index: {}]
  %s21 = inlined_call_operand.vmem [shape: f32[16,128], index: 21, kind: output, shape index: {}]
  %s22 = sld [smem:[#allocation0]]
  $region117: #{cnn_classifier_forward.1} parent=0
    _
  %s24 = ssub.s32 1, %s22
  %s25 = scalar_select 0, %s24, %s22
  loop: start=0, step=1, limit=4
  $region2: #{cnn_classifier_forward.1} parent=0 // loop_pre_header
    _
  $region3: #{cnn_classifier_forward.1} parent=0 // loop_header
    %s27 = sphi 0, %s31
    %p28 = scmp.ge.s32.totalorder %s27, 4
    %s37 = sphi 0, %s39
    %s40 = sphi 0, %s37
    %s41 = sphi 0, %s40
    %s57 = sphi 0, %s41
    %s61 = sphi 0, %s61
    %s63 = sphi 0, %s61
    %s64 = sphi 0, %s63
    %s78 = sphi 0, %s64
    %s82 = sphi 0, %s82
    %s84 = sphi 0, %s82
    %s85 = sphi 0, %s84
    %s99 = sphi 0, %s85
    %s103 = sphi 0, %s103
    %s105 = sphi 0, %s103
    %s106 = sphi 0, %s105
    %s120 = sphi 0, %s106
    %s124 = sphi 0, %s124
    %s126 = sphi 0, %s124
    %s127 = sphi 0, %s126
    %s141 = sphi 0, %s127
    %s145 = sphi 0, %s145
    %s147 = sphi 0, %s145
    %s148 = sphi 0, %s147
    %s162 = sphi 0, %s148
    %s166 = sphi 0, %s166
    %s168 = sphi 0, %s166
    %s169 = sphi 0, %s168
    %s183 = sphi 0, %s169
    %s187 = sphi 0, %s187
    %s189 = sphi 0, %s187
    %s190 = sphi 0, %s189
    %s204 = sphi 0, %s190
    %s208 = sphi 0, %s208
    %s210 = sphi 0, %s208
    %s211 = sphi 0, %s210
    %s225 = sphi 0, %s211
    %s229 = sphi 0, %s229
    %s231 = sphi 0, %s229
    %s232 = sphi 0, %s231
    %s246 = sphi 0, %s232
    %s250 = sphi 0, %s250
    %s252 = sphi 0, %s250
    %s253 = sphi 0, %s252
    %s267 = sphi 0, %s253
    %s271 = sphi 0, %s271
    %s273 = sphi 0, %s271
    %s274 = sphi 0, %s273
    %s288 = sphi 0, %s274
    %s292 = sphi 0, %s292
    %s294 = sphi 0, %s292
    %s295 = sphi 0, %s294
    %s309 = sphi 0, %s295
    %s313 = sphi 0, %s313
    %s315 = sphi 0, %s313
    %s316 = sphi 0, %s315
    %s330 = sphi 0, %s316
    %s334 = sphi 0, %s334
    %s336 = sphi 0, %s334
    %s337 = sphi 0, %s336
    %s351 = sphi 0, %s337
    %s355 = sphi 0, %s355
    %s357 = sphi 0, %s355
    %s358 = sphi 0, %s357
    %s372 = sphi 0, %s358
    %s376 = sphi 0, %s376
    %s378 = sphi 0, %s376
    %s379 = sphi 0, %s378
    %s393 = sphi 0, %s379
    %s397 = sphi 0, %s397
    %s399 = sphi 0, %s397
    %s400 = sphi 0, %s399
    %s414 = sphi 0, %s400
    %s418 = sphi 0, %s418
    %s420 = sphi 0, %s418
    %s421 = sphi 0, %s420
    %s435 = sphi 0, %s421
    %s439 = sphi 0, %s439
    %s441 = sphi 0, %s439
    %s442 = sphi 0, %s441
    %s456 = sphi 0, %s442
    %s460 = sphi 0, %s460
    %s462 = sphi 0, %s460
    %s463 = sphi 0, %s462
    %s477 = sphi 0, %s463
    %s483 = sphi 0, %s485
    %s486 = sphi 0, %s483
    %s487 = sphi 0, %s486
    %s503 = sphi 0, %s487
  $region4: #{cnn_classifier_forward.1} parent=0 // loop_header_branch
    %30 = sbr.rel (%p28) target = $region8
  $region5: #{cnn_classifier_forward.1} parent=0 // loop_body
    %s32 = ssub.s32 %s27, 1
    %s33 = ssub.s32 %s27, 2
    %s34 = sadd.s32 %s27, 1
    %s35 = ssub.s32 %s27, %s34
    %p36 = scmp.eq.s32.totalorder %s35, 0
    %s38 = sadd.s32 %s37, 1
    %s39 = scalar_select %p36, %s37, %s38
    %p42 = pneg %p36
    %p43 = scmp.eq.s32.totalorder %s27, 1
    %p44 = por %p42, %p43
    %p45 = scmp.ne.s32.totalorder %s37, %s40
    %p46 = scmp.eq.s32.totalorder %s27, 0
    %p47 = por %p45, %p46
    %p48 = scmp.ne.s32.totalorder %s37, %s40
    %p49 = scmp.eq.s32.totalorder %s32, 1
    %p50 = por %p48, %p49
    %p51 = scmp.ne.s32.totalorder %s40, %s41
    %p52 = scmp.eq.s32.totalorder %s32, 0
    %p53 = por %p51, %p52
    %p54 = scmp.ne.s32.totalorder %s40, %s41
    %p55 = scmp.eq.s32.totalorder %s33, 1
    %p56 = por %p54, %p55
    %p58 = scmp.ne.s32.totalorder %s41, %s57
    %p59 = scmp.eq.s32.totalorder %s33, 0
    %p60 = por %p58, %p59
    %s62 = sadd.s32 %s61, 1
    %p65 = scmp.eq.s32.totalorder %s27, 1
    %p66 = scmp.ne.s32.totalorder %s61, %s63
    %p67 = scmp.eq.s32.totalorder %s27, 0
    %p68 = por %p66, %p67
    %p69 = scmp.ne.s32.totalorder %s61, %s63
    %p70 = scmp.eq.s32.totalorder %s32, 1
    %p71 = por %p69, %p70
    %p72 = scmp.ne.s32.totalorder %s63, %s64
    %p73 = scmp.eq.s32.totalorder %s32, 0
    %p74 = por %p72, %p73
    %p75 = scmp.ne.s32.totalorder %s63, %s64
    %p76 = scmp.eq.s32.totalorder %s33, 1
    %p77 = por %p75, %p76
    %p79 = scmp.ne.s32.totalorder %s64, %s78
    %p80 = scmp.eq.s32.totalorder %s33, 0
    %p81 = por %p79, %p80
    %s83 = sadd.s32 %s82, 1
    %p86 = scmp.eq.s32.totalorder %s27, 1
    %p87 = scmp.ne.s32.totalorder %s82, %s84
    %p88 = scmp.eq.s32.totalorder %s27, 0
    %p89 = por %p87, %p88
    %p90 = scmp.ne.s32.totalorder %s82, %s84
    %p91 = scmp.eq.s32.totalorder %s32, 1
    %p92 = por %p90, %p91
    %p93 = scmp.ne.s32.totalorder %s84, %s85
    %p94 = scmp.eq.s32.totalorder %s32, 0
    %p95 = por %p93, %p94
    %p96 = scmp.ne.s32.totalorder %s84, %s85
    %p97 = scmp.eq.s32.totalorder %s33, 1
    %p98 = por %p96, %p97
    %p100 = scmp.ne.s32.totalorder %s85, %s99
    %p101 = scmp.eq.s32.totalorder %s33, 0
    %p102 = por %p100, %p101
    %s104 = sadd.s32 %s103, 1
    %p107 = scmp.eq.s32.totalorder %s27, 1
    %p108 = scmp.ne.s32.totalorder %s103, %s105
    %p109 = scmp.eq.s32.totalorder %s27, 0
    %p110 = por %p108, %p109
    %p111 = scmp.ne.s32.totalorder %s103, %s105
    %p112 = scmp.eq.s32.totalorder %s32, 1
    %p113 = por %p111, %p112
    %p114 = scmp.ne.s32.totalorder %s105, %s106
    %p115 = scmp.eq.s32.totalorder %s32, 0
    %p116 = por %p114, %p115
    %p117 = scmp.ne.s32.totalorder %s105, %s106
    %p118 = scmp.eq.s32.totalorder %s33, 1
    %p119 = por %p117, %p118
    %p121 = scmp.ne.s32.totalorder %s106, %s120
    %p122 = scmp.eq.s32.totalorder %s33, 0
    %p123 = por %p121, %p122
    %s125 = sadd.s32 %s124, 1
    %p128 = scmp.eq.s32.totalorder %s27, 1
    %p129 = scmp.ne.s32.totalorder %s124, %s126
    %p130 = scmp.eq.s32.totalorder %s27, 0
    %p131 = por %p129, %p130
    %p132 = scmp.ne.s32.totalorder %s124, %s126
    %p133 = scmp.eq.s32.totalorder %s32, 1
    %p134 = por %p132, %p133
    %p135 = scmp.ne.s32.totalorder %s126, %s127
    %p136 = scmp.eq.s32.totalorder %s32, 0
    %p137 = por %p135, %p136
    %p138 = scmp.ne.s32.totalorder %s126, %s127
    %p139 = scmp.eq.s32.totalorder %s33, 1
    %p140 = por %p138, %p139
    %p142 = scmp.ne.s32.totalorder %s127, %s141
    %p143 = scmp.eq.s32.totalorder %s33, 0
    %p144 = por %p142, %p143
    %s146 = sadd.s32 %s145, 1
    %p149 = scmp.eq.s32.totalorder %s27, 1
    %p150 = scmp.ne.s32.totalorder %s145, %s147
    %p151 = scmp.eq.s32.totalorder %s27, 0
    %p152 = por %p150, %p151
    %p153 = scmp.ne.s32.totalorder %s145, %s147
    %p154 = scmp.eq.s32.totalorder %s32, 1
    %p155 = por %p153, %p154
    %p156 = scmp.ne.s32.totalorder %s147, %s148
    %p157 = scmp.eq.s32.totalorder %s32, 0
    %p158 = por %p156, %p157
    %p159 = scmp.ne.s32.totalorder %s147, %s148
    %p160 = scmp.eq.s32.totalorder %s33, 1
    %p161 = por %p159, %p160
    %p163 = scmp.ne.s32.totalorder %s148, %s162
    %p164 = scmp.eq.s32.totalorder %s33, 0
    %p165 = por %p163, %p164
    %s167 = sadd.s32 %s166, 1
    %p170 = scmp.eq.s32.totalorder %s27, 1
    %p171 = scmp.ne.s32.totalorder %s166, %s168
    %p172 = scmp.eq.s32.totalorder %s27, 0
    %p173 = por %p171, %p172
    %p174 = scmp.ne.s32.totalorder %s166, %s168
    %p175 = scmp.eq.s32.totalorder %s32, 1
    %p176 = por %p174, %p175
    %p177 = scmp.ne.s32.totalorder %s168, %s169
    %p178 = scmp.eq.s32.totalorder %s32, 0
    %p179 = por %p177, %p178
    %p180 = scmp.ne.s32.totalorder %s168, %s169
    %p181 = scmp.eq.s32.totalorder %s33, 1
    %p182 = por %p180, %p181
    %p184 = scmp.ne.s32.totalorder %s169, %s183
    %p185 = scmp.eq.s32.totalorder %s33, 0
    %p186 = por %p184, %p185
    %s188 = sadd.s32 %s187, 1
    %p191 = scmp.eq.s32.totalorder %s27, 1
    %p192 = scmp.ne.s32.totalorder %s187, %s189
    %p193 = scmp.eq.s32.totalorder %s27, 0
    %p194 = por %p192, %p193
    %p195 = scmp.ne.s32.totalorder %s187, %s189
    %p196 = scmp.eq.s32.totalorder %s32, 1
    %p197 = por %p195, %p196
    %p198 = scmp.ne.s32.totalorder %s189, %s190
    %p199 = scmp.eq.s32.totalorder %s32, 0
    %p200 = por %p198, %p199
    %p201 = scmp.ne.s32.totalorder %s189, %s190
    %p202 = scmp.eq.s32.totalorder %s33, 1
    %p203 = por %p201, %p202
    %p205 = scmp.ne.s32.totalorder %s190, %s204
    %p206 = scmp.eq.s32.totalorder %s33, 0
    %p207 = por %p205, %p206
    %s209 = sadd.s32 %s208, 1
    %p212 = scmp.eq.s32.totalorder %s27, 1
    %p213 = scmp.ne.s32.totalorder %s208, %s210
    %p214 = scmp.eq.s32.totalorder %s27, 0
    %p215 = por %p213, %p214
    %p216 = scmp.ne.s32.totalorder %s208, %s210
    %p217 = scmp.eq.s32.totalorder %s32, 1
    %p218 = por %p216, %p217
    %p219 = scmp.ne.s32.totalorder %s210, %s211
    %p220 = scmp.eq.s32.totalorder %s32, 0
    %p221 = por %p219, %p220
    %p222 = scmp.ne.s32.totalorder %s210, %s211
    %p223 = scmp.eq.s32.totalorder %s33, 1
    %p224 = por %p222, %p223
    %p226 = scmp.ne.s32.totalorder %s211, %s225
    %p227 = scmp.eq.s32.totalorder %s33, 0
    %p228 = por %p226, %p227
    %s230 = sadd.s32 %s229, 1
    %p233 = scmp.eq.s32.totalorder %s27, 1
    %p234 = scmp.ne.s32.totalorder %s229, %s231
    %p235 = scmp.eq.s32.totalorder %s27, 0
    %p236 = por %p234, %p235
    %p237 = scmp.ne.s32.totalorder %s229, %s231
    %p238 = scmp.eq.s32.totalorder %s32, 1
    %p239 = por %p237, %p238
    %p240 = scmp.ne.s32.totalorder %s231, %s232
    %p241 = scmp.eq.s32.totalorder %s32, 0
    %p242 = por %p240, %p241
    %p243 = scmp.ne.s32.totalorder %s231, %s232
    %p244 = scmp.eq.s32.totalorder %s33, 1
    %p245 = por %p243, %p244
    %p247 = scmp.ne.s32.totalorder %s232, %s246
    %p248 = scmp.eq.s32.totalorder %s33, 0
    %p249 = por %p247, %p248
    %s251 = sadd.s32 %s250, 1
    %p254 = scmp.eq.s32.totalorder %s27, 1
    %p255 = scmp.ne.s32.totalorder %s250, %s252
    %p256 = scmp.eq.s32.totalorder %s27, 0
    %p257 = por %p255, %p256
    %p258 = scmp.ne.s32.totalorder %s250, %s252
    %p259 = scmp.eq.s32.totalorder %s32, 1
    %p260 = por %p258, %p259
    %p261 = scmp.ne.s32.totalorder %s252, %s253
    %p262 = scmp.eq.s32.totalorder %s32, 0
    %p263 = por %p261, %p262
    %p264 = scmp.ne.s32.totalorder %s252, %s253
    %p265 = scmp.eq.s32.totalorder %s33, 1
    %p266 = por %p264, %p265
    %p268 = scmp.ne.s32.totalorder %s253, %s267
    %p269 = scmp.eq.s32.totalorder %s33, 0
    %p270 = por %p268, %p269
    %s272 = sadd.s32 %s271, 1
    %p275 = scmp.eq.s32.totalorder %s27, 1
    %p276 = scmp.ne.s32.totalorder %s271, %s273
    %p277 = scmp.eq.s32.totalorder %s27, 0
    %p278 = por %p276, %p277
    %p279 = scmp.ne.s32.totalorder %s271, %s273
    %p280 = scmp.eq.s32.totalorder %s32, 1
    %p281 = por %p279, %p280
    %p282 = scmp.ne.s32.totalorder %s273, %s274
    %p283 = scmp.eq.s32.totalorder %s32, 0
    %p284 = por %p282, %p283
    %p285 = scmp.ne.s32.totalorder %s273, %s274
    %p286 = scmp.eq.s32.totalorder %s33, 1
    %p287 = por %p285, %p286
    %p289 = scmp.ne.s32.totalorder %s274, %s288
    %p290 = scmp.eq.s32.totalorder %s33, 0
    %p291 = por %p289, %p290
    %s293 = sadd.s32 %s292, 1
    %p296 = scmp.eq.s32.totalorder %s27, 1
    %p297 = scmp.ne.s32.totalorder %s292, %s294
    %p298 = scmp.eq.s32.totalorder %s27, 0
    %p299 = por %p297, %p298
    %p300 = scmp.ne.s32.totalorder %s292, %s294
    %p301 = scmp.eq.s32.totalorder %s32, 1
    %p302 = por %p300, %p301
    %p303 = scmp.ne.s32.totalorder %s294, %s295
    %p304 = scmp.eq.s32.totalorder %s32, 0
    %p305 = por %p303, %p304
    %p306 = scmp.ne.s32.totalorder %s294, %s295
    %p307 = scmp.eq.s32.totalorder %s33, 1
    %p308 = por %p306, %p307
    %p310 = scmp.ne.s32.totalorder %s295, %s309
    %p311 = scmp.eq.s32.totalorder %s33, 0
    %p312 = por %p310, %p311
    %s314 = sadd.s32 %s313, 1
    %p317 = scmp.eq.s32.totalorder %s27, 1
    %p318 = scmp.ne.s32.totalorder %s313, %s315
    %p319 = scmp.eq.s32.totalorder %s27, 0
    %p320 = por %p318, %p319
    %p321 = scmp.ne.s32.totalorder %s313, %s315
    %p322 = scmp.eq.s32.totalorder %s32, 1
    %p323 = por %p321, %p322
    %p324 = scmp.ne.s32.totalorder %s315, %s316
    %p325 = scmp.eq.s32.totalorder %s32, 0
    %p326 = por %p324, %p325
    %p327 = scmp.ne.s32.totalorder %s315, %s316
    %p328 = scmp.eq.s32.totalorder %s33, 1
    %p329 = por %p327, %p328
    %p331 = scmp.ne.s32.totalorder %s316, %s330
    %p332 = scmp.eq.s32.totalorder %s33, 0
    %p333 = por %p331, %p332
    %s335 = sadd.s32 %s334, 1
    %p338 = scmp.eq.s32.totalorder %s27, 1
    %p339 = scmp.ne.s32.totalorder %s334, %s336
    %p340 = scmp.eq.s32.totalorder %s27, 0
    %p341 = por %p339, %p340
    %p342 = scmp.ne.s32.totalorder %s334, %s336
    %p343 = scmp.eq.s32.totalorder %s32, 1
    %p344 = por %p342, %p343
    %p345 = scmp.ne.s32.totalorder %s336, %s337
    %p346 = scmp.eq.s32.totalorder %s32, 0
    %p347 = por %p345, %p346
    %p348 = scmp.ne.s32.totalorder %s336, %s337
    %p349 = scmp.eq.s32.totalorder %s33, 1
    %p350 = por %p348, %p349
    %p352 = scmp.ne.s32.totalorder %s337, %s351
    %p353 = scmp.eq.s32.totalorder %s33, 0
    %p354 = por %p352, %p353
    %s356 = sadd.s32 %s355, 1
    %p359 = scmp.eq.s32.totalorder %s27, 1
    %p360 = scmp.ne.s32.totalorder %s355, %s357
    %p361 = scmp.eq.s32.totalorder %s27, 0
    %p362 = por %p360, %p361
    %p363 = scmp.ne.s32.totalorder %s355, %s357
    %p364 = scmp.eq.s32.totalorder %s32, 1
    %p365 = por %p363, %p364
    %p366 = scmp.ne.s32.totalorder %s357, %s358
    %p367 = scmp.eq.s32.totalorder %s32, 0
    %p368 = por %p366, %p367
    %p369 = scmp.ne.s32.totalorder %s357, %s358
    %p370 = scmp.eq.s32.totalorder %s33, 1
    %p371 = por %p369, %p370
    %p373 = scmp.ne.s32.totalorder %s358, %s372
    %p374 = scmp.eq.s32.totalorder %s33, 0
    %p375 = por %p373, %p374
    %s377 = sadd.s32 %s376, 1
    %p380 = scmp.eq.s32.totalorder %s27, 1
    %p381 = scmp.ne.s32.totalorder %s376, %s378
    %p382 = scmp.eq.s32.totalorder %s27, 0
    %p383 = por %p381, %p382
    %p384 = scmp.ne.s32.totalorder %s376, %s378
    %p385 = scmp.eq.s32.totalorder %s32, 1
    %p386 = por %p384, %p385
    %p387 = scmp.ne.s32.totalorder %s378, %s379
    %p388 = scmp.eq.s32.totalorder %s32, 0
    %p389 = por %p387, %p388
    %p390 = scmp.ne.s32.totalorder %s378, %s379
    %p391 = scmp.eq.s32.totalorder %s33, 1
    %p392 = por %p390, %p391
    %p394 = scmp.ne.s32.totalorder %s379, %s393
    %p395 = scmp.eq.s32.totalorder %s33, 0
    %p396 = por %p394, %p395
    %s398 = sadd.s32 %s397, 1
    %p401 = scmp.eq.s32.totalorder %s27, 1
    %p402 = scmp.ne.s32.totalorder %s397, %s399
    %p403 = scmp.eq.s32.totalorder %s27, 0
    %p404 = por %p402, %p403
    %p405 = scmp.ne.s32.totalorder %s397, %s399
    %p406 = scmp.eq.s32.totalorder %s32, 1
    %p407 = por %p405, %p406
    %p408 = scmp.ne.s32.totalorder %s399, %s400
    %p409 = scmp.eq.s32.totalorder %s32, 0
    %p410 = por %p408, %p409
    %p411 = scmp.ne.s32.totalorder %s399, %s400
    %p412 = scmp.eq.s32.totalorder %s33, 1
    %p413 = por %p411, %p412
    %p415 = scmp.ne.s32.totalorder %s400, %s414
    %p416 = scmp.eq.s32.totalorder %s33, 0
    %p417 = por %p415, %p416
    %s419 = sadd.s32 %s418, 1
    %p422 = scmp.eq.s32.totalorder %s27, 1
    %p423 = scmp.ne.s32.totalorder %s418, %s420
    %p424 = scmp.eq.s32.totalorder %s27, 0
    %p425 = por %p423, %p424
    %p426 = scmp.ne.s32.totalorder %s418, %s420
    %p427 = scmp.eq.s32.totalorder %s32, 1
    %p428 = por %p426, %p427
    %p429 = scmp.ne.s32.totalorder %s420, %s421
    %p430 = scmp.eq.s32.totalorder %s32, 0
    %p431 = por %p429, %p430
    %p432 = scmp.ne.s32.totalorder %s420, %s421
    %p433 = scmp.eq.s32.totalorder %s33, 1
    %p434 = por %p432, %p433
    %p436 = scmp.ne.s32.totalorder %s421, %s435
    %p437 = scmp.eq.s32.totalorder %s33, 0
    %p438 = por %p436, %p437
    %s440 = sadd.s32 %s439, 1
    %p443 = scmp.eq.s32.totalorder %s27, 1
    %p444 = scmp.ne.s32.totalorder %s439, %s441
    %p445 = scmp.eq.s32.totalorder %s27, 0
    %p446 = por %p444, %p445
    %p447 = scmp.ne.s32.totalorder %s439, %s441
    %p448 = scmp.eq.s32.totalorder %s32, 1
    %p449 = por %p447, %p448
    %p450 = scmp.ne.s32.totalorder %s441, %s442
    %p451 = scmp.eq.s32.totalorder %s32, 0
    %p452 = por %p450, %p451
    %p453 = scmp.ne.s32.totalorder %s441, %s442
    %p454 = scmp.eq.s32.totalorder %s33, 1
    %p455 = por %p453, %p454
    %p457 = scmp.ne.s32.totalorder %s442, %s456
    %p458 = scmp.eq.s32.totalorder %s33, 0
    %p459 = por %p457, %p458
    %s461 = sadd.s32 %s460, 1
    %p464 = scmp.eq.s32.totalorder %s27, 1
    %p465 = scmp.ne.s32.totalorder %s460, %s462
    %p466 = scmp.eq.s32.totalorder %s27, 0
    %p467 = por %p465, %p466
    %p468 = scmp.ne.s32.totalorder %s460, %s462
    %p469 = scmp.eq.s32.totalorder %s32, 1
    %p470 = por %p468, %p469
    %p471 = scmp.ne.s32.totalorder %s462, %s463
    %p472 = scmp.eq.s32.totalorder %s32, 0
    %p473 = por %p471, %p472
    %p474 = scmp.ne.s32.totalorder %s462, %s463
    %p475 = scmp.eq.s32.totalorder %s33, 1
    %p476 = por %p474, %p475
    %p478 = scmp.ne.s32.totalorder %s463, %s477
    %p479 = scmp.eq.s32.totalorder %s33, 0
    %p480 = por %p478, %p479
    %s481 = ssub.s32 %s27, %s34
    %p482 = scmp.eq.s32.totalorder %s481, 0
    %s484 = sadd.s32 %s483, 1
    %s485 = scalar_select %p482, %s483, %s484
    %p488 = pneg %p482
    %p489 = scmp.eq.s32.totalorder %s27, 1
    %p490 = por %p488, %p489
    %p491 = scmp.ne.s32.totalorder %s483, %s486
    %p492 = scmp.eq.s32.totalorder %s27, 0
    %p493 = por %p491, %p492
    %p494 = scmp.ne.s32.totalorder %s483, %s486
    %p495 = scmp.eq.s32.totalorder %s32, 1
    %p496 = por %p494, %p495
    %p497 = scmp.ne.s32.totalorder %s486, %s487
    %p498 = scmp.eq.s32.totalorder %s32, 0
    %p499 = por %p497, %p498
    %p500 = scmp.ne.s32.totalorder %s486, %s487
    %p501 = scmp.eq.s32.totalorder %s33, 1
    %p502 = por %p500, %p501
    %p504 = scmp.ne.s32.totalorder %s487, %s503
    %p505 = scmp.eq.s32.totalorder %s33, 0
    %p506 = por %p504, %p505
    %p507 = scmp.le.s32.totalorder 1, %s27
    %p508 = scmp.lt.s32.totalorder %s27, 3
    %p509 = pnand %p507, %p508
    %p510 = pneg %p509
    // Predicated region
    $region9: #{cnn_classifier_forward.1} parent=5 // pred_check
      _
    $region10: #{cnn_classifier_forward.1} parent=5 // pred_check_branch
      %512 = sbr.rel (%p509) target = $region12
    $region11: #{cnn_classifier_forward.1} parent=5 // pred_region
      %s513 = ssub.s32 %s27, 1
      // Predicated region
      $region13: #{cnn_classifier_forward.1} parent=11 // pred_check
        %p514 = pneg %p74
      $region14: #{cnn_classifier_forward.1} parent=11 // pred_check_branch
        %516 = sbr.rel (%p514) target = $region16
      $region15: #{cnn_classifier_forward.1} parent=11 // pred_region
        _
      $region16: #{cnn_classifier_forward.1} parent=11 // pred_fallthru
        _
      // Predicated region
      $region17: #{cnn_classifier_forward.1} parent=11 // pred_check
        %p517 = pneg %p95
      $region18: #{cnn_classifier_forward.1} parent=11 // pred_check_branch
        %519 = sbr.rel (%p517) target = $region20
      $region19: #{cnn_classifier_forward.1} parent=11 // pred_region
        _
      $region20: #{cnn_classifier_forward.1} parent=11 // pred_fallthru
        _
      // Predicated region
      $region21: #{cnn_classifier_forward.1} parent=11 // pred_check
        %p520 = pneg %p116
      $region22: #{cnn_classifier_forward.1} parent=11 // pred_check_branch
        %522 = sbr.rel (%p520) target = $region24
      $region23: #{cnn_classifier_forward.1} parent=11 // pred_region
        _
      $region24: #{cnn_classifier_forward.1} parent=11 // pred_fallthru
        _
      // Predicated region
      $region25: #{cnn_classifier_forward.1} parent=11 // pred_check
        %p523 = pneg %p137
      $region26: #{cnn_classifier_forward.1} parent=11 // pred_check_branch
        %525 = sbr.rel (%p523) target = $region28
      $region27: #{cnn_classifier_forward.1} parent=11 // pred_region
        _
      $region28: #{cnn_classifier_forward.1} parent=11 // pred_fallthru
        _
      // Predicated region
      $region29: #{cnn_classifier_forward.1} parent=11 // pred_check
        %p526 = pneg %p158
      $region30: #{cnn_classifier_forward.1} parent=11 // pred_check_branch
        %528 = sbr.rel (%p526) target = $region32
      $region31: #{cnn_classifier_forward.1} parent=11 // pred_region
        _
      $region32: #{cnn_classifier_forward.1} parent=11 // pred_fallthru
        _
      // Predicated region
      $region33: #{cnn_classifier_forward.1} parent=11 // pred_check
        %p529 = pneg %p179
      $region34: #{cnn_classifier_forward.1} parent=11 // pred_check_branch
        %531 = sbr.rel (%p529) target = $region36
      $region35: #{cnn_classifier_forward.1} parent=11 // pred_region
        _
      $region36: #{cnn_classifier_forward.1} parent=11 // pred_fallthru
        _
      // Predicated region
      $region37: #{cnn_classifier_forward.1} parent=11 // pred_check
        %p532 = pneg %p200
      $region38: #{cnn_classifier_forward.1} parent=11 // pred_check_branch
        %534 = sbr.rel (%p532) target = $region40
      $region39: #{cnn_classifier_forward.1} parent=11 // pred_region
        _
      $region40: #{cnn_classifier_forward.1} parent=11 // pred_fallthru
        _
      // Predicated region
      $region41: #{cnn_classifier_forward.1} parent=11 // pred_check
        %p535 = pneg %p221
      $region42: #{cnn_classifier_forward.1} parent=11 // pred_check_branch
        %537 = sbr.rel (%p535) target = $region44
      $region43: #{cnn_classifier_forward.1} parent=11 // pred_region
        _
      $region44: #{cnn_classifier_forward.1} parent=11 // pred_fallthru
        _
      // Predicated region
      $region45: #{cnn_classifier_forward.1} parent=11 // pred_check
        %p538 = pneg %p242
      $region46: #{cnn_classifier_forward.1} parent=11 // pred_check_branch
        %540 = sbr.rel (%p538) target = $region48
      $region47: #{cnn_classifier_forward.1} parent=11 // pred_region
        _
      $region48: #{cnn_classifier_forward.1} parent=11 // pred_fallthru
        _
      // Predicated region
      $region49: #{cnn_classifier_forward.1} parent=11 // pred_check
        %p541 = pneg %p263
      $region50: #{cnn_classifier_forward.1} parent=11 // pred_check_branch
        %543 = sbr.rel (%p541) target = $region52
      $region51: #{cnn_classifier_forward.1} parent=11 // pred_region
        _
      $region52: #{cnn_classifier_forward.1} parent=11 // pred_fallthru
        _
      // Predicated region
      $region53: #{cnn_classifier_forward.1} parent=11 // pred_check
        %p544 = pneg %p284
      $region54: #{cnn_classifier_forward.1} parent=11 // pred_check_branch
        %546 = sbr.rel (%p544) target = $region56
      $region55: #{cnn_classifier_forward.1} parent=11 // pred_region
        _
      $region56: #{cnn_classifier_forward.1} parent=11 // pred_fallthru
        _
      // Predicated region
      $region57: #{cnn_classifier_forward.1} parent=11 // pred_check
        %p547 = pneg %p305
      $region58: #{cnn_classifier_forward.1} parent=11 // pred_check_branch
        %549 = sbr.rel (%p547) target = $region60
      $region59: #{cnn_classifier_forward.1} parent=11 // pred_region
        _
      $region60: #{cnn_classifier_forward.1} parent=11 // pred_fallthru
        _
      // Predicated region
      $region61: #{cnn_classifier_forward.1} parent=11 // pred_check
        %p550 = pneg %p326
      $region62: #{cnn_classifier_forward.1} parent=11 // pred_check_branch
        %552 = sbr.rel (%p550) target = $region64
      $region63: #{cnn_classifier_forward.1} parent=11 // pred_region
        _
      $region64: #{cnn_classifier_forward.1} parent=11 // pred_fallthru
        _
      // Predicated region
      $region65: #{cnn_classifier_forward.1} parent=11 // pred_check
        %p553 = pneg %p347
      $region66: #{cnn_classifier_forward.1} parent=11 // pred_check_branch
        %555 = sbr.rel (%p553) target = $region68
      $region67: #{cnn_classifier_forward.1} parent=11 // pred_region
        _
      $region68: #{cnn_classifier_forward.1} parent=11 // pred_fallthru
        _
      // Predicated region
      $region69: #{cnn_classifier_forward.1} parent=11 // pred_check
        %p556 = pneg %p368
      $region70: #{cnn_classifier_forward.1} parent=11 // pred_check_branch
        %558 = sbr.rel (%p556) target = $region72
      $region71: #{cnn_classifier_forward.1} parent=11 // pred_region
        _
      $region72: #{cnn_classifier_forward.1} parent=11 // pred_fallthru
        _
      // Predicated region
      $region73: #{cnn_classifier_forward.1} parent=11 // pred_check
        %p559 = pneg %p389
      $region74: #{cnn_classifier_forward.1} parent=11 // pred_check_branch
        %561 = sbr.rel (%p559) target = $region76
      $region75: #{cnn_classifier_forward.1} parent=11 // pred_region
        _
      $region76: #{cnn_classifier_forward.1} parent=11 // pred_fallthru
        _
      // Predicated region
      $region77: #{cnn_classifier_forward.1} parent=11 // pred_check
        %p562 = pneg %p410
      $region78: #{cnn_classifier_forward.1} parent=11 // pred_check_branch
        %564 = sbr.rel (%p562) target = $region80
      $region79: #{cnn_classifier_forward.1} parent=11 // pred_region
        _
      $region80: #{cnn_classifier_forward.1} parent=11 // pred_fallthru
        _
      // Predicated region
      $region81: #{cnn_classifier_forward.1} parent=11 // pred_check
        %p565 = pneg %p431
      $region82: #{cnn_classifier_forward.1} parent=11 // pred_check_branch
        %567 = sbr.rel (%p565) target = $region84
      $region83: #{cnn_classifier_forward.1} parent=11 // pred_region
        _
      $region84: #{cnn_classifier_forward.1} parent=11 // pred_fallthru
        _
      // Predicated region
      $region85: #{cnn_classifier_forward.1} parent=11 // pred_check
        %p568 = pneg %p452
      $region86: #{cnn_classifier_forward.1} parent=11 // pred_check_branch
        %570 = sbr.rel (%p568) target = $region88
      $region87: #{cnn_classifier_forward.1} parent=11 // pred_region
        _
      $region88: #{cnn_classifier_forward.1} parent=11 // pred_fallthru
        _
      // Predicated region
      $region89: #{cnn_classifier_forward.1} parent=11 // pred_check
        %p571 = pneg %p473
      $region90: #{cnn_classifier_forward.1} parent=11 // pred_check_branch
        %573 = sbr.rel (%p571) target = $region92
      $region91: #{cnn_classifier_forward.1} parent=11 // pred_region
        _
      $region92: #{cnn_classifier_forward.1} parent=11 // pred_fallthru
        _
    $region12: #{cnn_classifier_forward.1} parent=5 // pred_fallthru
      _
    %p574 = scmp.lt.s32.totalorder %s27, 2
    // Predicated region
    $region93: #{cnn_classifier_forward.1} parent=5 // pred_check
      %p575 = pneg %p574
    $region94: #{cnn_classifier_forward.1} parent=5 // pred_check_branch
      %577 = sbr.rel (%p575) target = $region96
    $region95: #{cnn_classifier_forward.1} parent=5 // pred_region
      // Predicated region
      $region97: #{cnn_classifier_forward.1} parent=95 // pred_check
        %p578 = pneg %p47
      $region98: #{cnn_classifier_forward.1} parent=95 // pred_check_branch
        %580 = sbr.rel (%p578) target = $region100
      $region99: #{cnn_classifier_forward.1} parent=95 // pred_region
        %s581 = smul.u32 64, %s27
        %p582 = scmp.lt.s32.totalorder %s581, 127
        %s583 = scalar_select %p582, %s581, 127
        %s584 = smul.addr %s583, 8
        %s585 = scalar_lea.vmem %s0, %s584
        %s586 = smul.u32 64, %s27
      $region100: #{cnn_classifier_forward.1} parent=95 // pred_fallthru
        _
    $region96: #{cnn_classifier_forward.1} parent=5 // pred_fallthru
      _
    %p587 = scmp.le.s32.totalorder 1, %s27
    %p588 = scmp.lt.s32.totalorder %s27, 3
    %p589 = pnand %p587, %p588
    %p590 = pneg %p589
    // Predicated region
    $region101: #{cnn_classifier_forward.1} parent=5 // pred_check
      _
    $region102: #{cnn_classifier_forward.1} parent=5 // pred_check_branch
      %592 = sbr.rel (%p589) target = $region104
    $region103: #{cnn_classifier_forward.1} parent=5 // pred_region
      %s593 = ssub.s32 %s27, 1
      %s594 = smul.u32 64, %s32
      %p595 = scmp.lt.s32.totalorder %s594, 127
      %s596 = scalar_select %p595, %s594, 127
      %s597 = smul.addr %s596, 8
      %s598 = scalar_lea.vmem %s0, %s597
      %p599 = pneg %p53
      %p600 = pneg %p50
      %p601 = pneg %p74
      %p602 = pneg %p71
      %p603 = pneg %p95
      %p604 = pneg %p92
      %p605 = pneg %p116
      %p606 = pneg %p113
      %p607 = pneg %p137
      %p608 = pneg %p134
      %p609 = pneg %p158
      %p610 = pneg %p155
      %p611 = pneg %p179
      %p612 = pneg %p176
      %p613 = pneg %p200
      %p614 = pneg %p197
      %p615 = pneg %p221
      %p616 = pneg %p218
      %p617 = pneg %p242
      %p618 = pneg %p239
      %p619 = pneg %p263
      %p620 = pneg %p260
      %p621 = pneg %p284
      %p622 = pneg %p281
      %p623 = pneg %p305
      %p624 = pneg %p302
      %p625 = pneg %p326
      %p626 = pneg %p323
      %p627 = pneg %p347
      %p628 = pneg %p344
      %p629 = pneg %p368
      %p630 = pneg %p365
      %p631 = pneg %p389
      %p632 = pneg %p386
      %p633 = pneg %p410
      %p634 = pneg %p407
      %p635 = pneg %p431
      %p636 = pneg %p428
      %p637 = pneg %p452
      %p638 = pneg %p449
      %p639 = pneg %p473
      %p640 = pneg %p470
      %p641 = pneg %p499
      %p642 = pneg %p496
      %p643 = scmp.lt.s32.totalorder %s32, 1
      %s644 = scalar_select %p643, %s32, 1
      %s645 = smul.addr %s644, 8
      %s646 = scalar_lea.vmem %s21, %s645
      %s647 = smul.u32 64, %s32
      %p648 = scmp.lt.s32.totalorder %s647, 127
      %s649 = scalar_select %p648, %s647, 127
      %s650 = smul.addr %s649, 8
      %s651 = scalar_lea.vmem %s0, %s650
      %s652 = smul.u32 64, %s32
      %p653 = scmp.lt.s32.totalorder %s32, 1
      %s654 = scalar_select %p653, %s32, 1
      %s655 = smul.addr %s654, 8
      %s656 = scalar_lea.vmem %s21, %s655
      %v658 = vld [vmem:[%s651] sm:$0xff]
      %v659 = vld [vmem:[%s651 + $0x8] sm:$0xff]
      %v660 = vld [vmem:[%s651 + $0x10] sm:$0xff]
      %v661 = vld [vmem:[%s651 + $0x18] sm:$0xff]
      %v662 = vld [vmem:[%s651 + $0x20] sm:$0xff]
      %v663 = vld [vmem:[%s651 + $0x28] sm:$0xff]
      %v664 = vld [vmem:[%s651 + $0x30] sm:$0xff]
      %v665 = vld [vmem:[%s651 + $0x38] sm:$0xff]
      %v666 = vld [vmem:[%s651 + $0x40] sm:$0xff]
      %v667 = vld [vmem:[%s651 + $0x48] sm:$0xff]
      %v668 = vld [vmem:[%s651 + $0x50] sm:$0xff]
      %v669 = vld [vmem:[%s651 + $0x58] sm:$0xff]
      %v670 = vld [vmem:[%s651 + $0x60] sm:$0xff]
      %v671 = vld [vmem:[%s651 + $0x68] sm:$0xff]
      %v672 = vld [vmem:[%s651 + $0x70] sm:$0xff]
      %v673 = vld [vmem:[%s651 + $0x78] sm:$0xff]
      %v674 = vld [vmem:[%s651 + $0x80] sm:$0xff]
      %v675 = vld [vmem:[%s651 + $0x88] sm:$0xff]
      %v676 = vld [vmem:[%s651 + $0x90] sm:$0xff]
      %v677 = vld [vmem:[%s651 + $0x98] sm:$0xff]
      %v678 = vld [vmem:[%s651 + $0xa0] sm:$0xff]
      %v679 = vld [vmem:[%s651 + $0xa8] sm:$0xff]
      %v680 = vld [vmem:[%s651 + $0xb0] sm:$0xff]
      %v681 = vld [vmem:[%s651 + $0xb8] sm:$0xff]
      %v682 = vld [vmem:[%s651 + $0xc0] sm:$0xff]
      %v683 = vld [vmem:[%s651 + $0xc8] sm:$0xff]
      %v684 = vld [vmem:[%s651 + $0xd0] sm:$0xff]
      %v685 = vld [vmem:[%s651 + $0xd8] sm:$0xff]
      %v686 = vld [vmem:[%s651 + $0xe0] sm:$0xff]
      %v687 = vld [vmem:[%s651 + $0xe8] sm:$0xff]
      %v688 = vld [vmem:[%s651 + $0xf0] sm:$0xff]
      %v689 = vld [vmem:[%s651 + $0xf8] sm:$0xff]
      %v690 = vld [vmem:[%s651 + $0x100] sm:$0xff]
      %v691 = vld [vmem:[%s651 + $0x108] sm:$0xff]
      %v692 = vld [vmem:[%s651 + $0x110] sm:$0xff]
      %v693 = vld [vmem:[%s651 + $0x118] sm:$0xff]
      %v694 = vld [vmem:[%s651 + $0x120] sm:$0xff]
      %v695 = vld [vmem:[%s651 + $0x128] sm:$0xff]
      %v696 = vld [vmem:[%s651 + $0x130] sm:$0xff]
      %v697 = vld [vmem:[%s651 + $0x138] sm:$0xff]
      %v698 = vld [vmem:[%s651 + $0x140] sm:$0xff]
      %v699 = vld [vmem:[%s651 + $0x148] sm:$0xff]
      %v700 = vld [vmem:[%s651 + $0x150] sm:$0xff]
      %v701 = vld [vmem:[%s651 + $0x158] sm:$0xff]
      %v702 = vld [vmem:[%s651 + $0x160] sm:$0xff]
      %v703 = vld [vmem:[%s651 + $0x168] sm:$0xff]
      %v704 = vld [vmem:[%s651 + $0x170] sm:$0xff]
      %v705 = vld [vmem:[%s651 + $0x178] sm:$0xff]
      %v706 = vld [vmem:[%s651 + $0x180] sm:$0xff]
      %v707 = vld [vmem:[%s651 + $0x188] sm:$0xff]
      %v708 = vld [vmem:[%s651 + $0x190] sm:$0xff]
      %v709 = vld [vmem:[%s651 + $0x198] sm:$0xff]
      %v710 = vld [vmem:[%s651 + $0x1a0] sm:$0xff]
      %v711 = vld [vmem:[%s651 + $0x1a8] sm:$0xff]
      %v712 = vld [vmem:[%s651 + $0x1b0] sm:$0xff]
      %v713 = vld [vmem:[%s651 + $0x1b8] sm:$0xff]
      %v714 = vld [vmem:[%s651 + $0x1c0] sm:$0xff]
      %v715 = vld [vmem:[%s651 + $0x1c8] sm:$0xff]
      %v716 = vld [vmem:[%s651 + $0x1d0] sm:$0xff]
      %v717 = vld [vmem:[%s651 + $0x1d8] sm:$0xff]
      %v718 = vld [vmem:[%s651 + $0x1e0] sm:$0xff]
      %v719 = vld [vmem:[%s651 + $0x1e8] sm:$0xff]
      %v720 = vld [vmem:[%s651 + $0x1f0] sm:$0xff]
      %v721 = vld [vmem:[%s651 + $0x1f8] sm:$0xff]
      %v722 = vld [vmem:[%s1] sm:$0x3]
      %v723 = vld [vmem:[%s2] sm:$0x1]
      %v724 = vld [vmem:[%s3] sm:$0x1]
      %v725 = vld [vmem:[%s4] sm:$0xff]
      %v726 = vld [vmem:[%s4 + $0x8] sm:$0xff]
      %v727 = vld [vmem:[%s4 + $0x10] sm:$0xff]
      %v728 = vld [vmem:[%s4 + $0x18] sm:$0xff]
      %v729 = vld [vmem:[%s4 + $0x20] sm:$0xff]
      %v730 = vld [vmem:[%s4 + $0x28] sm:$0xff]
      %v731 = vld [vmem:[%s4 + $0x30] sm:$0xff]
      %v732 = vld [vmem:[%s4 + $0x38] sm:$0xff]
      %v733 = vld [vmem:[%s4 + $0x40] sm:$0xff]
      %v734 = vld [vmem:[%s4 + $0x48] sm:$0xff]
      %v735 = vld [vmem:[%s4 + $0x50] sm:$0xff]
      %v736 = vld [vmem:[%s4 + $0x58] sm:$0xff]
      %v737 = vld [vmem:[%s4 + $0x60] sm:$0xff]
      %v738 = vld [vmem:[%s4 + $0x68] sm:$0xff]
      %v739 = vld [vmem:[%s4 + $0x70] sm:$0xff]
      %v740 = vld [vmem:[%s4 + $0x78] sm:$0xff]
      %v741 = vld [vmem:[%s4 + $0x80] sm:$0xff]
      %v742 = vld [vmem:[%s4 + $0x88] sm:$0xff]
      %v743 = vld [vmem:[%s4 + $0x90] sm:$0xff]
      %v744 = vld [vmem:[%s4 + $0x98] sm:$0xff]
      %v745 = vld [vmem:[%s4 + $0xa0] sm:$0xff]
      %v746 = vld [vmem:[%s4 + $0xa8] sm:$0xff]
      %v747 = vld [vmem:[%s4 + $0xb0] sm:$0xff]
      %v748 = vld [vmem:[%s4 + $0xb8] sm:$0xff]
      %v749 = vld [vmem:[%s4 + $0xc0] sm:$0xff]
      %v750 = vld [vmem:[%s4 + $0xc8] sm:$0xff]
      %v751 = vld [vmem:[%s4 + $0xd0] sm:$0xff]
      %v752 = vld [vmem:[%s4 + $0xd8] sm:$0xff]
      %v753 = vld [vmem:[%s4 + $0xe0] sm:$0xff]
      %v754 = vld [vmem:[%s4 + $0xe8] sm:$0xff]
      %v755 = vld [vmem:[%s4 + $0xf0] sm:$0xff]
      %v756 = vld [vmem:[%s4 + $0xf8] sm:$0xff]
      %v757 = vld [vmem:[%s4 + $0x100] sm:$0xff]
      %v758 = vld [vmem:[%s4 + $0x108] sm:$0xff]
      %v759 = vld [vmem:[%s4 + $0x110] sm:$0xff]
      %v760 = vld [vmem:[%s4 + $0x118] sm:$0xff]
      %v761 = vld [vmem:[%s4 + $0x120] sm:$0xff]
      %v762 = vld [vmem:[%s4 + $0x128] sm:$0xff]
      %v763 = vld [vmem:[%s4 + $0x130] sm:$0xff]
      %v764 = vld [vmem:[%s4 + $0x138] sm:$0xff]
      %v765 = vld [vmem:[%s4 + $0x140] sm:$0xff]
      %v766 = vld [vmem:[%s4 + $0x148] sm:$0xff]
      %v767 = vld [vmem:[%s4 + $0x150] sm:$0xff]
      %v768 = vld [vmem:[%s4 + $0x158] sm:$0xff]
      %v769 = vld [vmem:[%s4 + $0x160] sm:$0xff]
      %v770 = vld [vmem:[%s4 + $0x168] sm:$0xff]
      %v771 = vld [vmem:[%s4 + $0x170] sm:$0xff]
      %v772 = vld [vmem:[%s4 + $0x178] sm:$0xff]
      %v773 = vld [vmem:[%s4 + $0x180] sm:$0xff]
      %v774 = vld [vmem:[%s4 + $0x188] sm:$0xff]
      %v775 = vld [vmem:[%s4 + $0x190] sm:$0xff]
      %v776 = vld [vmem:[%s4 + $0x198] sm:$0xff]
      %v777 = vld [vmem:[%s4 + $0x1a0] sm:$0xff]
      %v778 = vld [vmem:[%s4 + $0x1a8] sm:$0xff]
      %v779 = vld [vmem:[%s4 + $0x1b0] sm:$0xff]
      %v780 = vld [vmem:[%s4 + $0x1b8] sm:$0xff]
      %v781 = vld [vmem:[%s4 + $0x1c0] sm:$0xff]
      %v782 = vld [vmem:[%s4 + $0x1c8] sm:$0xff]
      %v783 = vld [vmem:[%s4 + $0x1d0] sm:$0xff]
      %v784 = vld [vmem:[%s4 + $0x1d8] sm:$0xff]
      %v785 = vld [vmem:[%s4 + $0x1e0] sm:$0xff]
      %v786 = vld [vmem:[%s4 + $0x1e8] sm:$0xff]
      %v787 = vld [vmem:[%s4 + $0x1f0] sm:$0xff]
      %v788 = vld [vmem:[%s4 + $0x1f8] sm:$0xff]
      %v789 = vrot.slane %v658, 7
      %v790 = vrot.slane %v659, 7
      %v791 = vrot.slane %v660, 7
      %v792 = vrot.slane %v661, 7
      %v793 = vrot.slane %v662, 7
      %v794 = vrot.slane %v663, 7
      %v795 = vrot.slane %v664, 7
      %v796 = vrot.slane %v665, 7
      %v797 = vrot.slane %v666, 7
      %v798 = vrot.slane %v667, 7
      %v799 = vrot.slane %v668, 7
      %v800 = vrot.slane %v669, 7
      %v801 = vrot.slane %v670, 7
      %v802 = vrot.slane %v671, 7
      %v803 = vrot.slane %v672, 7
      %v804 = vrot.slane %v673, 7
      %v805 = vrot.slane %v674, 7
      %v806 = vrot.slane %v675, 7
      %v807 = vrot.slane %v676, 7
      %v808 = vrot.slane %v677, 7
      %v809 = vrot.slane %v678, 7
      %v810 = vrot.slane %v679, 7
      %v811 = vrot.slane %v680, 7
      %v812 = vrot.slane %v681, 7
      %v813 = vrot.slane %v682, 7
      %v814 = vrot.slane %v683, 7
      %v815 = vrot.slane %v684, 7
      %v816 = vrot.slane %v685, 7
      %v817 = vrot.slane %v686, 7
      %v818 = vrot.slane %v687, 7
      %v819 = vrot.slane %v688, 7
      %v820 = vrot.slane %v689, 7
      %v821 = vrot.slane %v690, 7
      %v822 = vrot.slane %v691, 7
      %v823 = vrot.slane %v692, 7
      %v824 = vrot.slane %v693, 7
      %v825 = vrot.slane %v694, 7
      %v826 = vrot.slane %v695, 7
      %v827 = vrot.slane %v696, 7
      %v828 = vrot.slane %v697, 7
      %v829 = vrot.slane %v698, 7
      %v830 = vrot.slane %v699, 7
      %v831 = vrot.slane %v700, 7
      %v832 = vrot.slane %v701, 7
      %v833 = vrot.slane %v702, 7
      %v834 = vrot.slane %v703, 7
      %v835 = vrot.slane %v704, 7
      %v836 = vrot.slane %v705, 7
      %v837 = vrot.slane %v706, 7
      %v838 = vrot.slane %v707, 7
      %v839 = vrot.slane %v708, 7
      %v840 = vrot.slane %v709, 7
      %v841 = vrot.slane %v710, 7
      %v842 = vrot.slane %v711, 7
      %v843 = vrot.slane %v712, 7
      %v844 = vrot.slane %v713, 7
      %v845 = vrot.slane %v714, 7
      %v846 = vrot.slane %v715, 7
      %v847 = vrot.slane %v716, 7
      %v848 = vrot.slane %v717, 7
      %v849 = vrot.slane %v718, 7
      %v850 = vrot.slane %v719, 7
      %v851 = vrot.slane %v720, 7
      %v852 = vrot.slane %v721, 7
      %v853 = vlaneseq
      %v854 = vshrl.u32 %v853, 7
      %vm855 = vcmp.lt.s32.totalorder %v854, 1
      %v856 = vsel %vm855, %v851, %v852
      %v857 = vsel %vm855, %v850, %v851
      %v858 = vsel %vm855, %v849, %v850
      %v859 = vsel %vm855, %v848, %v849
      %v860 = vsel %vm855, %v847, %v848
      %v861 = vsel %vm855, %v846, %v847
      %v862 = vsel %vm855, %v845, %v846
      %v863 = vsel %vm855, %v844, %v845
      %v864 = vsel %vm855, %v843, %v844
      %v865 = vsel %vm855, %v842, %v843
      %v866 = vsel %vm855, %v841, %v842
      %v867 = vsel %vm855, %v840, %v841
      %v868 = vsel %vm855, %v839, %v840
      %v869 = vsel %vm855, %v838, %v839
      %v870 = vsel %vm855, %v837, %v838
      %v871 = vsel %vm855, %v836, %v837
      %v872 = vsel %vm855, %v835, %v836
      %v873 = vsel %vm855, %v834, %v835
      %v874 = vsel %vm855, %v833, %v834
      %v875 = vsel %vm855, %v832, %v833
      %v876 = vsel %vm855, %v831, %v832
      %v877 = vsel %vm855, %v830, %v831
      %v878 = vsel %vm855, %v829, %v830
      %v879 = vsel %vm855, %v828, %v829
      %v880 = vsel %vm855, %v827, %v828
      %v881 = vsel %vm855, %v826, %v827
      %v882 = vsel %vm855, %v825, %v826
      %v883 = vsel %vm855, %v824, %v825
      %v884 = vsel %vm855, %v823, %v824
      %v885 = vsel %vm855, %v822, %v823
      %v886 = vsel %vm855, %v821, %v822
      %v887 = vsel %vm855, %v820, %v821
      %v888 = vsel %vm855, %v819, %v820
      %v889 = vsel %vm855, %v818, %v819
      %v890 = vsel %vm855, %v817, %v818
      %v891 = vsel %vm855, %v816, %v817
      %v892 = vsel %vm855, %v815, %v816
      %v893 = vsel %vm855, %v814, %v815
      %v894 = vsel %vm855, %v813, %v814
      %v895 = vsel %vm855, %v812, %v813
      %v896 = vsel %vm855, %v811, %v812
      %v897 = vsel %vm855, %v810, %v811
      %v898 = vsel %vm855, %v809, %v810
      %v899 = vsel %vm855, %v808, %v809
      %v900 = vsel %vm855, %v807, %v808
      %v901 = vsel %vm855, %v806, %v807
      %v902 = vsel %vm855, %v805, %v806
      %v903 = vsel %vm855, %v804, %v805
      %v904 = vsel %vm855, %v803, %v804
      %v905 = vsel %vm855, %v802, %v803
      %v906 = vsel %vm855, %v801, %v802
      %v907 = vsel %vm855, %v800, %v801
      %v908 = vsel %vm855, %v799, %v800
      %v909 = vsel %vm855, %v798, %v799
      %v910 = vsel %vm855, %v797, %v798
      %v911 = vsel %vm855, %v796, %v797
      %v912 = vsel %vm855, %v795, %v796
      %v913 = vsel %vm855, %v794, %v795
      %v914 = vsel %vm855, %v793, %v794
      %v915 = vsel %vm855, %v792, %v793
      %v916 = vsel %vm855, %v791, %v792
      %v917 = vsel %vm855, %v790, %v791
      %v918 = vsel %vm855, %v789, %v790
      %v919 = vsel %vm855, %v852, %v789
      %v920 = vmul.f32 %v919, %v725
      %v921 = vmul.f32 %v918, %v726
      %v922 = vmul.f32 %v917, %v727
      %v923 = vmul.f32 %v916, %v728
      %v924 = vmul.f32 %v915, %v729
      %v925 = vmul.f32 %v914, %v730
      %v926 = vmul.f32 %v913, %v731
      %v927 = vmul.f32 %v912, %v732
      %v928 = vmul.f32 %v911, %v733
      %v929 = vmul.f32 %v910, %v734
      %v930 = vmul.f32 %v909, %v735
      %v931 = vmul.f32 %v908, %v736
      %v932 = vmul.f32 %v907, %v737
      %v933 = vmul.f32 %v906, %v738
      %v934 = vmul.f32 %v905, %v739
      %v935 = vmul.f32 %v904, %v740
      %v936 = vmul.f32 %v903, %v741
      %v937 = vmul.f32 %v902, %v742
      %v938 = vmul.f32 %v901, %v743
      %v939 = vmul.f32 %v900, %v744
      %v940 = vmul.f32 %v899, %v745
      %v941 = vmul.f32 %v898, %v746
      %v942 = vmul.f32 %v897, %v747
      %v943 = vmul.f32 %v896, %v748
      %v944 = vmul.f32 %v895, %v749
      %v945 = vmul.f32 %v894, %v750
      %v946 = vmul.f32 %v893, %v751
      %v947 = vmul.f32 %v892, %v752
      %v948 = vmul.f32 %v891, %v753
      %v949 = vmul.f32 %v890, %v754
      %v950 = vmul.f32 %v889, %v755
      %v951 = vmul.f32 %v888, %v756
      %v952 = vmul.f32 %v887, %v757
      %v953 = vmul.f32 %v886, %v758
      %v954 = vmul.f32 %v885, %v759
      %v955 = vmul.f32 %v884, %v760
      %v956 = vmul.f32 %v883, %v761
      %v957 = vmul.f32 %v882, %v762
      %v958 = vmul.f32 %v881, %v763
      %v959 = vmul.f32 %v880, %v764
      %v960 = vmul.f32 %v879, %v765
      %v961 = vmul.f32 %v878, %v766
      %v962 = vmul.f32 %v877, %v767
      %v963 = vmul.f32 %v876, %v768
      %v964 = vmul.f32 %v875, %v769
      %v965 = vmul.f32 %v874, %v770
      %v966 = vmul.f32 %v873, %v771
      %v967 = vmul.f32 %v872, %v772
      %v968 = vmul.f32 %v871, %v773
      %v969 = vmul.f32 %v870, %v774
      %v970 = vmul.f32 %v869, %v775
      %v971 = vmul.f32 %v868, %v776
      %v972 = vmul.f32 %v867, %v777
      %v973 = vmul.f32 %v866, %v778
      %v974 = vmul.f32 %v865, %v779
      %v975 = vmul.f32 %v864, %v780
      %v976 = vmul.f32 %v863, %v781
      %v977 = vmul.f32 %v862, %v782
      %v978 = vmul.f32 %v861, %v783
      %v979 = vmul.f32 %v860, %v784
      %v980 = vmul.f32 %v859, %v785
      %v981 = vmul.f32 %v858, %v786
      %v982 = vmul.f32 %v857, %v787
      %v983 = vmul.f32 %v856, %v788
      %v984 = vpack.c.bf16 %v920, %v920
      %v985 = vpack.c.bf16 %v921, %v921
      %v986 = vpack.c.bf16 %v922, %v922
      %v987 = vpack.c.bf16 %v923, %v923
      %v988 = vpack.c.bf16 %v924, %v924
      %v989 = vpack.c.bf16 %v925, %v925
      %v990 = vpack.c.bf16 %v926, %v926
      %v991 = vpack.c.bf16 %v927, %v927
      %v992 = vpack.c.bf16 %v928, %v928
      %v993 = vpack.c.bf16 %v929, %v929
      %v994 = vpack.c.bf16 %v930, %v930
      %v995 = vpack.c.bf16 %v931, %v931
      %v996 = vpack.c.bf16 %v932, %v932
      %v997 = vpack.c.bf16 %v933, %v933
      %v998 = vpack.c.bf16 %v934, %v934
      %v999 = vpack.c.bf16 %v935, %v935
      %v1000 = vpack.c.bf16 %v936, %v936
      %v1001 = vpack.c.bf16 %v937, %v937
      %v1002 = vpack.c.bf16 %v938, %v938
      %v1003 = vpack.c.bf16 %v939, %v939
      %v1004 = vpack.c.bf16 %v940, %v940
      %v1005 = vpack.c.bf16 %v941, %v941
      %v1006 = vpack.c.bf16 %v942, %v942
      %v1007 = vpack.c.bf16 %v943, %v943
      %v1008 = vpack.c.bf16 %v944, %v944
      %v1009 = vpack.c.bf16 %v945, %v945
      %v1010 = vpack.c.bf16 %v946, %v946
      %v1011 = vpack.c.bf16 %v947, %v947
      %v1012 = vpack.c.bf16 %v948, %v948
      %v1013 = vpack.c.bf16 %v949, %v949
      %v1014 = vpack.c.bf16 %v950, %v950
      %v1015 = vpack.c.bf16 %v951, %v951
      %v1016 = vpack.c.bf16 %v952, %v952
      %v1017 = vpack.c.bf16 %v953, %v953
      %v1018 = vpack.c.bf16 %v954, %v954
      %v1019 = vpack.c.bf16 %v955, %v955
      %v1020 = vpack.c.bf16 %v956, %v956
      %v1021 = vpack.c.bf16 %v957, %v957
      %v1022 = vpack.c.bf16 %v958, %v958
      %v1023 = vpack.c.bf16 %v959, %v959
      %v1024 = vpack.c.bf16 %v960, %v960
      %v1025 = vpack.c.bf16 %v961, %v961
      %v1026 = vpack.c.bf16 %v962, %v962
      %v1027 = vpack.c.bf16 %v963, %v963
      %v1028 = vpack.c.bf16 %v964, %v964
      %v1029 = vpack.c.bf16 %v965, %v965
      %v1030 = vpack.c.bf16 %v966, %v966
      %v1031 = vpack.c.bf16 %v967, %v967
      %v1032 = vpack.c.bf16 %v968, %v968
      %v1033 = vpack.c.bf16 %v969, %v969
      %v1034 = vpack.c.bf16 %v970, %v970
      %v1035 = vpack.c.bf16 %v971, %v971
      %v1036 = vpack.c.bf16 %v972, %v972
      %v1037 = vpack.c.bf16 %v973, %v973
      %v1038 = vpack.c.bf16 %v974, %v974
      %v1039 = vpack.c.bf16 %v975, %v975
      %v1040 = vpack.c.bf16 %v976, %v976
      %v1041 = vpack.c.bf16 %v977, %v977
      %v1042 = vpack.c.bf16 %v978, %v978
      %v1043 = vpack.c.bf16 %v979, %v979
      %v1044 = vpack.c.bf16 %v980, %v980
      %v1045 = vpack.c.bf16 %v981, %v981
      %v1046 = vpack.c.bf16 %v982, %v982
      %v1047 = vpack.c.bf16 %v983, %v983
      %v1048 = vpack.c.bf16 %v658, %v658
      %v1049 = vpack.c.bf16 %v659, %v659
      %v1050 = vpack.c.bf16 %v660, %v660
      %v1051 = vpack.c.bf16 %v661, %v661
      %v1052 = vpack.c.bf16 %v662, %v662
      %v1053 = vpack.c.bf16 %v663, %v663
      %v1054 = vpack.c.bf16 %v664, %v664
      %v1055 = vpack.c.bf16 %v665, %v665
      %v1056 = vpack.c.bf16 %v666, %v666
      %v1057 = vpack.c.bf16 %v667, %v667
      %v1058 = vpack.c.bf16 %v668, %v668
      %v1059 = vpack.c.bf16 %v669, %v669
      %v1060 = vpack.c.bf16 %v670, %v670
      %v1061 = vpack.c.bf16 %v671, %v671
      %v1062 = vpack.c.bf16 %v672, %v672
      %v1063 = vpack.c.bf16 %v673, %v673
      %v1064 = vpack.c.bf16 %v674, %v674
      %v1065 = vpack.c.bf16 %v675, %v675
      %v1066 = vpack.c.bf16 %v676, %v676
      %v1067 = vpack.c.bf16 %v677, %v677
      %v1068 = vpack.c.bf16 %v678, %v678
      %v1069 = vpack.c.bf16 %v679, %v679
      %v1070 = vpack.c.bf16 %v680, %v680
      %v1071 = vpack.c.bf16 %v681, %v681
      %v1072 = vpack.c.bf16 %v682, %v682
      %v1073 = vpack.c.bf16 %v683, %v683
      %v1074 = vpack.c.bf16 %v684, %v684
      %v1075 = vpack.c.bf16 %v685, %v685
      %v1076 = vpack.c.bf16 %v686, %v686
      %v1077 = vpack.c.bf16 %v687, %v687
      %v1078 = vpack.c.bf16 %v688, %v688
      %v1079 = vpack.c.bf16 %v689, %v689
      %v1080 = vpack.c.bf16 %v690, %v690
      %v1081 = vpack.c.bf16 %v691, %v691
      %v1082 = vpack.c.bf16 %v692, %v692
      %v1083 = vpack.c.bf16 %v693, %v693
      %v1084 = vpack.c.bf16 %v694, %v694
      %v1085 = vpack.c.bf16 %v695, %v695
      %v1086 = vpack.c.bf16 %v696, %v696
      %v1087 = vpack.c.bf16 %v697, %v697
      %v1088 = vpack.c.bf16 %v698, %v698
      %v1089 = vpack.c.bf16 %v699, %v699
      %v1090 = vpack.c.bf16 %v700, %v700
      %v1091 = vpack.c.bf16 %v701, %v701
      %v1092 = vpack.c.bf16 %v702, %v702
      %v1093 = vpack.c.bf16 %v703, %v703
      %v1094 = vpack.c.bf16 %v704, %v704
      %v1095 = vpack.c.bf16 %v705, %v705
      %v1096 = vpack.c.bf16 %v706, %v706
      %v1097 = vpack.c.bf16 %v707, %v707
      %v1098 = vpack.c.bf16 %v708, %v708
      %v1099 = vpack.c.bf16 %v709, %v709
      %v1100 = vpack.c.bf16 %v710, %v710
      %v1101 = vpack.c.bf16 %v711, %v711
      %v1102 = vpack.c.bf16 %v712, %v712
      %v1103 = vpack.c.bf16 %v713, %v713
      %v1104 = vpack.c.bf16 %v714, %v714
      %v1105 = vpack.c.bf16 %v715, %v715
      %v1106 = vpack.c.bf16 %v716, %v716
      %v1107 = vpack.c.bf16 %v717, %v717
      %v1108 = vpack.c.bf16 %v718, %v718
      %v1109 = vpack.c.bf16 %v719, %v719
      %v1110 = vpack.c.bf16 %v720, %v720
      %v1111 = vpack.c.bf16 %v721, %v721
      %v1112 = vrot.slane %v658, 1
      %v1113 = vrot.slane %v659, 1
      %v1114 = vrot.slane %v660, 1
      %v1115 = vrot.slane %v661, 1
      %v1116 = vrot.slane %v662, 1
      %v1117 = vrot.slane %v663, 1
      %v1118 = vrot.slane %v664, 1
      %v1119 = vrot.slane %v665, 1
      %v1120 = vrot.slane %v666, 1
      %v1121 = vrot.slane %v667, 1
      %v1122 = vrot.slane %v668, 1
      %v1123 = vrot.slane %v669, 1
      %v1124 = vrot.slane %v670, 1
      %v1125 = vrot.slane %v671, 1
      %v1126 = vrot.slane %v672, 1
      %v1127 = vrot.slane %v673, 1
      %v1128 = vrot.slane %v674, 1
      %v1129 = vrot.slane %v675, 1
      %v1130 = vrot.slane %v676, 1
      %v1131 = vrot.slane %v677, 1
      %v1132 = vrot.slane %v678, 1
      %v1133 = vrot.slane %v679, 1
      %v1134 = vrot.slane %v680, 1
      %v1135 = vrot.slane %v681, 1
      %v1136 = vrot.slane %v682, 1
      %v1137 = vrot.slane %v683, 1
      %v1138 = vrot.slane %v684, 1
      %v1139 = vrot.slane %v685, 1
      %v1140 = vrot.slane %v686, 1
      %v1141 = vrot.slane %v687, 1
      %v1142 = vrot.slane %v688, 1
      %v1143 = vrot.slane %v689, 1
      %v1144 = vrot.slane %v690, 1
      %v1145 = vrot.slane %v691, 1
      %v1146 = vrot.slane %v692, 1
      %v1147 = vrot.slane %v693, 1
      %v1148 = vrot.slane %v694, 1
      %v1149 = vrot.slane %v695, 1
      %v1150 = vrot.slane %v696, 1
      %v1151 = vrot.slane %v697, 1
      %v1152 = vrot.slane %v698, 1
      %v1153 = vrot.slane %v699, 1
      %v1154 = vrot.slane %v700, 1
      %v1155 = vrot.slane %v701, 1
      %v1156 = vrot.slane %v702, 1
      %v1157 = vrot.slane %v703, 1
      %v1158 = vrot.slane %v704, 1
      %v1159 = vrot.slane %v705, 1
      %v1160 = vrot.slane %v706, 1
      %v1161 = vrot.slane %v707, 1
      %v1162 = vrot.slane %v708, 1
      %v1163 = vrot.slane %v709, 1
      %v1164 = vrot.slane %v710, 1
      %v1165 = vrot.slane %v711, 1
      %v1166 = vrot.slane %v712, 1
      %v1167 = vrot.slane %v713, 1
      %v1168 = vrot.slane %v714, 1
      %v1169 = vrot.slane %v715, 1
      %v1170 = vrot.slane %v716, 1
      %v1171 = vrot.slane %v717, 1
      %v1172 = vrot.slane %v718, 1
      %v1173 = vrot.slane %v719, 1
      %v1174 = vrot.slane %v720, 1
      %v1175 = vrot.slane %v721, 1
      %vm1176 = vcmp.lt.s32.totalorder %v854, 7
      %v1177 = vsel %vm1176, %v1174, %v1175
      %v1178 = vsel %vm1176, %v1173, %v1174
      %v1179 = vsel %vm1176, %v1172, %v1173
      %v1180 = vsel %vm1176, %v1171, %v1172
      %v1181 = vsel %vm1176, %v1170, %v1171
      %v1182 = vsel %vm1176, %v1169, %v1170
      %v1183 = vsel %vm1176, %v1168, %v1169
      %v1184 = vsel %vm1176, %v1167, %v1168
      %v1185 = vsel %vm1176, %v1166, %v1167
      %v1186 = vsel %vm1176, %v1165, %v1166
      %v1187 = vsel %vm1176, %v1164, %v1165
      %v1188 = vsel %vm1176, %v1163, %v1164
      %v1189 = vsel %vm1176, %v1162, %v1163
      %v1190 = vsel %vm1176, %v1161, %v1162
      %v1191 = vsel %vm1176, %v1160, %v1161
      %v1192 = vsel %vm1176, %v1159, %v1160
      %v1193 = vsel %vm1176, %v1158, %v1159
      %v1194 = vsel %vm1176, %v1157, %v1158
      %v1195 = vsel %vm1176, %v1156, %v1157
      %v1196 = vsel %vm1176, %v1155, %v1156
      %v1197 = vsel %vm1176, %v1154, %v1155
      %v1198 = vsel %vm1176, %v1153, %v1154
      %v1199 = vsel %vm1176, %v1152, %v1153
      %v1200 = vsel %vm1176, %v1151, %v1152
      %v1201 = vsel %vm1176, %v1150, %v1151
      %v1202 = vsel %vm1176, %v1149, %v1150
      %v1203 = vsel %vm1176, %v1148, %v1149
      %v1204 = vsel %vm1176, %v1147, %v1148
      %v1205 = vsel %vm1176, %v1146, %v1147
      %v1206 = vsel %vm1176, %v1145, %v1146
      %v1207 = vsel %vm1176, %v1144, %v1145
      %v1208 = vsel %vm1176, %v1143, %v1144
      %v1209 = vsel %vm1176, %v1142, %v1143
      %v1210 = vsel %vm1176, %v1141, %v1142
      %v1211 = vsel %vm1176, %v1140, %v1141
      %v1212 = vsel %vm1176, %v1139, %v1140
      %v1213 = vsel %vm1176, %v1138, %v1139
      %v1214 = vsel %vm1176, %v1137, %v1138
      %v1215 = vsel %vm1176, %v1136, %v1137
      %v1216 = vsel %vm1176, %v1135, %v1136
      %v1217 = vsel %vm1176, %v1134, %v1135
      %v1218 = vsel %vm1176, %v1133, %v1134
      %v1219 = vsel %vm1176, %v1132, %v1133
      %v1220 = vsel %vm1176, %v1131, %v1132
      %v1221 = vsel %vm1176, %v1130, %v1131
      %v1222 = vsel %vm1176, %v1129, %v1130
      %v1223 = vsel %vm1176, %v1128, %v1129
      %v1224 = vsel %vm1176, %v1127, %v1128
      %v1225 = vsel %vm1176, %v1126, %v1127
      %v1226 = vsel %vm1176, %v1125, %v1126
      %v1227 = vsel %vm1176, %v1124, %v1125
      %v1228 = vsel %vm1176, %v1123, %v1124
      %v1229 = vsel %vm1176, %v1122, %v1123
      %v1230 = vsel %vm1176, %v1121, %v1122
      %v1231 = vsel %vm1176, %v1120, %v1121
      %v1232 = vsel %vm1176, %v1119, %v1120
      %v1233 = vsel %vm1176, %v1118, %v1119
      %v1234 = vsel %vm1176, %v1117, %v1118
      %v1235 = vsel %vm1176, %v1116, %v1117
      %v1236 = vsel %vm1176, %v1115, %v1116
      %v1237 = vsel %vm1176, %v1114, %v1115
      %v1238 = vsel %vm1176, %v1113, %v1114
      %v1239 = vsel %vm1176, %v1112, %v1113
      %v1240 = vsel %vm1176, %v1175, %v1112
      %1305 = vrot.lane.b32.xlu0 %v725, 126
      %v1306 = vpop.permute.xlu0 %1305
      %1307 = vrot.lane.b32.xlu0 %v726, 126
      %v1308 = vpop.permute.xlu0 %1307
      %1309 = vrot.lane.b32.xlu0 %v727, 126
      %v1310 = vpop.permute.xlu0 %1309
      %1311 = vrot.lane.b32.xlu0 %v728, 126
      %v1312 = vpop.permute.xlu0 %1311
      %1313 = vrot.lane.b32.xlu0 %v729, 126
      %v1314 = vpop.permute.xlu0 %1313
      %1315 = vrot.lane.b32.xlu0 %v730, 126
      %v1316 = vpop.permute.xlu0 %1315
      %1317 = vrot.lane.b32.xlu0 %v731, 126
      %v1318 = vpop.permute.xlu0 %1317
      %1319 = vrot.lane.b32.xlu0 %v732, 126
      %v1320 = vpop.permute.xlu0 %1319
      %1321 = vrot.lane.b32.xlu0 %v733, 126
      %v1322 = vpop.permute.xlu0 %1321
      %1323 = vrot.lane.b32.xlu0 %v734, 126
      %v1324 = vpop.permute.xlu0 %1323
      %1325 = vrot.lane.b32.xlu0 %v735, 126
      %v1326 = vpop.permute.xlu0 %1325
      %1327 = vrot.lane.b32.xlu0 %v736, 126
      %v1328 = vpop.permute.xlu0 %1327
      %1329 = vrot.lane.b32.xlu0 %v737, 126
      %v1330 = vpop.permute.xlu0 %1329
      %1331 = vrot.lane.b32.xlu0 %v738, 126
      %v1332 = vpop.permute.xlu0 %1331
      %1333 = vrot.lane.b32.xlu0 %v739, 126
      %v1334 = vpop.permute.xlu0 %1333
      %1335 = vrot.lane.b32.xlu0 %v740, 126
      %v1336 = vpop.permute.xlu0 %1335
      %1337 = vrot.lane.b32.xlu0 %v741, 126
      %v1338 = vpop.permute.xlu0 %1337
      %1339 = vrot.lane.b32.xlu0 %v742, 126
      %v1340 = vpop.permute.xlu0 %1339
      %1341 = vrot.lane.b32.xlu0 %v743, 126
      %v1342 = vpop.permute.xlu0 %1341
      %1343 = vrot.lane.b32.xlu0 %v744, 126
      %v1344 = vpop.permute.xlu0 %1343
      %1345 = vrot.lane.b32.xlu0 %v745, 126
      %v1346 = vpop.permute.xlu0 %1345
      %1347 = vrot.lane.b32.xlu0 %v746, 126
      %v1348 = vpop.permute.xlu0 %1347
      %1349 = vrot.lane.b32.xlu0 %v747, 126
      %v1350 = vpop.permute.xlu0 %1349
      %1351 = vrot.lane.b32.xlu0 %v748, 126
      %v1352 = vpop.permute.xlu0 %1351
      %1353 = vrot.lane.b32.xlu0 %v749, 126
      %v1354 = vpop.permute.xlu0 %1353
      %1355 = vrot.lane.b32.xlu0 %v750, 126
      %v1356 = vpop.permute.xlu0 %1355
      %1357 = vrot.lane.b32.xlu0 %v751, 126
      %v1358 = vpop.permute.xlu0 %1357
      %1359 = vrot.lane.b32.xlu0 %v752, 126
      %v1360 = vpop.permute.xlu0 %1359
      %1361 = vrot.lane.b32.xlu0 %v753, 126
      %v1362 = vpop.permute.xlu0 %1361
      %1363 = vrot.lane.b32.xlu0 %v754, 126
      %v1364 = vpop.permute.xlu0 %1363
      %1365 = vrot.lane.b32.xlu0 %v755, 126
      %v1366 = vpop.permute.xlu0 %1365
      %1367 = vrot.lane.b32.xlu0 %v756, 126
      %v1368 = vpop.permute.xlu0 %1367
      %1369 = vrot.lane.b32.xlu0 %v757, 126
      %v1370 = vpop.permute.xlu0 %1369
      %1371 = vrot.lane.b32.xlu0 %v758, 126
      %v1372 = vpop.permute.xlu0 %1371
      %1373 = vrot.lane.b32.xlu0 %v759, 126
      %v1374 = vpop.permute.xlu0 %1373
      %1375 = vrot.lane.b32.xlu0 %v760, 126
      %v1376 = vpop.permute.xlu0 %1375
      %1377 = vrot.lane.b32.xlu0 %v761, 126
      %v1378 = vpop.permute.xlu0 %1377
      %1379 = vrot.lane.b32.xlu0 %v762, 126
      %v1380 = vpop.permute.xlu0 %1379
      %1381 = vrot.lane.b32.xlu0 %v763, 126
      %v1382 = vpop.permute.xlu0 %1381
      %1383 = vrot.lane.b32.xlu0 %v764, 126
      %v1384 = vpop.permute.xlu0 %1383
      %1385 = vrot.lane.b32.xlu0 %v765, 126
      %v1386 = vpop.permute.xlu0 %1385
      %1387 = vrot.lane.b32.xlu0 %v766, 126
      %v1388 = vpop.permute.xlu0 %1387
      %1389 = vrot.lane.b32.xlu0 %v767, 126
      %v1390 = vpop.permute.xlu0 %1389
      %1391 = vrot.lane.b32.xlu0 %v768, 126
      %v1392 = vpop.permute.xlu0 %1391
      %1393 = vrot.lane.b32.xlu0 %v769, 126
      %v1394 = vpop.permute.xlu0 %1393
      %1395 = vrot.lane.b32.xlu0 %v770, 126
      %v1396 = vpop.permute.xlu0 %1395
      %1397 = vrot.lane.b32.xlu0 %v771, 126
      %v1398 = vpop.permute.xlu0 %1397
      %1399 = vrot.lane.b32.xlu0 %v772, 126
      %v1400 = vpop.permute.xlu0 %1399
      %1401 = vrot.lane.b32.xlu0 %v773, 126
      %v1402 = vpop.permute.xlu0 %1401
      %1403 = vrot.lane.b32.xlu0 %v774, 126
      %v1404 = vpop.permute.xlu0 %1403
      %1405 = vrot.lane.b32.xlu0 %v775, 126
      %v1406 = vpop.permute.xlu0 %1405
      %1407 = vrot.lane.b32.xlu0 %v776, 126
      %v1408 = vpop.permute.xlu0 %1407
      %1409 = vrot.lane.b32.xlu0 %v777, 126
      %v1410 = vpop.permute.xlu0 %1409
      %1411 = vrot.lane.b32.xlu0 %v778, 126
      %v1412 = vpop.permute.xlu0 %1411
      %1413 = vrot.lane.b32.xlu0 %v779, 126
      %v1414 = vpop.permute.xlu0 %1413
      %1415 = vrot.lane.b32.xlu0 %v780, 126
      %v1416 = vpop.permute.xlu0 %1415
      %1417 = vrot.lane.b32.xlu0 %v781, 126
      %v1418 = vpop.permute.xlu0 %1417
      %1419 = vrot.lane.b32.xlu0 %v782, 126
      %v1420 = vpop.permute.xlu0 %1419
      %1421 = vrot.lane.b32.xlu0 %v783, 126
      %v1422 = vpop.permute.xlu0 %1421
      %1423 = vrot.lane.b32.xlu0 %v784, 126
      %v1424 = vpop.permute.xlu0 %1423
      %1425 = vrot.lane.b32.xlu0 %v785, 126
      %v1426 = vpop.permute.xlu0 %1425
      %1427 = vrot.lane.b32.xlu0 %v786, 126
      %v1428 = vpop.permute.xlu0 %1427
      %1429 = vrot.lane.b32.xlu0 %v787, 126
      %v1430 = vpop.permute.xlu0 %1429
      %1431 = vrot.lane.b32.xlu0 %v788, 126
      %v1432 = vpop.permute.xlu0 %1431
      %v1497 = vmul.f32 %v1239, %v1306
      %v1498 = vmul.f32 %v1238, %v1308
      %v1499 = vmul.f32 %v1237, %v1310
      %v1500 = vmul.f32 %v1236, %v1312
      %v1501 = vmul.f32 %v1235, %v1314
      %v1502 = vmul.f32 %v1234, %v1316
      %v1503 = vmul.f32 %v1233, %v1318
      %v1504 = vmul.f32 %v1232, %v1320
      %v1505 = vmul.f32 %v1231, %v1322
      %v1506 = vmul.f32 %v1230, %v1324
      %v1507 = vmul.f32 %v1229, %v1326
      %v1508 = vmul.f32 %v1228, %v1328
      %v1509 = vmul.f32 %v1227, %v1330
      %v1510 = vmul.f32 %v1226, %v1332
      %v1511 = vmul.f32 %v1225, %v1334
      %v1512 = vmul.f32 %v1224, %v1336
      %v1513 = vmul.f32 %v1223, %v1338
      %v1514 = vmul.f32 %v1222, %v1340
      %v1515 = vmul.f32 %v1221, %v1342
      %v1516 = vmul.f32 %v1220, %v1344
      %v1517 = vmul.f32 %v1219, %v1346
      %v1518 = vmul.f32 %v1218, %v1348
      %v1519 = vmul.f32 %v1217, %v1350
      %v1520 = vmul.f32 %v1216, %v1352
      %v1521 = vmul.f32 %v1215, %v1354
      %v1522 = vmul.f32 %v1214, %v1356
      %v1523 = vmul.f32 %v1213, %v1358
      %v1524 = vmul.f32 %v1212, %v1360
      %v1525 = vmul.f32 %v1211, %v1362
      %v1526 = vmul.f32 %v1210, %v1364
      %v1527 = vmul.f32 %v1209, %v1366
      %v1528 = vmul.f32 %v1208, %v1368
      %v1529 = vmul.f32 %v1207, %v1370
      %v1530 = vmul.f32 %v1206, %v1372
      %v1531 = vmul.f32 %v1205, %v1374
      %v1532 = vmul.f32 %v1204, %v1376
      %v1533 = vmul.f32 %v1203, %v1378
      %v1534 = vmul.f32 %v1202, %v1380
      %v1535 = vmul.f32 %v1201, %v1382
      %v1536 = vmul.f32 %v1200, %v1384
      %v1537 = vmul.f32 %v1199, %v1386
      %v1538 = vmul.f32 %v1198, %v1388
      %v1539 = vmul.f32 %v1197, %v1390
      %v1540 = vmul.f32 %v1196, %v1392
      %v1541 = vmul.f32 %v1195, %v1394
      %v1542 = vmul.f32 %v1194, %v1396
      %v1543 = vmul.f32 %v1193, %v1398
      %v1544 = vmul.f32 %v1192, %v1400
      %v1545 = vmul.f32 %v1191, %v1402
      %v1546 = vmul.f32 %v1190, %v1404
      %v1547 = vmul.f32 %v1189, %v1406
      %v1548 = vmul.f32 %v1188, %v1408
      %v1549 = vmul.f32 %v1187, %v1410
      %v1550 = vmul.f32 %v1186, %v1412
      %v1551 = vmul.f32 %v1185, %v1414
      %v1552 = vmul.f32 %v1184, %v1416
      %v1553 = vmul.f32 %v1183, %v1418
      %v1554 = vmul.f32 %v1182, %v1420
      %v1555 = vmul.f32 %v1181, %v1422
      %v1556 = vmul.f32 %v1180, %v1424
      %v1557 = vmul.f32 %v1179, %v1426
      %v1558 = vmul.f32 %v1178, %v1428
      %v1559 = vmul.f32 %v1177, %v1430
      %v1560 = vmul.f32 %v1240, %v1432
      %v1561 = vpack.c.bf16 %v1497, %v1497
      %v1562 = vpack.c.bf16 %v1498, %v1498
      %v1563 = vpack.c.bf16 %v1499, %v1499
      %v1564 = vpack.c.bf16 %v1500, %v1500
      %v1565 = vpack.c.bf16 %v1501, %v1501
      %v1566 = vpack.c.bf16 %v1502, %v1502
      %v1567 = vpack.c.bf16 %v1503, %v1503
      %v1568 = vpack.c.bf16 %v1504, %v1504
      %v1569 = vpack.c.bf16 %v1505, %v1505
      %v1570 = vpack.c.bf16 %v1506, %v1506
      %v1571 = vpack.c.bf16 %v1507, %v1507
      %v1572 = vpack.c.bf16 %v1508, %v1508
      %v1573 = vpack.c.bf16 %v1509, %v1509
      %v1574 = vpack.c.bf16 %v1510, %v1510
      %v1575 = vpack.c.bf16 %v1511, %v1511
      %v1576 = vpack.c.bf16 %v1512, %v1512
      %v1577 = vpack.c.bf16 %v1513, %v1513
      %v1578 = vpack.c.bf16 %v1514, %v1514
      %v1579 = vpack.c.bf16 %v1515, %v1515
      %v1580 = vpack.c.bf16 %v1516, %v1516
      %v1581 = vpack.c.bf16 %v1517, %v1517
      %v1582 = vpack.c.bf16 %v1518, %v1518
      %v1583 = vpack.c.bf16 %v1519, %v1519
      %v1584 = vpack.c.bf16 %v1520, %v1520
      %v1585 = vpack.c.bf16 %v1521, %v1521
      %v1586 = vpack.c.bf16 %v1522, %v1522
      %v1587 = vpack.c.bf16 %v1523, %v1523
      %v1588 = vpack.c.bf16 %v1524, %v1524
      %v1589 = vpack.c.bf16 %v1525, %v1525
      %v1590 = vpack.c.bf16 %v1526, %v1526
      %v1591 = vpack.c.bf16 %v1527, %v1527
      %v1592 = vpack.c.bf16 %v1528, %v1528
      %v1593 = vpack.c.bf16 %v1529, %v1529
      %v1594 = vpack.c.bf16 %v1530, %v1530
      %v1595 = vpack.c.bf16 %v1531, %v1531
      %v1596 = vpack.c.bf16 %v1532, %v1532
      %v1597 = vpack.c.bf16 %v1533, %v1533
      %v1598 = vpack.c.bf16 %v1534, %v1534
      %v1599 = vpack.c.bf16 %v1535, %v1535
      %v1600 = vpack.c.bf16 %v1536, %v1536
      %v1601 = vpack.c.bf16 %v1537, %v1537
      %v1602 = vpack.c.bf16 %v1538, %v1538
      %v1603 = vpack.c.bf16 %v1539, %v1539
      %v1604 = vpack.c.bf16 %v1540, %v1540
      %v1605 = vpack.c.bf16 %v1541, %v1541
      %v1606 = vpack.c.bf16 %v1542, %v1542
      %v1607 = vpack.c.bf16 %v1543, %v1543
      %v1608 = vpack.c.bf16 %v1544, %v1544
      %v1609 = vpack.c.bf16 %v1545, %v1545
      %v1610 = vpack.c.bf16 %v1546, %v1546
      %v1611 = vpack.c.bf16 %v1547, %v1547
      %v1612 = vpack.c.bf16 %v1548, %v1548
      %v1613 = vpack.c.bf16 %v1549, %v1549
      %v1614 = vpack.c.bf16 %v1550, %v1550
      %v1615 = vpack.c.bf16 %v1551, %v1551
      %v1616 = vpack.c.bf16 %v1552, %v1552
      %v1617 = vpack.c.bf16 %v1553, %v1553
      %v1618 = vpack.c.bf16 %v1554, %v1554
      %v1619 = vpack.c.bf16 %v1555, %v1555
      %v1620 = vpack.c.bf16 %v1556, %v1556
      %v1621 = vpack.c.bf16 %v1557, %v1557
      %v1622 = vpack.c.bf16 %v1558, %v1558
      %v1623 = vpack.c.bf16 %v1559, %v1559
      %v1624 = vpack.c.bf16 %v1560, %v1560
      %v1689 = vunpack.c.l.b16 %v984
      %v1690 = vunpack.c.l.b16 %v985
      %v1691 = vunpack.c.l.b16 %v986
      %v1692 = vunpack.c.l.b16 %v987
      %v1693 = vunpack.c.l.b16 %v988
      %v1694 = vunpack.c.l.b16 %v989
      %v1695 = vunpack.c.l.b16 %v990
      %v1696 = vunpack.c.l.b16 %v991
      %v1697 = vunpack.c.l.b16 %v992
      %v1698 = vunpack.c.l.b16 %v993
      %v1699 = vunpack.c.l.b16 %v994
      %v1700 = vunpack.c.l.b16 %v995
      %v1701 = vunpack.c.l.b16 %v996
      %v1702 = vunpack.c.l.b16 %v997
      %v1703 = vunpack.c.l.b16 %v998
      %v1704 = vunpack.c.l.b16 %v999
      %v1705 = vunpack.c.l.b16 %v1000
      %v1706 = vunpack.c.l.b16 %v1001
      %v1707 = vunpack.c.l.b16 %v1002
      %v1708 = vunpack.c.l.b16 %v1003
      %v1709 = vunpack.c.l.b16 %v1004
      %v1710 = vunpack.c.l.b16 %v1005
      %v1711 = vunpack.c.l.b16 %v1006
      %v1712 = vunpack.c.l.b16 %v1007
      %v1713 = vunpack.c.l.b16 %v1008
      %v1714 = vunpack.c.l.b16 %v1009
      %v1715 = vunpack.c.l.b16 %v1010
      %v1716 = vunpack.c.l.b16 %v1011
      %v1717 = vunpack.c.l.b16 %v1012
      %v1718 = vunpack.c.l.b16 %v1013
      %v1719 = vunpack.c.l.b16 %v1014
      %v1720 = vunpack.c.l.b16 %v1015
      %v1721 = vunpack.c.l.b16 %v1016
      %v1722 = vunpack.c.l.b16 %v1017
      %v1723 = vunpack.c.l.b16 %v1018
      %v1724 = vunpack.c.l.b16 %v1019
      %v1725 = vunpack.c.l.b16 %v1020
      %v1726 = vunpack.c.l.b16 %v1021
      %v1727 = vunpack.c.l.b16 %v1022
      %v1728 = vunpack.c.l.b16 %v1023
      %v1729 = vunpack.c.l.b16 %v1024
      %v1730 = vunpack.c.l.b16 %v1025
      %v1731 = vunpack.c.l.b16 %v1026
      %v1732 = vunpack.c.l.b16 %v1027
      %v1733 = vunpack.c.l.b16 %v1028
      %v1734 = vunpack.c.l.b16 %v1029
      %v1735 = vunpack.c.l.b16 %v1030
      %v1736 = vunpack.c.l.b16 %v1031
      %v1737 = vunpack.c.l.b16 %v1032
      %v1738 = vunpack.c.l.b16 %v1033
      %v1739 = vunpack.c.l.b16 %v1034
      %v1740 = vunpack.c.l.b16 %v1035
      %v1741 = vunpack.c.l.b16 %v1036
      %v1742 = vunpack.c.l.b16 %v1037
      %v1743 = vunpack.c.l.b16 %v1038
      %v1744 = vunpack.c.l.b16 %v1039
      %v1745 = vunpack.c.l.b16 %v1040
      %v1746 = vunpack.c.l.b16 %v1041
      %v1747 = vunpack.c.l.b16 %v1042
      %v1748 = vunpack.c.l.b16 %v1043
      %v1749 = vunpack.c.l.b16 %v1044
      %v1750 = vunpack.c.l.b16 %v1045
      %v1751 = vunpack.c.l.b16 %v1046
      %v1752 = vunpack.c.l.b16 %v1047
      %v1753 = vpack.c.b16 %v1690, %v1689
      %v1754 = vpack.c.b16 %v1692, %v1691
      %v1755 = vpack.c.b16 %v1694, %v1693
      %v1756 = vpack.c.b16 %v1696, %v1695
      %v1757 = vpack.c.b16 %v1698, %v1697
      %v1758 = vpack.c.b16 %v1700, %v1699
      %v1759 = vpack.c.b16 %v1702, %v1701
      %v1760 = vpack.c.b16 %v1704, %v1703
      %v1761 = vpack.c.b16 %v1706, %v1705
      %v1762 = vpack.c.b16 %v1708, %v1707
      %v1763 = vpack.c.b16 %v1710, %v1709
      %v1764 = vpack.c.b16 %v1712, %v1711
      %v1765 = vpack.c.b16 %v1714, %v1713
      %v1766 = vpack.c.b16 %v1716, %v1715
      %v1767 = vpack.c.b16 %v1718, %v1717
      %v1768 = vpack.c.b16 %v1720, %v1719
      %v1769 = vpack.c.b16 %v1722, %v1721
      %v1770 = vpack.c.b16 %v1724, %v1723
      %v1771 = vpack.c.b16 %v1726, %v1725
      %v1772 = vpack.c.b16 %v1728, %v1727
      %v1773 = vpack.c.b16 %v1730, %v1729
      %v1774 = vpack.c.b16 %v1732, %v1731
      %v1775 = vpack.c.b16 %v1734, %v1733
      %v1776 = vpack.c.b16 %v1736, %v1735
      %v1777 = vpack.c.b16 %v1738, %v1737
      %v1778 = vpack.c.b16 %v1740, %v1739
      %v1779 = vpack.c.b16 %v1742, %v1741
      %v1780 = vpack.c.b16 %v1744, %v1743
      %v1781 = vpack.c.b16 %v1746, %v1745
      %v1782 = vpack.c.b16 %v1748, %v1747
      %v1783 = vpack.c.b16 %v1750, %v1749
      %v1784 = vpack.c.b16 %v1752, %v1751
      %v1849 = vunpack.c.l.b16 %v1048
      %v1850 = vunpack.c.l.b16 %v1049
      %v1851 = vunpack.c.l.b16 %v1050
      %v1852 = vunpack.c.l.b16 %v1051
      %v1853 = vunpack.c.l.b16 %v1052
      %v1854 = vunpack.c.l.b16 %v1053
      %v1855 = vunpack.c.l.b16 %v1054
      %v1856 = vunpack.c.l.b16 %v1055
      %v1857 = vunpack.c.l.b16 %v1056
      %v1858 = vunpack.c.l.b16 %v1057
      %v1859 = vunpack.c.l.b16 %v1058
      %v1860 = vunpack.c.l.b16 %v1059
      %v1861 = vunpack.c.l.b16 %v1060
      %v1862 = vunpack.c.l.b16 %v1061
      %v1863 = vunpack.c.l.b16 %v1062
      %v1864 = vunpack.c.l.b16 %v1063
      %v1865 = vunpack.c.l.b16 %v1064
      %v1866 = vunpack.c.l.b16 %v1065
      %v1867 = vunpack.c.l.b16 %v1066
      %v1868 = vunpack.c.l.b16 %v1067
      %v1869 = vunpack.c.l.b16 %v1068
      %v1870 = vunpack.c.l.b16 %v1069
      %v1871 = vunpack.c.l.b16 %v1070
      %v1872 = vunpack.c.l.b16 %v1071
      %v1873 = vunpack.c.l.b16 %v1072
      %v1874 = vunpack.c.l.b16 %v1073
      %v1875 = vunpack.c.l.b16 %v1074
      %v1876 = vunpack.c.l.b16 %v1075
      %v1877 = vunpack.c.l.b16 %v1076
      %v1878 = vunpack.c.l.b16 %v1077
      %v1879 = vunpack.c.l.b16 %v1078
      %v1880 = vunpack.c.l.b16 %v1079
      %v1881 = vunpack.c.l.b16 %v1080
      %v1882 = vunpack.c.l.b16 %v1081
      %v1883 = vunpack.c.l.b16 %v1082
      %v1884 = vunpack.c.l.b16 %v1083
      %v1885 = vunpack.c.l.b16 %v1084
      %v1886 = vunpack.c.l.b16 %v1085
      %v1887 = vunpack.c.l.b16 %v1086
      %v1888 = vunpack.c.l.b16 %v1087
      %v1889 = vunpack.c.l.b16 %v1088
      %v1890 = vunpack.c.l.b16 %v1089
      %v1891 = vunpack.c.l.b16 %v1090
      %v1892 = vunpack.c.l.b16 %v1091
      %v1893 = vunpack.c.l.b16 %v1092
      %v1894 = vunpack.c.l.b16 %v1093
      %v1895 = vunpack.c.l.b16 %v1094
      %v1896 = vunpack.c.l.b16 %v1095
      %v1897 = vunpack.c.l.b16 %v1096
      %v1898 = vunpack.c.l.b16 %v1097
      %v1899 = vunpack.c.l.b16 %v1098
      %v1900 = vunpack.c.l.b16 %v1099
      %v1901 = vunpack.c.l.b16 %v1100
      %v1902 = vunpack.c.l.b16 %v1101
      %v1903 = vunpack.c.l.b16 %v1102
      %v1904 = vunpack.c.l.b16 %v1103
      %v1905 = vunpack.c.l.b16 %v1104
      %v1906 = vunpack.c.l.b16 %v1105
      %v1907 = vunpack.c.l.b16 %v1106
      %v1908 = vunpack.c.l.b16 %v1107
      %v1909 = vunpack.c.l.b16 %v1108
      %v1910 = vunpack.c.l.b16 %v1109
      %v1911 = vunpack.c.l.b16 %v1110
      %v1912 = vunpack.c.l.b16 %v1111
      %v1913 = vpack.c.b16 %v1850, %v1849
      %v1914 = vpack.c.b16 %v1852, %v1851
      %v1915 = vpack.c.b16 %v1854, %v1853
      %v1916 = vpack.c.b16 %v1856, %v1855
      %v1917 = vpack.c.b16 %v1858, %v1857
      %v1918 = vpack.c.b16 %v1860, %v1859
      %v1919 = vpack.c.b16 %v1862, %v1861
      %v1920 = vpack.c.b16 %v1864, %v1863
      %v1921 = vpack.c.b16 %v1866, %v1865
      %v1922 = vpack.c.b16 %v1868, %v1867
      %v1923 = vpack.c.b16 %v1870, %v1869
      %v1924 = vpack.c.b16 %v1872, %v1871
      %v1925 = vpack.c.b16 %v1874, %v1873
      %v1926 = vpack.c.b16 %v1876, %v1875
      %v1927 = vpack.c.b16 %v1878, %v1877
      %v1928 = vpack.c.b16 %v1880, %v1879
      %v1929 = vpack.c.b16 %v1882, %v1881
      %v1930 = vpack.c.b16 %v1884, %v1883
      %v1931 = vpack.c.b16 %v1886, %v1885
      %v1932 = vpack.c.b16 %v1888, %v1887
      %v1933 = vpack.c.b16 %v1890, %v1889
      %v1934 = vpack.c.b16 %v1892, %v1891
      %v1935 = vpack.c.b16 %v1894, %v1893
      %v1936 = vpack.c.b16 %v1896, %v1895
      %v1937 = vpack.c.b16 %v1898, %v1897
      %v1938 = vpack.c.b16 %v1900, %v1899
      %v1939 = vpack.c.b16 %v1902, %v1901
      %v1940 = vpack.c.b16 %v1904, %v1903
      %v1941 = vpack.c.b16 %v1906, %v1905
      %v1942 = vpack.c.b16 %v1908, %v1907
      %v1943 = vpack.c.b16 %v1910, %v1909
      %v1944 = vpack.c.b16 %v1912, %v1911
      %1945 = vrot.lane.b32.xlu0 %v1913, 1
      %v1946 = vpop.permute.xlu0 %1945
      %1947 = vrot.lane.b32.xlu0 %v1914, 1
      %v1948 = vpop.permute.xlu0 %1947
      %1949 = vrot.lane.b32.xlu0 %v1915, 1
      %v1950 = vpop.permute.xlu0 %1949
      %1951 = vrot.lane.b32.xlu0 %v1916, 1
      %v1952 = vpop.permute.xlu0 %1951
      %1953 = vrot.lane.b32.xlu0 %v1917, 1
      %v1954 = vpop.permute.xlu0 %1953
      %1955 = vrot.lane.b32.xlu0 %v1918, 1
      %v1956 = vpop.permute.xlu0 %1955
      %1957 = vrot.lane.b32.xlu0 %v1919, 1
      %v1958 = vpop.permute.xlu0 %1957
      %1959 = vrot.lane.b32.xlu0 %v1920, 1
      %v1960 = vpop.permute.xlu0 %1959
      %1961 = vrot.lane.b32.xlu0 %v1921, 1
      %v1962 = vpop.permute.xlu0 %1961
      %1963 = vrot.lane.b32.xlu0 %v1922, 1
      %v1964 = vpop.permute.xlu0 %1963
      %1965 = vrot.lane.b32.xlu0 %v1923, 1
      %v1966 = vpop.permute.xlu0 %1965
      %1967 = vrot.lane.b32.xlu0 %v1924, 1
      %v1968 = vpop.permute.xlu0 %1967
      %1969 = vrot.lane.b32.xlu0 %v1925, 1
      %v1970 = vpop.permute.xlu0 %1969
      %1971 = vrot.lane.b32.xlu0 %v1926, 1
      %v1972 = vpop.permute.xlu0 %1971
      %1973 = vrot.lane.b32.xlu0 %v1927, 1
      %v1974 = vpop.permute.xlu0 %1973
      %1975 = vrot.lane.b32.xlu0 %v1928, 1
      %v1976 = vpop.permute.xlu0 %1975
      %1977 = vrot.lane.b32.xlu0 %v1929, 1
      %v1978 = vpop.permute.xlu0 %1977
      %1979 = vrot.lane.b32.xlu0 %v1930, 1
      %v1980 = vpop.permute.xlu0 %1979
      %1981 = vrot.lane.b32.xlu0 %v1931, 1
      %v1982 = vpop.permute.xlu0 %1981
      %1983 = vrot.lane.b32.xlu0 %v1932, 1
      %v1984 = vpop.permute.xlu0 %1983
      %1985 = vrot.lane.b32.xlu0 %v1933, 1
      %v1986 = vpop.permute.xlu0 %1985
      %1987 = vrot.lane.b32.xlu0 %v1934, 1
      %v1988 = vpop.permute.xlu0 %1987
      %1989 = vrot.lane.b32.xlu0 %v1935, 1
      %v1990 = vpop.permute.xlu0 %1989
      %1991 = vrot.lane.b32.xlu0 %v1936, 1
      %v1992 = vpop.permute.xlu0 %1991
      %1993 = vrot.lane.b32.xlu0 %v1937, 1
      %v1994 = vpop.permute.xlu0 %1993
      %1995 = vrot.lane.b32.xlu0 %v1938, 1
      %v1996 = vpop.permute.xlu0 %1995
      %1997 = vrot.lane.b32.xlu0 %v1939, 1
      %v1998 = vpop.permute.xlu0 %1997
      %1999 = vrot.lane.b32.xlu0 %v1940, 1
      %v2000 = vpop.permute.xlu0 %1999
      %2001 = vrot.lane.b32.xlu0 %v1941, 1
      %v2002 = vpop.permute.xlu0 %2001
      %2003 = vrot.lane.b32.xlu0 %v1942, 1
      %v2004 = vpop.permute.xlu0 %2003
      %2005 = vrot.lane.b32.xlu0 %v1943, 1
      %v2006 = vpop.permute.xlu0 %2005
      %2007 = vrot.lane.b32.xlu0 %v1944, 1
      %v2008 = vpop.permute.xlu0 %2007
      %v2073 = vunpack.c.l.b16 %v1561
      %v2074 = vunpack.c.l.b16 %v1562
      %v2075 = vunpack.c.l.b16 %v1563
      %v2076 = vunpack.c.l.b16 %v1564
      %v2077 = vunpack.c.l.b16 %v1565
      %v2078 = vunpack.c.l.b16 %v1566
      %v2079 = vunpack.c.l.b16 %v1567
      %v2080 = vunpack.c.l.b16 %v1568
      %v2081 = vunpack.c.l.b16 %v1569
      %v2082 = vunpack.c.l.b16 %v1570
      %v2083 = vunpack.c.l.b16 %v1571
      %v2084 = vunpack.c.l.b16 %v1572
      %v2085 = vunpack.c.l.b16 %v1573
      %v2086 = vunpack.c.l.b16 %v1574
      %v2087 = vunpack.c.l.b16 %v1575
      %v2088 = vunpack.c.l.b16 %v1576
      %v2089 = vunpack.c.l.b16 %v1577
      %v2090 = vunpack.c.l.b16 %v1578
      %v2091 = vunpack.c.l.b16 %v1579
      %v2092 = vunpack.c.l.b16 %v1580
      %v2093 = vunpack.c.l.b16 %v1581
      %v2094 = vunpack.c.l.b16 %v1582
      %v2095 = vunpack.c.l.b16 %v1583
      %v2096 = vunpack.c.l.b16 %v1584
      %v2097 = vunpack.c.l.b16 %v1585
      %v2098 = vunpack.c.l.b16 %v1586
      %v2099 = vunpack.c.l.b16 %v1587
      %v2100 = vunpack.c.l.b16 %v1588
      %v2101 = vunpack.c.l.b16 %v1589
      %v2102 = vunpack.c.l.b16 %v1590
      %v2103 = vunpack.c.l.b16 %v1591
      %v2104 = vunpack.c.l.b16 %v1592
      %v2105 = vunpack.c.l.b16 %v1593
      %v2106 = vunpack.c.l.b16 %v1594
      %v2107 = vunpack.c.l.b16 %v1595
      %v2108 = vunpack.c.l.b16 %v1596
      %v2109 = vunpack.c.l.b16 %v1597
      %v2110 = vunpack.c.l.b16 %v1598
      %v2111 = vunpack.c.l.b16 %v1599
      %v2112 = vunpack.c.l.b16 %v1600
      %v2113 = vunpack.c.l.b16 %v1601
      %v2114 = vunpack.c.l.b16 %v1602
      %v2115 = vunpack.c.l.b16 %v1603
      %v2116 = vunpack.c.l.b16 %v1604
      %v2117 = vunpack.c.l.b16 %v1605
      %v2118 = vunpack.c.l.b16 %v1606
      %v2119 = vunpack.c.l.b16 %v1607
      %v2120 = vunpack.c.l.b16 %v1608
      %v2121 = vunpack.c.l.b16 %v1609
      %v2122 = vunpack.c.l.b16 %v1610
      %v2123 = vunpack.c.l.b16 %v1611
      %v2124 = vunpack.c.l.b16 %v1612
      %v2125 = vunpack.c.l.b16 %v1613
      %v2126 = vunpack.c.l.b16 %v1614
      %v2127 = vunpack.c.l.b16 %v1615
      %v2128 = vunpack.c.l.b16 %v1616
      %v2129 = vunpack.c.l.b16 %v1617
      %v2130 = vunpack.c.l.b16 %v1618
      %v2131 = vunpack.c.l.b16 %v1619
      %v2132 = vunpack.c.l.b16 %v1620
      %v2133 = vunpack.c.l.b16 %v1621
      %v2134 = vunpack.c.l.b16 %v1622
      %v2135 = vunpack.c.l.b16 %v1623
      %v2136 = vunpack.c.l.b16 %v1624
      %v2137 = vpack.c.b16 %v2074, %v2073
      %v2138 = vpack.c.b16 %v2076, %v2075
      %v2139 = vpack.c.b16 %v2078, %v2077
      %v2140 = vpack.c.b16 %v2080, %v2079
      %v2141 = vpack.c.b16 %v2082, %v2081
      %v2142 = vpack.c.b16 %v2084, %v2083
      %v2143 = vpack.c.b16 %v2086, %v2085
      %v2144 = vpack.c.b16 %v2088, %v2087
      %v2145 = vpack.c.b16 %v2090, %v2089
      %v2146 = vpack.c.b16 %v2092, %v2091
      %v2147 = vpack.c.b16 %v2094, %v2093
      %v2148 = vpack.c.b16 %v2096, %v2095
      %v2149 = vpack.c.b16 %v2098, %v2097
      %v2150 = vpack.c.b16 %v2100, %v2099
      %v2151 = vpack.c.b16 %v2102, %v2101
      %v2152 = vpack.c.b16 %v2104, %v2103
      %v2153 = vpack.c.b16 %v2106, %v2105
      %v2154 = vpack.c.b16 %v2108, %v2107
      %v2155 = vpack.c.b16 %v2110, %v2109
      %v2156 = vpack.c.b16 %v2112, %v2111
      %v2157 = vpack.c.b16 %v2114, %v2113
      %v2158 = vpack.c.b16 %v2116, %v2115
      %v2159 = vpack.c.b16 %v2118, %v2117
      %v2160 = vpack.c.b16 %v2120, %v2119
      %v2161 = vpack.c.b16 %v2122, %v2121
      %v2162 = vpack.c.b16 %v2124, %v2123
      %v2163 = vpack.c.b16 %v2126, %v2125
      %v2164 = vpack.c.b16 %v2128, %v2127
      %v2165 = vpack.c.b16 %v2130, %v2129
      %v2166 = vpack.c.b16 %v2132, %v2131
      %v2167 = vpack.c.b16 %v2134, %v2133
      %v2168 = vpack.c.b16 %v2136, %v2135
      %2169 = vrot.lane.b32.xlu0 %v2137, 2
      %v2170 = vpop.permute.xlu0 %2169
      %2171 = vrot.lane.b32.xlu0 %v2138, 2
      %v2172 = vpop.permute.xlu0 %2171
      %2173 = vrot.lane.b32.xlu0 %v2139, 2
      %v2174 = vpop.permute.xlu0 %2173
      %2175 = vrot.lane.b32.xlu0 %v2140, 2
      %v2176 = vpop.permute.xlu0 %2175
      %2177 = vrot.lane.b32.xlu0 %v2141, 2
      %v2178 = vpop.permute.xlu0 %2177
      %2179 = vrot.lane.b32.xlu0 %v2142, 2
      %v2180 = vpop.permute.xlu0 %2179
      %2181 = vrot.lane.b32.xlu0 %v2143, 2
      %v2182 = vpop.permute.xlu0 %2181
      %2183 = vrot.lane.b32.xlu0 %v2144, 2
      %v2184 = vpop.permute.xlu0 %2183
      %2185 = vrot.lane.b32.xlu0 %v2145, 2
      %v2186 = vpop.permute.xlu0 %2185
      %2187 = vrot.lane.b32.xlu0 %v2146, 2
      %v2188 = vpop.permute.xlu0 %2187
      %2189 = vrot.lane.b32.xlu0 %v2147, 2
      %v2190 = vpop.permute.xlu0 %2189
      %2191 = vrot.lane.b32.xlu0 %v2148, 2
      %v2192 = vpop.permute.xlu0 %2191
      %2193 = vrot.lane.b32.xlu0 %v2149, 2
      %v2194 = vpop.permute.xlu0 %2193
      %2195 = vrot.lane.b32.xlu0 %v2150, 2
      %v2196 = vpop.permute.xlu0 %2195
      %2197 = vrot.lane.b32.xlu0 %v2151, 2
      %v2198 = vpop.permute.xlu0 %2197
      %2199 = vrot.lane.b32.xlu0 %v2152, 2
      %v2200 = vpop.permute.xlu0 %2199
      %2201 = vrot.lane.b32.xlu0 %v2153, 2
      %v2202 = vpop.permute.xlu0 %2201
      %2203 = vrot.lane.b32.xlu0 %v2154, 2
      %v2204 = vpop.permute.xlu0 %2203
      %2205 = vrot.lane.b32.xlu0 %v2155, 2
      %v2206 = vpop.permute.xlu0 %2205
      %2207 = vrot.lane.b32.xlu0 %v2156, 2
      %v2208 = vpop.permute.xlu0 %2207
      %2209 = vrot.lane.b32.xlu0 %v2157, 2
      %v2210 = vpop.permute.xlu0 %2209
      %2211 = vrot.lane.b32.xlu0 %v2158, 2
      %v2212 = vpop.permute.xlu0 %2211
      %2213 = vrot.lane.b32.xlu0 %v2159, 2
      %v2214 = vpop.permute.xlu0 %2213
      %2215 = vrot.lane.b32.xlu0 %v2160, 2
      %v2216 = vpop.permute.xlu0 %2215
      %2217 = vrot.lane.b32.xlu0 %v2161, 2
      %v2218 = vpop.permute.xlu0 %2217
      %2219 = vrot.lane.b32.xlu0 %v2162, 2
      %v2220 = vpop.permute.xlu0 %2219
      %2221 = vrot.lane.b32.xlu0 %v2163, 2
      %v2222 = vpop.permute.xlu0 %2221
      %2223 = vrot.lane.b32.xlu0 %v2164, 2
      %v2224 = vpop.permute.xlu0 %2223
      %2225 = vrot.lane.b32.xlu0 %v2165, 2
      %v2226 = vpop.permute.xlu0 %2225
      %2227 = vrot.lane.b32.xlu0 %v2166, 2
      %v2228 = vpop.permute.xlu0 %2227
      %2229 = vrot.lane.b32.xlu0 %v2167, 2
      %v2230 = vpop.permute.xlu0 %2229
      %2231 = vrot.lane.b32.xlu0 %v2168, 2
      %v2232 = vpop.permute.xlu0 %2231
      %vm2233 = vcmask 7168
      %v2236 = vsel %vm2233, %v1753, %v1946
      %v2239 = vsel %vm2233, %v1754, %v1948
      %v2242 = vsel %vm2233, %v1755, %v1950
      %v2245 = vsel %vm2233, %v1756, %v1952
      %v2248 = vsel %vm2233, %v1757, %v1954
      %v2251 = vsel %vm2233, %v1758, %v1956
      %v2254 = vsel %vm2233, %v1759, %v1958
      %v2257 = vsel %vm2233, %v1760, %v1960
      %v2260 = vsel %vm2233, %v1761, %v1962
      %v2263 = vsel %vm2233, %v1762, %v1964
      %v2266 = vsel %vm2233, %v1763, %v1966
      %v2269 = vsel %vm2233, %v1764, %v1968
      %v2272 = vsel %vm2233, %v1765, %v1970
      %v2275 = vsel %vm2233, %v1766, %v1972
      %v2278 = vsel %vm2233, %v1767, %v1974
      %v2281 = vsel %vm2233, %v1768, %v1976
      %v2284 = vsel %vm2233, %v1769, %v1978
      %v2287 = vsel %vm2233, %v1770, %v1980
      %v2290 = vsel %vm2233, %v1771, %v1982
      %v2293 = vsel %vm2233, %v1772, %v1984
      %v2296 = vsel %vm2233, %v1773, %v1986
      %v2299 = vsel %vm2233, %v1774, %v1988
      %v2302 = vsel %vm2233, %v1775, %v1990
      %v2305 = vsel %vm2233, %v1776, %v1992
      %v2308 = vsel %vm2233, %v1777, %v1994
      %v2311 = vsel %vm2233, %v1778, %v1996
      %v2314 = vsel %vm2233, %v1779, %v1998
      %v2317 = vsel %vm2233, %v1780, %v2000
      %v2320 = vsel %vm2233, %v1781, %v2002
      %v2323 = vsel %vm2233, %v1782, %v2004
      %v2326 = vsel %vm2233, %v1783, %v2006
      %v2329 = vsel %vm2233, %v1784, %v2008
      %vm2330 = vcmask 15360
      %v2332 = vsel %vm2330, %v2236, %v2170
      %v2334 = vsel %vm2330, %v2239, %v2172
      %v2336 = vsel %vm2330, %v2242, %v2174
      %v2338 = vsel %vm2330, %v2245, %v2176
      %v2340 = vsel %vm2330, %v2248, %v2178
      %v2342 = vsel %vm2330, %v2251, %v2180
      %v2344 = vsel %vm2330, %v2254, %v2182
      %v2346 = vsel %vm2330, %v2257, %v2184
      %v2348 = vsel %vm2330, %v2260, %v2186
      %v2350 = vsel %vm2330, %v2263, %v2188
      %v2352 = vsel %vm2330, %v2266, %v2190
      %v2354 = vsel %vm2330, %v2269, %v2192
      %v2356 = vsel %vm2330, %v2272, %v2194
      %v2358 = vsel %vm2330, %v2275, %v2196
      %v2360 = vsel %vm2330, %v2278, %v2198
      %v2362 = vsel %vm2330, %v2281, %v2200
      %v2364 = vsel %vm2330, %v2284, %v2202
      %v2366 = vsel %vm2330, %v2287, %v2204
      %v2368 = vsel %vm2330, %v2290, %v2206
      %v2370 = vsel %vm2330, %v2293, %v2208
      %v2372 = vsel %vm2330, %v2296, %v2210
      %v2374 = vsel %vm2330, %v2299, %v2212
      %v2376 = vsel %vm2330, %v2302, %v2214
      %v2378 = vsel %vm2330, %v2305, %v2216
      %v2380 = vsel %vm2330, %v2308, %v2218
      %v2382 = vsel %vm2330, %v2311, %v2220
      %v2384 = vsel %vm2330, %v2314, %v2222
      %v2386 = vsel %vm2330, %v2317, %v2224
      %v2388 = vsel %vm2330, %v2320, %v2226
      %v2390 = vsel %vm2330, %v2323, %v2228
      %v2392 = vsel %vm2330, %v2326, %v2230
      %v2394 = vsel %vm2330, %v2329, %v2232
      %vm2395 = vcmask 23552
      %v2396 = vsel %vm2395, %v2332, 0
      %v2398 = vsel %vm2395, %v2334, 0
      %v2400 = vsel %vm2395, %v2336, 0
      %v2402 = vsel %vm2395, %v2338, 0
      %v2404 = vsel %vm2395, %v2340, 0
      %v2406 = vsel %vm2395, %v2342, 0
      %v2408 = vsel %vm2395, %v2344, 0
      %v2410 = vsel %vm2395, %v2346, 0
      %v2412 = vsel %vm2395, %v2348, 0
      %v2414 = vsel %vm2395, %v2350, 0
      %v2416 = vsel %vm2395, %v2352, 0
      %v2418 = vsel %vm2395, %v2354, 0
      %v2420 = vsel %vm2395, %v2356, 0
      %v2422 = vsel %vm2395, %v2358, 0
      %v2424 = vsel %vm2395, %v2360, 0
      %v2426 = vsel %vm2395, %v2362, 0
      %v2428 = vsel %vm2395, %v2364, 0
      %v2430 = vsel %vm2395, %v2366, 0
      %v2432 = vsel %vm2395, %v2368, 0
      %v2434 = vsel %vm2395, %v2370, 0
      %v2436 = vsel %vm2395, %v2372, 0
      %v2438 = vsel %vm2395, %v2374, 0
      %v2440 = vsel %vm2395, %v2376, 0
      %v2442 = vsel %vm2395, %v2378, 0
      %v2444 = vsel %vm2395, %v2380, 0
      %v2446 = vsel %vm2395, %v2382, 0
      %v2448 = vsel %vm2395, %v2384, 0
      %v2450 = vsel %vm2395, %v2386, 0
      %v2452 = vsel %vm2395, %v2388, 0
      %v2454 = vsel %vm2395, %v2390, 0
      %v2456 = vsel %vm2395, %v2392, 0
      %v2458 = vsel %vm2395, %v2394, 0
      %vm2460 = vcmask 1040384
      %vm2461 = vcmask 1041408
      %v2462 = vsel %vm2460, 4294967295, 65535
      %v2463 = vsel %vm2461, %v2462, 0
      %v2465 = vand.u32 %v722, %v2463
      %2467 = vmatpush.bf16.msra.mxu0 0
      %2468 = vmatpush.bf16.msra.mxu0 0
      %2469 = vmatpush.bf16.msra.mxu0 0
      %2470 = vmatpush.bf16.msra.mxu0 0
      %2471 = vmatpush.bf16.msra.mxu0 0
      %2472 = vmatpush.bf16.msra.mxu0 0
      %2473 = vmatpush.bf16.msra.mxu0 0
      %2474 = vmatpush.bf16.msra.mxu0 %v2465
      %2475 = vmatmul.bf16.gmra.mxu0 %v2396
      %v2476 = vpop.f32.mrf.mxu0
      %v2477 = vadd.f32 0.0, %v2476
      %v2478 = vpop.f32.mrf.mxu0
      %v2479 = vadd.f32 0.0, %v2478
      %2480 = vmatmul.bf16.gmra.mxu0 %v2398
      %v2481 = vpop.f32.mrf.mxu0
      %v2482 = vadd.f32 0.0, %v2481
      %v2483 = vpop.f32.mrf.mxu0
      %v2484 = vadd.f32 0.0, %v2483
      %2485 = vmatmul.bf16.gmra.mxu0 %v2400
      %v2486 = vpop.f32.mrf.mxu0
      %v2487 = vadd.f32 0.0, %v2486
      %v2488 = vpop.f32.mrf.mxu0
      %v2489 = vadd.f32 0.0, %v2488
      %2490 = vmatmul.bf16.gmra.mxu0 %v2402
      %v2491 = vpop.f32.mrf.mxu0
      %v2492 = vadd.f32 0.0, %v2491
      %v2493 = vpop.f32.mrf.mxu0
      %v2494 = vadd.f32 0.0, %v2493
      %2495 = vmatmul.bf16.gmra.mxu0 %v2404
      %v2496 = vpop.f32.mrf.mxu0
      %v2497 = vadd.f32 0.0, %v2496
      %v2498 = vpop.f32.mrf.mxu0
      %v2499 = vadd.f32 0.0, %v2498
      %2500 = vmatmul.bf16.gmra.mxu0 %v2406
      %v2501 = vpop.f32.mrf.mxu0
      %v2502 = vadd.f32 0.0, %v2501
      %v2503 = vpop.f32.mrf.mxu0
      %v2504 = vadd.f32 0.0, %v2503
      %2505 = vmatmul.bf16.gmra.mxu0 %v2408
      %v2506 = vpop.f32.mrf.mxu0
      %v2507 = vadd.f32 0.0, %v2506
      %v2508 = vpop.f32.mrf.mxu0
      %v2509 = vadd.f32 0.0, %v2508
      %2510 = vmatmul.bf16.gmra.mxu0 %v2410
      %v2511 = vpop.f32.mrf.mxu0
      %v2512 = vadd.f32 0.0, %v2511
      %v2513 = vpop.f32.mrf.mxu0
      %v2514 = vadd.f32 0.0, %v2513
      %2515 = vmatmul.bf16.gmra.mxu0 %v2412
      %v2516 = vpop.f32.mrf.mxu0
      %v2517 = vadd.f32 0.0, %v2516
      %v2518 = vpop.f32.mrf.mxu0
      %v2519 = vadd.f32 0.0, %v2518
      %2520 = vmatmul.bf16.gmra.mxu0 %v2414
      %v2521 = vpop.f32.mrf.mxu0
      %v2522 = vadd.f32 0.0, %v2521
      %v2523 = vpop.f32.mrf.mxu0
      %v2524 = vadd.f32 0.0, %v2523
      %2525 = vmatmul.bf16.gmra.mxu0 %v2416
      %v2526 = vpop.f32.mrf.mxu0
      %v2527 = vadd.f32 0.0, %v2526
      %v2528 = vpop.f32.mrf.mxu0
      %v2529 = vadd.f32 0.0, %v2528
      %2530 = vmatmul.bf16.gmra.mxu0 %v2418
      %v2531 = vpop.f32.mrf.mxu0
      %v2532 = vadd.f32 0.0, %v2531
      %v2533 = vpop.f32.mrf.mxu0
      %v2534 = vadd.f32 0.0, %v2533
      %2535 = vmatmul.bf16.gmra.mxu0 %v2420
      %v2536 = vpop.f32.mrf.mxu0
      %v2537 = vadd.f32 0.0, %v2536
      %v2538 = vpop.f32.mrf.mxu0
      %v2539 = vadd.f32 0.0, %v2538
      %2540 = vmatmul.bf16.gmra.mxu0 %v2422
      %v2541 = vpop.f32.mrf.mxu0
      %v2542 = vadd.f32 0.0, %v2541
      %v2543 = vpop.f32.mrf.mxu0
      %v2544 = vadd.f32 0.0, %v2543
      %2545 = vmatmul.bf16.gmra.mxu0 %v2424
      %v2546 = vpop.f32.mrf.mxu0
      %v2547 = vadd.f32 0.0, %v2546
      %v2548 = vpop.f32.mrf.mxu0
      %v2549 = vadd.f32 0.0, %v2548
      %2550 = vmatmul.bf16.gmra.mxu0 %v2426
      %v2551 = vpop.f32.mrf.mxu0
      %v2552 = vadd.f32 0.0, %v2551
      %v2553 = vpop.f32.mrf.mxu0
      %v2554 = vadd.f32 0.0, %v2553
      %2555 = vmatmul.bf16.gmra.mxu0 %v2428
      %v2556 = vpop.f32.mrf.mxu0
      %v2557 = vadd.f32 0.0, %v2556
      %v2558 = vpop.f32.mrf.mxu0
      %v2559 = vadd.f32 0.0, %v2558
      %2560 = vmatmul.bf16.gmra.mxu0 %v2430
      %v2561 = vpop.f32.mrf.mxu0
      %v2562 = vadd.f32 0.0, %v2561
      %v2563 = vpop.f32.mrf.mxu0
      %v2564 = vadd.f32 0.0, %v2563
      %2565 = vmatmul.bf16.gmra.mxu0 %v2432
      %v2566 = vpop.f32.mrf.mxu0
      %v2567 = vadd.f32 0.0, %v2566
      %v2568 = vpop.f32.mrf.mxu0
      %v2569 = vadd.f32 0.0, %v2568
      %2570 = vmatmul.bf16.gmra.mxu0 %v2434
      %v2571 = vpop.f32.mrf.mxu0
      %v2572 = vadd.f32 0.0, %v2571
      %v2573 = vpop.f32.mrf.mxu0
      %v2574 = vadd.f32 0.0, %v2573
      %2575 = vmatmul.bf16.gmra.mxu0 %v2436
      %v2576 = vpop.f32.mrf.mxu0
      %v2577 = vadd.f32 0.0, %v2576
      %v2578 = vpop.f32.mrf.mxu0
      %v2579 = vadd.f32 0.0, %v2578
      %2580 = vmatmul.bf16.gmra.mxu0 %v2438
      %v2581 = vpop.f32.mrf.mxu0
      %v2582 = vadd.f32 0.0, %v2581
      %v2583 = vpop.f32.mrf.mxu0
      %v2584 = vadd.f32 0.0, %v2583
      %2585 = vmatmul.bf16.gmra.mxu0 %v2440
      %v2586 = vpop.f32.mrf.mxu0
      %v2587 = vadd.f32 0.0, %v2586
      %v2588 = vpop.f32.mrf.mxu0
      %v2589 = vadd.f32 0.0, %v2588
      %2590 = vmatmul.bf16.gmra.mxu0 %v2442
      %v2591 = vpop.f32.mrf.mxu0
      %v2592 = vadd.f32 0.0, %v2591
      %v2593 = vpop.f32.mrf.mxu0
      %v2594 = vadd.f32 0.0, %v2593
      %2595 = vmatmul.bf16.gmra.mxu0 %v2444
      %v2596 = vpop.f32.mrf.mxu0
      %v2597 = vadd.f32 0.0, %v2596
      %v2598 = vpop.f32.mrf.mxu0
      %v2599 = vadd.f32 0.0, %v2598
      %2600 = vmatmul.bf16.gmra.mxu0 %v2446
      %v2601 = vpop.f32.mrf.mxu0
      %v2602 = vadd.f32 0.0, %v2601
      %v2603 = vpop.f32.mrf.mxu0
      %v2604 = vadd.f32 0.0, %v2603
      %2605 = vmatmul.bf16.gmra.mxu0 %v2448
      %v2606 = vpop.f32.mrf.mxu0
      %v2607 = vadd.f32 0.0, %v2606
      %v2608 = vpop.f32.mrf.mxu0
      %v2609 = vadd.f32 0.0, %v2608
      %2610 = vmatmul.bf16.gmra.mxu0 %v2450
      %v2611 = vpop.f32.mrf.mxu0
      %v2612 = vadd.f32 0.0, %v2611
      %v2613 = vpop.f32.mrf.mxu0
      %v2614 = vadd.f32 0.0, %v2613
      %2615 = vmatmul.bf16.gmra.mxu0 %v2452
      %v2616 = vpop.f32.mrf.mxu0
      %v2617 = vadd.f32 0.0, %v2616
      %v2618 = vpop.f32.mrf.mxu0
      %v2619 = vadd.f32 0.0, %v2618
      %2620 = vmatmul.bf16.gmra.mxu0 %v2454
      %v2621 = vpop.f32.mrf.mxu0
      %v2622 = vadd.f32 0.0, %v2621
      %v2623 = vpop.f32.mrf.mxu0
      %v2624 = vadd.f32 0.0, %v2623
      %2625 = vmatmul.bf16.gmra.mxu0 %v2456
      %v2626 = vpop.f32.mrf.mxu0
      %v2627 = vadd.f32 0.0, %v2626
      %v2628 = vpop.f32.mrf.mxu0
      %v2629 = vadd.f32 0.0, %v2628
      %2630 = vmatmul.bf16.gmra.mxu0 %v2458
      %v2631 = vpop.f32.mrf.mxu0
      %v2632 = vadd.f32 0.0, %v2631
      %v2633 = vpop.f32.mrf.mxu0
      %v2634 = vadd.f32 0.0, %v2633
      %2635 = vdwg.mxu0
      %v2637 = vperm.slane %v723, 0
      %v2639 = vmul.f32 %v2477, %v2637
      %v2640 = vmul.f32 %v2479, %v2637
      %v2641 = vmul.f32 %v2482, %v2637
      %v2642 = vmul.f32 %v2484, %v2637
      %v2643 = vmul.f32 %v2487, %v2637
      %v2644 = vmul.f32 %v2489, %v2637
      %v2645 = vmul.f32 %v2492, %v2637
      %v2646 = vmul.f32 %v2494, %v2637
      %v2647 = vmul.f32 %v2497, %v2637
      %v2648 = vmul.f32 %v2499, %v2637
      %v2649 = vmul.f32 %v2502, %v2637
      %v2650 = vmul.f32 %v2504, %v2637
      %v2651 = vmul.f32 %v2507, %v2637
      %v2652 = vmul.f32 %v2509, %v2637
      %v2653 = vmul.f32 %v2512, %v2637
      %v2654 = vmul.f32 %v2514, %v2637
      %v2655 = vmul.f32 %v2517, %v2637
      %v2656 = vmul.f32 %v2519, %v2637
      %v2657 = vmul.f32 %v2522, %v2637
      %v2658 = vmul.f32 %v2524, %v2637
      %v2659 = vmul.f32 %v2527, %v2637
      %v2660 = vmul.f32 %v2529, %v2637
      %v2661 = vmul.f32 %v2532, %v2637
      %v2662 = vmul.f32 %v2534, %v2637
      %v2663 = vmul.f32 %v2537, %v2637
      %v2664 = vmul.f32 %v2539, %v2637
      %v2665 = vmul.f32 %v2542, %v2637
      %v2666 = vmul.f32 %v2544, %v2637
      %v2667 = vmul.f32 %v2547, %v2637
      %v2668 = vmul.f32 %v2549, %v2637
      %v2669 = vmul.f32 %v2552, %v2637
      %v2670 = vmul.f32 %v2554, %v2637
      %v2671 = vmul.f32 %v2557, %v2637
      %v2672 = vmul.f32 %v2559, %v2637
      %v2673 = vmul.f32 %v2562, %v2637
      %v2674 = vmul.f32 %v2564, %v2637
      %v2675 = vmul.f32 %v2567, %v2637
      %v2676 = vmul.f32 %v2569, %v2637
      %v2677 = vmul.f32 %v2572, %v2637
      %v2678 = vmul.f32 %v2574, %v2637
      %v2679 = vmul.f32 %v2577, %v2637
      %v2680 = vmul.f32 %v2579, %v2637
      %v2681 = vmul.f32 %v2582, %v2637
      %v2682 = vmul.f32 %v2584, %v2637
      %v2683 = vmul.f32 %v2587, %v2637
      %v2684 = vmul.f32 %v2589, %v2637
      %v2685 = vmul.f32 %v2592, %v2637
      %v2686 = vmul.f32 %v2594, %v2637
      %v2687 = vmul.f32 %v2597, %v2637
      %v2688 = vmul.f32 %v2599, %v2637
      %v2689 = vmul.f32 %v2602, %v2637
      %v2690 = vmul.f32 %v2604, %v2637
      %v2691 = vmul.f32 %v2607, %v2637
      %v2692 = vmul.f32 %v2609, %v2637
      %v2693 = vmul.f32 %v2612, %v2637
      %v2694 = vmul.f32 %v2614, %v2637
      %v2695 = vmul.f32 %v2617, %v2637
      %v2696 = vmul.f32 %v2619, %v2637
      %v2697 = vmul.f32 %v2622, %v2637
      %v2698 = vmul.f32 %v2624, %v2637
      %v2699 = vmul.f32 %v2627, %v2637
      %v2700 = vmul.f32 %v2629, %v2637
      %v2701 = vmul.f32 %v2632, %v2637
      %v2702 = vmul.f32 %v2634, %v2637
      %v2704 = vperm.slane %v724, 0
      %v2706 = vadd.f32 %v2639, %v2704
      %v2707 = vadd.f32 %v2640, %v2704
      %v2708 = vadd.f32 %v2641, %v2704
      %v2709 = vadd.f32 %v2642, %v2704
      %v2710 = vadd.f32 %v2643, %v2704
      %v2711 = vadd.f32 %v2644, %v2704
      %v2712 = vadd.f32 %v2645, %v2704
      %v2713 = vadd.f32 %v2646, %v2704
      %v2714 = vadd.f32 %v2647, %v2704
      %v2715 = vadd.f32 %v2648, %v2704
      %v2716 = vadd.f32 %v2649, %v2704
      %v2717 = vadd.f32 %v2650, %v2704
      %v2718 = vadd.f32 %v2651, %v2704
      %v2719 = vadd.f32 %v2652, %v2704
      %v2720 = vadd.f32 %v2653, %v2704
      %v2721 = vadd.f32 %v2654, %v2704
      %v2722 = vadd.f32 %v2655, %v2704
      %v2723 = vadd.f32 %v2656, %v2704
      %v2724 = vadd.f32 %v2657, %v2704
      %v2725 = vadd.f32 %v2658, %v2704
      %v2726 = vadd.f32 %v2659, %v2704
      %v2727 = vadd.f32 %v2660, %v2704
      %v2728 = vadd.f32 %v2661, %v2704
      %v2729 = vadd.f32 %v2662, %v2704
      %v2730 = vadd.f32 %v2663, %v2704
      %v2731 = vadd.f32 %v2664, %v2704
      %v2732 = vadd.f32 %v2665, %v2704
      %v2733 = vadd.f32 %v2666, %v2704
      %v2734 = vadd.f32 %v2667, %v2704
      %v2735 = vadd.f32 %v2668, %v2704
      %v2736 = vadd.f32 %v2669, %v2704
      %v2737 = vadd.f32 %v2670, %v2704
      %v2738 = vadd.f32 %v2671, %v2704
      %v2739 = vadd.f32 %v2672, %v2704
      %v2740 = vadd.f32 %v2673, %v2704
      %v2741 = vadd.f32 %v2674, %v2704
      %v2742 = vadd.f32 %v2675, %v2704
      %v2743 = vadd.f32 %v2676, %v2704
      %v2744 = vadd.f32 %v2677, %v2704
      %v2745 = vadd.f32 %v2678, %v2704
      %v2746 = vadd.f32 %v2679, %v2704
      %v2747 = vadd.f32 %v2680, %v2704
      %v2748 = vadd.f32 %v2681, %v2704
      %v2749 = vadd.f32 %v2682, %v2704
      %v2750 = vadd.f32 %v2683, %v2704
      %v2751 = vadd.f32 %v2684, %v2704
      %v2752 = vadd.f32 %v2685, %v2704
      %v2753 = vadd.f32 %v2686, %v2704
      %v2754 = vadd.f32 %v2687, %v2704
      %v2755 = vadd.f32 %v2688, %v2704
      %v2756 = vadd.f32 %v2689, %v2704
      %v2757 = vadd.f32 %v2690, %v2704
      %v2758 = vadd.f32 %v2691, %v2704
      %v2759 = vadd.f32 %v2692, %v2704
      %v2760 = vadd.f32 %v2693, %v2704
      %v2761 = vadd.f32 %v2694, %v2704
      %v2762 = vadd.f32 %v2695, %v2704
      %v2763 = vadd.f32 %v2696, %v2704
      %v2764 = vadd.f32 %v2697, %v2704
      %v2765 = vadd.f32 %v2698, %v2704
      %v2766 = vadd.f32 %v2699, %v2704
      %v2767 = vadd.f32 %v2700, %v2704
      %v2768 = vadd.f32 %v2701, %v2704
      %v2769 = vadd.f32 %v2702, %v2704
      %v2770 = vmax.f32 %v2706, 0.0
      %v2771 = vmax.f32 %v2707, 0.0
      %v2772 = vmax.f32 %v2708, 0.0
      %v2773 = vmax.f32 %v2709, 0.0
      %v2774 = vmax.f32 %v2710, 0.0
      %v2775 = vmax.f32 %v2711, 0.0
      %v2776 = vmax.f32 %v2712, 0.0
      %v2777 = vmax.f32 %v2713, 0.0
      %v2778 = vmax.f32 %v2714, 0.0
      %v2779 = vmax.f32 %v2715, 0.0
      %v2780 = vmax.f32 %v2716, 0.0
      %v2781 = vmax.f32 %v2717, 0.0
      %v2782 = vmax.f32 %v2718, 0.0
      %v2783 = vmax.f32 %v2719, 0.0
      %v2784 = vmax.f32 %v2720, 0.0
      %v2785 = vmax.f32 %v2721, 0.0
      %v2786 = vmax.f32 %v2722, 0.0
      %v2787 = vmax.f32 %v2723, 0.0
      %v2788 = vmax.f32 %v2724, 0.0
      %v2789 = vmax.f32 %v2725, 0.0
      %v2790 = vmax.f32 %v2726, 0.0
      %v2791 = vmax.f32 %v2727, 0.0
      %v2792 = vmax.f32 %v2728, 0.0
      %v2793 = vmax.f32 %v2729, 0.0
      %v2794 = vmax.f32 %v2730, 0.0
      %v2795 = vmax.f32 %v2731, 0.0
      %v2796 = vmax.f32 %v2732, 0.0
      %v2797 = vmax.f32 %v2733, 0.0
      %v2798 = vmax.f32 %v2734, 0.0
      %v2799 = vmax.f32 %v2735, 0.0
      %v2800 = vmax.f32 %v2736, 0.0
      %v2801 = vmax.f32 %v2737, 0.0
      %v2802 = vmax.f32 %v2738, 0.0
      %v2803 = vmax.f32 %v2739, 0.0
      %v2804 = vmax.f32 %v2740, 0.0
      %v2805 = vmax.f32 %v2741, 0.0
      %v2806 = vmax.f32 %v2742, 0.0
      %v2807 = vmax.f32 %v2743, 0.0
      %v2808 = vmax.f32 %v2744, 0.0
      %v2809 = vmax.f32 %v2745, 0.0
      %v2810 = vmax.f32 %v2746, 0.0
      %v2811 = vmax.f32 %v2747, 0.0
      %v2812 = vmax.f32 %v2748, 0.0
      %v2813 = vmax.f32 %v2749, 0.0
      %v2814 = vmax.f32 %v2750, 0.0
      %v2815 = vmax.f32 %v2751, 0.0
      %v2816 = vmax.f32 %v2752, 0.0
      %v2817 = vmax.f32 %v2753, 0.0
      %v2818 = vmax.f32 %v2754, 0.0
      %v2819 = vmax.f32 %v2755, 0.0
      %v2820 = vmax.f32 %v2756, 0.0
      %v2821 = vmax.f32 %v2757, 0.0
      %v2822 = vmax.f32 %v2758, 0.0
      %v2823 = vmax.f32 %v2759, 0.0
      %v2824 = vmax.f32 %v2760, 0.0
      %v2825 = vmax.f32 %v2761, 0.0
      %v2826 = vmax.f32 %v2762, 0.0
      %v2827 = vmax.f32 %v2763, 0.0
      %v2828 = vmax.f32 %v2764, 0.0
      %v2829 = vmax.f32 %v2765, 0.0
      %v2830 = vmax.f32 %v2766, 0.0
      %v2831 = vmax.f32 %v2767, 0.0
      %v2832 = vmax.f32 %v2768, 0.0
      %v2833 = vmax.f32 %v2769, 0.0
      %v2834 = vld [vmem:[%s5] sm:$0xff]
      %v2835 = vld [vmem:[%s5 + $0x8] sm:$0xff]
      %v2836 = vld [vmem:[%s5 + $0x10] sm:$0xff]
      %v2837 = vld [vmem:[%s5 + $0x18] sm:$0xff]
      %v2838 = vld [vmem:[%s5 + $0x20] sm:$0xff]
      %v2839 = vld [vmem:[%s5 + $0x28] sm:$0xff]
      %v2840 = vld [vmem:[%s5 + $0x30] sm:$0xff]
      %v2841 = vld [vmem:[%s5 + $0x38] sm:$0xff]
      %v2842 = vld [vmem:[%s5 + $0x40] sm:$0xff]
      %v2843 = vld [vmem:[%s5 + $0x48] sm:$0xff]
      %v2844 = vld [vmem:[%s5 + $0x50] sm:$0xff]
      %v2845 = vld [vmem:[%s5 + $0x58] sm:$0xff]
      %v2846 = vld [vmem:[%s5 + $0x60] sm:$0xff]
      %v2847 = vld [vmem:[%s5 + $0x68] sm:$0xff]
      %v2848 = vld [vmem:[%s5 + $0x70] sm:$0xff]
      %v2849 = vld [vmem:[%s5 + $0x78] sm:$0xff]
      %v2850 = vld [vmem:[%s5 + $0x80] sm:$0xff]
      %v2851 = vld [vmem:[%s5 + $0x88] sm:$0xff]
      %v2852 = vld [vmem:[%s5 + $0x90] sm:$0xff]
      %v2853 = vld [vmem:[%s5 + $0x98] sm:$0xff]
      %v2854 = vld [vmem:[%s5 + $0xa0] sm:$0xff]
      %v2855 = vld [vmem:[%s5 + $0xa8] sm:$0xff]
      %v2856 = vld [vmem:[%s5 + $0xb0] sm:$0xff]
      %v2857 = vld [vmem:[%s5 + $0xb8] sm:$0xff]
      %v2858 = vld [vmem:[%s5 + $0xc0] sm:$0xff]
      %v2859 = vld [vmem:[%s5 + $0xc8] sm:$0xff]
      %v2860 = vld [vmem:[%s5 + $0xd0] sm:$0xff]
      %v2861 = vld [vmem:[%s5 + $0xd8] sm:$0xff]
      %v2862 = vld [vmem:[%s5 + $0xe0] sm:$0xff]
      %v2863 = vld [vmem:[%s5 + $0xe8] sm:$0xff]
      %v2864 = vld [vmem:[%s5 + $0xf0] sm:$0xff]
      %v2865 = vld [vmem:[%s5 + $0xf8] sm:$0xff]
      %v2866 = vld [vmem:[%s5 + $0x100] sm:$0xff]
      %v2867 = vld [vmem:[%s5 + $0x108] sm:$0xff]
      %v2868 = vld [vmem:[%s5 + $0x110] sm:$0xff]
      %v2869 = vld [vmem:[%s5 + $0x118] sm:$0xff]
      %v2870 = vld [vmem:[%s5 + $0x120] sm:$0xff]
      %v2871 = vld [vmem:[%s5 + $0x128] sm:$0xff]
      %v2872 = vld [vmem:[%s5 + $0x130] sm:$0xff]
      %v2873 = vld [vmem:[%s5 + $0x138] sm:$0xff]
      %v2874 = vld [vmem:[%s5 + $0x140] sm:$0xff]
      %v2875 = vld [vmem:[%s5 + $0x148] sm:$0xff]
      %v2876 = vld [vmem:[%s5 + $0x150] sm:$0xff]
      %v2877 = vld [vmem:[%s5 + $0x158] sm:$0xff]
      %v2878 = vld [vmem:[%s5 + $0x160] sm:$0xff]
      %v2879 = vld [vmem:[%s5 + $0x168] sm:$0xff]
      %v2880 = vld [vmem:[%s5 + $0x170] sm:$0xff]
      %v2881 = vld [vmem:[%s5 + $0x178] sm:$0xff]
      %v2882 = vld [vmem:[%s5 + $0x180] sm:$0xff]
      %v2883 = vld [vmem:[%s5 + $0x188] sm:$0xff]
      %v2884 = vld [vmem:[%s5 + $0x190] sm:$0xff]
      %v2885 = vld [vmem:[%s5 + $0x198] sm:$0xff]
      %v2886 = vld [vmem:[%s5 + $0x1a0] sm:$0xff]
      %v2887 = vld [vmem:[%s5 + $0x1a8] sm:$0xff]
      %v2888 = vld [vmem:[%s5 + $0x1b0] sm:$0xff]
      %v2889 = vld [vmem:[%s5 + $0x1b8] sm:$0xff]
      %v2890 = vld [vmem:[%s5 + $0x1c0] sm:$0xff]
      %v2891 = vld [vmem:[%s5 + $0x1c8] sm:$0xff]
      %v2892 = vld [vmem:[%s5 + $0x1d0] sm:$0xff]
      %v2893 = vld [vmem:[%s5 + $0x1d8] sm:$0xff]
      %v2894 = vld [vmem:[%s5 + $0x1e0] sm:$0xff]
      %v2895 = vld [vmem:[%s5 + $0x1e8] sm:$0xff]
      %v2896 = vld [vmem:[%s5 + $0x1f0] sm:$0xff]
      %v2897 = vld [vmem:[%s5 + $0x1f8] sm:$0xff]
      %v2898 = vrot.slane %v2770, 1
      %v2899 = vrot.slane %v2771, 1
      %v2900 = vrot.slane %v2772, 1
      %v2901 = vrot.slane %v2773, 1
      %v2902 = vrot.slane %v2774, 1
      %v2903 = vrot.slane %v2775, 1
      %v2904 = vrot.slane %v2776, 1
      %v2905 = vrot.slane %v2777, 1
      %v2906 = vrot.slane %v2778, 1
      %v2907 = vrot.slane %v2779, 1
      %v2908 = vrot.slane %v2780, 1
      %v2909 = vrot.slane %v2781, 1
      %v2910 = vrot.slane %v2782, 1
      %v2911 = vrot.slane %v2783, 1
      %v2912 = vrot.slane %v2784, 1
      %v2913 = vrot.slane %v2785, 1
      %v2914 = vrot.slane %v2786, 1
      %v2915 = vrot.slane %v2787, 1
      %v2916 = vrot.slane %v2788, 1
      %v2917 = vrot.slane %v2789, 1
      %v2918 = vrot.slane %v2790, 1
      %v2919 = vrot.slane %v2791, 1
      %v2920 = vrot.slane %v2792, 1
      %v2921 = vrot.slane %v2793, 1
      %v2922 = vrot.slane %v2794, 1
      %v2923 = vrot.slane %v2795, 1
      %v2924 = vrot.slane %v2796, 1
      %v2925 = vrot.slane %v2797, 1
      %v2926 = vrot.slane %v2798, 1
      %v2927 = vrot.slane %v2799, 1
      %v2928 = vrot.slane %v2800, 1
      %v2929 = vrot.slane %v2801, 1
      %v2930 = vrot.slane %v2802, 1
      %v2931 = vrot.slane %v2803, 1
      %v2932 = vrot.slane %v2804, 1
      %v2933 = vrot.slane %v2805, 1
      %v2934 = vrot.slane %v2806, 1
      %v2935 = vrot.slane %v2807, 1
      %v2936 = vrot.slane %v2808, 1
      %v2937 = vrot.slane %v2809, 1
      %v2938 = vrot.slane %v2810, 1
      %v2939 = vrot.slane %v2811, 1
      %v2940 = vrot.slane %v2812, 1
      %v2941 = vrot.slane %v2813, 1
      %v2942 = vrot.slane %v2814, 1
      %v2943 = vrot.slane %v2815, 1
      %v2944 = vrot.slane %v2816, 1
      %v2945 = vrot.slane %v2817, 1
      %v2946 = vrot.slane %v2818, 1
      %v2947 = vrot.slane %v2819, 1
      %v2948 = vrot.slane %v2820, 1
      %v2949 = vrot.slane %v2821, 1
      %v2950 = vrot.slane %v2822, 1
      %v2951 = vrot.slane %v2823, 1
      %v2952 = vrot.slane %v2824, 1
      %v2953 = vrot.slane %v2825, 1
      %v2954 = vrot.slane %v2826, 1
      %v2955 = vrot.slane %v2827, 1
      %v2956 = vrot.slane %v2828, 1
      %v2957 = vrot.slane %v2829, 1
      %v2958 = vrot.slane %v2830, 1
      %v2959 = vrot.slane %v2831, 1
      %v2960 = vrot.slane %v2832, 1
      %v2961 = vrot.slane %v2833, 1
      %v2962 = vsel %vm1176, %v2960, %v2961
      %v2963 = vsel %vm1176, %v2959, %v2960
      %v2964 = vsel %vm1176, %v2958, %v2959
      %v2965 = vsel %vm1176, %v2957, %v2958
      %v2966 = vsel %vm1176, %v2956, %v2957
      %v2967 = vsel %vm1176, %v2955, %v2956
      %v2968 = vsel %vm1176, %v2954, %v2955
      %v2969 = vsel %vm1176, %v2953, %v2954
      %v2970 = vsel %vm1176, %v2952, %v2953
      %v2971 = vsel %vm1176, %v2951, %v2952
      %v2972 = vsel %vm1176, %v2950, %v2951
      %v2973 = vsel %vm1176, %v2949, %v2950
      %v2974 = vsel %vm1176, %v2948, %v2949
      %v2975 = vsel %vm1176, %v2947, %v2948
      %v2976 = vsel %vm1176, %v2946, %v2947
      %v2977 = vsel %vm1176, %v2945, %v2946
      %v2978 = vsel %vm1176, %v2944, %v2945
      %v2979 = vsel %vm1176, %v2943, %v2944
      %v2980 = vsel %vm1176, %v2942, %v2943
      %v2981 = vsel %vm1176, %v2941, %v2942
      %v2982 = vsel %vm1176, %v2940, %v2941
      %v2983 = vsel %vm1176, %v2939, %v2940
      %v2984 = vsel %vm1176, %v2938, %v2939
      %v2985 = vsel %vm1176, %v2937, %v2938
      %v2986 = vsel %vm1176, %v2936, %v2937
      %v2987 = vsel %vm1176, %v2935, %v2936
      %v2988 = vsel %vm1176, %v2934, %v2935
      %v2989 = vsel %vm1176, %v2933, %v2934
      %v2990 = vsel %vm1176, %v2932, %v2933
      %v2991 = vsel %vm1176, %v2931, %v2932
      %v2992 = vsel %vm1176, %v2930, %v2931
      %v2993 = vsel %vm1176, %v2929, %v2930
      %v2994 = vsel %vm1176, %v2928, %v2929
      %v2995 = vsel %vm1176, %v2927, %v2928
      %v2996 = vsel %vm1176, %v2926, %v2927
      %v2997 = vsel %vm1176, %v2925, %v2926
      %v2998 = vsel %vm1176, %v2924, %v2925
      %v2999 = vsel %vm1176, %v2923, %v2924
      %v3000 = vsel %vm1176, %v2922, %v2923
      %v3001 = vsel %vm1176, %v2921, %v2922
      %v3002 = vsel %vm1176, %v2920, %v2921
      %v3003 = vsel %vm1176, %v2919, %v2920
      %v3004 = vsel %vm1176, %v2918, %v2919
      %v3005 = vsel %vm1176, %v2917, %v2918
      %v3006 = vsel %vm1176, %v2916, %v2917
      %v3007 = vsel %vm1176, %v2915, %v2916
      %v3008 = vsel %vm1176, %v2914, %v2915
      %v3009 = vsel %vm1176, %v2913, %v2914
      %v3010 = vsel %vm1176, %v2912, %v2913
      %v3011 = vsel %vm1176, %v2911, %v2912
      %v3012 = vsel %vm1176, %v2910, %v2911
      %v3013 = vsel %vm1176, %v2909, %v2910
      %v3014 = vsel %vm1176, %v2908, %v2909
      %v3015 = vsel %vm1176, %v2907, %v2908
      %v3016 = vsel %vm1176, %v2906, %v2907
      %v3017 = vsel %vm1176, %v2905, %v2906
      %v3018 = vsel %vm1176, %v2904, %v2905
      %v3019 = vsel %vm1176, %v2903, %v2904
      %v3020 = vsel %vm1176, %v2902, %v2903
      %v3021 = vsel %vm1176, %v2901, %v2902
      %v3022 = vsel %vm1176, %v2900, %v2901
      %v3023 = vsel %vm1176, %v2899, %v2900
      %v3024 = vsel %vm1176, %v2898, %v2899
      %v3025 = vsel %vm1176, %v2961, %v2898
      %v3026 = vmax.f32 %v2770, %v3024
      %v3027 = vmax.f32 %v2771, %v3023
      %v3028 = vmax.f32 %v2772, %v3022
      %v3029 = vmax.f32 %v2773, %v3021
      %v3030 = vmax.f32 %v2774, %v3020
      %v3031 = vmax.f32 %v2775, %v3019
      %v3032 = vmax.f32 %v2776, %v3018
      %v3033 = vmax.f32 %v2777, %v3017
      %v3034 = vmax.f32 %v2778, %v3016
      %v3035 = vmax.f32 %v2779, %v3015
      %v3036 = vmax.f32 %v2780, %v3014
      %v3037 = vmax.f32 %v2781, %v3013
      %v3038 = vmax.f32 %v2782, %v3012
      %v3039 = vmax.f32 %v2783, %v3011
      %v3040 = vmax.f32 %v2784, %v3010
      %v3041 = vmax.f32 %v2785, %v3009
      %v3042 = vmax.f32 %v2786, %v3008
      %v3043 = vmax.f32 %v2787, %v3007
      %v3044 = vmax.f32 %v2788, %v3006
      %v3045 = vmax.f32 %v2789, %v3005
      %v3046 = vmax.f32 %v2790, %v3004
      %v3047 = vmax.f32 %v2791, %v3003
      %v3048 = vmax.f32 %v2792, %v3002
      %v3049 = vmax.f32 %v2793, %v3001
      %v3050 = vmax.f32 %v2794, %v3000
      %v3051 = vmax.f32 %v2795, %v2999
      %v3052 = vmax.f32 %v2796, %v2998
      %v3053 = vmax.f32 %v2797, %v2997
      %v3054 = vmax.f32 %v2798, %v2996
      %v3055 = vmax.f32 %v2799, %v2995
      %v3056 = vmax.f32 %v2800, %v2994
      %v3057 = vmax.f32 %v2801, %v2993
      %v3058 = vmax.f32 %v2802, %v2992
      %v3059 = vmax.f32 %v2803, %v2991
      %v3060 = vmax.f32 %v2804, %v2990
      %v3061 = vmax.f32 %v2805, %v2989
      %v3062 = vmax.f32 %v2806, %v2988
      %v3063 = vmax.f32 %v2807, %v2987
      %v3064 = vmax.f32 %v2808, %v2986
      %v3065 = vmax.f32 %v2809, %v2985
      %v3066 = vmax.f32 %v2810, %v2984
      %v3067 = vmax.f32 %v2811, %v2983
      %v3068 = vmax.f32 %v2812, %v2982
      %v3069 = vmax.f32 %v2813, %v2981
      %v3070 = vmax.f32 %v2814, %v2980
      %v3071 = vmax.f32 %v2815, %v2979
      %v3072 = vmax.f32 %v2816, %v2978
      %v3073 = vmax.f32 %v2817, %v2977
      %v3074 = vmax.f32 %v2818, %v2976
      %v3075 = vmax.f32 %v2819, %v2975
      %v3076 = vmax.f32 %v2820, %v2974
      %v3077 = vmax.f32 %v2821, %v2973
      %v3078 = vmax.f32 %v2822, %v2972
      %v3079 = vmax.f32 %v2823, %v2971
      %v3080 = vmax.f32 %v2824, %v2970
      %v3081 = vmax.f32 %v2825, %v2969
      %v3082 = vmax.f32 %v2826, %v2968
      %v3083 = vmax.f32 %v2827, %v2967
      %v3084 = vmax.f32 %v2828, %v2966
      %v3085 = vmax.f32 %v2829, %v2965
      %v3086 = vmax.f32 %v2830, %v2964
      %v3087 = vmax.f32 %v2831, %v2963
      %v3088 = vmax.f32 %v2832, %v2962
      %v3089 = vmax.f32 %v2833, %v3025
      %v3090 = vpack.c.bf16 %v3027, %v3026
      %v3091 = vpack.c.bf16 %v3029, %v3028
      %v3092 = vpack.c.bf16 %v3031, %v3030
      %v3093 = vpack.c.bf16 %v3033, %v3032
      %v3094 = vpack.c.bf16 %v3035, %v3034
      %v3095 = vpack.c.bf16 %v3037, %v3036
      %v3096 = vpack.c.bf16 %v3039, %v3038
      %v3097 = vpack.c.bf16 %v3041, %v3040
      %v3098 = vpack.c.bf16 %v3043, %v3042
      %v3099 = vpack.c.bf16 %v3045, %v3044
      %v3100 = vpack.c.bf16 %v3047, %v3046
      %v3101 = vpack.c.bf16 %v3049, %v3048
      %v3102 = vpack.c.bf16 %v3051, %v3050
      %v3103 = vpack.c.bf16 %v3053, %v3052
      %v3104 = vpack.c.bf16 %v3055, %v3054
      %v3105 = vpack.c.bf16 %v3057, %v3056
      %v3106 = vpack.c.bf16 %v3059, %v3058
      %v3107 = vpack.c.bf16 %v3061, %v3060
      %v3108 = vpack.c.bf16 %v3063, %v3062
      %v3109 = vpack.c.bf16 %v3065, %v3064
      %v3110 = vpack.c.bf16 %v3067, %v3066
      %v3111 = vpack.c.bf16 %v3069, %v3068
      %v3112 = vpack.c.bf16 %v3071, %v3070
      %v3113 = vpack.c.bf16 %v3073, %v3072
      %v3114 = vpack.c.bf16 %v3075, %v3074
      %v3115 = vpack.c.bf16 %v3077, %v3076
      %v3116 = vpack.c.bf16 %v3079, %v3078
      %v3117 = vpack.c.bf16 %v3081, %v3080
      %v3118 = vpack.c.bf16 %v3083, %v3082
      %v3119 = vpack.c.bf16 %v3085, %v3084
      %v3120 = vpack.c.bf16 %v3087, %v3086
      %v3121 = vpack.c.bf16 %v3089, %v3088
      %v3186 = vunpack.c.l.b16 %v2834
      %v3187 = vunpack.c.h.b16 %v2834
      %v3188 = vunpack.c.l.b16 %v2835
      %v3189 = vunpack.c.h.b16 %v2835
      %v3190 = vunpack.c.l.b16 %v2836
      %v3191 = vunpack.c.h.b16 %v2836
      %v3192 = vunpack.c.l.b16 %v2837
      %v3193 = vunpack.c.h.b16 %v2837
      %v3194 = vunpack.c.l.b16 %v2838
      %v3195 = vunpack.c.h.b16 %v2838
      %v3196 = vunpack.c.l.b16 %v2839
      %v3197 = vunpack.c.h.b16 %v2839
      %v3198 = vunpack.c.l.b16 %v2840
      %v3199 = vunpack.c.h.b16 %v2840
      %v3200 = vunpack.c.l.b16 %v2841
      %v3201 = vunpack.c.h.b16 %v2841
      %v3202 = vunpack.c.l.b16 %v2842
      %v3203 = vunpack.c.h.b16 %v2842
      %v3204 = vunpack.c.l.b16 %v2843
      %v3205 = vunpack.c.h.b16 %v2843
      %v3206 = vunpack.c.l.b16 %v2844
      %v3207 = vunpack.c.h.b16 %v2844
      %v3208 = vunpack.c.l.b16 %v2845
      %v3209 = vunpack.c.h.b16 %v2845
      %v3210 = vunpack.c.l.b16 %v2846
      %v3211 = vunpack.c.h.b16 %v2846
      %v3212 = vunpack.c.l.b16 %v2847
      %v3213 = vunpack.c.h.b16 %v2847
      %v3214 = vunpack.c.l.b16 %v2848
      %v3215 = vunpack.c.h.b16 %v2848
      %v3216 = vunpack.c.l.b16 %v2849
      %v3217 = vunpack.c.h.b16 %v2849
      %v3218 = vunpack.c.l.b16 %v2850
      %v3219 = vunpack.c.h.b16 %v2850
      %v3220 = vunpack.c.l.b16 %v2851
      %v3221 = vunpack.c.h.b16 %v2851
      %v3222 = vunpack.c.l.b16 %v2852
      %v3223 = vunpack.c.h.b16 %v2852
      %v3224 = vunpack.c.l.b16 %v2853
      %v3225 = vunpack.c.h.b16 %v2853
      %v3226 = vunpack.c.l.b16 %v2854
      %v3227 = vunpack.c.h.b16 %v2854
      %v3228 = vunpack.c.l.b16 %v2855
      %v3229 = vunpack.c.h.b16 %v2855
      %v3230 = vunpack.c.l.b16 %v2856
      %v3231 = vunpack.c.h.b16 %v2856
      %v3232 = vunpack.c.l.b16 %v2857
      %v3233 = vunpack.c.h.b16 %v2857
      %v3234 = vunpack.c.l.b16 %v2858
      %v3235 = vunpack.c.h.b16 %v2858
      %v3236 = vunpack.c.l.b16 %v2859
      %v3237 = vunpack.c.h.b16 %v2859
      %v3238 = vunpack.c.l.b16 %v2860
      %v3239 = vunpack.c.h.b16 %v2860
      %v3240 = vunpack.c.l.b16 %v2861
      %v3241 = vunpack.c.h.b16 %v2861
      %v3242 = vunpack.c.l.b16 %v2862
      %v3243 = vunpack.c.h.b16 %v2862
      %v3244 = vunpack.c.l.b16 %v2863
      %v3245 = vunpack.c.h.b16 %v2863
      %v3246 = vunpack.c.l.b16 %v2864
      %v3247 = vunpack.c.h.b16 %v2864
      %v3248 = vunpack.c.l.b16 %v2865
      %v3249 = vunpack.c.h.b16 %v2865
      %v3250 = vunpack.c.l.b16 %v2866
      %v3251 = vunpack.c.h.b16 %v2866
      %v3252 = vunpack.c.l.b16 %v2867
      %v3253 = vunpack.c.h.b16 %v2867
      %v3254 = vunpack.c.l.b16 %v2868
      %v3255 = vunpack.c.h.b16 %v2868
      %v3256 = vunpack.c.l.b16 %v2869
      %v3257 = vunpack.c.h.b16 %v2869
      %v3258 = vunpack.c.l.b16 %v2870
      %v3259 = vunpack.c.h.b16 %v2870
      %v3260 = vunpack.c.l.b16 %v2871
      %v3261 = vunpack.c.h.b16 %v2871
      %v3262 = vunpack.c.l.b16 %v2872
      %v3263 = vunpack.c.h.b16 %v2872
      %v3264 = vunpack.c.l.b16 %v2873
      %v3265 = vunpack.c.h.b16 %v2873
      %v3266 = vunpack.c.l.b16 %v2874
      %v3267 = vunpack.c.h.b16 %v2874
      %v3268 = vunpack.c.l.b16 %v2875
      %v3269 = vunpack.c.h.b16 %v2875
      %v3270 = vunpack.c.l.b16 %v2876
      %v3271 = vunpack.c.h.b16 %v2876
      %v3272 = vunpack.c.l.b16 %v2877
      %v3273 = vunpack.c.h.b16 %v2877
      %v3274 = vunpack.c.l.b16 %v2878
      %v3275 = vunpack.c.h.b16 %v2878
      %v3276 = vunpack.c.l.b16 %v2879
      %v3277 = vunpack.c.h.b16 %v2879
      %v3278 = vunpack.c.l.b16 %v2880
      %v3279 = vunpack.c.h.b16 %v2880
      %v3280 = vunpack.c.l.b16 %v2881
      %v3281 = vunpack.c.h.b16 %v2881
      %v3282 = vunpack.c.l.b16 %v2882
      %v3283 = vunpack.c.h.b16 %v2882
      %v3284 = vunpack.c.l.b16 %v2883
      %v3285 = vunpack.c.h.b16 %v2883
      %v3286 = vunpack.c.l.b16 %v2884
      %v3287 = vunpack.c.h.b16 %v2884
      %v3288 = vunpack.c.l.b16 %v2885
      %v3289 = vunpack.c.h.b16 %v2885
      %v3290 = vunpack.c.l.b16 %v2886
      %v3291 = vunpack.c.h.b16 %v2886
      %v3292 = vunpack.c.l.b16 %v2887
      %v3293 = vunpack.c.h.b16 %v2887
      %v3294 = vunpack.c.l.b16 %v2888
      %v3295 = vunpack.c.h.b16 %v2888
      %v3296 = vunpack.c.l.b16 %v2889
      %v3297 = vunpack.c.h.b16 %v2889
      %v3298 = vunpack.c.l.b16 %v2890
      %v3299 = vunpack.c.h.b16 %v2890
      %v3300 = vunpack.c.l.b16 %v2891
      %v3301 = vunpack.c.h.b16 %v2891
      %v3302 = vunpack.c.l.b16 %v2892
      %v3303 = vunpack.c.h.b16 %v2892
      %v3304 = vunpack.c.l.b16 %v2893
      %v3305 = vunpack.c.h.b16 %v2893
      %v3306 = vunpack.c.l.b16 %v2894
      %v3307 = vunpack.c.h.b16 %v2894
      %v3308 = vunpack.c.l.b16 %v2895
      %v3309 = vunpack.c.h.b16 %v2895
      %v3310 = vunpack.c.l.b16 %v2896
      %v3311 = vunpack.c.h.b16 %v2896
      %v3312 = vunpack.c.l.b16 %v2897
      %v3313 = vunpack.c.h.b16 %v2897
      %v3314 = vpack.c.b16 %v3190, %v3186
      %v3315 = vpack.c.b16 %v3191, %v3187
      %v3316 = vpack.c.b16 %v3192, %v3188
      %v3317 = vpack.c.b16 %v3193, %v3189
      %v3318 = vpack.c.b16 %v3198, %v3194
      %v3319 = vpack.c.b16 %v3199, %v3195
      %v3320 = vpack.c.b16 %v3200, %v3196
      %v3321 = vpack.c.b16 %v3201, %v3197
      %v3322 = vpack.c.b16 %v3206, %v3202
      %v3323 = vpack.c.b16 %v3207, %v3203
      %v3324 = vpack.c.b16 %v3208, %v3204
      %v3325 = vpack.c.b16 %v3209, %v3205
      %v3326 = vpack.c.b16 %v3214, %v3210
      %v3327 = vpack.c.b16 %v3215, %v3211
      %v3328 = vpack.c.b16 %v3216, %v3212
      %v3329 = vpack.c.b16 %v3217, %v3213
      %v3330 = vpack.c.b16 %v3222, %v3218
      %v3331 = vpack.c.b16 %v3223, %v3219
      %v3332 = vpack.c.b16 %v3224, %v3220
      %v3333 = vpack.c.b16 %v3225, %v3221
      %v3334 = vpack.c.b16 %v3230, %v3226
      %v3335 = vpack.c.b16 %v3231, %v3227
      %v3336 = vpack.c.b16 %v3232, %v3228
      %v3337 = vpack.c.b16 %v3233, %v3229
      %v3338 = vpack.c.b16 %v3238, %v3234
      %v3339 = vpack.c.b16 %v3239, %v3235
      %v3340 = vpack.c.b16 %v3240, %v3236
      %v3341 = vpack.c.b16 %v3241, %v3237
      %v3342 = vpack.c.b16 %v3246, %v3242
      %v3343 = vpack.c.b16 %v3247, %v3243
      %v3344 = vpack.c.b16 %v3248, %v3244
      %v3345 = vpack.c.b16 %v3249, %v3245
      %v3346 = vpack.c.b16 %v3254, %v3250
      %v3347 = vpack.c.b16 %v3255, %v3251
      %v3348 = vpack.c.b16 %v3256, %v3252
      %v3349 = vpack.c.b16 %v3257, %v3253
      %v3350 = vpack.c.b16 %v3262, %v3258
      %v3351 = vpack.c.b16 %v3263, %v3259
      %v3352 = vpack.c.b16 %v3264, %v3260
      %v3353 = vpack.c.b16 %v3265, %v3261
      %v3354 = vpack.c.b16 %v3270, %v3266
      %v3355 = vpack.c.b16 %v3271, %v3267
      %v3356 = vpack.c.b16 %v3272, %v3268
      %v3357 = vpack.c.b16 %v3273, %v3269
      %v3358 = vpack.c.b16 %v3278, %v3274
      %v3359 = vpack.c.b16 %v3279, %v3275
      %v3360 = vpack.c.b16 %v3280, %v3276
      %v3361 = vpack.c.b16 %v3281, %v3277
      %v3362 = vpack.c.b16 %v3286, %v3282
      %v3363 = vpack.c.b16 %v3287, %v3283
      %v3364 = vpack.c.b16 %v3288, %v3284
      %v3365 = vpack.c.b16 %v3289, %v3285
      %v3366 = vpack.c.b16 %v3294, %v3290
      %v3367 = vpack.c.b16 %v3295, %v3291
      %v3368 = vpack.c.b16 %v3296, %v3292
      %v3369 = vpack.c.b16 %v3297, %v3293
      %v3370 = vpack.c.b16 %v3302, %v3298
      %v3371 = vpack.c.b16 %v3303, %v3299
      %v3372 = vpack.c.b16 %v3304, %v3300
      %v3373 = vpack.c.b16 %v3305, %v3301
      %v3374 = vpack.c.b16 %v3310, %v3306
      %v3375 = vpack.c.b16 %v3311, %v3307
      %v3376 = vpack.c.b16 %v3312, %v3308
      %v3377 = vpack.c.b16 %v3313, %v3309
      %3442 = vmatpush.bf16.msra.mxu0 %v3097
      %3443 = vmatpush.bf16.msra.mxu0 %v3096
      %3444 = vmatpush.bf16.msra.mxu0 %v3095
      %3445 = vmatpush.bf16.msra.mxu0 %v3094
      %3446 = vmatpush.bf16.msra.mxu0 %v3093
      %3447 = vmatpush.bf16.msra.mxu0 %v3092
      %3448 = vmatpush.bf16.msra.mxu0 %v3091
      %3449 = vmatpush.bf16.msra.mxu0 %v3090
      %3450 = vmatmul.bf16.gmra.mxu0 %v3314
      %v3451 = vpop.f32.mrf.mxu0
      %v3452 = vadd.f32 0.0, %v3451
      %v3453 = vpop.f32.mrf.mxu0
      %v3454 = vadd.f32 0.0, %v3453
      %3455 = vmatmul.bf16.gmra.mxu0 %v3318
      %v3456 = vpop.f32.mrf.mxu0
      %v3457 = vadd.f32 0.0, %v3456
      %v3458 = vpop.f32.mrf.mxu0
      %v3459 = vadd.f32 0.0, %v3458
      %3460 = vmatmul.bf16.gmra.mxu0 %v3322
      %v3461 = vpop.f32.mrf.mxu0
      %v3462 = vadd.f32 0.0, %v3461
      %v3463 = vpop.f32.mrf.mxu0
      %v3464 = vadd.f32 0.0, %v3463
      %3465 = vmatmul.bf16.gmra.mxu0 %v3326
      %v3466 = vpop.f32.mrf.mxu0
      %v3467 = vadd.f32 0.0, %v3466
      %v3468 = vpop.f32.mrf.mxu0
      %v3469 = vadd.f32 0.0, %v3468
      %3470 = vmatmul.bf16.gmra.mxu0 %v3330
      %v3471 = vpop.f32.mrf.mxu0
      %v3472 = vadd.f32 0.0, %v3471
      %v3473 = vpop.f32.mrf.mxu0
      %v3474 = vadd.f32 0.0, %v3473
      %3475 = vmatmul.bf16.gmra.mxu0 %v3334
      %v3476 = vpop.f32.mrf.mxu0
      %v3477 = vadd.f32 0.0, %v3476
      %v3478 = vpop.f32.mrf.mxu0
      %v3479 = vadd.f32 0.0, %v3478
      %3480 = vmatmul.bf16.gmra.mxu0 %v3338
      %v3481 = vpop.f32.mrf.mxu0
      %v3482 = vadd.f32 0.0, %v3481
      %v3483 = vpop.f32.mrf.mxu0
      %v3484 = vadd.f32 0.0, %v3483
      %3485 = vmatmul.bf16.gmra.mxu0 %v3342
      %v3486 = vpop.f32.mrf.mxu0
      %v3487 = vadd.f32 0.0, %v3486
      %v3488 = vpop.f32.mrf.mxu0
      %v3489 = vadd.f32 0.0, %v3488
      %3490 = vmatmul.bf16.gmra.mxu0 %v3346
      %v3491 = vpop.f32.mrf.mxu0
      %v3492 = vadd.f32 0.0, %v3491
      %v3493 = vpop.f32.mrf.mxu0
      %v3494 = vadd.f32 0.0, %v3493
      %3495 = vmatmul.bf16.gmra.mxu0 %v3350
      %v3496 = vpop.f32.mrf.mxu0
      %v3497 = vadd.f32 0.0, %v3496
      %v3498 = vpop.f32.mrf.mxu0
      %v3499 = vadd.f32 0.0, %v3498
      %3500 = vmatmul.bf16.gmra.mxu0 %v3354
      %v3501 = vpop.f32.mrf.mxu0
      %v3502 = vadd.f32 0.0, %v3501
      %v3503 = vpop.f32.mrf.mxu0
      %v3504 = vadd.f32 0.0, %v3503
      %3505 = vmatmul.bf16.gmra.mxu0 %v3358
      %v3506 = vpop.f32.mrf.mxu0
      %v3507 = vadd.f32 0.0, %v3506
      %v3508 = vpop.f32.mrf.mxu0
      %v3509 = vadd.f32 0.0, %v3508
      %3510 = vmatmul.bf16.gmra.mxu0 %v3362
      %v3511 = vpop.f32.mrf.mxu0
      %v3512 = vadd.f32 0.0, %v3511
      %v3513 = vpop.f32.mrf.mxu0
      %v3514 = vadd.f32 0.0, %v3513
      %3515 = vmatmul.bf16.gmra.mxu0 %v3366
      %v3516 = vpop.f32.mrf.mxu0
      %v3517 = vadd.f32 0.0, %v3516
      %v3518 = vpop.f32.mrf.mxu0
      %v3519 = vadd.f32 0.0, %v3518
      %3520 = vmatmul.bf16.gmra.mxu0 %v3370
      %v3521 = vpop.f32.mrf.mxu0
      %v3522 = vadd.f32 0.0, %v3521
      %v3523 = vpop.f32.mrf.mxu0
      %v3524 = vadd.f32 0.0, %v3523
      %3525 = vmatmul.bf16.gmra.mxu0 %v3374
      %v3526 = vpop.f32.mrf.mxu0
      %v3527 = vadd.f32 0.0, %v3526
      %v3528 = vpop.f32.mrf.mxu0
      %v3529 = vadd.f32 0.0, %v3528
      %3530 = vdwg.mxu0
      %3531 = vmatpush.bf16.msra.mxu0 %v3105
      %3532 = vmatpush.bf16.msra.mxu0 %v3104
      %3533 = vmatpush.bf16.msra.mxu0 %v3103
      %3534 = vmatpush.bf16.msra.mxu0 %v3102
      %3535 = vmatpush.bf16.msra.mxu0 %v3101
      %3536 = vmatpush.bf16.msra.mxu0 %v3100
      %3537 = vmatpush.bf16.msra.mxu0 %v3099
      %3538 = vmatpush.bf16.msra.mxu0 %v3098
      %3539 = vmatmul.bf16.gmra.mxu0 %v3315
      %v3540 = vpop.f32.mrf.mxu0
      %v3541 = vadd.f32 %v3452, %v3540
      %v3542 = vpop.f32.mrf.mxu0
      %v3543 = vadd.f32 %v3454, %v3542
      %3544 = vmatmul.bf16.gmra.mxu0 %v3319
      %v3545 = vpop.f32.mrf.mxu0
      %v3546 = vadd.f32 %v3457, %v3545
      %v3547 = vpop.f32.mrf.mxu0
      %v3548 = vadd.f32 %v3459, %v3547
      %3549 = vmatmul.bf16.gmra.mxu0 %v3323
      %v3550 = vpop.f32.mrf.mxu0
      %v3551 = vadd.f32 %v3462, %v3550
      %v3552 = vpop.f32.mrf.mxu0
      %v3553 = vadd.f32 %v3464, %v3552
      %3554 = vmatmul.bf16.gmra.mxu0 %v3327
      %v3555 = vpop.f32.mrf.mxu0
      %v3556 = vadd.f32 %v3467, %v3555
      %v3557 = vpop.f32.mrf.mxu0
      %v3558 = vadd.f32 %v3469, %v3557
      %3559 = vmatmul.bf16.gmra.mxu0 %v3331
      %v3560 = vpop.f32.mrf.mxu0
      %v3561 = vadd.f32 %v3472, %v3560
      %v3562 = vpop.f32.mrf.mxu0
      %v3563 = vadd.f32 %v3474, %v3562
      %3564 = vmatmul.bf16.gmra.mxu0 %v3335
      %v3565 = vpop.f32.mrf.mxu0
      %v3566 = vadd.f32 %v3477, %v3565
      %v3567 = vpop.f32.mrf.mxu0
      %v3568 = vadd.f32 %v3479, %v3567
      %3569 = vmatmul.bf16.gmra.mxu0 %v3339
      %v3570 = vpop.f32.mrf.mxu0
      %v3571 = vadd.f32 %v3482, %v3570
      %v3572 = vpop.f32.mrf.mxu0
      %v3573 = vadd.f32 %v3484, %v3572
      %3574 = vmatmul.bf16.gmra.mxu0 %v3343
      %v3575 = vpop.f32.mrf.mxu0
      %v3576 = vadd.f32 %v3487, %v3575
      %v3577 = vpop.f32.mrf.mxu0
      %v3578 = vadd.f32 %v3489, %v3577
      %3579 = vmatmul.bf16.gmra.mxu0 %v3347
      %v3580 = vpop.f32.mrf.mxu0
      %v3581 = vadd.f32 %v3492, %v3580
      %v3582 = vpop.f32.mrf.mxu0
      %v3583 = vadd.f32 %v3494, %v3582
      %3584 = vmatmul.bf16.gmra.mxu0 %v3351
      %v3585 = vpop.f32.mrf.mxu0
      %v3586 = vadd.f32 %v3497, %v3585
      %v3587 = vpop.f32.mrf.mxu0
      %v3588 = vadd.f32 %v3499, %v3587
      %3589 = vmatmul.bf16.gmra.mxu0 %v3355
      %v3590 = vpop.f32.mrf.mxu0
      %v3591 = vadd.f32 %v3502, %v3590
      %v3592 = vpop.f32.mrf.mxu0
      %v3593 = vadd.f32 %v3504, %v3592
      %3594 = vmatmul.bf16.gmra.mxu0 %v3359
      %v3595 = vpop.f32.mrf.mxu0
      %v3596 = vadd.f32 %v3507, %v3595
      %v3597 = vpop.f32.mrf.mxu0
      %v3598 = vadd.f32 %v3509, %v3597
      %3599 = vmatmul.bf16.gmra.mxu0 %v3363
      %v3600 = vpop.f32.mrf.mxu0
      %v3601 = vadd.f32 %v3512, %v3600
      %v3602 = vpop.f32.mrf.mxu0
      %v3603 = vadd.f32 %v3514, %v3602
      %3604 = vmatmul.bf16.gmra.mxu0 %v3367
      %v3605 = vpop.f32.mrf.mxu0
      %v3606 = vadd.f32 %v3517, %v3605
      %v3607 = vpop.f32.mrf.mxu0
      %v3608 = vadd.f32 %v3519, %v3607
      %3609 = vmatmul.bf16.gmra.mxu0 %v3371
      %v3610 = vpop.f32.mrf.mxu0
      %v3611 = vadd.f32 %v3522, %v3610
      %v3612 = vpop.f32.mrf.mxu0
      %v3613 = vadd.f32 %v3524, %v3612
      %3614 = vmatmul.bf16.gmra.mxu0 %v3375
      %v3615 = vpop.f32.mrf.mxu0
      %v3616 = vadd.f32 %v3527, %v3615
      %v3617 = vpop.f32.mrf.mxu0
      %v3618 = vadd.f32 %v3529, %v3617
      %3619 = vdwg.mxu0
      %3620 = vmatpush.bf16.msra.mxu0 %v3113
      %3621 = vmatpush.bf16.msra.mxu0 %v3112
      %3622 = vmatpush.bf16.msra.mxu0 %v3111
      %3623 = vmatpush.bf16.msra.mxu0 %v3110
      %3624 = vmatpush.bf16.msra.mxu0 %v3109
      %3625 = vmatpush.bf16.msra.mxu0 %v3108
      %3626 = vmatpush.bf16.msra.mxu0 %v3107
      %3627 = vmatpush.bf16.msra.mxu0 %v3106
      %3628 = vmatmul.bf16.gmra.mxu0 %v3316
      %v3629 = vpop.f32.mrf.mxu0
      %v3630 = vadd.f32 %v3541, %v3629
      %v3631 = vpop.f32.mrf.mxu0
      %v3632 = vadd.f32 %v3543, %v3631
      %3633 = vmatmul.bf16.gmra.mxu0 %v3320
      %v3634 = vpop.f32.mrf.mxu0
      %v3635 = vadd.f32 %v3546, %v3634
      %v3636 = vpop.f32.mrf.mxu0
      %v3637 = vadd.f32 %v3548, %v3636
      %3638 = vmatmul.bf16.gmra.mxu0 %v3324
      %v3639 = vpop.f32.mrf.mxu0
      %v3640 = vadd.f32 %v3551, %v3639
      %v3641 = vpop.f32.mrf.mxu0
      %v3642 = vadd.f32 %v3553, %v3641
      %3643 = vmatmul.bf16.gmra.mxu0 %v3328
      %v3644 = vpop.f32.mrf.mxu0
      %v3645 = vadd.f32 %v3556, %v3644
      %v3646 = vpop.f32.mrf.mxu0
      %v3647 = vadd.f32 %v3558, %v3646
      %3648 = vmatmul.bf16.gmra.mxu0 %v3332
      %v3649 = vpop.f32.mrf.mxu0
      %v3650 = vadd.f32 %v3561, %v3649
      %v3651 = vpop.f32.mrf.mxu0
      %v3652 = vadd.f32 %v3563, %v3651
      %3653 = vmatmul.bf16.gmra.mxu0 %v3336
      %v3654 = vpop.f32.mrf.mxu0
      %v3655 = vadd.f32 %v3566, %v3654
      %v3656 = vpop.f32.mrf.mxu0
      %v3657 = vadd.f32 %v3568, %v3656
      %3658 = vmatmul.bf16.gmra.mxu0 %v3340
      %v3659 = vpop.f32.mrf.mxu0
      %v3660 = vadd.f32 %v3571, %v3659
      %v3661 = vpop.f32.mrf.mxu0
      %v3662 = vadd.f32 %v3573, %v3661
      %3663 = vmatmul.bf16.gmra.mxu0 %v3344
      %v3664 = vpop.f32.mrf.mxu0
      %v3665 = vadd.f32 %v3576, %v3664
      %v3666 = vpop.f32.mrf.mxu0
      %v3667 = vadd.f32 %v3578, %v3666
      %3668 = vmatmul.bf16.gmra.mxu0 %v3348
      %v3669 = vpop.f32.mrf.mxu0
      %v3670 = vadd.f32 %v3581, %v3669
      %v3671 = vpop.f32.mrf.mxu0
      %v3672 = vadd.f32 %v3583, %v3671
      %3673 = vmatmul.bf16.gmra.mxu0 %v3352
      %v3674 = vpop.f32.mrf.mxu0
      %v3675 = vadd.f32 %v3586, %v3674
      %v3676 = vpop.f32.mrf.mxu0
      %v3677 = vadd.f32 %v3588, %v3676
      %3678 = vmatmul.bf16.gmra.mxu0 %v3356
      %v3679 = vpop.f32.mrf.mxu0
      %v3680 = vadd.f32 %v3591, %v3679
      %v3681 = vpop.f32.mrf.mxu0
      %v3682 = vadd.f32 %v3593, %v3681
      %3683 = vmatmul.bf16.gmra.mxu0 %v3360
      %v3684 = vpop.f32.mrf.mxu0
      %v3685 = vadd.f32 %v3596, %v3684
      %v3686 = vpop.f32.mrf.mxu0
      %v3687 = vadd.f32 %v3598, %v3686
      %3688 = vmatmul.bf16.gmra.mxu0 %v3364
      %v3689 = vpop.f32.mrf.mxu0
      %v3690 = vadd.f32 %v3601, %v3689
      %v3691 = vpop.f32.mrf.mxu0
      %v3692 = vadd.f32 %v3603, %v3691
      %3693 = vmatmul.bf16.gmra.mxu0 %v3368
      %v3694 = vpop.f32.mrf.mxu0
      %v3695 = vadd.f32 %v3606, %v3694
      %v3696 = vpop.f32.mrf.mxu0
      %v3697 = vadd.f32 %v3608, %v3696
      %3698 = vmatmul.bf16.gmra.mxu0 %v3372
      %v3699 = vpop.f32.mrf.mxu0
      %v3700 = vadd.f32 %v3611, %v3699
      %v3701 = vpop.f32.mrf.mxu0
      %v3702 = vadd.f32 %v3613, %v3701
      %3703 = vmatmul.bf16.gmra.mxu0 %v3376
      %v3704 = vpop.f32.mrf.mxu0
      %v3705 = vadd.f32 %v3616, %v3704
      %v3706 = vpop.f32.mrf.mxu0
      %v3707 = vadd.f32 %v3618, %v3706
      %3708 = vdwg.mxu0
      %3709 = vmatpush.bf16.msra.mxu0 %v3121
      %3710 = vmatpush.bf16.msra.mxu0 %v3120
      %3711 = vmatpush.bf16.msra.mxu0 %v3119
      %3712 = vmatpush.bf16.msra.mxu0 %v3118
      %3713 = vmatpush.bf16.msra.mxu0 %v3117
      %3714 = vmatpush.bf16.msra.mxu0 %v3116
      %3715 = vmatpush.bf16.msra.mxu0 %v3115
      %3716 = vmatpush.bf16.msra.mxu0 %v3114
      %3717 = vmatmul.bf16.gmra.mxu0 %v3317
      %v3718 = vpop.f32.mrf.mxu0
      %v3719 = vadd.f32 %v3630, %v3718
      %v3720 = vpop.f32.mrf.mxu0
      %v3721 = vadd.f32 %v3632, %v3720
      %3722 = vmatmul.bf16.gmra.mxu0 %v3321
      %v3723 = vpop.f32.mrf.mxu0
      %v3724 = vadd.f32 %v3635, %v3723
      %v3725 = vpop.f32.mrf.mxu0
      %v3726 = vadd.f32 %v3637, %v3725
      %3727 = vmatmul.bf16.gmra.mxu0 %v3325
      %v3728 = vpop.f32.mrf.mxu0
      %v3729 = vadd.f32 %v3640, %v3728
      %v3730 = vpop.f32.mrf.mxu0
      %v3731 = vadd.f32 %v3642, %v3730
      %3732 = vmatmul.bf16.gmra.mxu0 %v3329
      %v3733 = vpop.f32.mrf.mxu0
      %v3734 = vadd.f32 %v3645, %v3733
      %v3735 = vpop.f32.mrf.mxu0
      %v3736 = vadd.f32 %v3647, %v3735
      %3737 = vmatmul.bf16.gmra.mxu0 %v3333
      %v3738 = vpop.f32.mrf.mxu0
      %v3739 = vadd.f32 %v3650, %v3738
      %v3740 = vpop.f32.mrf.mxu0
      %v3741 = vadd.f32 %v3652, %v3740
      %3742 = vmatmul.bf16.gmra.mxu0 %v3337
      %v3743 = vpop.f32.mrf.mxu0
      %v3744 = vadd.f32 %v3655, %v3743
      %v3745 = vpop.f32.mrf.mxu0
      %v3746 = vadd.f32 %v3657, %v3745
      %3747 = vmatmul.bf16.gmra.mxu0 %v3341
      %v3748 = vpop.f32.mrf.mxu0
      %v3749 = vadd.f32 %v3660, %v3748
      %v3750 = vpop.f32.mrf.mxu0
      %v3751 = vadd.f32 %v3662, %v3750
      %3752 = vmatmul.bf16.gmra.mxu0 %v3345
      %v3753 = vpop.f32.mrf.mxu0
      %v3754 = vadd.f32 %v3665, %v3753
      %v3755 = vpop.f32.mrf.mxu0
      %v3756 = vadd.f32 %v3667, %v3755
      %3757 = vmatmul.bf16.gmra.mxu0 %v3349
      %v3758 = vpop.f32.mrf.mxu0
      %v3759 = vadd.f32 %v3670, %v3758
      %v3760 = vpop.f32.mrf.mxu0
      %v3761 = vadd.f32 %v3672, %v3760
      %3762 = vmatmul.bf16.gmra.mxu0 %v3353
      %v3763 = vpop.f32.mrf.mxu0
      %v3764 = vadd.f32 %v3675, %v3763
      %v3765 = vpop.f32.mrf.mxu0
      %v3766 = vadd.f32 %v3677, %v3765
      %3767 = vmatmul.bf16.gmra.mxu0 %v3357
      %v3768 = vpop.f32.mrf.mxu0
      %v3769 = vadd.f32 %v3680, %v3768
      %v3770 = vpop.f32.mrf.mxu0
      %v3771 = vadd.f32 %v3682, %v3770
      %3772 = vmatmul.bf16.gmra.mxu0 %v3361
      %v3773 = vpop.f32.mrf.mxu0
      %v3774 = vadd.f32 %v3685, %v3773
      %v3775 = vpop.f32.mrf.mxu0
      %v3776 = vadd.f32 %v3687, %v3775
      %3777 = vmatmul.bf16.gmra.mxu0 %v3365
      %v3778 = vpop.f32.mrf.mxu0
      %v3779 = vadd.f32 %v3690, %v3778
      %v3780 = vpop.f32.mrf.mxu0
      %v3781 = vadd.f32 %v3692, %v3780
      %3782 = vmatmul.bf16.gmra.mxu0 %v3369
      %v3783 = vpop.f32.mrf.mxu0
      %v3784 = vadd.f32 %v3695, %v3783
      %v3785 = vpop.f32.mrf.mxu0
      %v3786 = vadd.f32 %v3697, %v3785
      %3787 = vmatmul.bf16.gmra.mxu0 %v3373
      %v3788 = vpop.f32.mrf.mxu0
      %v3789 = vadd.f32 %v3700, %v3788
      %v3790 = vpop.f32.mrf.mxu0
      %v3791 = vadd.f32 %v3702, %v3790
      %3792 = vmatmul.bf16.gmra.mxu0 %v3377
      %v3793 = vpop.f32.mrf.mxu0
      %v3794 = vadd.f32 %v3705, %v3793
      %v3795 = vpop.f32.mrf.mxu0
      %v3796 = vadd.f32 %v3707, %v3795
      %3797 = vdwg.mxu0
      %v3798 = vld [vmem:[%s6] sm:$0xf]
      %v3799 = vld [vmem:[%s6 + $0x4] sm:$0xf]
      %v3800 = vld [vmem:[%s6 + $0x8] sm:$0xf]
      %v3801 = vld [vmem:[%s6 + $0xc] sm:$0xf]
      %v3802 = vld [vmem:[%s6 + $0x10] sm:$0xf]
      %v3803 = vld [vmem:[%s6 + $0x14] sm:$0xf]
      %v3804 = vld [vmem:[%s6 + $0x18] sm:$0xf]
      %v3805 = vld [vmem:[%s6 + $0x1c] sm:$0xf]
      %v3806 = vld [vmem:[%s6 + $0x20] sm:$0xf]
      %v3807 = vld [vmem:[%s6 + $0x24] sm:$0xf]
      %v3808 = vld [vmem:[%s6 + $0x28] sm:$0xf]
      %v3809 = vld [vmem:[%s6 + $0x2c] sm:$0xf]
      %v3810 = vld [vmem:[%s6 + $0x30] sm:$0xf]
      %v3811 = vld [vmem:[%s6 + $0x34] sm:$0xf]
      %v3812 = vld [vmem:[%s6 + $0x38] sm:$0xf]
      %v3813 = vld [vmem:[%s6 + $0x3c] sm:$0xf]
      %v3814 = vld [vmem:[%s6 + $0x40] sm:$0xf]
      %v3815 = vld [vmem:[%s6 + $0x44] sm:$0xf]
      %v3816 = vld [vmem:[%s6 + $0x48] sm:$0xf]
      %v3817 = vld [vmem:[%s6 + $0x4c] sm:$0xf]
      %v3818 = vld [vmem:[%s6 + $0x50] sm:$0xf]
      %v3819 = vld [vmem:[%s6 + $0x54] sm:$0xf]
      %v3820 = vld [vmem:[%s6 + $0x58] sm:$0xf]
      %v3821 = vld [vmem:[%s6 + $0x5c] sm:$0xf]
      %v3822 = vld [vmem:[%s6 + $0x60] sm:$0xf]
      %v3823 = vld [vmem:[%s6 + $0x64] sm:$0xf]
      %v3824 = vld [vmem:[%s6 + $0x68] sm:$0xf]
      %v3825 = vld [vmem:[%s6 + $0x6c] sm:$0xf]
      %v3826 = vld [vmem:[%s6 + $0x70] sm:$0xf]
      %v3827 = vld [vmem:[%s6 + $0x74] sm:$0xf]
      %v3828 = vld [vmem:[%s6 + $0x78] sm:$0xf]
      %v3829 = vld [vmem:[%s6 + $0x7c] sm:$0xf]
      %v3830 = vld [vmem:[%s6 + $0x80] sm:$0xf]
      %v3831 = vld [vmem:[%s6 + $0x84] sm:$0xf]
      %v3832 = vld [vmem:[%s6 + $0x88] sm:$0xf]
      %v3833 = vld [vmem:[%s6 + $0x8c] sm:$0xf]
      %v3834 = vld [vmem:[%s6 + $0x90] sm:$0xf]
      %v3835 = vld [vmem:[%s6 + $0x94] sm:$0xf]
      %v3836 = vld [vmem:[%s6 + $0x98] sm:$0xf]
      %v3837 = vld [vmem:[%s6 + $0x9c] sm:$0xf]
      %v3838 = vld [vmem:[%s7] sm:$0x1]
      %v3839 = vld [vmem:[%s8] sm:$0x1]
      %v3840 = vld [vmem:[%s9] sm:$0xff]
      %v3841 = vld [vmem:[%s9 + $0x8] sm:$0xff]
      %v3842 = vld [vmem:[%s9 + $0x10] sm:$0xff]
      %v3843 = vld [vmem:[%s9 + $0x18] sm:$0xff]
      %v3844 = vld [vmem:[%s9 + $0x20] sm:$0xff]
      %v3845 = vld [vmem:[%s9 + $0x28] sm:$0xff]
      %v3846 = vld [vmem:[%s9 + $0x30] sm:$0xff]
      %v3847 = vld [vmem:[%s9 + $0x38] sm:$0xff]
      %v3848 = vld [vmem:[%s9 + $0x40] sm:$0xff]
      %v3849 = vld [vmem:[%s9 + $0x48] sm:$0xff]
      %v3850 = vld [vmem:[%s9 + $0x50] sm:$0xff]
      %v3851 = vld [vmem:[%s9 + $0x58] sm:$0xff]
      %v3852 = vld [vmem:[%s9 + $0x60] sm:$0xff]
      %v3853 = vld [vmem:[%s9 + $0x68] sm:$0xff]
      %v3854 = vld [vmem:[%s9 + $0x70] sm:$0xff]
      %v3855 = vld [vmem:[%s9 + $0x78] sm:$0xff]
      %v3856 = vld [vmem:[%s9 + $0x80] sm:$0xff]
      %v3857 = vld [vmem:[%s9 + $0x88] sm:$0xff]
      %v3858 = vld [vmem:[%s9 + $0x90] sm:$0xff]
      %v3859 = vld [vmem:[%s9 + $0x98] sm:$0xff]
      %v3860 = vld [vmem:[%s9 + $0xa0] sm:$0xff]
      %v3861 = vld [vmem:[%s9 + $0xa8] sm:$0xff]
      %v3862 = vld [vmem:[%s9 + $0xb0] sm:$0xff]
      %v3863 = vld [vmem:[%s9 + $0xb8] sm:$0xff]
      %v3864 = vld [vmem:[%s9 + $0xc0] sm:$0xff]
      %v3865 = vld [vmem:[%s9 + $0xc8] sm:$0xff]
      %v3866 = vld [vmem:[%s9 + $0xd0] sm:$0xff]
      %v3867 = vld [vmem:[%s9 + $0xd8] sm:$0xff]
      %v3868 = vld [vmem:[%s9 + $0xe0] sm:$0xff]
      %v3869 = vld [vmem:[%s9 + $0xe8] sm:$0xff]
      %v3870 = vld [vmem:[%s9 + $0xf0] sm:$0xff]
      %v3871 = vld [vmem:[%s9 + $0xf8] sm:$0xff]
      %v3872 = vrot.slane %v3719, 6
      %v3873 = vrot.slane %v3721, 6
      %v3874 = vrot.slane %v3724, 6
      %v3875 = vrot.slane %v3726, 6
      %v3876 = vrot.slane %v3729, 6
      %v3877 = vrot.slane %v3731, 6
      %v3878 = vrot.slane %v3734, 6
      %v3879 = vrot.slane %v3736, 6
      %v3880 = vrot.slane %v3739, 6
      %v3881 = vrot.slane %v3741, 6
      %v3882 = vrot.slane %v3744, 6
      %v3883 = vrot.slane %v3746, 6
      %v3884 = vrot.slane %v3749, 6
      %v3885 = vrot.slane %v3751, 6
      %v3886 = vrot.slane %v3754, 6
      %v3887 = vrot.slane %v3756, 6
      %v3888 = vrot.slane %v3759, 6
      %v3889 = vrot.slane %v3761, 6
      %v3890 = vrot.slane %v3764, 6
      %v3891 = vrot.slane %v3766, 6
      %v3892 = vrot.slane %v3769, 6
      %v3893 = vrot.slane %v3771, 6
      %v3894 = vrot.slane %v3774, 6
      %v3895 = vrot.slane %v3776, 6
      %v3896 = vrot.slane %v3779, 6
      %v3897 = vrot.slane %v3781, 6
      %v3898 = vrot.slane %v3784, 6
      %v3899 = vrot.slane %v3786, 6
      %v3900 = vrot.slane %v3789, 6
      %v3901 = vrot.slane %v3791, 6
      %v3902 = vrot.slane %v3794, 6
      %v3903 = vrot.slane %v3796, 6
      %vm3904 = vcmp.lt.s32.totalorder %v854, 2
      %v3905 = vsel %vm3904, %v3902, %v3903
      %v3906 = vsel %vm3904, %v3901, %v3902
      %v3907 = vsel %vm3904, %v3900, %v3901
      %v3908 = vsel %vm3904, %v3899, %v3900
      %v3909 = vsel %vm3904, %v3898, %v3899
      %v3910 = vsel %vm3904, %v3897, %v3898
      %v3911 = vsel %vm3904, %v3896, %v3897
      %v3912 = vsel %vm3904, %v3895, %v3896
      %v3913 = vsel %vm3904, %v3894, %v3895
      %v3914 = vsel %vm3904, %v3893, %v3894
      %v3915 = vsel %vm3904, %v3892, %v3893
      %v3916 = vsel %vm3904, %v3891, %v3892
      %v3917 = vsel %vm3904, %v3890, %v3891
      %v3918 = vsel %vm3904, %v3889, %v3890
      %v3919 = vsel %vm3904, %v3888, %v3889
      %v3920 = vsel %vm3904, %v3887, %v3888
      %v3921 = vsel %vm3904, %v3886, %v3887
      %v3922 = vsel %vm3904, %v3885, %v3886
      %v3923 = vsel %vm3904, %v3884, %v3885
      %v3924 = vsel %vm3904, %v3883, %v3884
      %v3925 = vsel %vm3904, %v3882, %v3883
      %v3926 = vsel %vm3904, %v3881, %v3882
      %v3927 = vsel %vm3904, %v3880, %v3881
      %v3928 = vsel %vm3904, %v3879, %v3880
      %v3929 = vsel %vm3904, %v3878, %v3879
      %v3930 = vsel %vm3904, %v3877, %v3878
      %v3931 = vsel %vm3904, %v3876, %v3877
      %v3932 = vsel %vm3904, %v3875, %v3876
      %v3933 = vsel %vm3904, %v3874, %v3875
      %v3934 = vsel %vm3904, %v3873, %v3874
      %v3935 = vsel %vm3904, %v3872, %v3873
      %v3936 = vsel %vm3904, %v3903, %v3872
      %3938 = vset.pattern.permute.xlu0 0
      %3939 = vperm.xlu0 %3938, %v3840
      %v3940 = vpop.permute.xlu0 %3939
      %3943 = vset.pattern.permute.xlu0 0
      %3944 = vperm.xlu0 %3943, %v3841
      %v3945 = vpop.permute.xlu0 %3944
      %3948 = vset.pattern.permute.xlu0 0
      %3949 = vperm.xlu0 %3948, %v3842
      %v3950 = vpop.permute.xlu0 %3949
      %3953 = vset.pattern.permute.xlu0 0
      %3954 = vperm.xlu0 %3953, %v3843
      %v3955 = vpop.permute.xlu0 %3954
      %3958 = vset.pattern.permute.xlu0 0
      %3959 = vperm.xlu0 %3958, %v3844
      %v3960 = vpop.permute.xlu0 %3959
      %3963 = vset.pattern.permute.xlu0 0
      %3964 = vperm.xlu0 %3963, %v3845
      %v3965 = vpop.permute.xlu0 %3964
      %3968 = vset.pattern.permute.xlu0 0
      %3969 = vperm.xlu0 %3968, %v3846
      %v3970 = vpop.permute.xlu0 %3969
      %3973 = vset.pattern.permute.xlu0 0
      %3974 = vperm.xlu0 %3973, %v3847
      %v3975 = vpop.permute.xlu0 %3974
      %3978 = vset.pattern.permute.xlu0 0
      %3979 = vperm.xlu0 %3978, %v3848
      %v3980 = vpop.permute.xlu0 %3979
      %3983 = vset.pattern.permute.xlu0 0
      %3984 = vperm.xlu0 %3983, %v3849
      %v3985 = vpop.permute.xlu0 %3984
      %3988 = vset.pattern.permute.xlu0 0
      %3989 = vperm.xlu0 %3988, %v3850
      %v3990 = vpop.permute.xlu0 %3989
      %3993 = vset.pattern.permute.xlu0 0
      %3994 = vperm.xlu0 %3993, %v3851
      %v3995 = vpop.permute.xlu0 %3994
      %3998 = vset.pattern.permute.xlu0 0
      %3999 = vperm.xlu0 %3998, %v3852
      %v4000 = vpop.permute.xlu0 %3999
      %4003 = vset.pattern.permute.xlu0 0
      %4004 = vperm.xlu0 %4003, %v3853
      %v4005 = vpop.permute.xlu0 %4004
      %4008 = vset.pattern.permute.xlu0 0
      %4009 = vperm.xlu0 %4008, %v3854
      %v4010 = vpop.permute.xlu0 %4009
      %4013 = vset.pattern.permute.xlu0 0
      %4014 = vperm.xlu0 %4013, %v3855
      %v4015 = vpop.permute.xlu0 %4014
      %4018 = vset.pattern.permute.xlu0 0
      %4019 = vperm.xlu0 %4018, %v3856
      %v4020 = vpop.permute.xlu0 %4019
      %4023 = vset.pattern.permute.xlu0 0
      %4024 = vperm.xlu0 %4023, %v3857
      %v4025 = vpop.permute.xlu0 %4024
      %4028 = vset.pattern.permute.xlu0 0
      %4029 = vperm.xlu0 %4028, %v3858
      %v4030 = vpop.permute.xlu0 %4029
      %4033 = vset.pattern.permute.xlu0 0
      %4034 = vperm.xlu0 %4033, %v3859
      %v4035 = vpop.permute.xlu0 %4034
      %4038 = vset.pattern.permute.xlu0 0
      %4039 = vperm.xlu0 %4038, %v3860
      %v4040 = vpop.permute.xlu0 %4039
      %4043 = vset.pattern.permute.xlu0 0
      %4044 = vperm.xlu0 %4043, %v3861
      %v4045 = vpop.permute.xlu0 %4044
      %4048 = vset.pattern.permute.xlu0 0
      %4049 = vperm.xlu0 %4048, %v3862
      %v4050 = vpop.permute.xlu0 %4049
      %4053 = vset.pattern.permute.xlu0 0
      %4054 = vperm.xlu0 %4053, %v3863
      %v4055 = vpop.permute.xlu0 %4054
      %4058 = vset.pattern.permute.xlu0 0
      %4059 = vperm.xlu0 %4058, %v3864
      %v4060 = vpop.permute.xlu0 %4059
      %4063 = vset.pattern.permute.xlu0 0
      %4064 = vperm.xlu0 %4063, %v3865
      %v4065 = vpop.permute.xlu0 %4064
      %4068 = vset.pattern.permute.xlu0 0
      %4069 = vperm.xlu0 %4068, %v3866
      %v4070 = vpop.permute.xlu0 %4069
      %4073 = vset.pattern.permute.xlu0 0
      %4074 = vperm.xlu0 %4073, %v3867
      %v4075 = vpop.permute.xlu0 %4074
      %4078 = vset.pattern.permute.xlu0 0
      %4079 = vperm.xlu0 %4078, %v3868
      %v4080 = vpop.permute.xlu0 %4079
      %4083 = vset.pattern.permute.xlu0 0
      %4084 = vperm.xlu0 %4083, %v3869
      %v4085 = vpop.permute.xlu0 %4084
      %4088 = vset.pattern.permute.xlu0 0
      %4089 = vperm.xlu0 %4088, %v3870
      %v4090 = vpop.permute.xlu0 %4089
      %4093 = vset.pattern.permute.xlu0 0
      %4094 = vperm.xlu0 %4093, %v3871
      %v4095 = vpop.permute.xlu0 %4094
      %v4097 = vmul.f32 %v3936, %v3940
      %v4098 = vmul.f32 %v3935, %v3945
      %v4099 = vmul.f32 %v3934, %v3950
      %v4100 = vmul.f32 %v3933, %v3955
      %v4101 = vmul.f32 %v3932, %v3960
      %v4102 = vmul.f32 %v3931, %v3965
      %v4103 = vmul.f32 %v3930, %v3970
      %v4104 = vmul.f32 %v3929, %v3975
      %v4105 = vmul.f32 %v3928, %v3980
      %v4106 = vmul.f32 %v3927, %v3985
      %v4107 = vmul.f32 %v3926, %v3990
      %v4108 = vmul.f32 %v3925, %v3995
      %v4109 = vmul.f32 %v3924, %v4000
      %v4110 = vmul.f32 %v3923, %v4005
      %v4111 = vmul.f32 %v3922, %v4010
      %v4112 = vmul.f32 %v3921, %v4015
      %v4113 = vmul.f32 %v3920, %v4020
      %v4114 = vmul.f32 %v3919, %v4025
      %v4115 = vmul.f32 %v3918, %v4030
      %v4116 = vmul.f32 %v3917, %v4035
      %v4117 = vmul.f32 %v3916, %v4040
      %v4118 = vmul.f32 %v3915, %v4045
      %v4119 = vmul.f32 %v3914, %v4050
      %v4120 = vmul.f32 %v3913, %v4055
      %v4121 = vmul.f32 %v3912, %v4060
      %v4122 = vmul.f32 %v3911, %v4065
      %v4123 = vmul.f32 %v3910, %v4070
      %v4124 = vmul.f32 %v3909, %v4075
      %v4125 = vmul.f32 %v3908, %v4080
      %v4126 = vmul.f32 %v3907, %v4085
      %v4127 = vmul.f32 %v3906, %v4090
      %v4128 = vmul.f32 %v3905, %v4095
      %v4129 = vpack.c.bf16 %v4097, %v4097
      %v4130 = vpack.c.bf16 %v4098, %v4098
      %v4131 = vpack.c.bf16 %v4099, %v4099
      %v4132 = vpack.c.bf16 %v4100, %v4100
      %v4133 = vpack.c.bf16 %v4101, %v4101
      %v4134 = vpack.c.bf16 %v4102, %v4102
      %v4135 = vpack.c.bf16 %v4103, %v4103
      %v4136 = vpack.c.bf16 %v4104, %v4104
      %v4137 = vpack.c.bf16 %v4105, %v4105
      %v4138 = vpack.c.bf16 %v4106, %v4106
      %v4139 = vpack.c.bf16 %v4107, %v4107
      %v4140 = vpack.c.bf16 %v4108, %v4108
      %v4141 = vpack.c.bf16 %v4109, %v4109
      %v4142 = vpack.c.bf16 %v4110, %v4110
      %v4143 = vpack.c.bf16 %v4111, %v4111
      %v4144 = vpack.c.bf16 %v4112, %v4112
      %v4145 = vpack.c.bf16 %v4113, %v4113
      %v4146 = vpack.c.bf16 %v4114, %v4114
      %v4147 = vpack.c.bf16 %v4115, %v4115
      %v4148 = vpack.c.bf16 %v4116, %v4116
      %v4149 = vpack.c.bf16 %v4117, %v4117
      %v4150 = vpack.c.bf16 %v4118, %v4118
      %v4151 = vpack.c.bf16 %v4119, %v4119
      %v4152 = vpack.c.bf16 %v4120, %v4120
      %v4153 = vpack.c.bf16 %v4121, %v4121
      %v4154 = vpack.c.bf16 %v4122, %v4122
      %v4155 = vpack.c.bf16 %v4123, %v4123
      %v4156 = vpack.c.bf16 %v4124, %v4124
      %v4157 = vpack.c.bf16 %v4125, %v4125
      %v4158 = vpack.c.bf16 %v4126, %v4126
      %v4159 = vpack.c.bf16 %v4127, %v4127
      %v4160 = vpack.c.bf16 %v4128, %v4128
      %v4161 = vrot.slane %v3719, 7
      %v4162 = vrot.slane %v3721, 7
      %v4163 = vrot.slane %v3724, 7
      %v4164 = vrot.slane %v3726, 7
      %v4165 = vrot.slane %v3729, 7
      %v4166 = vrot.slane %v3731, 7
      %v4167 = vrot.slane %v3734, 7
      %v4168 = vrot.slane %v3736, 7
      %v4169 = vrot.slane %v3739, 7
      %v4170 = vrot.slane %v3741, 7
      %v4171 = vrot.slane %v3744, 7
      %v4172 = vrot.slane %v3746, 7
      %v4173 = vrot.slane %v3749, 7
      %v4174 = vrot.slane %v3751, 7
      %v4175 = vrot.slane %v3754, 7
      %v4176 = vrot.slane %v3756, 7
      %v4177 = vrot.slane %v3759, 7
      %v4178 = vrot.slane %v3761, 7
      %v4179 = vrot.slane %v3764, 7
      %v4180 = vrot.slane %v3766, 7
      %v4181 = vrot.slane %v3769, 7
      %v4182 = vrot.slane %v3771, 7
      %v4183 = vrot.slane %v3774, 7
      %v4184 = vrot.slane %v3776, 7
      %v4185 = vrot.slane %v3779, 7
      %v4186 = vrot.slane %v3781, 7
      %v4187 = vrot.slane %v3784, 7
      %v4188 = vrot.slane %v3786, 7
      %v4189 = vrot.slane %v3789, 7
      %v4190 = vrot.slane %v3791, 7
      %v4191 = vrot.slane %v3794, 7
      %v4192 = vrot.slane %v3796, 7
      %v4193 = vsel %vm855, %v4191, %v4192
      %v4194 = vsel %vm855, %v4190, %v4191
      %v4195 = vsel %vm855, %v4189, %v4190
      %v4196 = vsel %vm855, %v4188, %v4189
      %v4197 = vsel %vm855, %v4187, %v4188
      %v4198 = vsel %vm855, %v4186, %v4187
      %v4199 = vsel %vm855, %v4185, %v4186
      %v4200 = vsel %vm855, %v4184, %v4185
      %v4201 = vsel %vm855, %v4183, %v4184
      %v4202 = vsel %vm855, %v4182, %v4183
      %v4203 = vsel %vm855, %v4181, %v4182
      %v4204 = vsel %vm855, %v4180, %v4181
      %v4205 = vsel %vm855, %v4179, %v4180
      %v4206 = vsel %vm855, %v4178, %v4179
      %v4207 = vsel %vm855, %v4177, %v4178
      %v4208 = vsel %vm855, %v4176, %v4177
      %v4209 = vsel %vm855, %v4175, %v4176
      %v4210 = vsel %vm855, %v4174, %v4175
      %v4211 = vsel %vm855, %v4173, %v4174
      %v4212 = vsel %vm855, %v4172, %v4173
      %v4213 = vsel %vm855, %v4171, %v4172
      %v4214 = vsel %vm855, %v4170, %v4171
      %v4215 = vsel %vm855, %v4169, %v4170
      %v4216 = vsel %vm855, %v4168, %v4169
      %v4217 = vsel %vm855, %v4167, %v4168
      %v4218 = vsel %vm855, %v4166, %v4167
      %v4219 = vsel %vm855, %v4165, %v4166
      %v4220 = vsel %vm855, %v4164, %v4165
      %v4221 = vsel %vm855, %v4163, %v4164
      %v4222 = vsel %vm855, %v4162, %v4163
      %v4223 = vsel %vm855, %v4161, %v4162
      %v4224 = vsel %vm855, %v4192, %v4161
      %4225 = vset.pattern.permute.xlu0 1
      %4226 = vperm.xlu0 %4225, %v3840
      %v4227 = vpop.permute.xlu0 %4226
      %4229 = vset.pattern.permute.xlu0 1
      %4230 = vperm.xlu0 %4229, %v3841
      %v4231 = vpop.permute.xlu0 %4230
      %4233 = vset.pattern.permute.xlu0 1
      %4234 = vperm.xlu0 %4233, %v3842
      %v4235 = vpop.permute.xlu0 %4234
      %4237 = vset.pattern.permute.xlu0 1
      %4238 = vperm.xlu0 %4237, %v3843
      %v4239 = vpop.permute.xlu0 %4238
      %4241 = vset.pattern.permute.xlu0 1
      %4242 = vperm.xlu0 %4241, %v3844
      %v4243 = vpop.permute.xlu0 %4242
      %4245 = vset.pattern.permute.xlu0 1
      %4246 = vperm.xlu0 %4245, %v3845
      %v4247 = vpop.permute.xlu0 %4246
      %4249 = vset.pattern.permute.xlu0 1
      %4250 = vperm.xlu0 %4249, %v3846
      %v4251 = vpop.permute.xlu0 %4250
      %4253 = vset.pattern.permute.xlu0 1
      %4254 = vperm.xlu0 %4253, %v3847
      %v4255 = vpop.permute.xlu0 %4254
      %4257 = vset.pattern.permute.xlu0 1
      %4258 = vperm.xlu0 %4257, %v3848
      %v4259 = vpop.permute.xlu0 %4258
      %4261 = vset.pattern.permute.xlu0 1
      %4262 = vperm.xlu0 %4261, %v3849
      %v4263 = vpop.permute.xlu0 %4262
      %4265 = vset.pattern.permute.xlu0 1
      %4266 = vperm.xlu0 %4265, %v3850
      %v4267 = vpop.permute.xlu0 %4266
      %4269 = vset.pattern.permute.xlu0 1
      %4270 = vperm.xlu0 %4269, %v3851
      %v4271 = vpop.permute.xlu0 %4270
      %4273 = vset.pattern.permute.xlu0 1
      %4274 = vperm.xlu0 %4273, %v3852
      %v4275 = vpop.permute.xlu0 %4274
      %4277 = vset.pattern.permute.xlu0 1
      %4278 = vperm.xlu0 %4277, %v3853
      %v4279 = vpop.permute.xlu0 %4278
      %4281 = vset.pattern.permute.xlu0 1
      %4282 = vperm.xlu0 %4281, %v3854
      %v4283 = vpop.permute.xlu0 %4282
      %4285 = vset.pattern.permute.xlu0 1
      %4286 = vperm.xlu0 %4285, %v3855
      %v4287 = vpop.permute.xlu0 %4286
      %4289 = vset.pattern.permute.xlu0 1
      %4290 = vperm.xlu0 %4289, %v3856
      %v4291 = vpop.permute.xlu0 %4290
      %4293 = vset.pattern.permute.xlu0 1
      %4294 = vperm.xlu0 %4293, %v3857
      %v4295 = vpop.permute.xlu0 %4294
      %4297 = vset.pattern.permute.xlu0 1
      %4298 = vperm.xlu0 %4297, %v3858
      %v4299 = vpop.permute.xlu0 %4298
      %4301 = vset.pattern.permute.xlu0 1
      %4302 = vperm.xlu0 %4301, %v3859
      %v4303 = vpop.permute.xlu0 %4302
      %4305 = vset.pattern.permute.xlu0 1
      %4306 = vperm.xlu0 %4305, %v3860
      %v4307 = vpop.permute.xlu0 %4306
      %4309 = vset.pattern.permute.xlu0 1
      %4310 = vperm.xlu0 %4309, %v3861
      %v4311 = vpop.permute.xlu0 %4310
      %4313 = vset.pattern.permute.xlu0 1
      %4314 = vperm.xlu0 %4313, %v3862
      %v4315 = vpop.permute.xlu0 %4314
      %4317 = vset.pattern.permute.xlu0 1
      %4318 = vperm.xlu0 %4317, %v3863
      %v4319 = vpop.permute.xlu0 %4318
      %4321 = vset.pattern.permute.xlu0 1
      %4322 = vperm.xlu0 %4321, %v3864
      %v4323 = vpop.permute.xlu0 %4322
      %4325 = vset.pattern.permute.xlu0 1
      %4326 = vperm.xlu0 %4325, %v3865
      %v4327 = vpop.permute.xlu0 %4326
      %4329 = vset.pattern.permute.xlu0 1
      %4330 = vperm.xlu0 %4329, %v3866
      %v4331 = vpop.permute.xlu0 %4330
      %4333 = vset.pattern.permute.xlu0 1
      %4334 = vperm.xlu0 %4333, %v3867
      %v4335 = vpop.permute.xlu0 %4334
      %4337 = vset.pattern.permute.xlu0 1
      %4338 = vperm.xlu0 %4337, %v3868
      %v4339 = vpop.permute.xlu0 %4338
      %4341 = vset.pattern.permute.xlu0 1
      %4342 = vperm.xlu0 %4341, %v3869
      %v4343 = vpop.permute.xlu0 %4342
      %4345 = vset.pattern.permute.xlu0 1
      %4346 = vperm.xlu0 %4345, %v3870
      %v4347 = vpop.permute.xlu0 %4346
      %4349 = vset.pattern.permute.xlu0 1
      %4350 = vperm.xlu0 %4349, %v3871
      %v4351 = vpop.permute.xlu0 %4350
      %v4353 = vmul.f32 %v4224, %v4227
      %v4354 = vmul.f32 %v4223, %v4231
      %v4355 = vmul.f32 %v4222, %v4235
      %v4356 = vmul.f32 %v4221, %v4239
      %v4357 = vmul.f32 %v4220, %v4243
      %v4358 = vmul.f32 %v4219, %v4247
      %v4359 = vmul.f32 %v4218, %v4251
      %v4360 = vmul.f32 %v4217, %v4255
      %v4361 = vmul.f32 %v4216, %v4259
      %v4362 = vmul.f32 %v4215, %v4263
      %v4363 = vmul.f32 %v4214, %v4267
      %v4364 = vmul.f32 %v4213, %v4271
      %v4365 = vmul.f32 %v4212, %v4275
      %v4366 = vmul.f32 %v4211, %v4279
      %v4367 = vmul.f32 %v4210, %v4283
      %v4368 = vmul.f32 %v4209, %v4287
      %v4369 = vmul.f32 %v4208, %v4291
      %v4370 = vmul.f32 %v4207, %v4295
      %v4371 = vmul.f32 %v4206, %v4299
      %v4372 = vmul.f32 %v4205, %v4303
      %v4373 = vmul.f32 %v4204, %v4307
      %v4374 = vmul.f32 %v4203, %v4311
      %v4375 = vmul.f32 %v4202, %v4315
      %v4376 = vmul.f32 %v4201, %v4319
      %v4377 = vmul.f32 %v4200, %v4323
      %v4378 = vmul.f32 %v4199, %v4327
      %v4379 = vmul.f32 %v4198, %v4331
      %v4380 = vmul.f32 %v4197, %v4335
      %v4381 = vmul.f32 %v4196, %v4339
      %v4382 = vmul.f32 %v4195, %v4343
      %v4383 = vmul.f32 %v4194, %v4347
      %v4384 = vmul.f32 %v4193, %v4351
      %v4385 = vpack.c.bf16 %v4353, %v4353
      %v4386 = vpack.c.bf16 %v4354, %v4354
      %v4387 = vpack.c.bf16 %v4355, %v4355
      %v4388 = vpack.c.bf16 %v4356, %v4356
      %v4389 = vpack.c.bf16 %v4357, %v4357
      %v4390 = vpack.c.bf16 %v4358, %v4358
      %v4391 = vpack.c.bf16 %v4359, %v4359
      %v4392 = vpack.c.bf16 %v4360, %v4360
      %v4393 = vpack.c.bf16 %v4361, %v4361
      %v4394 = vpack.c.bf16 %v4362, %v4362
      %v4395 = vpack.c.bf16 %v4363, %v4363
      %v4396 = vpack.c.bf16 %v4364, %v4364
      %v4397 = vpack.c.bf16 %v4365, %v4365
      %v4398 = vpack.c.bf16 %v4366, %v4366
      %v4399 = vpack.c.bf16 %v4367, %v4367
      %v4400 = vpack.c.bf16 %v4368, %v4368
      %v4401 = vpack.c.bf16 %v4369, %v4369
      %v4402 = vpack.c.bf16 %v4370, %v4370
      %v4403 = vpack.c.bf16 %v4371, %v4371
      %v4404 = vpack.c.bf16 %v4372, %v4372
      %v4405 = vpack.c.bf16 %v4373, %v4373
      %v4406 = vpack.c.bf16 %v4374, %v4374
      %v4407 = vpack.c.bf16 %v4375, %v4375
      %v4408 = vpack.c.bf16 %v4376, %v4376
      %v4409 = vpack.c.bf16 %v4377, %v4377
      %v4410 = vpack.c.bf16 %v4378, %v4378
      %v4411 = vpack.c.bf16 %v4379, %v4379
      %v4412 = vpack.c.bf16 %v4380, %v4380
      %v4413 = vpack.c.bf16 %v4381, %v4381
      %v4414 = vpack.c.bf16 %v4382, %v4382
      %v4415 = vpack.c.bf16 %v4383, %v4383
      %v4416 = vpack.c.bf16 %v4384, %v4384
      %v4417 = vpack.c.bf16 %v3719, %v3719
      %v4418 = vpack.c.bf16 %v3721, %v3721
      %v4419 = vpack.c.bf16 %v3724, %v3724
      %v4420 = vpack.c.bf16 %v3726, %v3726
      %v4421 = vpack.c.bf16 %v3729, %v3729
      %v4422 = vpack.c.bf16 %v3731, %v3731
      %v4423 = vpack.c.bf16 %v3734, %v3734
      %v4424 = vpack.c.bf16 %v3736, %v3736
      %v4425 = vpack.c.bf16 %v3739, %v3739
      %v4426 = vpack.c.bf16 %v3741, %v3741
      %v4427 = vpack.c.bf16 %v3744, %v3744
      %v4428 = vpack.c.bf16 %v3746, %v3746
      %v4429 = vpack.c.bf16 %v3749, %v3749
      %v4430 = vpack.c.bf16 %v3751, %v3751
      %v4431 = vpack.c.bf16 %v3754, %v3754
      %v4432 = vpack.c.bf16 %v3756, %v3756
      %v4433 = vpack.c.bf16 %v3759, %v3759
      %v4434 = vpack.c.bf16 %v3761, %v3761
      %v4435 = vpack.c.bf16 %v3764, %v3764
      %v4436 = vpack.c.bf16 %v3766, %v3766
      %v4437 = vpack.c.bf16 %v3769, %v3769
      %v4438 = vpack.c.bf16 %v3771, %v3771
      %v4439 = vpack.c.bf16 %v3774, %v3774
      %v4440 = vpack.c.bf16 %v3776, %v3776
      %v4441 = vpack.c.bf16 %v3779, %v3779
      %v4442 = vpack.c.bf16 %v3781, %v3781
      %v4443 = vpack.c.bf16 %v3784, %v3784
      %v4444 = vpack.c.bf16 %v3786, %v3786
      %v4445 = vpack.c.bf16 %v3789, %v3789
      %v4446 = vpack.c.bf16 %v3791, %v3791
      %v4447 = vpack.c.bf16 %v3794, %v3794
      %v4448 = vpack.c.bf16 %v3796, %v3796
      %v4449 = vrot.slane %v3719, 1
      %v4450 = vrot.slane %v3721, 1
      %v4451 = vrot.slane %v3724, 1
      %v4452 = vrot.slane %v3726, 1
      %v4453 = vrot.slane %v3729, 1
      %v4454 = vrot.slane %v3731, 1
      %v4455 = vrot.slane %v3734, 1
      %v4456 = vrot.slane %v3736, 1
      %v4457 = vrot.slane %v3739, 1
      %v4458 = vrot.slane %v3741, 1
      %v4459 = vrot.slane %v3744, 1
      %v4460 = vrot.slane %v3746, 1
      %v4461 = vrot.slane %v3749, 1
      %v4462 = vrot.slane %v3751, 1
      %v4463 = vrot.slane %v3754, 1
      %v4464 = vrot.slane %v3756, 1
      %v4465 = vrot.slane %v3759, 1
      %v4466 = vrot.slane %v3761, 1
      %v4467 = vrot.slane %v3764, 1
      %v4468 = vrot.slane %v3766, 1
      %v4469 = vrot.slane %v3769, 1
      %v4470 = vrot.slane %v3771, 1
      %v4471 = vrot.slane %v3774, 1
      %v4472 = vrot.slane %v3776, 1
      %v4473 = vrot.slane %v3779, 1
      %v4474 = vrot.slane %v3781, 1
      %v4475 = vrot.slane %v3784, 1
      %v4476 = vrot.slane %v3786, 1
      %v4477 = vrot.slane %v3789, 1
      %v4478 = vrot.slane %v3791, 1
      %v4479 = vrot.slane %v3794, 1
      %v4480 = vrot.slane %v3796, 1
      %v4481 = vsel %vm1176, %v4479, %v4480
      %v4482 = vsel %vm1176, %v4478, %v4479
      %v4483 = vsel %vm1176, %v4477, %v4478
      %v4484 = vsel %vm1176, %v4476, %v4477
      %v4485 = vsel %vm1176, %v4475, %v4476
      %v4486 = vsel %vm1176, %v4474, %v4475
      %v4487 = vsel %vm1176, %v4473, %v4474
      %v4488 = vsel %vm1176, %v4472, %v4473
      %v4489 = vsel %vm1176, %v4471, %v4472
      %v4490 = vsel %vm1176, %v4470, %v4471
      %v4491 = vsel %vm1176, %v4469, %v4470
      %v4492 = vsel %vm1176, %v4468, %v4469
      %v4493 = vsel %vm1176, %v4467, %v4468
      %v4494 = vsel %vm1176, %v4466, %v4467
      %v4495 = vsel %vm1176, %v4465, %v4466
      %v4496 = vsel %vm1176, %v4464, %v4465
      %v4497 = vsel %vm1176, %v4463, %v4464
      %v4498 = vsel %vm1176, %v4462, %v4463
      %v4499 = vsel %vm1176, %v4461, %v4462
      %v4500 = vsel %vm1176, %v4460, %v4461
      %v4501 = vsel %vm1176, %v4459, %v4460
      %v4502 = vsel %vm1176, %v4458, %v4459
      %v4503 = vsel %vm1176, %v4457, %v4458
      %v4504 = vsel %vm1176, %v4456, %v4457
      %v4505 = vsel %vm1176, %v4455, %v4456
      %v4506 = vsel %vm1176, %v4454, %v4455
      %v4507 = vsel %vm1176, %v4453, %v4454
      %v4508 = vsel %vm1176, %v4452, %v4453
      %v4509 = vsel %vm1176, %v4451, %v4452
      %v4510 = vsel %vm1176, %v4450, %v4451
      %v4511 = vsel %vm1176, %v4449, %v4450
      %v4512 = vsel %vm1176, %v4480, %v4449
      %4513 = vset.pattern.permute.xlu0 3
      %4514 = vperm.xlu0 %4513, %v3840
      %v4515 = vpop.permute.xlu0 %4514
      %4517 = vset.pattern.permute.xlu0 3
      %4518 = vperm.xlu0 %4517, %v3841
      %v4519 = vpop.permute.xlu0 %4518
      %4521 = vset.pattern.permute.xlu0 3
      %4522 = vperm.xlu0 %4521, %v3842
      %v4523 = vpop.permute.xlu0 %4522
      %4525 = vset.pattern.permute.xlu0 3
      %4526 = vperm.xlu0 %4525, %v3843
      %v4527 = vpop.permute.xlu0 %4526
      %4529 = vset.pattern.permute.xlu0 3
      %4530 = vperm.xlu0 %4529, %v3844
      %v4531 = vpop.permute.xlu0 %4530
      %4533 = vset.pattern.permute.xlu0 3
      %4534 = vperm.xlu0 %4533, %v3845
      %v4535 = vpop.permute.xlu0 %4534
      %4537 = vset.pattern.permute.xlu0 3
      %4538 = vperm.xlu0 %4537, %v3846
      %v4539 = vpop.permute.xlu0 %4538
      %4541 = vset.pattern.permute.xlu0 3
      %4542 = vperm.xlu0 %4541, %v3847
      %v4543 = vpop.permute.xlu0 %4542
      %4545 = vset.pattern.permute.xlu0 3
      %4546 = vperm.xlu0 %4545, %v3848
      %v4547 = vpop.permute.xlu0 %4546
      %4549 = vset.pattern.permute.xlu0 3
      %4550 = vperm.xlu0 %4549, %v3849
      %v4551 = vpop.permute.xlu0 %4550
      %4553 = vset.pattern.permute.xlu0 3
      %4554 = vperm.xlu0 %4553, %v3850
      %v4555 = vpop.permute.xlu0 %4554
      %4557 = vset.pattern.permute.xlu0 3
      %4558 = vperm.xlu0 %4557, %v3851
      %v4559 = vpop.permute.xlu0 %4558
      %4561 = vset.pattern.permute.xlu0 3
      %4562 = vperm.xlu0 %4561, %v3852
      %v4563 = vpop.permute.xlu0 %4562
      %4565 = vset.pattern.permute.xlu0 3
      %4566 = vperm.xlu0 %4565, %v3853
      %v4567 = vpop.permute.xlu0 %4566
      %4569 = vset.pattern.permute.xlu0 3
      %4570 = vperm.xlu0 %4569, %v3854
      %v4571 = vpop.permute.xlu0 %4570
      %4573 = vset.pattern.permute.xlu0 3
      %4574 = vperm.xlu0 %4573, %v3855
      %v4575 = vpop.permute.xlu0 %4574
      %4577 = vset.pattern.permute.xlu0 3
      %4578 = vperm.xlu0 %4577, %v3856
      %v4579 = vpop.permute.xlu0 %4578
      %4581 = vset.pattern.permute.xlu0 3
      %4582 = vperm.xlu0 %4581, %v3857
      %v4583 = vpop.permute.xlu0 %4582
      %4585 = vset.pattern.permute.xlu0 3
      %4586 = vperm.xlu0 %4585, %v3858
      %v4587 = vpop.permute.xlu0 %4586
      %4589 = vset.pattern.permute.xlu0 3
      %4590 = vperm.xlu0 %4589, %v3859
      %v4591 = vpop.permute.xlu0 %4590
      %4593 = vset.pattern.permute.xlu0 3
      %4594 = vperm.xlu0 %4593, %v3860
      %v4595 = vpop.permute.xlu0 %4594
      %4597 = vset.pattern.permute.xlu0 3
      %4598 = vperm.xlu0 %4597, %v3861
      %v4599 = vpop.permute.xlu0 %4598
      %4601 = vset.pattern.permute.xlu0 3
      %4602 = vperm.xlu0 %4601, %v3862
      %v4603 = vpop.permute.xlu0 %4602
      %4605 = vset.pattern.permute.xlu0 3
      %4606 = vperm.xlu0 %4605, %v3863
      %v4607 = vpop.permute.xlu0 %4606
      %4609 = vset.pattern.permute.xlu0 3
      %4610 = vperm.xlu0 %4609, %v3864
      %v4611 = vpop.permute.xlu0 %4610
      %4613 = vset.pattern.permute.xlu0 3
      %4614 = vperm.xlu0 %4613, %v3865
      %v4615 = vpop.permute.xlu0 %4614
      %4617 = vset.pattern.permute.xlu0 3
      %4618 = vperm.xlu0 %4617, %v3866
      %v4619 = vpop.permute.xlu0 %4618
      %4621 = vset.pattern.permute.xlu0 3
      %4622 = vperm.xlu0 %4621, %v3867
      %v4623 = vpop.permute.xlu0 %4622
      %4625 = vset.pattern.permute.xlu0 3
      %4626 = vperm.xlu0 %4625, %v3868
      %v4627 = vpop.permute.xlu0 %4626
      %4629 = vset.pattern.permute.xlu0 3
      %4630 = vperm.xlu0 %4629, %v3869
      %v4631 = vpop.permute.xlu0 %4630
      %4633 = vset.pattern.permute.xlu0 3
      %4634 = vperm.xlu0 %4633, %v3870
      %v4635 = vpop.permute.xlu0 %4634
      %4637 = vset.pattern.permute.xlu0 3
      %4638 = vperm.xlu0 %4637, %v3871
      %v4639 = vpop.permute.xlu0 %4638
      %v4641 = vmul.f32 %v4511, %v4515
      %v4642 = vmul.f32 %v4510, %v4519
      %v4643 = vmul.f32 %v4509, %v4523
      %v4644 = vmul.f32 %v4508, %v4527
      %v4645 = vmul.f32 %v4507, %v4531
      %v4646 = vmul.f32 %v4506, %v4535
      %v4647 = vmul.f32 %v4505, %v4539
      %v4648 = vmul.f32 %v4504, %v4543
      %v4649 = vmul.f32 %v4503, %v4547
      %v4650 = vmul.f32 %v4502, %v4551
      %v4651 = vmul.f32 %v4501, %v4555
      %v4652 = vmul.f32 %v4500, %v4559
      %v4653 = vmul.f32 %v4499, %v4563
      %v4654 = vmul.f32 %v4498, %v4567
      %v4655 = vmul.f32 %v4497, %v4571
      %v4656 = vmul.f32 %v4496, %v4575
      %v4657 = vmul.f32 %v4495, %v4579
      %v4658 = vmul.f32 %v4494, %v4583
      %v4659 = vmul.f32 %v4493, %v4587
      %v4660 = vmul.f32 %v4492, %v4591
      %v4661 = vmul.f32 %v4491, %v4595
      %v4662 = vmul.f32 %v4490, %v4599
      %v4663 = vmul.f32 %v4489, %v4603
      %v4664 = vmul.f32 %v4488, %v4607
      %v4665 = vmul.f32 %v4487, %v4611
      %v4666 = vmul.f32 %v4486, %v4615
      %v4667 = vmul.f32 %v4485, %v4619
      %v4668 = vmul.f32 %v4484, %v4623
      %v4669 = vmul.f32 %v4483, %v4627
      %v4670 = vmul.f32 %v4482, %v4631
      %v4671 = vmul.f32 %v4481, %v4635
      %v4672 = vmul.f32 %v4512, %v4639
      %v4673 = vpack.c.bf16 %v4641, %v4641
      %v4674 = vpack.c.bf16 %v4642, %v4642
      %v4675 = vpack.c.bf16 %v4643, %v4643
      %v4676 = vpack.c.bf16 %v4644, %v4644
      %v4677 = vpack.c.bf16 %v4645, %v4645
      %v4678 = vpack.c.bf16 %v4646, %v4646
      %v4679 = vpack.c.bf16 %v4647, %v4647
      %v4680 = vpack.c.bf16 %v4648, %v4648
      %v4681 = vpack.c.bf16 %v4649, %v4649
      %v4682 = vpack.c.bf16 %v4650, %v4650
      %v4683 = vpack.c.bf16 %v4651, %v4651
      %v4684 = vpack.c.bf16 %v4652, %v4652
      %v4685 = vpack.c.bf16 %v4653, %v4653
      %v4686 = vpack.c.bf16 %v4654, %v4654
      %v4687 = vpack.c.bf16 %v4655, %v4655
      %v4688 = vpack.c.bf16 %v4656, %v4656
      %v4689 = vpack.c.bf16 %v4657, %v4657
      %v4690 = vpack.c.bf16 %v4658, %v4658
      %v4691 = vpack.c.bf16 %v4659, %v4659
      %v4692 = vpack.c.bf16 %v4660, %v4660
      %v4693 = vpack.c.bf16 %v4661, %v4661
      %v4694 = vpack.c.bf16 %v4662, %v4662
      %v4695 = vpack.c.bf16 %v4663, %v4663
      %v4696 = vpack.c.bf16 %v4664, %v4664
      %v4697 = vpack.c.bf16 %v4665, %v4665
      %v4698 = vpack.c.bf16 %v4666, %v4666
      %v4699 = vpack.c.bf16 %v4667, %v4667
      %v4700 = vpack.c.bf16 %v4668, %v4668
      %v4701 = vpack.c.bf16 %v4669, %v4669
      %v4702 = vpack.c.bf16 %v4670, %v4670
      %v4703 = vpack.c.bf16 %v4671, %v4671
      %v4704 = vpack.c.bf16 %v4672, %v4672
      %v4705 = vrot.slane %v3719, 2
      %v4706 = vrot.slane %v3721, 2
      %v4707 = vrot.slane %v3724, 2
      %v4708 = vrot.slane %v3726, 2
      %v4709 = vrot.slane %v3729, 2
      %v4710 = vrot.slane %v3731, 2
      %v4711 = vrot.slane %v3734, 2
      %v4712 = vrot.slane %v3736, 2
      %v4713 = vrot.slane %v3739, 2
      %v4714 = vrot.slane %v3741, 2
      %v4715 = vrot.slane %v3744, 2
      %v4716 = vrot.slane %v3746, 2
      %v4717 = vrot.slane %v3749, 2
      %v4718 = vrot.slane %v3751, 2
      %v4719 = vrot.slane %v3754, 2
      %v4720 = vrot.slane %v3756, 2
      %v4721 = vrot.slane %v3759, 2
      %v4722 = vrot.slane %v3761, 2
      %v4723 = vrot.slane %v3764, 2
      %v4724 = vrot.slane %v3766, 2
      %v4725 = vrot.slane %v3769, 2
      %v4726 = vrot.slane %v3771, 2
      %v4727 = vrot.slane %v3774, 2
      %v4728 = vrot.slane %v3776, 2
      %v4729 = vrot.slane %v3779, 2
      %v4730 = vrot.slane %v3781, 2
      %v4731 = vrot.slane %v3784, 2
      %v4732 = vrot.slane %v3786, 2
      %v4733 = vrot.slane %v3789, 2
      %v4734 = vrot.slane %v3791, 2
      %v4735 = vrot.slane %v3794, 2
      %v4736 = vrot.slane %v3796, 2
      %vm4737 = vcmp.lt.s32.totalorder %v854, 6
      %v4738 = vsel %vm4737, %v4735, %v4736
      %v4739 = vsel %vm4737, %v4734, %v4735
      %v4740 = vsel %vm4737, %v4733, %v4734
      %v4741 = vsel %vm4737, %v4732, %v4733
      %v4742 = vsel %vm4737, %v4731, %v4732
      %v4743 = vsel %vm4737, %v4730, %v4731
      %v4744 = vsel %vm4737, %v4729, %v4730
      %v4745 = vsel %vm4737, %v4728, %v4729
      %v4746 = vsel %vm4737, %v4727, %v4728
      %v4747 = vsel %vm4737, %v4726, %v4727
      %v4748 = vsel %vm4737, %v4725, %v4726
      %v4749 = vsel %vm4737, %v4724, %v4725
      %v4750 = vsel %vm4737, %v4723, %v4724
      %v4751 = vsel %vm4737, %v4722, %v4723
      %v4752 = vsel %vm4737, %v4721, %v4722
      %v4753 = vsel %vm4737, %v4720, %v4721
      %v4754 = vsel %vm4737, %v4719, %v4720
      %v4755 = vsel %vm4737, %v4718, %v4719
      %v4756 = vsel %vm4737, %v4717, %v4718
      %v4757 = vsel %vm4737, %v4716, %v4717
      %v4758 = vsel %vm4737, %v4715, %v4716
      %v4759 = vsel %vm4737, %v4714, %v4715
      %v4760 = vsel %vm4737, %v4713, %v4714
      %v4761 = vsel %vm4737, %v4712, %v4713
      %v4762 = vsel %vm4737, %v4711, %v4712
      %v4763 = vsel %vm4737, %v4710, %v4711
      %v4764 = vsel %vm4737, %v4709, %v4710
      %v4765 = vsel %vm4737, %v4708, %v4709
      %v4766 = vsel %vm4737, %v4707, %v4708
      %v4767 = vsel %vm4737, %v4706, %v4707
      %v4768 = vsel %vm4737, %v4705, %v4706
      %v4769 = vsel %vm4737, %v4736, %v4705
      %4770 = vset.pattern.permute.xlu0 4
      %4771 = vperm.xlu0 %4770, %v3840
      %v4772 = vpop.permute.xlu0 %4771
      %4774 = vset.pattern.permute.xlu0 4
      %4775 = vperm.xlu0 %4774, %v3841
      %v4776 = vpop.permute.xlu0 %4775
      %4778 = vset.pattern.permute.xlu0 4
      %4779 = vperm.xlu0 %4778, %v3842
      %v4780 = vpop.permute.xlu0 %4779
      %4782 = vset.pattern.permute.xlu0 4
      %4783 = vperm.xlu0 %4782, %v3843
      %v4784 = vpop.permute.xlu0 %4783
      %4786 = vset.pattern.permute.xlu0 4
      %4787 = vperm.xlu0 %4786, %v3844
      %v4788 = vpop.permute.xlu0 %4787
      %4790 = vset.pattern.permute.xlu0 4
      %4791 = vperm.xlu0 %4790, %v3845
      %v4792 = vpop.permute.xlu0 %4791
      %4794 = vset.pattern.permute.xlu0 4
      %4795 = vperm.xlu0 %4794, %v3846
      %v4796 = vpop.permute.xlu0 %4795
      %4798 = vset.pattern.permute.xlu0 4
      %4799 = vperm.xlu0 %4798, %v3847
      %v4800 = vpop.permute.xlu0 %4799
      %4802 = vset.pattern.permute.xlu0 4
      %4803 = vperm.xlu0 %4802, %v3848
      %v4804 = vpop.permute.xlu0 %4803
      %4806 = vset.pattern.permute.xlu0 4
      %4807 = vperm.xlu0 %4806, %v3849
      %v4808 = vpop.permute.xlu0 %4807
      %4810 = vset.pattern.permute.xlu0 4
      %4811 = vperm.xlu0 %4810, %v3850
      %v4812 = vpop.permute.xlu0 %4811
      %4814 = vset.pattern.permute.xlu0 4
      %4815 = vperm.xlu0 %4814, %v3851
      %v4816 = vpop.permute.xlu0 %4815
      %4818 = vset.pattern.permute.xlu0 4
      %4819 = vperm.xlu0 %4818, %v3852
      %v4820 = vpop.permute.xlu0 %4819
      %4822 = vset.pattern.permute.xlu0 4
      %4823 = vperm.xlu0 %4822, %v3853
      %v4824 = vpop.permute.xlu0 %4823
      %4826 = vset.pattern.permute.xlu0 4
      %4827 = vperm.xlu0 %4826, %v3854
      %v4828 = vpop.permute.xlu0 %4827
      %4830 = vset.pattern.permute.xlu0 4
      %4831 = vperm.xlu0 %4830, %v3855
      %v4832 = vpop.permute.xlu0 %4831
      %4834 = vset.pattern.permute.xlu0 4
      %4835 = vperm.xlu0 %4834, %v3856
      %v4836 = vpop.permute.xlu0 %4835
      %4838 = vset.pattern.permute.xlu0 4
      %4839 = vperm.xlu0 %4838, %v3857
      %v4840 = vpop.permute.xlu0 %4839
      %4842 = vset.pattern.permute.xlu0 4
      %4843 = vperm.xlu0 %4842, %v3858
      %v4844 = vpop.permute.xlu0 %4843
      %4846 = vset.pattern.permute.xlu0 4
      %4847 = vperm.xlu0 %4846, %v3859
      %v4848 = vpop.permute.xlu0 %4847
      %4850 = vset.pattern.permute.xlu0 4
      %4851 = vperm.xlu0 %4850, %v3860
      %v4852 = vpop.permute.xlu0 %4851
      %4854 = vset.pattern.permute.xlu0 4
      %4855 = vperm.xlu0 %4854, %v3861
      %v4856 = vpop.permute.xlu0 %4855
      %4858 = vset.pattern.permute.xlu0 4
      %4859 = vperm.xlu0 %4858, %v3862
      %v4860 = vpop.permute.xlu0 %4859
      %4862 = vset.pattern.permute.xlu0 4
      %4863 = vperm.xlu0 %4862, %v3863
      %v4864 = vpop.permute.xlu0 %4863
      %4866 = vset.pattern.permute.xlu0 4
      %4867 = vperm.xlu0 %4866, %v3864
      %v4868 = vpop.permute.xlu0 %4867
      %4870 = vset.pattern.permute.xlu0 4
      %4871 = vperm.xlu0 %4870, %v3865
      %v4872 = vpop.permute.xlu0 %4871
      %4874 = vset.pattern.permute.xlu0 4
      %4875 = vperm.xlu0 %4874, %v3866
      %v4876 = vpop.permute.xlu0 %4875
      %4878 = vset.pattern.permute.xlu0 4
      %4879 = vperm.xlu0 %4878, %v3867
      %v4880 = vpop.permute.xlu0 %4879
      %4882 = vset.pattern.permute.xlu0 4
      %4883 = vperm.xlu0 %4882, %v3868
      %v4884 = vpop.permute.xlu0 %4883
      %4886 = vset.pattern.permute.xlu0 4
      %4887 = vperm.xlu0 %4886, %v3869
      %v4888 = vpop.permute.xlu0 %4887
      %4890 = vset.pattern.permute.xlu0 4
      %4891 = vperm.xlu0 %4890, %v3870
      %v4892 = vpop.permute.xlu0 %4891
      %4894 = vset.pattern.permute.xlu0 4
      %4895 = vperm.xlu0 %4894, %v3871
      %v4896 = vpop.permute.xlu0 %4895
      %v4898 = vmul.f32 %v4768, %v4772
      %v4899 = vmul.f32 %v4767, %v4776
      %v4900 = vmul.f32 %v4766, %v4780
      %v4901 = vmul.f32 %v4765, %v4784
      %v4902 = vmul.f32 %v4764, %v4788
      %v4903 = vmul.f32 %v4763, %v4792
      %v4904 = vmul.f32 %v4762, %v4796
      %v4905 = vmul.f32 %v4761, %v4800
      %v4906 = vmul.f32 %v4760, %v4804
      %v4907 = vmul.f32 %v4759, %v4808
      %v4908 = vmul.f32 %v4758, %v4812
      %v4909 = vmul.f32 %v4757, %v4816
      %v4910 = vmul.f32 %v4756, %v4820
      %v4911 = vmul.f32 %v4755, %v4824
      %v4912 = vmul.f32 %v4754, %v4828
      %v4913 = vmul.f32 %v4753, %v4832
      %v4914 = vmul.f32 %v4752, %v4836
      %v4915 = vmul.f32 %v4751, %v4840
      %v4916 = vmul.f32 %v4750, %v4844
      %v4917 = vmul.f32 %v4749, %v4848
      %v4918 = vmul.f32 %v4748, %v4852
      %v4919 = vmul.f32 %v4747, %v4856
      %v4920 = vmul.f32 %v4746, %v4860
      %v4921 = vmul.f32 %v4745, %v4864
      %v4922 = vmul.f32 %v4744, %v4868
      %v4923 = vmul.f32 %v4743, %v4872
      %v4924 = vmul.f32 %v4742, %v4876
      %v4925 = vmul.f32 %v4741, %v4880
      %v4926 = vmul.f32 %v4740, %v4884
      %v4927 = vmul.f32 %v4739, %v4888
      %v4928 = vmul.f32 %v4738, %v4892
      %v4929 = vmul.f32 %v4769, %v4896
      %v4930 = vpack.c.bf16 %v4898, %v4898
      %v4931 = vpack.c.bf16 %v4899, %v4899
      %v4932 = vpack.c.bf16 %v4900, %v4900
      %v4933 = vpack.c.bf16 %v4901, %v4901
      %v4934 = vpack.c.bf16 %v4902, %v4902
      %v4935 = vpack.c.bf16 %v4903, %v4903
      %v4936 = vpack.c.bf16 %v4904, %v4904
      %v4937 = vpack.c.bf16 %v4905, %v4905
      %v4938 = vpack.c.bf16 %v4906, %v4906
      %v4939 = vpack.c.bf16 %v4907, %v4907
      %v4940 = vpack.c.bf16 %v4908, %v4908
      %v4941 = vpack.c.bf16 %v4909, %v4909
      %v4942 = vpack.c.bf16 %v4910, %v4910
      %v4943 = vpack.c.bf16 %v4911, %v4911
      %v4944 = vpack.c.bf16 %v4912, %v4912
      %v4945 = vpack.c.bf16 %v4913, %v4913
      %v4946 = vpack.c.bf16 %v4914, %v4914
      %v4947 = vpack.c.bf16 %v4915, %v4915
      %v4948 = vpack.c.bf16 %v4916, %v4916
      %v4949 = vpack.c.bf16 %v4917, %v4917
      %v4950 = vpack.c.bf16 %v4918, %v4918
      %v4951 = vpack.c.bf16 %v4919, %v4919
      %v4952 = vpack.c.bf16 %v4920, %v4920
      %v4953 = vpack.c.bf16 %v4921, %v4921
      %v4954 = vpack.c.bf16 %v4922, %v4922
      %v4955 = vpack.c.bf16 %v4923, %v4923
      %v4956 = vpack.c.bf16 %v4924, %v4924
      %v4957 = vpack.c.bf16 %v4925, %v4925
      %v4958 = vpack.c.bf16 %v4926, %v4926
      %v4959 = vpack.c.bf16 %v4927, %v4927
      %v4960 = vpack.c.bf16 %v4928, %v4928
      %v4961 = vpack.c.bf16 %v4929, %v4929
      %v4994 = vunpack.c.l.b16 %v4129
      %v4995 = vunpack.c.l.b16 %v4130
      %v4996 = vunpack.c.l.b16 %v4131
      %v4997 = vunpack.c.l.b16 %v4132
      %v4998 = vunpack.c.l.b16 %v4133
      %v4999 = vunpack.c.l.b16 %v4134
      %v5000 = vunpack.c.l.b16 %v4135
      %v5001 = vunpack.c.l.b16 %v4136
      %v5002 = vunpack.c.l.b16 %v4137
      %v5003 = vunpack.c.l.b16 %v4138
      %v5004 = vunpack.c.l.b16 %v4139
      %v5005 = vunpack.c.l.b16 %v4140
      %v5006 = vunpack.c.l.b16 %v4141
      %v5007 = vunpack.c.l.b16 %v4142
      %v5008 = vunpack.c.l.b16 %v4143
      %v5009 = vunpack.c.l.b16 %v4144
      %v5010 = vunpack.c.l.b16 %v4145
      %v5011 = vunpack.c.l.b16 %v4146
      %v5012 = vunpack.c.l.b16 %v4147
      %v5013 = vunpack.c.l.b16 %v4148
      %v5014 = vunpack.c.l.b16 %v4149
      %v5015 = vunpack.c.l.b16 %v4150
      %v5016 = vunpack.c.l.b16 %v4151
      %v5017 = vunpack.c.l.b16 %v4152
      %v5018 = vunpack.c.l.b16 %v4153
      %v5019 = vunpack.c.l.b16 %v4154
      %v5020 = vunpack.c.l.b16 %v4155
      %v5021 = vunpack.c.l.b16 %v4156
      %v5022 = vunpack.c.l.b16 %v4157
      %v5023 = vunpack.c.l.b16 %v4158
      %v5024 = vunpack.c.l.b16 %v4159
      %v5025 = vunpack.c.l.b16 %v4160
      %v5026 = vpack.c.b16 %v4995, %v4994
      %v5027 = vpack.c.b16 %v4997, %v4996
      %v5028 = vpack.c.b16 %v4999, %v4998
      %v5029 = vpack.c.b16 %v5001, %v5000
      %v5030 = vpack.c.b16 %v5003, %v5002
      %v5031 = vpack.c.b16 %v5005, %v5004
      %v5032 = vpack.c.b16 %v5007, %v5006
      %v5033 = vpack.c.b16 %v5009, %v5008
      %v5034 = vpack.c.b16 %v5011, %v5010
      %v5035 = vpack.c.b16 %v5013, %v5012
      %v5036 = vpack.c.b16 %v5015, %v5014
      %v5037 = vpack.c.b16 %v5017, %v5016
      %v5038 = vpack.c.b16 %v5019, %v5018
      %v5039 = vpack.c.b16 %v5021, %v5020
      %v5040 = vpack.c.b16 %v5023, %v5022
      %v5041 = vpack.c.b16 %v5025, %v5024
      %v5074 = vunpack.c.l.b16 %v4385
      %v5075 = vunpack.c.l.b16 %v4386
      %v5076 = vunpack.c.l.b16 %v4387
      %v5077 = vunpack.c.l.b16 %v4388
      %v5078 = vunpack.c.l.b16 %v4389
      %v5079 = vunpack.c.l.b16 %v4390
      %v5080 = vunpack.c.l.b16 %v4391
      %v5081 = vunpack.c.l.b16 %v4392
      %v5082 = vunpack.c.l.b16 %v4393
      %v5083 = vunpack.c.l.b16 %v4394
      %v5084 = vunpack.c.l.b16 %v4395
      %v5085 = vunpack.c.l.b16 %v4396
      %v5086 = vunpack.c.l.b16 %v4397
      %v5087 = vunpack.c.l.b16 %v4398
      %v5088 = vunpack.c.l.b16 %v4399
      %v5089 = vunpack.c.l.b16 %v4400
      %v5090 = vunpack.c.l.b16 %v4401
      %v5091 = vunpack.c.l.b16 %v4402
      %v5092 = vunpack.c.l.b16 %v4403
      %v5093 = vunpack.c.l.b16 %v4404
      %v5094 = vunpack.c.l.b16 %v4405
      %v5095 = vunpack.c.l.b16 %v4406
      %v5096 = vunpack.c.l.b16 %v4407
      %v5097 = vunpack.c.l.b16 %v4408
      %v5098 = vunpack.c.l.b16 %v4409
      %v5099 = vunpack.c.l.b16 %v4410
      %v5100 = vunpack.c.l.b16 %v4411
      %v5101 = vunpack.c.l.b16 %v4412
      %v5102 = vunpack.c.l.b16 %v4413
      %v5103 = vunpack.c.l.b16 %v4414
      %v5104 = vunpack.c.l.b16 %v4415
      %v5105 = vunpack.c.l.b16 %v4416
      %v5106 = vpack.c.b16 %v5075, %v5074
      %v5107 = vpack.c.b16 %v5077, %v5076
      %v5108 = vpack.c.b16 %v5079, %v5078
      %v5109 = vpack.c.b16 %v5081, %v5080
      %v5110 = vpack.c.b16 %v5083, %v5082
      %v5111 = vpack.c.b16 %v5085, %v5084
      %v5112 = vpack.c.b16 %v5087, %v5086
      %v5113 = vpack.c.b16 %v5089, %v5088
      %v5114 = vpack.c.b16 %v5091, %v5090
      %v5115 = vpack.c.b16 %v5093, %v5092
      %v5116 = vpack.c.b16 %v5095, %v5094
      %v5117 = vpack.c.b16 %v5097, %v5096
      %v5118 = vpack.c.b16 %v5099, %v5098
      %v5119 = vpack.c.b16 %v5101, %v5100
      %v5120 = vpack.c.b16 %v5103, %v5102
      %v5121 = vpack.c.b16 %v5105, %v5104
      %5122 = vrot.lane.b32.xlu0 %v5106, 64
      %v5123 = vpop.permute.xlu0 %5122
      %5124 = vrot.lane.b32.xlu0 %v5107, 64
      %v5125 = vpop.permute.xlu0 %5124
      %5126 = vrot.lane.b32.xlu0 %v5108, 64
      %v5127 = vpop.permute.xlu0 %5126
      %5128 = vrot.lane.b32.xlu0 %v5109, 64
      %v5129 = vpop.permute.xlu0 %5128
      %5130 = vrot.lane.b32.xlu0 %v5110, 64
      %v5131 = vpop.permute.xlu0 %5130
      %5132 = vrot.lane.b32.xlu0 %v5111, 64
      %v5133 = vpop.permute.xlu0 %5132
      %5134 = vrot.lane.b32.xlu0 %v5112, 64
      %v5135 = vpop.permute.xlu0 %5134
      %5136 = vrot.lane.b32.xlu0 %v5113, 64
      %v5137 = vpop.permute.xlu0 %5136
      %5138 = vrot.lane.b32.xlu0 %v5114, 64
      %v5139 = vpop.permute.xlu0 %5138
      %5140 = vrot.lane.b32.xlu0 %v5115, 64
      %v5141 = vpop.permute.xlu0 %5140
      %5142 = vrot.lane.b32.xlu0 %v5116, 64
      %v5143 = vpop.permute.xlu0 %5142
      %5144 = vrot.lane.b32.xlu0 %v5117, 64
      %v5145 = vpop.permute.xlu0 %5144
      %5146 = vrot.lane.b32.xlu0 %v5118, 64
      %v5147 = vpop.permute.xlu0 %5146
      %5148 = vrot.lane.b32.xlu0 %v5119, 64
      %v5149 = vpop.permute.xlu0 %5148
      %5150 = vrot.lane.b32.xlu0 %v5120, 64
      %v5151 = vpop.permute.xlu0 %5150
      %5152 = vrot.lane.b32.xlu0 %v5121, 64
      %v5153 = vpop.permute.xlu0 %5152
      %v5186 = vunpack.c.l.b16 %v4417
      %v5187 = vunpack.c.l.b16 %v4418
      %v5188 = vunpack.c.l.b16 %v4419
      %v5189 = vunpack.c.l.b16 %v4420
      %v5190 = vunpack.c.l.b16 %v4421
      %v5191 = vunpack.c.l.b16 %v4422
      %v5192 = vunpack.c.l.b16 %v4423
      %v5193 = vunpack.c.l.b16 %v4424
      %v5194 = vunpack.c.l.b16 %v4425
      %v5195 = vunpack.c.l.b16 %v4426
      %v5196 = vunpack.c.l.b16 %v4427
      %v5197 = vunpack.c.l.b16 %v4428
      %v5198 = vunpack.c.l.b16 %v4429
      %v5199 = vunpack.c.l.b16 %v4430
      %v5200 = vunpack.c.l.b16 %v4431
      %v5201 = vunpack.c.l.b16 %v4432
      %v5202 = vunpack.c.l.b16 %v4433
      %v5203 = vunpack.c.l.b16 %v4434
      %v5204 = vunpack.c.l.b16 %v4435
      %v5205 = vunpack.c.l.b16 %v4436
      %v5206 = vunpack.c.l.b16 %v4437
      %v5207 = vunpack.c.l.b16 %v4438
      %v5208 = vunpack.c.l.b16 %v4439
      %v5209 = vunpack.c.l.b16 %v4440
      %v5210 = vunpack.c.l.b16 %v4441
      %v5211 = vunpack.c.l.b16 %v4442
      %v5212 = vunpack.c.l.b16 %v4443
      %v5213 = vunpack.c.l.b16 %v4444
      %v5214 = vunpack.c.l.b16 %v4445
      %v5215 = vunpack.c.l.b16 %v4446
      %v5216 = vunpack.c.l.b16 %v4447
      %v5217 = vunpack.c.l.b16 %v4448
      %v5218 = vpack.c.b16 %v5187, %v5186
      %v5219 = vpack.c.b16 %v5189, %v5188
      %v5220 = vpack.c.b16 %v5191, %v5190
      %v5221 = vpack.c.b16 %v5193, %v5192
      %v5222 = vpack.c.b16 %v5195, %v5194
      %v5223 = vpack.c.b16 %v5197, %v5196
      %v5224 = vpack.c.b16 %v5199, %v5198
      %v5225 = vpack.c.b16 %v5201, %v5200
      %v5226 = vpack.c.b16 %v5203, %v5202
      %v5227 = vpack.c.b16 %v5205, %v5204
      %v5228 = vpack.c.b16 %v5207, %v5206
      %v5229 = vpack.c.b16 %v5209, %v5208
      %v5230 = vpack.c.b16 %v5211, %v5210
      %v5231 = vpack.c.b16 %v5213, %v5212
      %v5232 = vpack.c.b16 %v5215, %v5214
      %v5233 = vpack.c.b16 %v5217, %v5216
      %v5266 = vunpack.c.l.b16 %v4673
      %v5267 = vunpack.c.l.b16 %v4674
      %v5268 = vunpack.c.l.b16 %v4675
      %v5269 = vunpack.c.l.b16 %v4676
      %v5270 = vunpack.c.l.b16 %v4677
      %v5271 = vunpack.c.l.b16 %v4678
      %v5272 = vunpack.c.l.b16 %v4679
      %v5273 = vunpack.c.l.b16 %v4680
      %v5274 = vunpack.c.l.b16 %v4681
      %v5275 = vunpack.c.l.b16 %v4682
      %v5276 = vunpack.c.l.b16 %v4683
      %v5277 = vunpack.c.l.b16 %v4684
      %v5278 = vunpack.c.l.b16 %v4685
      %v5279 = vunpack.c.l.b16 %v4686
      %v5280 = vunpack.c.l.b16 %v4687
      %v5281 = vunpack.c.l.b16 %v4688
      %v5282 = vunpack.c.l.b16 %v4689
      %v5283 = vunpack.c.l.b16 %v4690
      %v5284 = vunpack.c.l.b16 %v4691
      %v5285 = vunpack.c.l.b16 %v4692
      %v5286 = vunpack.c.l.b16 %v4693
      %v5287 = vunpack.c.l.b16 %v4694
      %v5288 = vunpack.c.l.b16 %v4695
      %v5289 = vunpack.c.l.b16 %v4696
      %v5290 = vunpack.c.l.b16 %v4697
      %v5291 = vunpack.c.l.b16 %v4698
      %v5292 = vunpack.c.l.b16 %v4699
      %v5293 = vunpack.c.l.b16 %v4700
      %v5294 = vunpack.c.l.b16 %v4701
      %v5295 = vunpack.c.l.b16 %v4702
      %v5296 = vunpack.c.l.b16 %v4703
      %v5297 = vunpack.c.l.b16 %v4704
      %v5298 = vpack.c.b16 %v5267, %v5266
      %v5299 = vpack.c.b16 %v5269, %v5268
      %v5300 = vpack.c.b16 %v5271, %v5270
      %v5301 = vpack.c.b16 %v5273, %v5272
      %v5302 = vpack.c.b16 %v5275, %v5274
      %v5303 = vpack.c.b16 %v5277, %v5276
      %v5304 = vpack.c.b16 %v5279, %v5278
      %v5305 = vpack.c.b16 %v5281, %v5280
      %v5306 = vpack.c.b16 %v5283, %v5282
      %v5307 = vpack.c.b16 %v5285, %v5284
      %v5308 = vpack.c.b16 %v5287, %v5286
      %v5309 = vpack.c.b16 %v5289, %v5288
      %v5310 = vpack.c.b16 %v5291, %v5290
      %v5311 = vpack.c.b16 %v5293, %v5292
      %v5312 = vpack.c.b16 %v5295, %v5294
      %v5313 = vpack.c.b16 %v5297, %v5296
      %5314 = vrot.lane.b32.xlu0 %v5298, 64
      %v5315 = vpop.permute.xlu0 %5314
      %5316 = vrot.lane.b32.xlu0 %v5299, 64
      %v5317 = vpop.permute.xlu0 %5316
      %5318 = vrot.lane.b32.xlu0 %v5300, 64
      %v5319 = vpop.permute.xlu0 %5318
      %5320 = vrot.lane.b32.xlu0 %v5301, 64
      %v5321 = vpop.permute.xlu0 %5320
      %5322 = vrot.lane.b32.xlu0 %v5302, 64
      %v5323 = vpop.permute.xlu0 %5322
      %5324 = vrot.lane.b32.xlu0 %v5303, 64
      %v5325 = vpop.permute.xlu0 %5324
      %5326 = vrot.lane.b32.xlu0 %v5304, 64
      %v5327 = vpop.permute.xlu0 %5326
      %5328 = vrot.lane.b32.xlu0 %v5305, 64
      %v5329 = vpop.permute.xlu0 %5328
      %5330 = vrot.lane.b32.xlu0 %v5306, 64
      %v5331 = vpop.permute.xlu0 %5330
      %5332 = vrot.lane.b32.xlu0 %v5307, 64
      %v5333 = vpop.permute.xlu0 %5332
      %5334 = vrot.lane.b32.xlu0 %v5308, 64
      %v5335 = vpop.permute.xlu0 %5334
      %5336 = vrot.lane.b32.xlu0 %v5309, 64
      %v5337 = vpop.permute.xlu0 %5336
      %5338 = vrot.lane.b32.xlu0 %v5310, 64
      %v5339 = vpop.permute.xlu0 %5338
      %5340 = vrot.lane.b32.xlu0 %v5311, 64
      %v5341 = vpop.permute.xlu0 %5340
      %5342 = vrot.lane.b32.xlu0 %v5312, 64
      %v5343 = vpop.permute.xlu0 %5342
      %5344 = vrot.lane.b32.xlu0 %v5313, 64
      %v5345 = vpop.permute.xlu0 %5344
      %v5378 = vunpack.c.l.b16 %v4930
      %v5379 = vunpack.c.l.b16 %v4931
      %v5380 = vunpack.c.l.b16 %v4932
      %v5381 = vunpack.c.l.b16 %v4933
      %v5382 = vunpack.c.l.b16 %v4934
      %v5383 = vunpack.c.l.b16 %v4935
      %v5384 = vunpack.c.l.b16 %v4936
      %v5385 = vunpack.c.l.b16 %v4937
      %v5386 = vunpack.c.l.b16 %v4938
      %v5387 = vunpack.c.l.b16 %v4939
      %v5388 = vunpack.c.l.b16 %v4940
      %v5389 = vunpack.c.l.b16 %v4941
      %v5390 = vunpack.c.l.b16 %v4942
      %v5391 = vunpack.c.l.b16 %v4943
      %v5392 = vunpack.c.l.b16 %v4944
      %v5393 = vunpack.c.l.b16 %v4945
      %v5394 = vunpack.c.l.b16 %v4946
      %v5395 = vunpack.c.l.b16 %v4947
      %v5396 = vunpack.c.l.b16 %v4948
      %v5397 = vunpack.c.l.b16 %v4949
      %v5398 = vunpack.c.l.b16 %v4950
      %v5399 = vunpack.c.l.b16 %v4951
      %v5400 = vunpack.c.l.b16 %v4952
      %v5401 = vunpack.c.l.b16 %v4953
      %v5402 = vunpack.c.l.b16 %v4954
      %v5403 = vunpack.c.l.b16 %v4955
      %v5404 = vunpack.c.l.b16 %v4956
      %v5405 = vunpack.c.l.b16 %v4957
      %v5406 = vunpack.c.l.b16 %v4958
      %v5407 = vunpack.c.l.b16 %v4959
      %v5408 = vunpack.c.l.b16 %v4960
      %v5409 = vunpack.c.l.b16 %v4961
      %v5410 = vpack.c.b16 %v5379, %v5378
      %v5411 = vpack.c.b16 %v5381, %v5380
      %v5412 = vpack.c.b16 %v5383, %v5382
      %v5413 = vpack.c.b16 %v5385, %v5384
      %v5414 = vpack.c.b16 %v5387, %v5386
      %v5415 = vpack.c.b16 %v5389, %v5388
      %v5416 = vpack.c.b16 %v5391, %v5390
      %v5417 = vpack.c.b16 %v5393, %v5392
      %v5418 = vpack.c.b16 %v5395, %v5394
      %v5419 = vpack.c.b16 %v5397, %v5396
      %v5420 = vpack.c.b16 %v5399, %v5398
      %v5421 = vpack.c.b16 %v5401, %v5400
      %v5422 = vpack.c.b16 %v5403, %v5402
      %v5423 = vpack.c.b16 %v5405, %v5404
      %v5424 = vpack.c.b16 %v5407, %v5406
      %v5425 = vpack.c.b16 %v5409, %v5408
      %vm5426 = vcmask 523264
      %v5429 = vsel %vm5426, %v5026, %v5123
      %v5433 = vsel %vm5426, %v5027, %v5125
      %v5437 = vsel %vm5426, %v5028, %v5127
      %v5441 = vsel %vm5426, %v5029, %v5129
      %v5445 = vsel %vm5426, %v5030, %v5131
      %v5449 = vsel %vm5426, %v5031, %v5133
      %v5453 = vsel %vm5426, %v5032, %v5135
      %v5457 = vsel %vm5426, %v5033, %v5137
      %v5461 = vsel %vm5426, %v5034, %v5139
      %v5465 = vsel %vm5426, %v5035, %v5141
      %v5469 = vsel %vm5426, %v5036, %v5143
      %v5473 = vsel %vm5426, %v5037, %v5145
      %v5477 = vsel %vm5426, %v5038, %v5147
      %v5481 = vsel %vm5426, %v5039, %v5149
      %v5485 = vsel %vm5426, %v5040, %v5151
      %v5489 = vsel %vm5426, %v5041, %v5153
      %v5493 = vsel %vm5426, %v5218, %v5315
      %v5497 = vsel %vm5426, %v5219, %v5317
      %v5501 = vsel %vm5426, %v5220, %v5319
      %v5505 = vsel %vm5426, %v5221, %v5321
      %v5509 = vsel %vm5426, %v5222, %v5323
      %v5513 = vsel %vm5426, %v5223, %v5325
      %v5517 = vsel %vm5426, %v5224, %v5327
      %v5521 = vsel %vm5426, %v5225, %v5329
      %v5525 = vsel %vm5426, %v5226, %v5331
      %v5529 = vsel %vm5426, %v5227, %v5333
      %v5533 = vsel %vm5426, %v5228, %v5335
      %v5537 = vsel %vm5426, %v5229, %v5337
      %v5541 = vsel %vm5426, %v5230, %v5339
      %v5545 = vsel %vm5426, %v5231, %v5341
      %v5549 = vsel %vm5426, %v5232, %v5343
      %v5553 = vsel %vm5426, %v5233, %v5345
      %v5595 = vunpack.c.l.b16 %v3798
      %v5596 = vunpack.c.l.b16 %v3799
      %v5597 = vunpack.c.l.b16 %v3800
      %v5598 = vunpack.c.l.b16 %v3801
      %v5599 = vunpack.c.l.b16 %v3802
      %v5600 = vunpack.c.l.b16 %v3803
      %v5601 = vunpack.c.l.b16 %v3804
      %v5602 = vunpack.c.l.b16 %v3805
      %v5603 = vunpack.c.l.b16 %v3806
      %v5604 = vunpack.c.l.b16 %v3807
      %v5605 = vunpack.c.l.b16 %v3808
      %v5606 = vunpack.c.l.b16 %v3809
      %v5607 = vunpack.c.l.b16 %v3810
      %v5608 = vunpack.c.l.b16 %v3811
      %v5609 = vunpack.c.l.b16 %v3812
      %v5610 = vunpack.c.l.b16 %v3813
      %v5611 = vunpack.c.l.b16 %v3814
      %v5612 = vunpack.c.l.b16 %v3815
      %v5613 = vunpack.c.l.b16 %v3816
      %v5614 = vunpack.c.l.b16 %v3817
      %v5615 = vunpack.c.l.b16 %v3818
      %v5616 = vunpack.c.l.b16 %v3819
      %v5617 = vunpack.c.l.b16 %v3820
      %v5618 = vunpack.c.l.b16 %v3821
      %v5619 = vunpack.c.l.b16 %v3822
      %v5620 = vunpack.c.l.b16 %v3823
      %v5621 = vunpack.c.l.b16 %v3824
      %v5622 = vunpack.c.l.b16 %v3825
      %v5623 = vunpack.c.l.b16 %v3826
      %v5624 = vunpack.c.l.b16 %v3827
      %v5625 = vunpack.c.l.b16 %v3828
      %v5626 = vunpack.c.l.b16 %v3829
      %v5627 = vunpack.c.l.b16 %v3830
      %v5628 = vunpack.c.l.b16 %v3831
      %v5629 = vunpack.c.l.b16 %v3832
      %v5630 = vunpack.c.l.b16 %v3833
      %v5631 = vunpack.c.l.b16 %v3834
      %v5632 = vunpack.c.l.b16 %v3835
      %v5633 = vunpack.c.l.b16 %v3836
      %v5634 = vunpack.c.l.b16 %v3837
      %v5635 = vpack.c.b16 %v5596, %v5595
      %v5636 = vpack.c.b16 %v5598, %v5597
      %v5637 = vpack.c.b16 %v5600, %v5599
      %v5638 = vpack.c.b16 %v5602, %v5601
      %v5639 = vpack.c.b16 %v5604, %v5603
      %v5640 = vpack.c.b16 %v5606, %v5605
      %v5641 = vpack.c.b16 %v5608, %v5607
      %v5642 = vpack.c.b16 %v5610, %v5609
      %v5643 = vpack.c.b16 %v5612, %v5611
      %v5644 = vpack.c.b16 %v5614, %v5613
      %v5645 = vpack.c.b16 %v5616, %v5615
      %v5646 = vpack.c.b16 %v5618, %v5617
      %v5647 = vpack.c.b16 %v5620, %v5619
      %v5648 = vpack.c.b16 %v5622, %v5621
      %v5649 = vpack.c.b16 %v5624, %v5623
      %v5650 = vpack.c.b16 %v5626, %v5625
      %v5651 = vpack.c.b16 %v5628, %v5627
      %v5652 = vpack.c.b16 %v5630, %v5629
      %v5653 = vpack.c.b16 %v5632, %v5631
      %v5654 = vpack.c.b16 %v5634, %v5633
      %v5676 = vsel %vm5426, %v5410, 0
      %v5679 = vsel %vm5426, %v5411, 0
      %v5682 = vsel %vm5426, %v5412, 0
      %v5685 = vsel %vm5426, %v5413, 0
      %v5688 = vsel %vm5426, %v5414, 0
      %v5691 = vsel %vm5426, %v5415, 0
      %v5694 = vsel %vm5426, %v5416, 0
      %v5697 = vsel %vm5426, %v5417, 0
      %v5700 = vsel %vm5426, %v5418, 0
      %v5703 = vsel %vm5426, %v5419, 0
      %v5706 = vsel %vm5426, %v5420, 0
      %v5709 = vsel %vm5426, %v5421, 0
      %v5712 = vsel %vm5426, %v5422, 0
      %v5715 = vsel %vm5426, %v5423, 0
      %v5718 = vsel %vm5426, %v5424, 0
      %v5721 = vsel %vm5426, %v5425, 0
      %5723 = vmatpush.bf16.msra.mxu0 %v5642
      %5724 = vmatpush.bf16.msra.mxu0 %v5641
      %5725 = vmatpush.bf16.msra.mxu0 %v5640
      %5726 = vmatpush.bf16.msra.mxu0 %v5639
      %5727 = vmatpush.bf16.msra.mxu0 %v5638
      %5728 = vmatpush.bf16.msra.mxu0 %v5637
      %5729 = vmatpush.bf16.msra.mxu0 %v5636
      %5730 = vmatpush.bf16.msra.mxu0 %v5635
      %5731 = vmatmul.bf16.gmra.mxu0 %v5429
      %v5732 = vpop.f32.mrf.mxu0
      %v5733 = vadd.f32 0.0, %v5732
      %v5734 = vpop.f32.mrf.mxu0
      %v5735 = vadd.f32 0.0, %v5734
      %5736 = vmatmul.bf16.gmra.mxu0 %v5433
      %v5737 = vpop.f32.mrf.mxu0
      %v5738 = vadd.f32 0.0, %v5737
      %v5739 = vpop.f32.mrf.mxu0
      %v5740 = vadd.f32 0.0, %v5739
      %5741 = vmatmul.bf16.gmra.mxu0 %v5437
      %v5742 = vpop.f32.mrf.mxu0
      %v5743 = vadd.f32 0.0, %v5742
      %v5744 = vpop.f32.mrf.mxu0
      %v5745 = vadd.f32 0.0, %v5744
      %5746 = vmatmul.bf16.gmra.mxu0 %v5441
      %v5747 = vpop.f32.mrf.mxu0
      %v5748 = vadd.f32 0.0, %v5747
      %v5749 = vpop.f32.mrf.mxu0
      %v5750 = vadd.f32 0.0, %v5749
      %5751 = vmatmul.bf16.gmra.mxu0 %v5445
      %v5752 = vpop.f32.mrf.mxu0
      %v5753 = vadd.f32 0.0, %v5752
      %v5754 = vpop.f32.mrf.mxu0
      %v5755 = vadd.f32 0.0, %v5754
      %5756 = vmatmul.bf16.gmra.mxu0 %v5449
      %v5757 = vpop.f32.mrf.mxu0
      %v5758 = vadd.f32 0.0, %v5757
      %v5759 = vpop.f32.mrf.mxu0
      %v5760 = vadd.f32 0.0, %v5759
      %5761 = vmatmul.bf16.gmra.mxu0 %v5453
      %v5762 = vpop.f32.mrf.mxu0
      %v5763 = vadd.f32 0.0, %v5762
      %v5764 = vpop.f32.mrf.mxu0
      %v5765 = vadd.f32 0.0, %v5764
      %5766 = vmatmul.bf16.gmra.mxu0 %v5457
      %v5767 = vpop.f32.mrf.mxu0
      %v5768 = vadd.f32 0.0, %v5767
      %v5769 = vpop.f32.mrf.mxu0
      %v5770 = vadd.f32 0.0, %v5769
      %5771 = vmatmul.bf16.gmra.mxu0 %v5461
      %v5772 = vpop.f32.mrf.mxu0
      %v5773 = vadd.f32 0.0, %v5772
      %v5774 = vpop.f32.mrf.mxu0
      %v5775 = vadd.f32 0.0, %v5774
      %5776 = vmatmul.bf16.gmra.mxu0 %v5465
      %v5777 = vpop.f32.mrf.mxu0
      %v5778 = vadd.f32 0.0, %v5777
      %v5779 = vpop.f32.mrf.mxu0
      %v5780 = vadd.f32 0.0, %v5779
      %5781 = vmatmul.bf16.gmra.mxu0 %v5469
      %v5782 = vpop.f32.mrf.mxu0
      %v5783 = vadd.f32 0.0, %v5782
      %v5784 = vpop.f32.mrf.mxu0
      %v5785 = vadd.f32 0.0, %v5784
      %5786 = vmatmul.bf16.gmra.mxu0 %v5473
      %v5787 = vpop.f32.mrf.mxu0
      %v5788 = vadd.f32 0.0, %v5787
      %v5789 = vpop.f32.mrf.mxu0
      %v5790 = vadd.f32 0.0, %v5789
      %5791 = vmatmul.bf16.gmra.mxu0 %v5477
      %v5792 = vpop.f32.mrf.mxu0
      %v5793 = vadd.f32 0.0, %v5792
      %v5794 = vpop.f32.mrf.mxu0
      %v5795 = vadd.f32 0.0, %v5794
      %5796 = vmatmul.bf16.gmra.mxu0 %v5481
      %v5797 = vpop.f32.mrf.mxu0
      %v5798 = vadd.f32 0.0, %v5797
      %v5799 = vpop.f32.mrf.mxu0
      %v5800 = vadd.f32 0.0, %v5799
      %5801 = vmatmul.bf16.gmra.mxu0 %v5485
      %v5802 = vpop.f32.mrf.mxu0
      %v5803 = vadd.f32 0.0, %v5802
      %v5804 = vpop.f32.mrf.mxu0
      %v5805 = vadd.f32 0.0, %v5804
      %5806 = vmatmul.bf16.gmra.mxu0 %v5489
      %v5807 = vpop.f32.mrf.mxu0
      %v5808 = vadd.f32 0.0, %v5807
      %v5809 = vpop.f32.mrf.mxu0
      %v5810 = vadd.f32 0.0, %v5809
      %5811 = vdwg.mxu0
      %5812 = vmatpush.bf16.msra.mxu0 %v5650
      %5813 = vmatpush.bf16.msra.mxu0 %v5649
      %5814 = vmatpush.bf16.msra.mxu0 %v5648
      %5815 = vmatpush.bf16.msra.mxu0 %v5647
      %5816 = vmatpush.bf16.msra.mxu0 %v5646
      %5817 = vmatpush.bf16.msra.mxu0 %v5645
      %5818 = vmatpush.bf16.msra.mxu0 %v5644
      %5819 = vmatpush.bf16.msra.mxu0 %v5643
      %5820 = vmatmul.bf16.gmra.mxu0 %v5493
      %v5821 = vpop.f32.mrf.mxu0
      %v5822 = vadd.f32 %v5733, %v5821
      %v5823 = vpop.f32.mrf.mxu0
      %v5824 = vadd.f32 %v5735, %v5823
      %5825 = vmatmul.bf16.gmra.mxu0 %v5497
      %v5826 = vpop.f32.mrf.mxu0
      %v5827 = vadd.f32 %v5738, %v5826
      %v5828 = vpop.f32.mrf.mxu0
      %v5829 = vadd.f32 %v5740, %v5828
      %5830 = vmatmul.bf16.gmra.mxu0 %v5501
      %v5831 = vpop.f32.mrf.mxu0
      %v5832 = vadd.f32 %v5743, %v5831
      %v5833 = vpop.f32.mrf.mxu0
      %v5834 = vadd.f32 %v5745, %v5833
      %5835 = vmatmul.bf16.gmra.mxu0 %v5505
      %v5836 = vpop.f32.mrf.mxu0
      %v5837 = vadd.f32 %v5748, %v5836
      %v5838 = vpop.f32.mrf.mxu0
      %v5839 = vadd.f32 %v5750, %v5838
      %5840 = vmatmul.bf16.gmra.mxu0 %v5509
      %v5841 = vpop.f32.mrf.mxu0
      %v5842 = vadd.f32 %v5753, %v5841
      %v5843 = vpop.f32.mrf.mxu0
      %v5844 = vadd.f32 %v5755, %v5843
      %5845 = vmatmul.bf16.gmra.mxu0 %v5513
      %v5846 = vpop.f32.mrf.mxu0
      %v5847 = vadd.f32 %v5758, %v5846
      %v5848 = vpop.f32.mrf.mxu0
      %v5849 = vadd.f32 %v5760, %v5848
      %5850 = vmatmul.bf16.gmra.mxu0 %v5517
      %v5851 = vpop.f32.mrf.mxu0
      %v5852 = vadd.f32 %v5763, %v5851
      %v5853 = vpop.f32.mrf.mxu0
      %v5854 = vadd.f32 %v5765, %v5853
      %5855 = vmatmul.bf16.gmra.mxu0 %v5521
      %v5856 = vpop.f32.mrf.mxu0
      %v5857 = vadd.f32 %v5768, %v5856
      %v5858 = vpop.f32.mrf.mxu0
      %v5859 = vadd.f32 %v5770, %v5858
      %5860 = vmatmul.bf16.gmra.mxu0 %v5525
      %v5861 = vpop.f32.mrf.mxu0
      %v5862 = vadd.f32 %v5773, %v5861
      %v5863 = vpop.f32.mrf.mxu0
      %v5864 = vadd.f32 %v5775, %v5863
      %5865 = vmatmul.bf16.gmra.mxu0 %v5529
      %v5866 = vpop.f32.mrf.mxu0
      %v5867 = vadd.f32 %v5778, %v5866
      %v5868 = vpop.f32.mrf.mxu0
      %v5869 = vadd.f32 %v5780, %v5868
      %5870 = vmatmul.bf16.gmra.mxu0 %v5533
      %v5871 = vpop.f32.mrf.mxu0
      %v5872 = vadd.f32 %v5783, %v5871
      %v5873 = vpop.f32.mrf.mxu0
      %v5874 = vadd.f32 %v5785, %v5873
      %5875 = vmatmul.bf16.gmra.mxu0 %v5537
      %v5876 = vpop.f32.mrf.mxu0
      %v5877 = vadd.f32 %v5788, %v5876
      %v5878 = vpop.f32.mrf.mxu0
      %v5879 = vadd.f32 %v5790, %v5878
      %5880 = vmatmul.bf16.gmra.mxu0 %v5541
      %v5881 = vpop.f32.mrf.mxu0
      %v5882 = vadd.f32 %v5793, %v5881
      %v5883 = vpop.f32.mrf.mxu0
      %v5884 = vadd.f32 %v5795, %v5883
      %5885 = vmatmul.bf16.gmra.mxu0 %v5545
      %v5886 = vpop.f32.mrf.mxu0
      %v5887 = vadd.f32 %v5798, %v5886
      %v5888 = vpop.f32.mrf.mxu0
      %v5889 = vadd.f32 %v5800, %v5888
      %5890 = vmatmul.bf16.gmra.mxu0 %v5549
      %v5891 = vpop.f32.mrf.mxu0
      %v5892 = vadd.f32 %v5803, %v5891
      %v5893 = vpop.f32.mrf.mxu0
      %v5894 = vadd.f32 %v5805, %v5893
      %5895 = vmatmul.bf16.gmra.mxu0 %v5553
      %v5896 = vpop.f32.mrf.mxu0
      %v5897 = vadd.f32 %v5808, %v5896
      %v5898 = vpop.f32.mrf.mxu0
      %v5899 = vadd.f32 %v5810, %v5898
      %5900 = vdwg.mxu0
      %5901 = vmatpush.bf16.msra.mxu0 0
      %5902 = vmatpush.bf16.msra.mxu0 0
      %5903 = vmatpush.bf16.msra.mxu0 0
      %5904 = vmatpush.bf16.msra.mxu0 0
      %5905 = vmatpush.bf16.msra.mxu0 %v5654
      %5906 = vmatpush.bf16.msra.mxu0 %v5653
      %5907 = vmatpush.bf16.msra.mxu0 %v5652
      %5908 = vmatpush.bf16.msra.mxu0 %v5651
      %5909 = vmatmul.bf16.gmra.mxu0 %v5676
      %v5910 = vpop.f32.mrf.mxu0
      %v5911 = vadd.f32 %v5822, %v5910
      %v5912 = vpop.f32.mrf.mxu0
      %v5913 = vadd.f32 %v5824, %v5912
      %5914 = vmatmul.bf16.gmra.mxu0 %v5679
      %v5915 = vpop.f32.mrf.mxu0
      %v5916 = vadd.f32 %v5827, %v5915
      %v5917 = vpop.f32.mrf.mxu0
      %v5918 = vadd.f32 %v5829, %v5917
      %5919 = vmatmul.bf16.gmra.mxu0 %v5682
      %v5920 = vpop.f32.mrf.mxu0
      %v5921 = vadd.f32 %v5832, %v5920
      %v5922 = vpop.f32.mrf.mxu0
      %v5923 = vadd.f32 %v5834, %v5922
      %5924 = vmatmul.bf16.gmra.mxu0 %v5685
      %v5925 = vpop.f32.mrf.mxu0
      %v5926 = vadd.f32 %v5837, %v5925
      %v5927 = vpop.f32.mrf.mxu0
      %v5928 = vadd.f32 %v5839, %v5927
      %5929 = vmatmul.bf16.gmra.mxu0 %v5688
      %v5930 = vpop.f32.mrf.mxu0
      %v5931 = vadd.f32 %v5842, %v5930
      %v5932 = vpop.f32.mrf.mxu0
      %v5933 = vadd.f32 %v5844, %v5932
      %5934 = vmatmul.bf16.gmra.mxu0 %v5691
      %v5935 = vpop.f32.mrf.mxu0
      %v5936 = vadd.f32 %v5847, %v5935
      %v5937 = vpop.f32.mrf.mxu0
      %v5938 = vadd.f32 %v5849, %v5937
      %5939 = vmatmul.bf16.gmra.mxu0 %v5694
      %v5940 = vpop.f32.mrf.mxu0
      %v5941 = vadd.f32 %v5852, %v5940
      %v5942 = vpop.f32.mrf.mxu0
      %v5943 = vadd.f32 %v5854, %v5942
      %5944 = vmatmul.bf16.gmra.mxu0 %v5697
      %v5945 = vpop.f32.mrf.mxu0
      %v5946 = vadd.f32 %v5857, %v5945
      %v5947 = vpop.f32.mrf.mxu0
      %v5948 = vadd.f32 %v5859, %v5947
      %5949 = vmatmul.bf16.gmra.mxu0 %v5700
      %v5950 = vpop.f32.mrf.mxu0
      %v5951 = vadd.f32 %v5862, %v5950
      %v5952 = vpop.f32.mrf.mxu0
      %v5953 = vadd.f32 %v5864, %v5952
      %5954 = vmatmul.bf16.gmra.mxu0 %v5703
      %v5955 = vpop.f32.mrf.mxu0
      %v5956 = vadd.f32 %v5867, %v5955
      %v5957 = vpop.f32.mrf.mxu0
      %v5958 = vadd.f32 %v5869, %v5957
      %5959 = vmatmul.bf16.gmra.mxu0 %v5706
      %v5960 = vpop.f32.mrf.mxu0
      %v5961 = vadd.f32 %v5872, %v5960
      %v5962 = vpop.f32.mrf.mxu0
      %v5963 = vadd.f32 %v5874, %v5962
      %5964 = vmatmul.bf16.gmra.mxu0 %v5709
      %v5965 = vpop.f32.mrf.mxu0
      %v5966 = vadd.f32 %v5877, %v5965
      %v5967 = vpop.f32.mrf.mxu0
      %v5968 = vadd.f32 %v5879, %v5967
      %5969 = vmatmul.bf16.gmra.mxu0 %v5712
      %v5970 = vpop.f32.mrf.mxu0
      %v5971 = vadd.f32 %v5882, %v5970
      %v5972 = vpop.f32.mrf.mxu0
      %v5973 = vadd.f32 %v5884, %v5972
      %5974 = vmatmul.bf16.gmra.mxu0 %v5715
      %v5975 = vpop.f32.mrf.mxu0
      %v5976 = vadd.f32 %v5887, %v5975
      %v5977 = vpop.f32.mrf.mxu0
      %v5978 = vadd.f32 %v5889, %v5977
      %5979 = vmatmul.bf16.gmra.mxu0 %v5718
      %v5980 = vpop.f32.mrf.mxu0
      %v5981 = vadd.f32 %v5892, %v5980
      %v5982 = vpop.f32.mrf.mxu0
      %v5983 = vadd.f32 %v5894, %v5982
      %5984 = vmatmul.bf16.gmra.mxu0 %v5721
      %v5985 = vpop.f32.mrf.mxu0
      %v5986 = vadd.f32 %v5897, %v5985
      %v5987 = vpop.f32.mrf.mxu0
      %v5988 = vadd.f32 %v5899, %v5987
      %5989 = vdwg.mxu0
      %v5991 = vperm.slane %v3838, 0
      %v5993 = vmul.f32 %v5911, %v5991
      %v5994 = vmul.f32 %v5913, %v5991
      %v5995 = vmul.f32 %v5916, %v5991
      %v5996 = vmul.f32 %v5918, %v5991
      %v5997 = vmul.f32 %v5921, %v5991
      %v5998 = vmul.f32 %v5923, %v5991
      %v5999 = vmul.f32 %v5926, %v5991
      %v6000 = vmul.f32 %v5928, %v5991
      %v6001 = vmul.f32 %v5931, %v5991
      %v6002 = vmul.f32 %v5933, %v5991
      %v6003 = vmul.f32 %v5936, %v5991
      %v6004 = vmul.f32 %v5938, %v5991
      %v6005 = vmul.f32 %v5941, %v5991
      %v6006 = vmul.f32 %v5943, %v5991
      %v6007 = vmul.f32 %v5946, %v5991
      %v6008 = vmul.f32 %v5948, %v5991
      %v6009 = vmul.f32 %v5951, %v5991
      %v6010 = vmul.f32 %v5953, %v5991
      %v6011 = vmul.f32 %v5956, %v5991
      %v6012 = vmul.f32 %v5958, %v5991
      %v6013 = vmul.f32 %v5961, %v5991
      %v6014 = vmul.f32 %v5963, %v5991
      %v6015 = vmul.f32 %v5966, %v5991
      %v6016 = vmul.f32 %v5968, %v5991
      %v6017 = vmul.f32 %v5971, %v5991
      %v6018 = vmul.f32 %v5973, %v5991
      %v6019 = vmul.f32 %v5976, %v5991
      %v6020 = vmul.f32 %v5978, %v5991
      %v6021 = vmul.f32 %v5981, %v5991
      %v6022 = vmul.f32 %v5983, %v5991
      %v6023 = vmul.f32 %v5986, %v5991
      %v6024 = vmul.f32 %v5988, %v5991
      %v6026 = vperm.slane %v3839, 0
      %v6028 = vadd.f32 %v5993, %v6026
      %v6029 = vadd.f32 %v5994, %v6026
      %v6030 = vadd.f32 %v5995, %v6026
      %v6031 = vadd.f32 %v5996, %v6026
      %v6032 = vadd.f32 %v5997, %v6026
      %v6033 = vadd.f32 %v5998, %v6026
      %v6034 = vadd.f32 %v5999, %v6026
      %v6035 = vadd.f32 %v6000, %v6026
      %v6036 = vadd.f32 %v6001, %v6026
      %v6037 = vadd.f32 %v6002, %v6026
      %v6038 = vadd.f32 %v6003, %v6026
      %v6039 = vadd.f32 %v6004, %v6026
      %v6040 = vadd.f32 %v6005, %v6026
      %v6041 = vadd.f32 %v6006, %v6026
      %v6042 = vadd.f32 %v6007, %v6026
      %v6043 = vadd.f32 %v6008, %v6026
      %v6044 = vadd.f32 %v6009, %v6026
      %v6045 = vadd.f32 %v6010, %v6026
      %v6046 = vadd.f32 %v6011, %v6026
      %v6047 = vadd.f32 %v6012, %v6026
      %v6048 = vadd.f32 %v6013, %v6026
      %v6049 = vadd.f32 %v6014, %v6026
      %v6050 = vadd.f32 %v6015, %v6026
      %v6051 = vadd.f32 %v6016, %v6026
      %v6052 = vadd.f32 %v6017, %v6026
      %v6053 = vadd.f32 %v6018, %v6026
      %v6054 = vadd.f32 %v6019, %v6026
      %v6055 = vadd.f32 %v6020, %v6026
      %v6056 = vadd.f32 %v6021, %v6026
      %v6057 = vadd.f32 %v6022, %v6026
      %v6058 = vadd.f32 %v6023, %v6026
      %v6059 = vadd.f32 %v6024, %v6026
      %v6060 = vmax.f32 %v6028, 0.0
      %v6061 = vmax.f32 %v6029, 0.0
      %v6062 = vmax.f32 %v6030, 0.0
      %v6063 = vmax.f32 %v6031, 0.0
      %v6064 = vmax.f32 %v6032, 0.0
      %v6065 = vmax.f32 %v6033, 0.0
      %v6066 = vmax.f32 %v6034, 0.0
      %v6067 = vmax.f32 %v6035, 0.0
      %v6068 = vmax.f32 %v6036, 0.0
      %v6069 = vmax.f32 %v6037, 0.0
      %v6070 = vmax.f32 %v6038, 0.0
      %v6071 = vmax.f32 %v6039, 0.0
      %v6072 = vmax.f32 %v6040, 0.0
      %v6073 = vmax.f32 %v6041, 0.0
      %v6074 = vmax.f32 %v6042, 0.0
      %v6075 = vmax.f32 %v6043, 0.0
      %v6076 = vmax.f32 %v6044, 0.0
      %v6077 = vmax.f32 %v6045, 0.0
      %v6078 = vmax.f32 %v6046, 0.0
      %v6079 = vmax.f32 %v6047, 0.0
      %v6080 = vmax.f32 %v6048, 0.0
      %v6081 = vmax.f32 %v6049, 0.0
      %v6082 = vmax.f32 %v6050, 0.0
      %v6083 = vmax.f32 %v6051, 0.0
      %v6084 = vmax.f32 %v6052, 0.0
      %v6085 = vmax.f32 %v6053, 0.0
      %v6086 = vmax.f32 %v6054, 0.0
      %v6087 = vmax.f32 %v6055, 0.0
      %v6088 = vmax.f32 %v6056, 0.0
      %v6089 = vmax.f32 %v6057, 0.0
      %v6090 = vmax.f32 %v6058, 0.0
      %v6091 = vmax.f32 %v6059, 0.0
      %v6092 = vld [vmem:[%s10] sm:$0xff]
      %v6093 = vld [vmem:[%s10 + $0x8] sm:$0xff]
      %v6094 = vld [vmem:[%s10 + $0x10] sm:$0xff]
      %v6095 = vld [vmem:[%s10 + $0x18] sm:$0xff]
      %v6096 = vld [vmem:[%s10 + $0x20] sm:$0xff]
      %v6097 = vld [vmem:[%s10 + $0x28] sm:$0xff]
      %v6098 = vld [vmem:[%s10 + $0x30] sm:$0xff]
      %v6099 = vld [vmem:[%s10 + $0x38] sm:$0xff]
      %v6100 = vld [vmem:[%s10 + $0x40] sm:$0xff]
      %v6101 = vld [vmem:[%s10 + $0x48] sm:$0xff]
      %v6102 = vld [vmem:[%s10 + $0x50] sm:$0xff]
      %v6103 = vld [vmem:[%s10 + $0x58] sm:$0xff]
      %v6104 = vld [vmem:[%s10 + $0x60] sm:$0xff]
      %v6105 = vld [vmem:[%s10 + $0x68] sm:$0xff]
      %v6106 = vld [vmem:[%s10 + $0x70] sm:$0xff]
      %v6107 = vld [vmem:[%s10 + $0x78] sm:$0xff]
      %v6108 = vrot.slane %v6060, 1
      %v6109 = vrot.slane %v6061, 1
      %v6110 = vrot.slane %v6062, 1
      %v6111 = vrot.slane %v6063, 1
      %v6112 = vrot.slane %v6064, 1
      %v6113 = vrot.slane %v6065, 1
      %v6114 = vrot.slane %v6066, 1
      %v6115 = vrot.slane %v6067, 1
      %v6116 = vrot.slane %v6068, 1
      %v6117 = vrot.slane %v6069, 1
      %v6118 = vrot.slane %v6070, 1
      %v6119 = vrot.slane %v6071, 1
      %v6120 = vrot.slane %v6072, 1
      %v6121 = vrot.slane %v6073, 1
      %v6122 = vrot.slane %v6074, 1
      %v6123 = vrot.slane %v6075, 1
      %v6124 = vrot.slane %v6076, 1
      %v6125 = vrot.slane %v6077, 1
      %v6126 = vrot.slane %v6078, 1
      %v6127 = vrot.slane %v6079, 1
      %v6128 = vrot.slane %v6080, 1
      %v6129 = vrot.slane %v6081, 1
      %v6130 = vrot.slane %v6082, 1
      %v6131 = vrot.slane %v6083, 1
      %v6132 = vrot.slane %v6084, 1
      %v6133 = vrot.slane %v6085, 1
      %v6134 = vrot.slane %v6086, 1
      %v6135 = vrot.slane %v6087, 1
      %v6136 = vrot.slane %v6088, 1
      %v6137 = vrot.slane %v6089, 1
      %v6138 = vrot.slane %v6090, 1
      %v6139 = vrot.slane %v6091, 1
      %v6140 = vsel %vm1176, %v6138, %v6139
      %v6141 = vsel %vm1176, %v6137, %v6138
      %v6142 = vsel %vm1176, %v6136, %v6137
      %v6143 = vsel %vm1176, %v6135, %v6136
      %v6144 = vsel %vm1176, %v6134, %v6135
      %v6145 = vsel %vm1176, %v6133, %v6134
      %v6146 = vsel %vm1176, %v6132, %v6133
      %v6147 = vsel %vm1176, %v6131, %v6132
      %v6148 = vsel %vm1176, %v6130, %v6131
      %v6149 = vsel %vm1176, %v6129, %v6130
      %v6150 = vsel %vm1176, %v6128, %v6129
      %v6151 = vsel %vm1176, %v6127, %v6128
      %v6152 = vsel %vm1176, %v6126, %v6127
      %v6153 = vsel %vm1176, %v6125, %v6126
      %v6154 = vsel %vm1176, %v6124, %v6125
      %v6155 = vsel %vm1176, %v6123, %v6124
      %v6156 = vsel %vm1176, %v6122, %v6123
      %v6157 = vsel %vm1176, %v6121, %v6122
      %v6158 = vsel %vm1176, %v6120, %v6121
      %v6159 = vsel %vm1176, %v6119, %v6120
      %v6160 = vsel %vm1176, %v6118, %v6119
      %v6161 = vsel %vm1176, %v6117, %v6118
      %v6162 = vsel %vm1176, %v6116, %v6117
      %v6163 = vsel %vm1176, %v6115, %v6116
      %v6164 = vsel %vm1176, %v6114, %v6115
      %v6165 = vsel %vm1176, %v6113, %v6114
      %v6166 = vsel %vm1176, %v6112, %v6113
      %v6167 = vsel %vm1176, %v6111, %v6112
      %v6168 = vsel %vm1176, %v6110, %v6111
      %v6169 = vsel %vm1176, %v6109, %v6110
      %v6170 = vsel %vm1176, %v6108, %v6109
      %v6171 = vsel %vm1176, %v6139, %v6108
      %v6172 = vmax.f32 %v6060, %v6170
      %v6173 = vmax.f32 %v6061, %v6169
      %v6174 = vmax.f32 %v6062, %v6168
      %v6175 = vmax.f32 %v6063, %v6167
      %v6176 = vmax.f32 %v6064, %v6166
      %v6177 = vmax.f32 %v6065, %v6165
      %v6178 = vmax.f32 %v6066, %v6164
      %v6179 = vmax.f32 %v6067, %v6163
      %v6180 = vmax.f32 %v6068, %v6162
      %v6181 = vmax.f32 %v6069, %v6161
      %v6182 = vmax.f32 %v6070, %v6160
      %v6183 = vmax.f32 %v6071, %v6159
      %v6184 = vmax.f32 %v6072, %v6158
      %v6185 = vmax.f32 %v6073, %v6157
      %v6186 = vmax.f32 %v6074, %v6156
      %v6187 = vmax.f32 %v6075, %v6155
      %v6188 = vmax.f32 %v6076, %v6154
      %v6189 = vmax.f32 %v6077, %v6153
      %v6190 = vmax.f32 %v6078, %v6152
      %v6191 = vmax.f32 %v6079, %v6151
      %v6192 = vmax.f32 %v6080, %v6150
      %v6193 = vmax.f32 %v6081, %v6149
      %v6194 = vmax.f32 %v6082, %v6148
      %v6195 = vmax.f32 %v6083, %v6147
      %v6196 = vmax.f32 %v6084, %v6146
      %v6197 = vmax.f32 %v6085, %v6145
      %v6198 = vmax.f32 %v6086, %v6144
      %v6199 = vmax.f32 %v6087, %v6143
      %v6200 = vmax.f32 %v6088, %v6142
      %v6201 = vmax.f32 %v6089, %v6141
      %v6202 = vmax.f32 %v6090, %v6140
      %v6203 = vmax.f32 %v6091, %v6171
      %v6204 = vpack.c.bf16 %v6173, %v6172
      %v6205 = vpack.c.bf16 %v6175, %v6174
      %v6206 = vpack.c.bf16 %v6177, %v6176
      %v6207 = vpack.c.bf16 %v6179, %v6178
      %v6208 = vpack.c.bf16 %v6181, %v6180
      %v6209 = vpack.c.bf16 %v6183, %v6182
      %v6210 = vpack.c.bf16 %v6185, %v6184
      %v6211 = vpack.c.bf16 %v6187, %v6186
      %v6212 = vpack.c.bf16 %v6189, %v6188
      %v6213 = vpack.c.bf16 %v6191, %v6190
      %v6214 = vpack.c.bf16 %v6193, %v6192
      %v6215 = vpack.c.bf16 %v6195, %v6194
      %v6216 = vpack.c.bf16 %v6197, %v6196
      %v6217 = vpack.c.bf16 %v6199, %v6198
      %v6218 = vpack.c.bf16 %v6201, %v6200
      %v6219 = vpack.c.bf16 %v6203, %v6202
      %v6236 = vunpack.c.l.b16 %v6092
      %v6237 = vunpack.c.h.b16 %v6092
      %v6238 = vunpack.c.l.b16 %v6093
      %v6239 = vunpack.c.h.b16 %v6093
      %v6240 = vunpack.c.l.b16 %v6094
      %v6241 = vunpack.c.h.b16 %v6094
      %v6242 = vunpack.c.l.b16 %v6095
      %v6243 = vunpack.c.h.b16 %v6095
      %v6244 = vunpack.c.l.b16 %v6096
      %v6245 = vunpack.c.h.b16 %v6096
      %v6246 = vunpack.c.l.b16 %v6097
      %v6247 = vunpack.c.h.b16 %v6097
      %v6248 = vunpack.c.l.b16 %v6098
      %v6249 = vunpack.c.h.b16 %v6098
      %v6250 = vunpack.c.l.b16 %v6099
      %v6251 = vunpack.c.h.b16 %v6099
      %v6252 = vunpack.c.l.b16 %v6100
      %v6253 = vunpack.c.h.b16 %v6100
      %v6254 = vunpack.c.l.b16 %v6101
      %v6255 = vunpack.c.h.b16 %v6101
      %v6256 = vunpack.c.l.b16 %v6102
      %v6257 = vunpack.c.h.b16 %v6102
      %v6258 = vunpack.c.l.b16 %v6103
      %v6259 = vunpack.c.h.b16 %v6103
      %v6260 = vunpack.c.l.b16 %v6104
      %v6261 = vunpack.c.h.b16 %v6104
      %v6262 = vunpack.c.l.b16 %v6105
      %v6263 = vunpack.c.h.b16 %v6105
      %v6264 = vunpack.c.l.b16 %v6106
      %v6265 = vunpack.c.h.b16 %v6106
      %v6266 = vunpack.c.l.b16 %v6107
      %v6267 = vunpack.c.h.b16 %v6107
      %v6268 = vpack.c.b16 %v6238, %v6236
      %v6269 = vpack.c.b16 %v6239, %v6237
      %v6270 = vpack.c.b16 %v6242, %v6240
      %v6271 = vpack.c.b16 %v6243, %v6241
      %v6272 = vpack.c.b16 %v6246, %v6244
      %v6273 = vpack.c.b16 %v6247, %v6245
      %v6274 = vpack.c.b16 %v6250, %v6248
      %v6275 = vpack.c.b16 %v6251, %v6249
      %v6276 = vpack.c.b16 %v6254, %v6252
      %v6277 = vpack.c.b16 %v6255, %v6253
      %v6278 = vpack.c.b16 %v6258, %v6256
      %v6279 = vpack.c.b16 %v6259, %v6257
      %v6280 = vpack.c.b16 %v6262, %v6260
      %v6281 = vpack.c.b16 %v6263, %v6261
      %v6282 = vpack.c.b16 %v6266, %v6264
      %v6283 = vpack.c.b16 %v6267, %v6265
      %6300 = vmatpush.bf16.msra.mxu0 %v6211
      %6301 = vmatpush.bf16.msra.mxu0 %v6210
      %6302 = vmatpush.bf16.msra.mxu0 %v6209
      %6303 = vmatpush.bf16.msra.mxu0 %v6208
      %6304 = vmatpush.bf16.msra.mxu0 %v6207
      %6305 = vmatpush.bf16.msra.mxu0 %v6206
      %6306 = vmatpush.bf16.msra.mxu0 %v6205
      %6307 = vmatpush.bf16.msra.mxu0 %v6204
      %6308 = vmatmul.bf16.gmra.mxu0 %v6268
      %v6309 = vpop.f32.mrf.mxu0
      %v6310 = vadd.f32 0.0, %v6309
      %v6311 = vpop.f32.mrf.mxu0
      %v6312 = vadd.f32 0.0, %v6311
      %6313 = vmatmul.bf16.gmra.mxu0 %v6270
      %v6314 = vpop.f32.mrf.mxu0
      %v6315 = vadd.f32 0.0, %v6314
      %v6316 = vpop.f32.mrf.mxu0
      %v6317 = vadd.f32 0.0, %v6316
      %6318 = vmatmul.bf16.gmra.mxu0 %v6272
      %v6319 = vpop.f32.mrf.mxu0
      %v6320 = vadd.f32 0.0, %v6319
      %v6321 = vpop.f32.mrf.mxu0
      %v6322 = vadd.f32 0.0, %v6321
      %6323 = vmatmul.bf16.gmra.mxu0 %v6274
      %v6324 = vpop.f32.mrf.mxu0
      %v6325 = vadd.f32 0.0, %v6324
      %v6326 = vpop.f32.mrf.mxu0
      %v6327 = vadd.f32 0.0, %v6326
      %6328 = vmatmul.bf16.gmra.mxu0 %v6276
      %v6329 = vpop.f32.mrf.mxu0
      %v6330 = vadd.f32 0.0, %v6329
      %v6331 = vpop.f32.mrf.mxu0
      %v6332 = vadd.f32 0.0, %v6331
      %6333 = vmatmul.bf16.gmra.mxu0 %v6278
      %v6334 = vpop.f32.mrf.mxu0
      %v6335 = vadd.f32 0.0, %v6334
      %v6336 = vpop.f32.mrf.mxu0
      %v6337 = vadd.f32 0.0, %v6336
      %6338 = vmatmul.bf16.gmra.mxu0 %v6280
      %v6339 = vpop.f32.mrf.mxu0
      %v6340 = vadd.f32 0.0, %v6339
      %v6341 = vpop.f32.mrf.mxu0
      %v6342 = vadd.f32 0.0, %v6341
      %6343 = vmatmul.bf16.gmra.mxu0 %v6282
      %v6344 = vpop.f32.mrf.mxu0
      %v6345 = vadd.f32 0.0, %v6344
      %v6346 = vpop.f32.mrf.mxu0
      %v6347 = vadd.f32 0.0, %v6346
      %6348 = vdwg.mxu0
      %6349 = vmatpush.bf16.msra.mxu0 %v6219
      %6350 = vmatpush.bf16.msra.mxu0 %v6218
      %6351 = vmatpush.bf16.msra.mxu0 %v6217
      %6352 = vmatpush.bf16.msra.mxu0 %v6216
      %6353 = vmatpush.bf16.msra.mxu0 %v6215
      %6354 = vmatpush.bf16.msra.mxu0 %v6214
      %6355 = vmatpush.bf16.msra.mxu0 %v6213
      %6356 = vmatpush.bf16.msra.mxu0 %v6212
      %6357 = vmatmul.bf16.gmra.mxu0 %v6269
      %v6358 = vpop.f32.mrf.mxu0
      %v6359 = vadd.f32 %v6310, %v6358
      %v6360 = vpop.f32.mrf.mxu0
      %v6361 = vadd.f32 %v6312, %v6360
      %6362 = vmatmul.bf16.gmra.mxu0 %v6271
      %v6363 = vpop.f32.mrf.mxu0
      %v6364 = vadd.f32 %v6315, %v6363
      %v6365 = vpop.f32.mrf.mxu0
      %v6366 = vadd.f32 %v6317, %v6365
      %6367 = vmatmul.bf16.gmra.mxu0 %v6273
      %v6368 = vpop.f32.mrf.mxu0
      %v6369 = vadd.f32 %v6320, %v6368
      %v6370 = vpop.f32.mrf.mxu0
      %v6371 = vadd.f32 %v6322, %v6370
      %6372 = vmatmul.bf16.gmra.mxu0 %v6275
      %v6373 = vpop.f32.mrf.mxu0
      %v6374 = vadd.f32 %v6325, %v6373
      %v6375 = vpop.f32.mrf.mxu0
      %v6376 = vadd.f32 %v6327, %v6375
      %6377 = vmatmul.bf16.gmra.mxu0 %v6277
      %v6378 = vpop.f32.mrf.mxu0
      %v6379 = vadd.f32 %v6330, %v6378
      %v6380 = vpop.f32.mrf.mxu0
      %v6381 = vadd.f32 %v6332, %v6380
      %6382 = vmatmul.bf16.gmra.mxu0 %v6279
      %v6383 = vpop.f32.mrf.mxu0
      %v6384 = vadd.f32 %v6335, %v6383
      %v6385 = vpop.f32.mrf.mxu0
      %v6386 = vadd.f32 %v6337, %v6385
      %6387 = vmatmul.bf16.gmra.mxu0 %v6281
      %v6388 = vpop.f32.mrf.mxu0
      %v6389 = vadd.f32 %v6340, %v6388
      %v6390 = vpop.f32.mrf.mxu0
      %v6391 = vadd.f32 %v6342, %v6390
      %6392 = vmatmul.bf16.gmra.mxu0 %v6283
      %v6393 = vpop.f32.mrf.mxu0
      %v6394 = vadd.f32 %v6345, %v6393
      %v6395 = vpop.f32.mrf.mxu0
      %v6396 = vadd.f32 %v6347, %v6395
      %6397 = vdwg.mxu0
      %v6398 = vld [vmem:[%s11] sm:$0xff]
      %v6399 = vld [vmem:[%s11 + $0x8] sm:$0xff]
      %v6400 = vld [vmem:[%s11 + $0x10] sm:$0xff]
      %v6401 = vld [vmem:[%s11 + $0x18] sm:$0xff]
      %v6402 = vld [vmem:[%s11 + $0x20] sm:$0xff]
      %v6403 = vld [vmem:[%s11 + $0x28] sm:$0xff]
      %v6404 = vld [vmem:[%s11 + $0x30] sm:$0xff]
      %v6405 = vld [vmem:[%s11 + $0x38] sm:$0xff]
      %v6406 = vld [vmem:[%s11 + $0x40] sm:$0xff]
      %v6407 = vld [vmem:[%s11 + $0x48] sm:$0xff]
      %v6408 = vld [vmem:[%s11 + $0x50] sm:$0xff]
      %v6409 = vld [vmem:[%s11 + $0x58] sm:$0xff]
      %v6410 = vld [vmem:[%s11 + $0x60] sm:$0xff]
      %v6411 = vld [vmem:[%s11 + $0x68] sm:$0xff]
      %v6412 = vld [vmem:[%s11 + $0x70] sm:$0xff]
      %v6413 = vld [vmem:[%s11 + $0x78] sm:$0xff]
      %v6414 = vld [vmem:[%s11 + $0x80] sm:$0xff]
      %v6415 = vld [vmem:[%s11 + $0x88] sm:$0xff]
      %v6416 = vld [vmem:[%s11 + $0x90] sm:$0xff]
      %v6417 = vld [vmem:[%s11 + $0x98] sm:$0xff]
      %v6418 = vld [vmem:[%s11 + $0xa0] sm:$0xff]
      %v6419 = vld [vmem:[%s11 + $0xa8] sm:$0xff]
      %v6420 = vld [vmem:[%s11 + $0xb0] sm:$0xff]
      %v6421 = vld [vmem:[%s11 + $0xb8] sm:$0xff]
      %v6422 = vld [vmem:[%s11 + $0xc0] sm:$0xff]
      %v6423 = vld [vmem:[%s11 + $0xc8] sm:$0xff]
      %v6424 = vld [vmem:[%s11 + $0xd0] sm:$0xff]
      %v6425 = vld [vmem:[%s11 + $0xd8] sm:$0xff]
      %v6426 = vld [vmem:[%s11 + $0xe0] sm:$0xff]
      %v6427 = vld [vmem:[%s11 + $0xe8] sm:$0xff]
      %v6428 = vld [vmem:[%s11 + $0xf0] sm:$0xff]
      %v6429 = vld [vmem:[%s11 + $0xf8] sm:$0xff]
      %v6430 = vld [vmem:[%s11 + $0x100] sm:$0xff]
      %v6431 = vld [vmem:[%s11 + $0x108] sm:$0xff]
      %v6432 = vld [vmem:[%s11 + $0x110] sm:$0xff]
      %v6433 = vld [vmem:[%s11 + $0x118] sm:$0xff]
      %v6434 = vld [vmem:[%s11 + $0x120] sm:$0xff]
      %v6435 = vld [vmem:[%s11 + $0x128] sm:$0xff]
      %v6436 = vld [vmem:[%s11 + $0x130] sm:$0xff]
      %v6437 = vld [vmem:[%s11 + $0x138] sm:$0xff]
      %v6438 = vld [vmem:[%s11 + $0x140] sm:$0xff]
      %v6439 = vld [vmem:[%s11 + $0x148] sm:$0xff]
      %v6440 = vld [vmem:[%s11 + $0x150] sm:$0xff]
      %v6441 = vld [vmem:[%s11 + $0x158] sm:$0xff]
      %v6442 = vld [vmem:[%s11 + $0x160] sm:$0xff]
      %v6443 = vld [vmem:[%s11 + $0x168] sm:$0xff]
      %v6444 = vld [vmem:[%s11 + $0x170] sm:$0xff]
      %v6445 = vld [vmem:[%s11 + $0x178] sm:$0xff]
      %v6446 = vld [vmem:[%s11 + $0x180] sm:$0xff]
      %v6447 = vld [vmem:[%s11 + $0x188] sm:$0xff]
      %v6448 = vld [vmem:[%s11 + $0x190] sm:$0xff]
      %v6449 = vld [vmem:[%s11 + $0x198] sm:$0xff]
      %v6450 = vld [vmem:[%s11 + $0x1a0] sm:$0xff]
      %v6451 = vld [vmem:[%s11 + $0x1a8] sm:$0xff]
      %v6452 = vld [vmem:[%s11 + $0x1b0] sm:$0xff]
      %v6453 = vld [vmem:[%s11 + $0x1b8] sm:$0xff]
      %v6454 = vld [vmem:[%s11 + $0x1c0] sm:$0xff]
      %v6455 = vld [vmem:[%s11 + $0x1c8] sm:$0xff]
      %v6456 = vld [vmem:[%s11 + $0x1d0] sm:$0xff]
      %v6457 = vld [vmem:[%s11 + $0x1d8] sm:$0xff]
      %v6458 = vld [vmem:[%s11 + $0x1e0] sm:$0xff]
      %v6459 = vld [vmem:[%s11 + $0x1e8] sm:$0xff]
      %v6460 = vld [vmem:[%s11 + $0x1f0] sm:$0xff]
      %v6461 = vld [vmem:[%s11 + $0x1f8] sm:$0xff]
      %v6462 = vld [vmem:[%s11 + $0x200] sm:$0xff]
      %v6463 = vld [vmem:[%s11 + $0x208] sm:$0xff]
      %v6464 = vld [vmem:[%s11 + $0x210] sm:$0xff]
      %v6465 = vld [vmem:[%s11 + $0x218] sm:$0xff]
      %v6466 = vld [vmem:[%s11 + $0x220] sm:$0xff]
      %v6467 = vld [vmem:[%s11 + $0x228] sm:$0xff]
      %v6468 = vld [vmem:[%s11 + $0x230] sm:$0xff]
      %v6469 = vld [vmem:[%s11 + $0x238] sm:$0xff]
      %v6470 = vld [vmem:[%s11 + $0x240] sm:$0xff]
      %v6471 = vld [vmem:[%s11 + $0x248] sm:$0xff]
      %v6472 = vld [vmem:[%s11 + $0x250] sm:$0xff]
      %v6473 = vld [vmem:[%s11 + $0x258] sm:$0xff]
      %v6474 = vld [vmem:[%s11 + $0x260] sm:$0xff]
      %v6475 = vld [vmem:[%s11 + $0x268] sm:$0xff]
      %v6476 = vld [vmem:[%s11 + $0x270] sm:$0xff]
      %v6477 = vld [vmem:[%s11 + $0x278] sm:$0xff]
      %v6478 = vld [vmem:[%s11 + $0x280] sm:$0xff]
      %v6479 = vld [vmem:[%s11 + $0x288] sm:$0xff]
      %v6480 = vld [vmem:[%s11 + $0x290] sm:$0xff]
      %v6481 = vld [vmem:[%s11 + $0x298] sm:$0xff]
      %v6482 = vld [vmem:[%s11 + $0x2a0] sm:$0xff]
      %v6483 = vld [vmem:[%s11 + $0x2a8] sm:$0xff]
      %v6484 = vld [vmem:[%s11 + $0x2b0] sm:$0xff]
      %v6485 = vld [vmem:[%s11 + $0x2b8] sm:$0xff]
      %v6486 = vld [vmem:[%s11 + $0x2c0] sm:$0xff]
      %v6487 = vld [vmem:[%s11 + $0x2c8] sm:$0xff]
      %v6488 = vld [vmem:[%s11 + $0x2d0] sm:$0xff]
      %v6489 = vld [vmem:[%s11 + $0x2d8] sm:$0xff]
      %v6490 = vld [vmem:[%s11 + $0x2e0] sm:$0xff]
      %v6491 = vld [vmem:[%s11 + $0x2e8] sm:$0xff]
      %v6492 = vld [vmem:[%s11 + $0x2f0] sm:$0xff]
      %v6493 = vld [vmem:[%s11 + $0x2f8] sm:$0xff]
      %v6494 = vld [vmem:[%s11 + $0x300] sm:$0xff]
      %v6495 = vld [vmem:[%s11 + $0x308] sm:$0xff]
      %v6496 = vld [vmem:[%s11 + $0x310] sm:$0xff]
      %v6497 = vld [vmem:[%s11 + $0x318] sm:$0xff]
      %v6498 = vld [vmem:[%s11 + $0x320] sm:$0xff]
      %v6499 = vld [vmem:[%s11 + $0x328] sm:$0xff]
      %v6500 = vld [vmem:[%s11 + $0x330] sm:$0xff]
      %v6501 = vld [vmem:[%s11 + $0x338] sm:$0xff]
      %v6502 = vld [vmem:[%s11 + $0x340] sm:$0xff]
      %v6503 = vld [vmem:[%s11 + $0x348] sm:$0xff]
      %v6504 = vld [vmem:[%s11 + $0x350] sm:$0xff]
      %v6505 = vld [vmem:[%s11 + $0x358] sm:$0xff]
      %v6506 = vld [vmem:[%s11 + $0x360] sm:$0xff]
      %v6507 = vld [vmem:[%s11 + $0x368] sm:$0xff]
      %v6508 = vld [vmem:[%s11 + $0x370] sm:$0xff]
      %v6509 = vld [vmem:[%s11 + $0x378] sm:$0xff]
      %v6510 = vld [vmem:[%s12] sm:$0x3]
      %v6511 = vld [vmem:[%s13] sm:$0x3]
      %v6512 = vld [vmem:[%s14] sm:$0xff]
      %v6513 = vld [vmem:[%s14 + $0x8] sm:$0xff]
      %v6514 = vld [vmem:[%s14 + $0x10] sm:$0xff]
      %v6515 = vld [vmem:[%s14 + $0x18] sm:$0xff]
      %v6516 = vld [vmem:[%s14 + $0x20] sm:$0xff]
      %v6517 = vld [vmem:[%s14 + $0x28] sm:$0xff]
      %v6518 = vld [vmem:[%s14 + $0x30] sm:$0xff]
      %v6519 = vld [vmem:[%s14 + $0x38] sm:$0xff]
      %v6520 = vld [vmem:[%s14 + $0x40] sm:$0xff]
      %v6521 = vld [vmem:[%s14 + $0x48] sm:$0xff]
      %v6522 = vld [vmem:[%s14 + $0x50] sm:$0xff]
      %v6523 = vld [vmem:[%s14 + $0x58] sm:$0xff]
      %v6524 = vld [vmem:[%s14 + $0x60] sm:$0xff]
      %v6525 = vld [vmem:[%s14 + $0x68] sm:$0xff]
      %v6526 = vld [vmem:[%s14 + $0x70] sm:$0xff]
      %v6527 = vld [vmem:[%s14 + $0x78] sm:$0xff]
      %v6528 = vrot.slane %v6359, 5
      %v6529 = vrot.slane %v6361, 5
      %v6530 = vrot.slane %v6364, 5
      %v6531 = vrot.slane %v6366, 5
      %v6532 = vrot.slane %v6369, 5
      %v6533 = vrot.slane %v6371, 5
      %v6534 = vrot.slane %v6374, 5
      %v6535 = vrot.slane %v6376, 5
      %v6536 = vrot.slane %v6379, 5
      %v6537 = vrot.slane %v6381, 5
      %v6538 = vrot.slane %v6384, 5
      %v6539 = vrot.slane %v6386, 5
      %v6540 = vrot.slane %v6389, 5
      %v6541 = vrot.slane %v6391, 5
      %v6542 = vrot.slane %v6394, 5
      %v6543 = vrot.slane %v6396, 5
      %vm6544 = vcmp.lt.s32.totalorder %v854, 3
      %v6545 = vsel %vm6544, %v6542, %v6543
      %v6546 = vsel %vm6544, %v6541, %v6542
      %v6547 = vsel %vm6544, %v6540, %v6541
      %v6548 = vsel %vm6544, %v6539, %v6540
      %v6549 = vsel %vm6544, %v6538, %v6539
      %v6550 = vsel %vm6544, %v6537, %v6538
      %v6551 = vsel %vm6544, %v6536, %v6537
      %v6552 = vsel %vm6544, %v6535, %v6536
      %v6553 = vsel %vm6544, %v6534, %v6535
      %v6554 = vsel %vm6544, %v6533, %v6534
      %v6555 = vsel %vm6544, %v6532, %v6533
      %v6556 = vsel %vm6544, %v6531, %v6532
      %v6557 = vsel %vm6544, %v6530, %v6531
      %v6558 = vsel %vm6544, %v6529, %v6530
      %v6559 = vsel %vm6544, %v6528, %v6529
      %v6560 = vsel %vm6544, %v6543, %v6528
      %6562 = vset.pattern.permute.xlu0 0
      %6563 = vperm.xlu0 %6562, %v6512
      %v6564 = vpop.permute.xlu0 %6563
      %6567 = vset.pattern.permute.xlu0 0
      %6568 = vperm.xlu0 %6567, %v6513
      %v6569 = vpop.permute.xlu0 %6568
      %6572 = vset.pattern.permute.xlu0 0
      %6573 = vperm.xlu0 %6572, %v6514
      %v6574 = vpop.permute.xlu0 %6573
      %6577 = vset.pattern.permute.xlu0 0
      %6578 = vperm.xlu0 %6577, %v6515
      %v6579 = vpop.permute.xlu0 %6578
      %6582 = vset.pattern.permute.xlu0 0
      %6583 = vperm.xlu0 %6582, %v6516
      %v6584 = vpop.permute.xlu0 %6583
      %6587 = vset.pattern.permute.xlu0 0
      %6588 = vperm.xlu0 %6587, %v6517
      %v6589 = vpop.permute.xlu0 %6588
      %6592 = vset.pattern.permute.xlu0 0
      %6593 = vperm.xlu0 %6592, %v6518
      %v6594 = vpop.permute.xlu0 %6593
      %6597 = vset.pattern.permute.xlu0 0
      %6598 = vperm.xlu0 %6597, %v6519
      %v6599 = vpop.permute.xlu0 %6598
      %6602 = vset.pattern.permute.xlu0 0
      %6603 = vperm.xlu0 %6602, %v6520
      %v6604 = vpop.permute.xlu0 %6603
      %6607 = vset.pattern.permute.xlu0 0
      %6608 = vperm.xlu0 %6607, %v6521
      %v6609 = vpop.permute.xlu0 %6608
      %6612 = vset.pattern.permute.xlu0 0
      %6613 = vperm.xlu0 %6612, %v6522
      %v6614 = vpop.permute.xlu0 %6613
      %6617 = vset.pattern.permute.xlu0 0
      %6618 = vperm.xlu0 %6617, %v6523
      %v6619 = vpop.permute.xlu0 %6618
      %6622 = vset.pattern.permute.xlu0 0
      %6623 = vperm.xlu0 %6622, %v6524
      %v6624 = vpop.permute.xlu0 %6623
      %6627 = vset.pattern.permute.xlu0 0
      %6628 = vperm.xlu0 %6627, %v6525
      %v6629 = vpop.permute.xlu0 %6628
      %6632 = vset.pattern.permute.xlu0 0
      %6633 = vperm.xlu0 %6632, %v6526
      %v6634 = vpop.permute.xlu0 %6633
      %6637 = vset.pattern.permute.xlu0 0
      %6638 = vperm.xlu0 %6637, %v6527
      %v6639 = vpop.permute.xlu0 %6638
      %v6641 = vmul.f32 %v6560, %v6564
      %v6642 = vmul.f32 %v6559, %v6569
      %v6643 = vmul.f32 %v6558, %v6574
      %v6644 = vmul.f32 %v6557, %v6579
      %v6645 = vmul.f32 %v6556, %v6584
      %v6646 = vmul.f32 %v6555, %v6589
      %v6647 = vmul.f32 %v6554, %v6594
      %v6648 = vmul.f32 %v6553, %v6599
      %v6649 = vmul.f32 %v6552, %v6604
      %v6650 = vmul.f32 %v6551, %v6609
      %v6651 = vmul.f32 %v6550, %v6614
      %v6652 = vmul.f32 %v6549, %v6619
      %v6653 = vmul.f32 %v6548, %v6624
      %v6654 = vmul.f32 %v6547, %v6629
      %v6655 = vmul.f32 %v6546, %v6634
      %v6656 = vmul.f32 %v6545, %v6639
      %v6657 = vpack.c.bf16 %v6641, %v6641
      %v6658 = vpack.c.bf16 %v6642, %v6642
      %v6659 = vpack.c.bf16 %v6643, %v6643
      %v6660 = vpack.c.bf16 %v6644, %v6644
      %v6661 = vpack.c.bf16 %v6645, %v6645
      %v6662 = vpack.c.bf16 %v6646, %v6646
      %v6663 = vpack.c.bf16 %v6647, %v6647
      %v6664 = vpack.c.bf16 %v6648, %v6648
      %v6665 = vpack.c.bf16 %v6649, %v6649
      %v6666 = vpack.c.bf16 %v6650, %v6650
      %v6667 = vpack.c.bf16 %v6651, %v6651
      %v6668 = vpack.c.bf16 %v6652, %v6652
      %v6669 = vpack.c.bf16 %v6653, %v6653
      %v6670 = vpack.c.bf16 %v6654, %v6654
      %v6671 = vpack.c.bf16 %v6655, %v6655
      %v6672 = vpack.c.bf16 %v6656, %v6656
      %v6673 = vrot.slane %v6359, 6
      %v6674 = vrot.slane %v6361, 6
      %v6675 = vrot.slane %v6364, 6
      %v6676 = vrot.slane %v6366, 6
      %v6677 = vrot.slane %v6369, 6
      %v6678 = vrot.slane %v6371, 6
      %v6679 = vrot.slane %v6374, 6
      %v6680 = vrot.slane %v6376, 6
      %v6681 = vrot.slane %v6379, 6
      %v6682 = vrot.slane %v6381, 6
      %v6683 = vrot.slane %v6384, 6
      %v6684 = vrot.slane %v6386, 6
      %v6685 = vrot.slane %v6389, 6
      %v6686 = vrot.slane %v6391, 6
      %v6687 = vrot.slane %v6394, 6
      %v6688 = vrot.slane %v6396, 6
      %v6689 = vsel %vm3904, %v6687, %v6688
      %v6690 = vsel %vm3904, %v6686, %v6687
      %v6691 = vsel %vm3904, %v6685, %v6686
      %v6692 = vsel %vm3904, %v6684, %v6685
      %v6693 = vsel %vm3904, %v6683, %v6684
      %v6694 = vsel %vm3904, %v6682, %v6683
      %v6695 = vsel %vm3904, %v6681, %v6682
      %v6696 = vsel %vm3904, %v6680, %v6681
      %v6697 = vsel %vm3904, %v6679, %v6680
      %v6698 = vsel %vm3904, %v6678, %v6679
      %v6699 = vsel %vm3904, %v6677, %v6678
      %v6700 = vsel %vm3904, %v6676, %v6677
      %v6701 = vsel %vm3904, %v6675, %v6676
      %v6702 = vsel %vm3904, %v6674, %v6675
      %v6703 = vsel %vm3904, %v6673, %v6674
      %v6704 = vsel %vm3904, %v6688, %v6673
      %6705 = vset.pattern.permute.xlu0 1
      %6706 = vperm.xlu0 %6705, %v6512
      %v6707 = vpop.permute.xlu0 %6706
      %6709 = vset.pattern.permute.xlu0 1
      %6710 = vperm.xlu0 %6709, %v6513
      %v6711 = vpop.permute.xlu0 %6710
      %6713 = vset.pattern.permute.xlu0 1
      %6714 = vperm.xlu0 %6713, %v6514
      %v6715 = vpop.permute.xlu0 %6714
      %6717 = vset.pattern.permute.xlu0 1
      %6718 = vperm.xlu0 %6717, %v6515
      %v6719 = vpop.permute.xlu0 %6718
      %6721 = vset.pattern.permute.xlu0 1
      %6722 = vperm.xlu0 %6721, %v6516
      %v6723 = vpop.permute.xlu0 %6722
      %6725 = vset.pattern.permute.xlu0 1
      %6726 = vperm.xlu0 %6725, %v6517
      %v6727 = vpop.permute.xlu0 %6726
      %6729 = vset.pattern.permute.xlu0 1
      %6730 = vperm.xlu0 %6729, %v6518
      %v6731 = vpop.permute.xlu0 %6730
      %6733 = vset.pattern.permute.xlu0 1
      %6734 = vperm.xlu0 %6733, %v6519
      %v6735 = vpop.permute.xlu0 %6734
      %6737 = vset.pattern.permute.xlu0 1
      %6738 = vperm.xlu0 %6737, %v6520
      %v6739 = vpop.permute.xlu0 %6738
      %6741 = vset.pattern.permute.xlu0 1
      %6742 = vperm.xlu0 %6741, %v6521
      %v6743 = vpop.permute.xlu0 %6742
      %6745 = vset.pattern.permute.xlu0 1
      %6746 = vperm.xlu0 %6745, %v6522
      %v6747 = vpop.permute.xlu0 %6746
      %6749 = vset.pattern.permute.xlu0 1
      %6750 = vperm.xlu0 %6749, %v6523
      %v6751 = vpop.permute.xlu0 %6750
      %6753 = vset.pattern.permute.xlu0 1
      %6754 = vperm.xlu0 %6753, %v6524
      %v6755 = vpop.permute.xlu0 %6754
      %6757 = vset.pattern.permute.xlu0 1
      %6758 = vperm.xlu0 %6757, %v6525
      %v6759 = vpop.permute.xlu0 %6758
      %6761 = vset.pattern.permute.xlu0 1
      %6762 = vperm.xlu0 %6761, %v6526
      %v6763 = vpop.permute.xlu0 %6762
      %6765 = vset.pattern.permute.xlu0 1
      %6766 = vperm.xlu0 %6765, %v6527
      %v6767 = vpop.permute.xlu0 %6766
      %v6769 = vmul.f32 %v6704, %v6707
      %v6770 = vmul.f32 %v6703, %v6711
      %v6771 = vmul.f32 %v6702, %v6715
      %v6772 = vmul.f32 %v6701, %v6719
      %v6773 = vmul.f32 %v6700, %v6723
      %v6774 = vmul.f32 %v6699, %v6727
      %v6775 = vmul.f32 %v6698, %v6731
      %v6776 = vmul.f32 %v6697, %v6735
      %v6777 = vmul.f32 %v6696, %v6739
      %v6778 = vmul.f32 %v6695, %v6743
      %v6779 = vmul.f32 %v6694, %v6747
      %v6780 = vmul.f32 %v6693, %v6751
      %v6781 = vmul.f32 %v6692, %v6755
      %v6782 = vmul.f32 %v6691, %v6759
      %v6783 = vmul.f32 %v6690, %v6763
      %v6784 = vmul.f32 %v6689, %v6767
      %v6785 = vpack.c.bf16 %v6769, %v6769
      %v6786 = vpack.c.bf16 %v6770, %v6770
      %v6787 = vpack.c.bf16 %v6771, %v6771
      %v6788 = vpack.c.bf16 %v6772, %v6772
      %v6789 = vpack.c.bf16 %v6773, %v6773
      %v6790 = vpack.c.bf16 %v6774, %v6774
      %v6791 = vpack.c.bf16 %v6775, %v6775
      %v6792 = vpack.c.bf16 %v6776, %v6776
      %v6793 = vpack.c.bf16 %v6777, %v6777
      %v6794 = vpack.c.bf16 %v6778, %v6778
      %v6795 = vpack.c.bf16 %v6779, %v6779
      %v6796 = vpack.c.bf16 %v6780, %v6780
      %v6797 = vpack.c.bf16 %v6781, %v6781
      %v6798 = vpack.c.bf16 %v6782, %v6782
      %v6799 = vpack.c.bf16 %v6783, %v6783
      %v6800 = vpack.c.bf16 %v6784, %v6784
      %v6801 = vrot.slane %v6359, 7
      %v6802 = vrot.slane %v6361, 7
      %v6803 = vrot.slane %v6364, 7
      %v6804 = vrot.slane %v6366, 7
      %v6805 = vrot.slane %v6369, 7
      %v6806 = vrot.slane %v6371, 7
      %v6807 = vrot.slane %v6374, 7
      %v6808 = vrot.slane %v6376, 7
      %v6809 = vrot.slane %v6379, 7
      %v6810 = vrot.slane %v6381, 7
      %v6811 = vrot.slane %v6384, 7
      %v6812 = vrot.slane %v6386, 7
      %v6813 = vrot.slane %v6389, 7
      %v6814 = vrot.slane %v6391, 7
      %v6815 = vrot.slane %v6394, 7
      %v6816 = vrot.slane %v6396, 7
      %v6817 = vsel %vm855, %v6815, %v6816
      %v6818 = vsel %vm855, %v6814, %v6815
      %v6819 = vsel %vm855, %v6813, %v6814
      %v6820 = vsel %vm855, %v6812, %v6813
      %v6821 = vsel %vm855, %v6811, %v6812
      %v6822 = vsel %vm855, %v6810, %v6811
      %v6823 = vsel %vm855, %v6809, %v6810
      %v6824 = vsel %vm855, %v6808, %v6809
      %v6825 = vsel %vm855, %v6807, %v6808
      %v6826 = vsel %vm855, %v6806, %v6807
      %v6827 = vsel %vm855, %v6805, %v6806
      %v6828 = vsel %vm855, %v6804, %v6805
      %v6829 = vsel %vm855, %v6803, %v6804
      %v6830 = vsel %vm855, %v6802, %v6803
      %v6831 = vsel %vm855, %v6801, %v6802
      %v6832 = vsel %vm855, %v6816, %v6801
      %6833 = vset.pattern.permute.xlu0 2
      %6834 = vperm.xlu0 %6833, %v6512
      %v6835 = vpop.permute.xlu0 %6834
      %6837 = vset.pattern.permute.xlu0 2
      %6838 = vperm.xlu0 %6837, %v6513
      %v6839 = vpop.permute.xlu0 %6838
      %6841 = vset.pattern.permute.xlu0 2
      %6842 = vperm.xlu0 %6841, %v6514
      %v6843 = vpop.permute.xlu0 %6842
      %6845 = vset.pattern.permute.xlu0 2
      %6846 = vperm.xlu0 %6845, %v6515
      %v6847 = vpop.permute.xlu0 %6846
      %6849 = vset.pattern.permute.xlu0 2
      %6850 = vperm.xlu0 %6849, %v6516
      %v6851 = vpop.permute.xlu0 %6850
      %6853 = vset.pattern.permute.xlu0 2
      %6854 = vperm.xlu0 %6853, %v6517
      %v6855 = vpop.permute.xlu0 %6854
      %6857 = vset.pattern.permute.xlu0 2
      %6858 = vperm.xlu0 %6857, %v6518
      %v6859 = vpop.permute.xlu0 %6858
      %6861 = vset.pattern.permute.xlu0 2
      %6862 = vperm.xlu0 %6861, %v6519
      %v6863 = vpop.permute.xlu0 %6862
      %6865 = vset.pattern.permute.xlu0 2
      %6866 = vperm.xlu0 %6865, %v6520
      %v6867 = vpop.permute.xlu0 %6866
      %6869 = vset.pattern.permute.xlu0 2
      %6870 = vperm.xlu0 %6869, %v6521
      %v6871 = vpop.permute.xlu0 %6870
      %6873 = vset.pattern.permute.xlu0 2
      %6874 = vperm.xlu0 %6873, %v6522
      %v6875 = vpop.permute.xlu0 %6874
      %6877 = vset.pattern.permute.xlu0 2
      %6878 = vperm.xlu0 %6877, %v6523
      %v6879 = vpop.permute.xlu0 %6878
      %6881 = vset.pattern.permute.xlu0 2
      %6882 = vperm.xlu0 %6881, %v6524
      %v6883 = vpop.permute.xlu0 %6882
      %6885 = vset.pattern.permute.xlu0 2
      %6886 = vperm.xlu0 %6885, %v6525
      %v6887 = vpop.permute.xlu0 %6886
      %6889 = vset.pattern.permute.xlu0 2
      %6890 = vperm.xlu0 %6889, %v6526
      %v6891 = vpop.permute.xlu0 %6890
      %6893 = vset.pattern.permute.xlu0 2
      %6894 = vperm.xlu0 %6893, %v6527
      %v6895 = vpop.permute.xlu0 %6894
      %v6897 = vmul.f32 %v6832, %v6835
      %v6898 = vmul.f32 %v6831, %v6839
      %v6899 = vmul.f32 %v6830, %v6843
      %v6900 = vmul.f32 %v6829, %v6847
      %v6901 = vmul.f32 %v6828, %v6851
      %v6902 = vmul.f32 %v6827, %v6855
      %v6903 = vmul.f32 %v6826, %v6859
      %v6904 = vmul.f32 %v6825, %v6863
      %v6905 = vmul.f32 %v6824, %v6867
      %v6906 = vmul.f32 %v6823, %v6871
      %v6907 = vmul.f32 %v6822, %v6875
      %v6908 = vmul.f32 %v6821, %v6879
      %v6909 = vmul.f32 %v6820, %v6883
      %v6910 = vmul.f32 %v6819, %v6887
      %v6911 = vmul.f32 %v6818, %v6891
      %v6912 = vmul.f32 %v6817, %v6895
      %v6913 = vpack.c.bf16 %v6897, %v6897
      %v6914 = vpack.c.bf16 %v6898, %v6898
      %v6915 = vpack.c.bf16 %v6899, %v6899
      %v6916 = vpack.c.bf16 %v6900, %v6900
      %v6917 = vpack.c.bf16 %v6901, %v6901
      %v6918 = vpack.c.bf16 %v6902, %v6902
      %v6919 = vpack.c.bf16 %v6903, %v6903
      %v6920 = vpack.c.bf16 %v6904, %v6904
      %v6921 = vpack.c.bf16 %v6905, %v6905
      %v6922 = vpack.c.bf16 %v6906, %v6906
      %v6923 = vpack.c.bf16 %v6907, %v6907
      %v6924 = vpack.c.bf16 %v6908, %v6908
      %v6925 = vpack.c.bf16 %v6909, %v6909
      %v6926 = vpack.c.bf16 %v6910, %v6910
      %v6927 = vpack.c.bf16 %v6911, %v6911
      %v6928 = vpack.c.bf16 %v6912, %v6912
      %v6929 = vpack.c.bf16 %v6359, %v6359
      %v6930 = vpack.c.bf16 %v6361, %v6361
      %v6931 = vpack.c.bf16 %v6364, %v6364
      %v6932 = vpack.c.bf16 %v6366, %v6366
      %v6933 = vpack.c.bf16 %v6369, %v6369
      %v6934 = vpack.c.bf16 %v6371, %v6371
      %v6935 = vpack.c.bf16 %v6374, %v6374
      %v6936 = vpack.c.bf16 %v6376, %v6376
      %v6937 = vpack.c.bf16 %v6379, %v6379
      %v6938 = vpack.c.bf16 %v6381, %v6381
      %v6939 = vpack.c.bf16 %v6384, %v6384
      %v6940 = vpack.c.bf16 %v6386, %v6386
      %v6941 = vpack.c.bf16 %v6389, %v6389
      %v6942 = vpack.c.bf16 %v6391, %v6391
      %v6943 = vpack.c.bf16 %v6394, %v6394
      %v6944 = vpack.c.bf16 %v6396, %v6396
      %v6945 = vrot.slane %v6359, 1
      %v6946 = vrot.slane %v6361, 1
      %v6947 = vrot.slane %v6364, 1
      %v6948 = vrot.slane %v6366, 1
      %v6949 = vrot.slane %v6369, 1
      %v6950 = vrot.slane %v6371, 1
      %v6951 = vrot.slane %v6374, 1
      %v6952 = vrot.slane %v6376, 1
      %v6953 = vrot.slane %v6379, 1
      %v6954 = vrot.slane %v6381, 1
      %v6955 = vrot.slane %v6384, 1
      %v6956 = vrot.slane %v6386, 1
      %v6957 = vrot.slane %v6389, 1
      %v6958 = vrot.slane %v6391, 1
      %v6959 = vrot.slane %v6394, 1
      %v6960 = vrot.slane %v6396, 1
      %v6961 = vsel %vm1176, %v6959, %v6960
      %v6962 = vsel %vm1176, %v6958, %v6959
      %v6963 = vsel %vm1176, %v6957, %v6958
      %v6964 = vsel %vm1176, %v6956, %v6957
      %v6965 = vsel %vm1176, %v6955, %v6956
      %v6966 = vsel %vm1176, %v6954, %v6955
      %v6967 = vsel %vm1176, %v6953, %v6954
      %v6968 = vsel %vm1176, %v6952, %v6953
      %v6969 = vsel %vm1176, %v6951, %v6952
      %v6970 = vsel %vm1176, %v6950, %v6951
      %v6971 = vsel %vm1176, %v6949, %v6950
      %v6972 = vsel %vm1176, %v6948, %v6949
      %v6973 = vsel %vm1176, %v6947, %v6948
      %v6974 = vsel %vm1176, %v6946, %v6947
      %v6975 = vsel %vm1176, %v6945, %v6946
      %v6976 = vsel %vm1176, %v6960, %v6945
      %6977 = vset.pattern.permute.xlu0 4
      %6978 = vperm.xlu0 %6977, %v6512
      %v6979 = vpop.permute.xlu0 %6978
      %6981 = vset.pattern.permute.xlu0 4
      %6982 = vperm.xlu0 %6981, %v6513
      %v6983 = vpop.permute.xlu0 %6982
      %6985 = vset.pattern.permute.xlu0 4
      %6986 = vperm.xlu0 %6985, %v6514
      %v6987 = vpop.permute.xlu0 %6986
      %6989 = vset.pattern.permute.xlu0 4
      %6990 = vperm.xlu0 %6989, %v6515
      %v6991 = vpop.permute.xlu0 %6990
      %6993 = vset.pattern.permute.xlu0 4
      %6994 = vperm.xlu0 %6993, %v6516
      %v6995 = vpop.permute.xlu0 %6994
      %6997 = vset.pattern.permute.xlu0 4
      %6998 = vperm.xlu0 %6997, %v6517
      %v6999 = vpop.permute.xlu0 %6998
      %7001 = vset.pattern.permute.xlu0 4
      %7002 = vperm.xlu0 %7001, %v6518
      %v7003 = vpop.permute.xlu0 %7002
      %7005 = vset.pattern.permute.xlu0 4
      %7006 = vperm.xlu0 %7005, %v6519
      %v7007 = vpop.permute.xlu0 %7006
      %7009 = vset.pattern.permute.xlu0 4
      %7010 = vperm.xlu0 %7009, %v6520
      %v7011 = vpop.permute.xlu0 %7010
      %7013 = vset.pattern.permute.xlu0 4
      %7014 = vperm.xlu0 %7013, %v6521
      %v7015 = vpop.permute.xlu0 %7014
      %7017 = vset.pattern.permute.xlu0 4
      %7018 = vperm.xlu0 %7017, %v6522
      %v7019 = vpop.permute.xlu0 %7018
      %7021 = vset.pattern.permute.xlu0 4
      %7022 = vperm.xlu0 %7021, %v6523
      %v7023 = vpop.permute.xlu0 %7022
      %7025 = vset.pattern.permute.xlu0 4
      %7026 = vperm.xlu0 %7025, %v6524
      %v7027 = vpop.permute.xlu0 %7026
      %7029 = vset.pattern.permute.xlu0 4
      %7030 = vperm.xlu0 %7029, %v6525
      %v7031 = vpop.permute.xlu0 %7030
      %7033 = vset.pattern.permute.xlu0 4
      %7034 = vperm.xlu0 %7033, %v6526
      %v7035 = vpop.permute.xlu0 %7034
      %7037 = vset.pattern.permute.xlu0 4
      %7038 = vperm.xlu0 %7037, %v6527
      %v7039 = vpop.permute.xlu0 %7038
      %v7041 = vmul.f32 %v6975, %v6979
      %v7042 = vmul.f32 %v6974, %v6983
      %v7043 = vmul.f32 %v6973, %v6987
      %v7044 = vmul.f32 %v6972, %v6991
      %v7045 = vmul.f32 %v6971, %v6995
      %v7046 = vmul.f32 %v6970, %v6999
      %v7047 = vmul.f32 %v6969, %v7003
      %v7048 = vmul.f32 %v6968, %v7007
      %v7049 = vmul.f32 %v6967, %v7011
      %v7050 = vmul.f32 %v6966, %v7015
      %v7051 = vmul.f32 %v6965, %v7019
      %v7052 = vmul.f32 %v6964, %v7023
      %v7053 = vmul.f32 %v6963, %v7027
      %v7054 = vmul.f32 %v6962, %v7031
      %v7055 = vmul.f32 %v6961, %v7035
      %v7056 = vmul.f32 %v6976, %v7039
      %v7057 = vpack.c.bf16 %v7041, %v7041
      %v7058 = vpack.c.bf16 %v7042, %v7042
      %v7059 = vpack.c.bf16 %v7043, %v7043
      %v7060 = vpack.c.bf16 %v7044, %v7044
      %v7061 = vpack.c.bf16 %v7045, %v7045
      %v7062 = vpack.c.bf16 %v7046, %v7046
      %v7063 = vpack.c.bf16 %v7047, %v7047
      %v7064 = vpack.c.bf16 %v7048, %v7048
      %v7065 = vpack.c.bf16 %v7049, %v7049
      %v7066 = vpack.c.bf16 %v7050, %v7050
      %v7067 = vpack.c.bf16 %v7051, %v7051
      %v7068 = vpack.c.bf16 %v7052, %v7052
      %v7069 = vpack.c.bf16 %v7053, %v7053
      %v7070 = vpack.c.bf16 %v7054, %v7054
      %v7071 = vpack.c.bf16 %v7055, %v7055
      %v7072 = vpack.c.bf16 %v7056, %v7056
      %v7073 = vrot.slane %v6359, 2
      %v7074 = vrot.slane %v6361, 2
      %v7075 = vrot.slane %v6364, 2
      %v7076 = vrot.slane %v6366, 2
      %v7077 = vrot.slane %v6369, 2
      %v7078 = vrot.slane %v6371, 2
      %v7079 = vrot.slane %v6374, 2
      %v7080 = vrot.slane %v6376, 2
      %v7081 = vrot.slane %v6379, 2
      %v7082 = vrot.slane %v6381, 2
      %v7083 = vrot.slane %v6384, 2
      %v7084 = vrot.slane %v6386, 2
      %v7085 = vrot.slane %v6389, 2
      %v7086 = vrot.slane %v6391, 2
      %v7087 = vrot.slane %v6394, 2
      %v7088 = vrot.slane %v6396, 2
      %v7089 = vsel %vm4737, %v7087, %v7088
      %v7090 = vsel %vm4737, %v7086, %v7087
      %v7091 = vsel %vm4737, %v7085, %v7086
      %v7092 = vsel %vm4737, %v7084, %v7085
      %v7093 = vsel %vm4737, %v7083, %v7084
      %v7094 = vsel %vm4737, %v7082, %v7083
      %v7095 = vsel %vm4737, %v7081, %v7082
      %v7096 = vsel %vm4737, %v7080, %v7081
      %v7097 = vsel %vm4737, %v7079, %v7080
      %v7098 = vsel %vm4737, %v7078, %v7079
      %v7099 = vsel %vm4737, %v7077, %v7078
      %v7100 = vsel %vm4737, %v7076, %v7077
      %v7101 = vsel %vm4737, %v7075, %v7076
      %v7102 = vsel %vm4737, %v7074, %v7075
      %v7103 = vsel %vm4737, %v7073, %v7074
      %v7104 = vsel %vm4737, %v7088, %v7073
      %7105 = vset.pattern.permute.xlu0 5
      %7106 = vperm.xlu0 %7105, %v6512
      %v7107 = vpop.permute.xlu0 %7106
      %7109 = vset.pattern.permute.xlu0 5
      %7110 = vperm.xlu0 %7109, %v6513
      %v7111 = vpop.permute.xlu0 %7110
      %7113 = vset.pattern.permute.xlu0 5
      %7114 = vperm.xlu0 %7113, %v6514
      %v7115 = vpop.permute.xlu0 %7114
      %7117 = vset.pattern.permute.xlu0 5
      %7118 = vperm.xlu0 %7117, %v6515
      %v7119 = vpop.permute.xlu0 %7118
      %7121 = vset.pattern.permute.xlu0 5
      %7122 = vperm.xlu0 %7121, %v6516
      %v7123 = vpop.permute.xlu0 %7122
      %7125 = vset.pattern.permute.xlu0 5
      %7126 = vperm.xlu0 %7125, %v6517
      %v7127 = vpop.permute.xlu0 %7126
      %7129 = vset.pattern.permute.xlu0 5
      %7130 = vperm.xlu0 %7129, %v6518
      %v7131 = vpop.permute.xlu0 %7130
      %7133 = vset.pattern.permute.xlu0 5
      %7134 = vperm.xlu0 %7133, %v6519
      %v7135 = vpop.permute.xlu0 %7134
      %7137 = vset.pattern.permute.xlu0 5
      %7138 = vperm.xlu0 %7137, %v6520
      %v7139 = vpop.permute.xlu0 %7138
      %7141 = vset.pattern.permute.xlu0 5
      %7142 = vperm.xlu0 %7141, %v6521
      %v7143 = vpop.permute.xlu0 %7142
      %7145 = vset.pattern.permute.xlu0 5
      %7146 = vperm.xlu0 %7145, %v6522
      %v7147 = vpop.permute.xlu0 %7146
      %7149 = vset.pattern.permute.xlu0 5
      %7150 = vperm.xlu0 %7149, %v6523
      %v7151 = vpop.permute.xlu0 %7150
      %7153 = vset.pattern.permute.xlu0 5
      %7154 = vperm.xlu0 %7153, %v6524
      %v7155 = vpop.permute.xlu0 %7154
      %7157 = vset.pattern.permute.xlu0 5
      %7158 = vperm.xlu0 %7157, %v6525
      %v7159 = vpop.permute.xlu0 %7158
      %7161 = vset.pattern.permute.xlu0 5
      %7162 = vperm.xlu0 %7161, %v6526
      %v7163 = vpop.permute.xlu0 %7162
      %7165 = vset.pattern.permute.xlu0 5
      %7166 = vperm.xlu0 %7165, %v6527
      %v7167 = vpop.permute.xlu0 %7166
      %v7169 = vmul.f32 %v7103, %v7107
      %v7170 = vmul.f32 %v7102, %v7111
      %v7171 = vmul.f32 %v7101, %v7115
      %v7172 = vmul.f32 %v7100, %v7119
      %v7173 = vmul.f32 %v7099, %v7123
      %v7174 = vmul.f32 %v7098, %v7127
      %v7175 = vmul.f32 %v7097, %v7131
      %v7176 = vmul.f32 %v7096, %v7135
      %v7177 = vmul.f32 %v7095, %v7139
      %v7178 = vmul.f32 %v7094, %v7143
      %v7179 = vmul.f32 %v7093, %v7147
      %v7180 = vmul.f32 %v7092, %v7151
      %v7181 = vmul.f32 %v7091, %v7155
      %v7182 = vmul.f32 %v7090, %v7159
      %v7183 = vmul.f32 %v7089, %v7163
      %v7184 = vmul.f32 %v7104, %v7167
      %v7185 = vpack.c.bf16 %v7169, %v7169
      %v7186 = vpack.c.bf16 %v7170, %v7170
      %v7187 = vpack.c.bf16 %v7171, %v7171
      %v7188 = vpack.c.bf16 %v7172, %v7172
      %v7189 = vpack.c.bf16 %v7173, %v7173
      %v7190 = vpack.c.bf16 %v7174, %v7174
      %v7191 = vpack.c.bf16 %v7175, %v7175
      %v7192 = vpack.c.bf16 %v7176, %v7176
      %v7193 = vpack.c.bf16 %v7177, %v7177
      %v7194 = vpack.c.bf16 %v7178, %v7178
      %v7195 = vpack.c.bf16 %v7179, %v7179
      %v7196 = vpack.c.bf16 %v7180, %v7180
      %v7197 = vpack.c.bf16 %v7181, %v7181
      %v7198 = vpack.c.bf16 %v7182, %v7182
      %v7199 = vpack.c.bf16 %v7183, %v7183
      %v7200 = vpack.c.bf16 %v7184, %v7184
      %v7201 = vrot.slane %v6359, 3
      %v7202 = vrot.slane %v6361, 3
      %v7203 = vrot.slane %v6364, 3
      %v7204 = vrot.slane %v6366, 3
      %v7205 = vrot.slane %v6369, 3
      %v7206 = vrot.slane %v6371, 3
      %v7207 = vrot.slane %v6374, 3
      %v7208 = vrot.slane %v6376, 3
      %v7209 = vrot.slane %v6379, 3
      %v7210 = vrot.slane %v6381, 3
      %v7211 = vrot.slane %v6384, 3
      %v7212 = vrot.slane %v6386, 3
      %v7213 = vrot.slane %v6389, 3
      %v7214 = vrot.slane %v6391, 3
      %v7215 = vrot.slane %v6394, 3
      %v7216 = vrot.slane %v6396, 3
      %vm7217 = vcmp.lt.s32.totalorder %v854, 5
      %v7218 = vsel %vm7217, %v7215, %v7216
      %v7219 = vsel %vm7217, %v7214, %v7215
      %v7220 = vsel %vm7217, %v7213, %v7214
      %v7221 = vsel %vm7217, %v7212, %v7213
      %v7222 = vsel %vm7217, %v7211, %v7212
      %v7223 = vsel %vm7217, %v7210, %v7211
      %v7224 = vsel %vm7217, %v7209, %v7210
      %v7225 = vsel %vm7217, %v7208, %v7209
      %v7226 = vsel %vm7217, %v7207, %v7208
      %v7227 = vsel %vm7217, %v7206, %v7207
      %v7228 = vsel %vm7217, %v7205, %v7206
      %v7229 = vsel %vm7217, %v7204, %v7205
      %v7230 = vsel %vm7217, %v7203, %v7204
      %v7231 = vsel %vm7217, %v7202, %v7203
      %v7232 = vsel %vm7217, %v7201, %v7202
      %v7233 = vsel %vm7217, %v7216, %v7201
      %7234 = vset.pattern.permute.xlu0 6
      %7235 = vperm.xlu0 %7234, %v6512
      %v7236 = vpop.permute.xlu0 %7235
      %7238 = vset.pattern.permute.xlu0 6
      %7239 = vperm.xlu0 %7238, %v6513
      %v7240 = vpop.permute.xlu0 %7239
      %7242 = vset.pattern.permute.xlu0 6
      %7243 = vperm.xlu0 %7242, %v6514
      %v7244 = vpop.permute.xlu0 %7243
      %7246 = vset.pattern.permute.xlu0 6
      %7247 = vperm.xlu0 %7246, %v6515
      %v7248 = vpop.permute.xlu0 %7247
      %7250 = vset.pattern.permute.xlu0 6
      %7251 = vperm.xlu0 %7250, %v6516
      %v7252 = vpop.permute.xlu0 %7251
      %7254 = vset.pattern.permute.xlu0 6
      %7255 = vperm.xlu0 %7254, %v6517
      %v7256 = vpop.permute.xlu0 %7255
      %7258 = vset.pattern.permute.xlu0 6
      %7259 = vperm.xlu0 %7258, %v6518
      %v7260 = vpop.permute.xlu0 %7259
      %7262 = vset.pattern.permute.xlu0 6
      %7263 = vperm.xlu0 %7262, %v6519
      %v7264 = vpop.permute.xlu0 %7263
      %7266 = vset.pattern.permute.xlu0 6
      %7267 = vperm.xlu0 %7266, %v6520
      %v7268 = vpop.permute.xlu0 %7267
      %7270 = vset.pattern.permute.xlu0 6
      %7271 = vperm.xlu0 %7270, %v6521
      %v7272 = vpop.permute.xlu0 %7271
      %7274 = vset.pattern.permute.xlu0 6
      %7275 = vperm.xlu0 %7274, %v6522
      %v7276 = vpop.permute.xlu0 %7275
      %7278 = vset.pattern.permute.xlu0 6
      %7279 = vperm.xlu0 %7278, %v6523
      %v7280 = vpop.permute.xlu0 %7279
      %7282 = vset.pattern.permute.xlu0 6
      %7283 = vperm.xlu0 %7282, %v6524
      %v7284 = vpop.permute.xlu0 %7283
      %7286 = vset.pattern.permute.xlu0 6
      %7287 = vperm.xlu0 %7286, %v6525
      %v7288 = vpop.permute.xlu0 %7287
      %7290 = vset.pattern.permute.xlu0 6
      %7291 = vperm.xlu0 %7290, %v6526
      %v7292 = vpop.permute.xlu0 %7291
      %7294 = vset.pattern.permute.xlu0 6
      %7295 = vperm.xlu0 %7294, %v6527
      %v7296 = vpop.permute.xlu0 %7295
      %v7298 = vmul.f32 %v7232, %v7236
      %v7299 = vmul.f32 %v7231, %v7240
      %v7300 = vmul.f32 %v7230, %v7244
      %v7301 = vmul.f32 %v7229, %v7248
      %v7302 = vmul.f32 %v7228, %v7252
      %v7303 = vmul.f32 %v7227, %v7256
      %v7304 = vmul.f32 %v7226, %v7260
      %v7305 = vmul.f32 %v7225, %v7264
      %v7306 = vmul.f32 %v7224, %v7268
      %v7307 = vmul.f32 %v7223, %v7272
      %v7308 = vmul.f32 %v7222, %v7276
      %v7309 = vmul.f32 %v7221, %v7280
      %v7310 = vmul.f32 %v7220, %v7284
      %v7311 = vmul.f32 %v7219, %v7288
      %v7312 = vmul.f32 %v7218, %v7292
      %v7313 = vmul.f32 %v7233, %v7296
      %v7314 = vpack.c.bf16 %v7298, %v7298
      %v7315 = vpack.c.bf16 %v7299, %v7299
      %v7316 = vpack.c.bf16 %v7300, %v7300
      %v7317 = vpack.c.bf16 %v7301, %v7301
      %v7318 = vpack.c.bf16 %v7302, %v7302
      %v7319 = vpack.c.bf16 %v7303, %v7303
      %v7320 = vpack.c.bf16 %v7304, %v7304
      %v7321 = vpack.c.bf16 %v7305, %v7305
      %v7322 = vpack.c.bf16 %v7306, %v7306
      %v7323 = vpack.c.bf16 %v7307, %v7307
      %v7324 = vpack.c.bf16 %v7308, %v7308
      %v7325 = vpack.c.bf16 %v7309, %v7309
      %v7326 = vpack.c.bf16 %v7310, %v7310
      %v7327 = vpack.c.bf16 %v7311, %v7311
      %v7328 = vpack.c.bf16 %v7312, %v7312
      %v7329 = vpack.c.bf16 %v7313, %v7313
      %v7346 = vunpack.c.l.b16 %v6657
      %v7347 = vunpack.c.l.b16 %v6658
      %v7348 = vunpack.c.l.b16 %v6659
      %v7349 = vunpack.c.l.b16 %v6660
      %v7350 = vunpack.c.l.b16 %v6661
      %v7351 = vunpack.c.l.b16 %v6662
      %v7352 = vunpack.c.l.b16 %v6663
      %v7353 = vunpack.c.l.b16 %v6664
      %v7354 = vunpack.c.l.b16 %v6665
      %v7355 = vunpack.c.l.b16 %v6666
      %v7356 = vunpack.c.l.b16 %v6667
      %v7357 = vunpack.c.l.b16 %v6668
      %v7358 = vunpack.c.l.b16 %v6669
      %v7359 = vunpack.c.l.b16 %v6670
      %v7360 = vunpack.c.l.b16 %v6671
      %v7361 = vunpack.c.l.b16 %v6672
      %v7362 = vpack.c.b16 %v7347, %v7346
      %v7363 = vpack.c.b16 %v7349, %v7348
      %v7364 = vpack.c.b16 %v7351, %v7350
      %v7365 = vpack.c.b16 %v7353, %v7352
      %v7366 = vpack.c.b16 %v7355, %v7354
      %v7367 = vpack.c.b16 %v7357, %v7356
      %v7368 = vpack.c.b16 %v7359, %v7358
      %v7369 = vpack.c.b16 %v7361, %v7360
      %v7394 = vunpack.c.l.b16 %v6785
      %v7395 = vunpack.c.l.b16 %v6786
      %v7396 = vunpack.c.l.b16 %v6787
      %v7397 = vunpack.c.l.b16 %v6788
      %v7398 = vunpack.c.l.b16 %v6789
      %v7399 = vunpack.c.l.b16 %v6790
      %v7400 = vunpack.c.l.b16 %v6791
      %v7401 = vunpack.c.l.b16 %v6792
      %v7402 = vunpack.c.l.b16 %v6793
      %v7403 = vunpack.c.l.b16 %v6794
      %v7404 = vunpack.c.l.b16 %v6795
      %v7405 = vunpack.c.l.b16 %v6796
      %v7406 = vunpack.c.l.b16 %v6797
      %v7407 = vunpack.c.l.b16 %v6798
      %v7408 = vunpack.c.l.b16 %v6799
      %v7409 = vunpack.c.l.b16 %v6800
      %v7410 = vpack.c.b16 %v7395, %v7394
      %v7411 = vpack.c.b16 %v7397, %v7396
      %v7412 = vpack.c.b16 %v7399, %v7398
      %v7413 = vpack.c.b16 %v7401, %v7400
      %v7414 = vpack.c.b16 %v7403, %v7402
      %v7415 = vpack.c.b16 %v7405, %v7404
      %v7416 = vpack.c.b16 %v7407, %v7406
      %v7417 = vpack.c.b16 %v7409, %v7408
      %v7442 = vunpack.c.l.b16 %v6913
      %v7443 = vunpack.c.l.b16 %v6914
      %v7444 = vunpack.c.l.b16 %v6915
      %v7445 = vunpack.c.l.b16 %v6916
      %v7446 = vunpack.c.l.b16 %v6917
      %v7447 = vunpack.c.l.b16 %v6918
      %v7448 = vunpack.c.l.b16 %v6919
      %v7449 = vunpack.c.l.b16 %v6920
      %v7450 = vunpack.c.l.b16 %v6921
      %v7451 = vunpack.c.l.b16 %v6922
      %v7452 = vunpack.c.l.b16 %v6923
      %v7453 = vunpack.c.l.b16 %v6924
      %v7454 = vunpack.c.l.b16 %v6925
      %v7455 = vunpack.c.l.b16 %v6926
      %v7456 = vunpack.c.l.b16 %v6927
      %v7457 = vunpack.c.l.b16 %v6928
      %v7458 = vpack.c.b16 %v7443, %v7442
      %v7459 = vpack.c.b16 %v7445, %v7444
      %v7460 = vpack.c.b16 %v7447, %v7446
      %v7461 = vpack.c.b16 %v7449, %v7448
      %v7462 = vpack.c.b16 %v7451, %v7450
      %v7463 = vpack.c.b16 %v7453, %v7452
      %v7464 = vpack.c.b16 %v7455, %v7454
      %v7465 = vpack.c.b16 %v7457, %v7456
      %v7490 = vunpack.c.l.b16 %v6929
      %v7491 = vunpack.c.l.b16 %v6930
      %v7492 = vunpack.c.l.b16 %v6931
      %v7493 = vunpack.c.l.b16 %v6932
      %v7494 = vunpack.c.l.b16 %v6933
      %v7495 = vunpack.c.l.b16 %v6934
      %v7496 = vunpack.c.l.b16 %v6935
      %v7497 = vunpack.c.l.b16 %v6936
      %v7498 = vunpack.c.l.b16 %v6937
      %v7499 = vunpack.c.l.b16 %v6938
      %v7500 = vunpack.c.l.b16 %v6939
      %v7501 = vunpack.c.l.b16 %v6940
      %v7502 = vunpack.c.l.b16 %v6941
      %v7503 = vunpack.c.l.b16 %v6942
      %v7504 = vunpack.c.l.b16 %v6943
      %v7505 = vunpack.c.l.b16 %v6944
      %v7506 = vpack.c.b16 %v7491, %v7490
      %v7507 = vpack.c.b16 %v7493, %v7492
      %v7508 = vpack.c.b16 %v7495, %v7494
      %v7509 = vpack.c.b16 %v7497, %v7496
      %v7510 = vpack.c.b16 %v7499, %v7498
      %v7511 = vpack.c.b16 %v7501, %v7500
      %v7512 = vpack.c.b16 %v7503, %v7502
      %v7513 = vpack.c.b16 %v7505, %v7504
      %v7538 = vunpack.c.l.b16 %v7057
      %v7539 = vunpack.c.l.b16 %v7058
      %v7540 = vunpack.c.l.b16 %v7059
      %v7541 = vunpack.c.l.b16 %v7060
      %v7542 = vunpack.c.l.b16 %v7061
      %v7543 = vunpack.c.l.b16 %v7062
      %v7544 = vunpack.c.l.b16 %v7063
      %v7545 = vunpack.c.l.b16 %v7064
      %v7546 = vunpack.c.l.b16 %v7065
      %v7547 = vunpack.c.l.b16 %v7066
      %v7548 = vunpack.c.l.b16 %v7067
      %v7549 = vunpack.c.l.b16 %v7068
      %v7550 = vunpack.c.l.b16 %v7069
      %v7551 = vunpack.c.l.b16 %v7070
      %v7552 = vunpack.c.l.b16 %v7071
      %v7553 = vunpack.c.l.b16 %v7072
      %v7554 = vpack.c.b16 %v7539, %v7538
      %v7555 = vpack.c.b16 %v7541, %v7540
      %v7556 = vpack.c.b16 %v7543, %v7542
      %v7557 = vpack.c.b16 %v7545, %v7544
      %v7558 = vpack.c.b16 %v7547, %v7546
      %v7559 = vpack.c.b16 %v7549, %v7548
      %v7560 = vpack.c.b16 %v7551, %v7550
      %v7561 = vpack.c.b16 %v7553, %v7552
      %v7586 = vunpack.c.l.b16 %v7185
      %v7587 = vunpack.c.l.b16 %v7186
      %v7588 = vunpack.c.l.b16 %v7187
      %v7589 = vunpack.c.l.b16 %v7188
      %v7590 = vunpack.c.l.b16 %v7189
      %v7591 = vunpack.c.l.b16 %v7190
      %v7592 = vunpack.c.l.b16 %v7191
      %v7593 = vunpack.c.l.b16 %v7192
      %v7594 = vunpack.c.l.b16 %v7193
      %v7595 = vunpack.c.l.b16 %v7194
      %v7596 = vunpack.c.l.b16 %v7195
      %v7597 = vunpack.c.l.b16 %v7196
      %v7598 = vunpack.c.l.b16 %v7197
      %v7599 = vunpack.c.l.b16 %v7198
      %v7600 = vunpack.c.l.b16 %v7199
      %v7601 = vunpack.c.l.b16 %v7200
      %v7602 = vpack.c.b16 %v7587, %v7586
      %v7603 = vpack.c.b16 %v7589, %v7588
      %v7604 = vpack.c.b16 %v7591, %v7590
      %v7605 = vpack.c.b16 %v7593, %v7592
      %v7606 = vpack.c.b16 %v7595, %v7594
      %v7607 = vpack.c.b16 %v7597, %v7596
      %v7608 = vpack.c.b16 %v7599, %v7598
      %v7609 = vpack.c.b16 %v7601, %v7600
      %v7634 = vunpack.c.l.b16 %v7314
      %v7635 = vunpack.c.l.b16 %v7315
      %v7636 = vunpack.c.l.b16 %v7316
      %v7637 = vunpack.c.l.b16 %v7317
      %v7638 = vunpack.c.l.b16 %v7318
      %v7639 = vunpack.c.l.b16 %v7319
      %v7640 = vunpack.c.l.b16 %v7320
      %v7641 = vunpack.c.l.b16 %v7321
      %v7642 = vunpack.c.l.b16 %v7322
      %v7643 = vunpack.c.l.b16 %v7323
      %v7644 = vunpack.c.l.b16 %v7324
      %v7645 = vunpack.c.l.b16 %v7325
      %v7646 = vunpack.c.l.b16 %v7326
      %v7647 = vunpack.c.l.b16 %v7327
      %v7648 = vunpack.c.l.b16 %v7328
      %v7649 = vunpack.c.l.b16 %v7329
      %v7650 = vpack.c.b16 %v7635, %v7634
      %v7651 = vpack.c.b16 %v7637, %v7636
      %v7652 = vpack.c.b16 %v7639, %v7638
      %v7653 = vpack.c.b16 %v7641, %v7640
      %v7654 = vpack.c.b16 %v7643, %v7642
      %v7655 = vpack.c.b16 %v7645, %v7644
      %v7656 = vpack.c.b16 %v7647, %v7646
      %v7657 = vpack.c.b16 %v7649, %v7648
      %v7778 = vunpack.c.l.b16 %v6398
      %v7779 = vunpack.c.h.b16 %v6398
      %v7780 = vunpack.c.l.b16 %v6399
      %v7781 = vunpack.c.h.b16 %v6399
      %v7782 = vunpack.c.l.b16 %v6400
      %v7783 = vunpack.c.h.b16 %v6400
      %v7784 = vunpack.c.l.b16 %v6401
      %v7785 = vunpack.c.h.b16 %v6401
      %v7786 = vunpack.c.l.b16 %v6402
      %v7787 = vunpack.c.h.b16 %v6402
      %v7788 = vunpack.c.l.b16 %v6403
      %v7789 = vunpack.c.h.b16 %v6403
      %v7790 = vunpack.c.l.b16 %v6404
      %v7791 = vunpack.c.h.b16 %v6404
      %v7792 = vunpack.c.l.b16 %v6405
      %v7793 = vunpack.c.h.b16 %v6405
      %v7794 = vunpack.c.l.b16 %v6406
      %v7795 = vunpack.c.h.b16 %v6406
      %v7796 = vunpack.c.l.b16 %v6407
      %v7797 = vunpack.c.h.b16 %v6407
      %v7798 = vunpack.c.l.b16 %v6408
      %v7799 = vunpack.c.h.b16 %v6408
      %v7800 = vunpack.c.l.b16 %v6409
      %v7801 = vunpack.c.h.b16 %v6409
      %v7802 = vunpack.c.l.b16 %v6410
      %v7803 = vunpack.c.h.b16 %v6410
      %v7804 = vunpack.c.l.b16 %v6411
      %v7805 = vunpack.c.h.b16 %v6411
      %v7806 = vunpack.c.l.b16 %v6412
      %v7807 = vunpack.c.h.b16 %v6412
      %v7808 = vunpack.c.l.b16 %v6413
      %v7809 = vunpack.c.h.b16 %v6413
      %v7810 = vunpack.c.l.b16 %v6414
      %v7811 = vunpack.c.h.b16 %v6414
      %v7812 = vunpack.c.l.b16 %v6415
      %v7813 = vunpack.c.h.b16 %v6415
      %v7814 = vunpack.c.l.b16 %v6416
      %v7815 = vunpack.c.h.b16 %v6416
      %v7816 = vunpack.c.l.b16 %v6417
      %v7817 = vunpack.c.h.b16 %v6417
      %v7818 = vunpack.c.l.b16 %v6418
      %v7819 = vunpack.c.h.b16 %v6418
      %v7820 = vunpack.c.l.b16 %v6419
      %v7821 = vunpack.c.h.b16 %v6419
      %v7822 = vunpack.c.l.b16 %v6420
      %v7823 = vunpack.c.h.b16 %v6420
      %v7824 = vunpack.c.l.b16 %v6421
      %v7825 = vunpack.c.h.b16 %v6421
      %v7826 = vunpack.c.l.b16 %v6422
      %v7827 = vunpack.c.h.b16 %v6422
      %v7828 = vunpack.c.l.b16 %v6423
      %v7829 = vunpack.c.h.b16 %v6423
      %v7830 = vunpack.c.l.b16 %v6424
      %v7831 = vunpack.c.h.b16 %v6424
      %v7832 = vunpack.c.l.b16 %v6425
      %v7833 = vunpack.c.h.b16 %v6425
      %v7834 = vunpack.c.l.b16 %v6426
      %v7835 = vunpack.c.h.b16 %v6426
      %v7836 = vunpack.c.l.b16 %v6427
      %v7837 = vunpack.c.h.b16 %v6427
      %v7838 = vunpack.c.l.b16 %v6428
      %v7839 = vunpack.c.h.b16 %v6428
      %v7840 = vunpack.c.l.b16 %v6429
      %v7841 = vunpack.c.h.b16 %v6429
      %v7842 = vunpack.c.l.b16 %v6430
      %v7843 = vunpack.c.h.b16 %v6430
      %v7844 = vunpack.c.l.b16 %v6431
      %v7845 = vunpack.c.h.b16 %v6431
      %v7846 = vunpack.c.l.b16 %v6432
      %v7847 = vunpack.c.h.b16 %v6432
      %v7848 = vunpack.c.l.b16 %v6433
      %v7849 = vunpack.c.h.b16 %v6433
      %v7850 = vunpack.c.l.b16 %v6434
      %v7851 = vunpack.c.h.b16 %v6434
      %v7852 = vunpack.c.l.b16 %v6435
      %v7853 = vunpack.c.h.b16 %v6435
      %v7854 = vunpack.c.l.b16 %v6436
      %v7855 = vunpack.c.h.b16 %v6436
      %v7856 = vunpack.c.l.b16 %v6437
      %v7857 = vunpack.c.h.b16 %v6437
      %v7858 = vunpack.c.l.b16 %v6438
      %v7859 = vunpack.c.h.b16 %v6438
      %v7860 = vunpack.c.l.b16 %v6439
      %v7861 = vunpack.c.h.b16 %v6439
      %v7862 = vunpack.c.l.b16 %v6440
      %v7863 = vunpack.c.h.b16 %v6440
      %v7864 = vunpack.c.l.b16 %v6441
      %v7865 = vunpack.c.h.b16 %v6441
      %v7866 = vunpack.c.l.b16 %v6442
      %v7867 = vunpack.c.h.b16 %v6442
      %v7868 = vunpack.c.l.b16 %v6443
      %v7869 = vunpack.c.h.b16 %v6443
      %v7870 = vunpack.c.l.b16 %v6444
      %v7871 = vunpack.c.h.b16 %v6444
      %v7872 = vunpack.c.l.b16 %v6445
      %v7873 = vunpack.c.h.b16 %v6445
      %v7874 = vunpack.c.l.b16 %v6446
      %v7875 = vunpack.c.h.b16 %v6446
      %v7876 = vunpack.c.l.b16 %v6447
      %v7877 = vunpack.c.h.b16 %v6447
      %v7878 = vunpack.c.l.b16 %v6448
      %v7879 = vunpack.c.h.b16 %v6448
      %v7880 = vunpack.c.l.b16 %v6449
      %v7881 = vunpack.c.h.b16 %v6449
      %v7882 = vunpack.c.l.b16 %v6450
      %v7883 = vunpack.c.h.b16 %v6450
      %v7884 = vunpack.c.l.b16 %v6451
      %v7885 = vunpack.c.h.b16 %v6451
      %v7886 = vunpack.c.l.b16 %v6452
      %v7887 = vunpack.c.h.b16 %v6452
      %v7888 = vunpack.c.l.b16 %v6453
      %v7889 = vunpack.c.h.b16 %v6453
      %v7890 = vunpack.c.l.b16 %v6454
      %v7891 = vunpack.c.h.b16 %v6454
      %v7892 = vunpack.c.l.b16 %v6455
      %v7893 = vunpack.c.h.b16 %v6455
      %v7894 = vunpack.c.l.b16 %v6456
      %v7895 = vunpack.c.h.b16 %v6456
      %v7896 = vunpack.c.l.b16 %v6457
      %v7897 = vunpack.c.h.b16 %v6457
      %v7898 = vunpack.c.l.b16 %v6458
      %v7899 = vunpack.c.h.b16 %v6458
      %v7900 = vunpack.c.l.b16 %v6459
      %v7901 = vunpack.c.h.b16 %v6459
      %v7902 = vunpack.c.l.b16 %v6460
      %v7903 = vunpack.c.h.b16 %v6460
      %v7904 = vunpack.c.l.b16 %v6461
      %v7905 = vunpack.c.h.b16 %v6461
      %v7906 = vunpack.c.l.b16 %v6462
      %v7907 = vunpack.c.h.b16 %v6462
      %v7908 = vunpack.c.l.b16 %v6463
      %v7909 = vunpack.c.h.b16 %v6463
      %v7910 = vunpack.c.l.b16 %v6464
      %v7911 = vunpack.c.h.b16 %v6464
      %v7912 = vunpack.c.l.b16 %v6465
      %v7913 = vunpack.c.h.b16 %v6465
      %v7914 = vunpack.c.l.b16 %v6466
      %v7915 = vunpack.c.h.b16 %v6466
      %v7916 = vunpack.c.l.b16 %v6467
      %v7917 = vunpack.c.h.b16 %v6467
      %v7918 = vunpack.c.l.b16 %v6468
      %v7919 = vunpack.c.h.b16 %v6468
      %v7920 = vunpack.c.l.b16 %v6469
      %v7921 = vunpack.c.h.b16 %v6469
      %v7922 = vunpack.c.l.b16 %v6470
      %v7923 = vunpack.c.h.b16 %v6470
      %v7924 = vunpack.c.l.b16 %v6471
      %v7925 = vunpack.c.h.b16 %v6471
      %v7926 = vunpack.c.l.b16 %v6472
      %v7927 = vunpack.c.h.b16 %v6472
      %v7928 = vunpack.c.l.b16 %v6473
      %v7929 = vunpack.c.h.b16 %v6473
      %v7930 = vunpack.c.l.b16 %v6474
      %v7931 = vunpack.c.h.b16 %v6474
      %v7932 = vunpack.c.l.b16 %v6475
      %v7933 = vunpack.c.h.b16 %v6475
      %v7934 = vunpack.c.l.b16 %v6476
      %v7935 = vunpack.c.h.b16 %v6476
      %v7936 = vunpack.c.l.b16 %v6477
      %v7937 = vunpack.c.h.b16 %v6477
      %v7938 = vunpack.c.l.b16 %v6478
      %v7939 = vunpack.c.h.b16 %v6478
      %v7940 = vunpack.c.l.b16 %v6479
      %v7941 = vunpack.c.h.b16 %v6479
      %v7942 = vunpack.c.l.b16 %v6480
      %v7943 = vunpack.c.h.b16 %v6480
      %v7944 = vunpack.c.l.b16 %v6481
      %v7945 = vunpack.c.h.b16 %v6481
      %v7946 = vunpack.c.l.b16 %v6482
      %v7947 = vunpack.c.h.b16 %v6482
      %v7948 = vunpack.c.l.b16 %v6483
      %v7949 = vunpack.c.h.b16 %v6483
      %v7950 = vunpack.c.l.b16 %v6484
      %v7951 = vunpack.c.h.b16 %v6484
      %v7952 = vunpack.c.l.b16 %v6485
      %v7953 = vunpack.c.h.b16 %v6485
      %v7954 = vunpack.c.l.b16 %v6486
      %v7955 = vunpack.c.h.b16 %v6486
      %v7956 = vunpack.c.l.b16 %v6487
      %v7957 = vunpack.c.h.b16 %v6487
      %v7958 = vunpack.c.l.b16 %v6488
      %v7959 = vunpack.c.h.b16 %v6488
      %v7960 = vunpack.c.l.b16 %v6489
      %v7961 = vunpack.c.h.b16 %v6489
      %v7962 = vunpack.c.l.b16 %v6490
      %v7963 = vunpack.c.h.b16 %v6490
      %v7964 = vunpack.c.l.b16 %v6491
      %v7965 = vunpack.c.h.b16 %v6491
      %v7966 = vunpack.c.l.b16 %v6492
      %v7967 = vunpack.c.h.b16 %v6492
      %v7968 = vunpack.c.l.b16 %v6493
      %v7969 = vunpack.c.h.b16 %v6493
      %v7970 = vunpack.c.l.b16 %v6494
      %v7971 = vunpack.c.h.b16 %v6494
      %v7972 = vunpack.c.l.b16 %v6495
      %v7973 = vunpack.c.h.b16 %v6495
      %v7974 = vunpack.c.l.b16 %v6496
      %v7975 = vunpack.c.h.b16 %v6496
      %v7976 = vunpack.c.l.b16 %v6497
      %v7977 = vunpack.c.h.b16 %v6497
      %v7978 = vunpack.c.l.b16 %v6498
      %v7979 = vunpack.c.h.b16 %v6498
      %v7980 = vunpack.c.l.b16 %v6499
      %v7981 = vunpack.c.h.b16 %v6499
      %v7982 = vunpack.c.l.b16 %v6500
      %v7983 = vunpack.c.h.b16 %v6500
      %v7984 = vunpack.c.l.b16 %v6501
      %v7985 = vunpack.c.h.b16 %v6501
      %v7986 = vunpack.c.l.b16 %v6502
      %v7987 = vunpack.c.h.b16 %v6502
      %v7988 = vunpack.c.l.b16 %v6503
      %v7989 = vunpack.c.h.b16 %v6503
      %v7990 = vunpack.c.l.b16 %v6504
      %v7991 = vunpack.c.h.b16 %v6504
      %v7992 = vunpack.c.l.b16 %v6505
      %v7993 = vunpack.c.h.b16 %v6505
      %v7994 = vunpack.c.l.b16 %v6506
      %v7995 = vunpack.c.h.b16 %v6506
      %v7996 = vunpack.c.l.b16 %v6507
      %v7997 = vunpack.c.h.b16 %v6507
      %v7998 = vunpack.c.l.b16 %v6508
      %v7999 = vunpack.c.h.b16 %v6508
      %v8000 = vunpack.c.l.b16 %v6509
      %v8001 = vunpack.c.h.b16 %v6509
      %v8002 = vpack.c.b16 %v7780, %v7778
      %v8003 = vpack.c.b16 %v7781, %v7779
      %v8004 = vpack.c.b16 %v7784, %v7782
      %v8005 = vpack.c.b16 %v7785, %v7783
      %v8006 = vpack.c.b16 %v7788, %v7786
      %v8007 = vpack.c.b16 %v7789, %v7787
      %v8008 = vpack.c.b16 %v7792, %v7790
      %v8009 = vpack.c.b16 %v7793, %v7791
      %v8010 = vpack.c.b16 %v7796, %v7794
      %v8011 = vpack.c.b16 %v7797, %v7795
      %v8012 = vpack.c.b16 %v7800, %v7798
      %v8013 = vpack.c.b16 %v7801, %v7799
      %v8014 = vpack.c.b16 %v7804, %v7802
      %v8015 = vpack.c.b16 %v7805, %v7803
      %v8016 = vpack.c.b16 %v7808, %v7806
      %v8017 = vpack.c.b16 %v7809, %v7807
      %v8018 = vpack.c.b16 %v7812, %v7810
      %v8019 = vpack.c.b16 %v7813, %v7811
      %v8020 = vpack.c.b16 %v7816, %v7814
      %v8021 = vpack.c.b16 %v7817, %v7815
      %v8022 = vpack.c.b16 %v7820, %v7818
      %v8023 = vpack.c.b16 %v7821, %v7819
      %v8024 = vpack.c.b16 %v7824, %v7822
      %v8025 = vpack.c.b16 %v7825, %v7823
      %v8026 = vpack.c.b16 %v7828, %v7826
      %v8027 = vpack.c.b16 %v7829, %v7827
      %v8028 = vpack.c.b16 %v7832, %v7830
      %v8029 = vpack.c.b16 %v7833, %v7831
      %v8030 = vpack.c.b16 %v7836, %v7834
      %v8031 = vpack.c.b16 %v7837, %v7835
      %v8032 = vpack.c.b16 %v7840, %v7838
      %v8033 = vpack.c.b16 %v7841, %v7839
      %v8034 = vpack.c.b16 %v7844, %v7842
      %v8035 = vpack.c.b16 %v7845, %v7843
      %v8036 = vpack.c.b16 %v7848, %v7846
      %v8037 = vpack.c.b16 %v7849, %v7847
      %v8038 = vpack.c.b16 %v7852, %v7850
      %v8039 = vpack.c.b16 %v7853, %v7851
      %v8040 = vpack.c.b16 %v7856, %v7854
      %v8041 = vpack.c.b16 %v7857, %v7855
      %v8042 = vpack.c.b16 %v7860, %v7858
      %v8043 = vpack.c.b16 %v7861, %v7859
      %v8044 = vpack.c.b16 %v7864, %v7862
      %v8045 = vpack.c.b16 %v7865, %v7863
      %v8046 = vpack.c.b16 %v7868, %v7866
      %v8047 = vpack.c.b16 %v7869, %v7867
      %v8048 = vpack.c.b16 %v7872, %v7870
      %v8049 = vpack.c.b16 %v7873, %v7871
      %v8050 = vpack.c.b16 %v7876, %v7874
      %v8051 = vpack.c.b16 %v7877, %v7875
      %v8052 = vpack.c.b16 %v7880, %v7878
      %v8053 = vpack.c.b16 %v7881, %v7879
      %v8054 = vpack.c.b16 %v7884, %v7882
      %v8055 = vpack.c.b16 %v7885, %v7883
      %v8056 = vpack.c.b16 %v7888, %v7886
      %v8057 = vpack.c.b16 %v7889, %v7887
      %v8058 = vpack.c.b16 %v7892, %v7890
      %v8059 = vpack.c.b16 %v7893, %v7891
      %v8060 = vpack.c.b16 %v7896, %v7894
      %v8061 = vpack.c.b16 %v7897, %v7895
      %v8062 = vpack.c.b16 %v7900, %v7898
      %v8063 = vpack.c.b16 %v7901, %v7899
      %v8064 = vpack.c.b16 %v7904, %v7902
      %v8065 = vpack.c.b16 %v7905, %v7903
      %v8066 = vpack.c.b16 %v7908, %v7906
      %v8067 = vpack.c.b16 %v7909, %v7907
      %v8068 = vpack.c.b16 %v7912, %v7910
      %v8069 = vpack.c.b16 %v7913, %v7911
      %v8070 = vpack.c.b16 %v7916, %v7914
      %v8071 = vpack.c.b16 %v7917, %v7915
      %v8072 = vpack.c.b16 %v7920, %v7918
      %v8073 = vpack.c.b16 %v7921, %v7919
      %v8074 = vpack.c.b16 %v7924, %v7922
      %v8075 = vpack.c.b16 %v7925, %v7923
      %v8076 = vpack.c.b16 %v7928, %v7926
      %v8077 = vpack.c.b16 %v7929, %v7927
      %v8078 = vpack.c.b16 %v7932, %v7930
      %v8079 = vpack.c.b16 %v7933, %v7931
      %v8080 = vpack.c.b16 %v7936, %v7934
      %v8081 = vpack.c.b16 %v7937, %v7935
      %v8082 = vpack.c.b16 %v7940, %v7938
      %v8083 = vpack.c.b16 %v7941, %v7939
      %v8084 = vpack.c.b16 %v7944, %v7942
      %v8085 = vpack.c.b16 %v7945, %v7943
      %v8086 = vpack.c.b16 %v7948, %v7946
      %v8087 = vpack.c.b16 %v7949, %v7947
      %v8088 = vpack.c.b16 %v7952, %v7950
      %v8089 = vpack.c.b16 %v7953, %v7951
      %v8090 = vpack.c.b16 %v7956, %v7954
      %v8091 = vpack.c.b16 %v7957, %v7955
      %v8092 = vpack.c.b16 %v7960, %v7958
      %v8093 = vpack.c.b16 %v7961, %v7959
      %v8094 = vpack.c.b16 %v7964, %v7962
      %v8095 = vpack.c.b16 %v7965, %v7963
      %v8096 = vpack.c.b16 %v7968, %v7966
      %v8097 = vpack.c.b16 %v7969, %v7967
      %v8098 = vpack.c.b16 %v7972, %v7970
      %v8099 = vpack.c.b16 %v7973, %v7971
      %v8100 = vpack.c.b16 %v7976, %v7974
      %v8101 = vpack.c.b16 %v7977, %v7975
      %v8102 = vpack.c.b16 %v7980, %v7978
      %v8103 = vpack.c.b16 %v7981, %v7979
      %v8104 = vpack.c.b16 %v7984, %v7982
      %v8105 = vpack.c.b16 %v7985, %v7983
      %v8106 = vpack.c.b16 %v7988, %v7986
      %v8107 = vpack.c.b16 %v7989, %v7987
      %v8108 = vpack.c.b16 %v7992, %v7990
      %v8109 = vpack.c.b16 %v7993, %v7991
      %v8110 = vpack.c.b16 %v7996, %v7994
      %v8111 = vpack.c.b16 %v7997, %v7995
      %v8112 = vpack.c.b16 %v8000, %v7998
      %v8113 = vpack.c.b16 %v8001, %v7999
      %8226 = vmatpush.bf16.msra.mxu0 %v8016
      %8227 = vmatpush.bf16.msra.mxu0 %v8014
      %8228 = vmatpush.bf16.msra.mxu0 %v8012
      %8229 = vmatpush.bf16.msra.mxu0 %v8010
      %8230 = vmatpush.bf16.msra.mxu0 %v8008
      %8231 = vmatpush.bf16.msra.mxu0 %v8006
      %8232 = vmatpush.bf16.msra.mxu0 %v8004
      %8233 = vmatpush.bf16.msra.mxu0 %v8002
      %8234 = vmatmul.bf16.gmra.mxu0 %v7362
      %v8235 = vpop.f32.mrf.mxu0
      %v8236 = vadd.f32 0.0, %v8235
      %v8237 = vpop.f32.mrf.mxu0
      %v8238 = vadd.f32 0.0, %v8237
      %8239 = vmatmul.bf16.gmra.mxu0 %v7363
      %v8240 = vpop.f32.mrf.mxu0
      %v8241 = vadd.f32 0.0, %v8240
      %v8242 = vpop.f32.mrf.mxu0
      %v8243 = vadd.f32 0.0, %v8242
      %8244 = vmatmul.bf16.gmra.mxu0 %v7364
      %v8245 = vpop.f32.mrf.mxu0
      %v8246 = vadd.f32 0.0, %v8245
      %v8247 = vpop.f32.mrf.mxu0
      %v8248 = vadd.f32 0.0, %v8247
      %8249 = vmatmul.bf16.gmra.mxu0 %v7365
      %v8250 = vpop.f32.mrf.mxu0
      %v8251 = vadd.f32 0.0, %v8250
      %v8252 = vpop.f32.mrf.mxu0
      %v8253 = vadd.f32 0.0, %v8252
      %8254 = vmatmul.bf16.gmra.mxu0 %v7366
      %v8255 = vpop.f32.mrf.mxu0
      %v8256 = vadd.f32 0.0, %v8255
      %v8257 = vpop.f32.mrf.mxu0
      %v8258 = vadd.f32 0.0, %v8257
      %8259 = vmatmul.bf16.gmra.mxu0 %v7367
      %v8260 = vpop.f32.mrf.mxu0
      %v8261 = vadd.f32 0.0, %v8260
      %v8262 = vpop.f32.mrf.mxu0
      %v8263 = vadd.f32 0.0, %v8262
      %8264 = vmatmul.bf16.gmra.mxu0 %v7368
      %v8265 = vpop.f32.mrf.mxu0
      %v8266 = vadd.f32 0.0, %v8265
      %v8267 = vpop.f32.mrf.mxu0
      %v8268 = vadd.f32 0.0, %v8267
      %8269 = vmatmul.bf16.gmra.mxu0 %v7369
      %v8270 = vpop.f32.mrf.mxu0
      %v8271 = vadd.f32 0.0, %v8270
      %v8272 = vpop.f32.mrf.mxu0
      %v8273 = vadd.f32 0.0, %v8272
      %8274 = vdwg.mxu0
      %8275 = vmatpush.bf16.msra.mxu0 %v8032
      %8276 = vmatpush.bf16.msra.mxu0 %v8030
      %8277 = vmatpush.bf16.msra.mxu0 %v8028
      %8278 = vmatpush.bf16.msra.mxu0 %v8026
      %8279 = vmatpush.bf16.msra.mxu0 %v8024
      %8280 = vmatpush.bf16.msra.mxu0 %v8022
      %8281 = vmatpush.bf16.msra.mxu0 %v8020
      %8282 = vmatpush.bf16.msra.mxu0 %v8018
      %8283 = vmatmul.bf16.gmra.mxu0 %v7410
      %v8284 = vpop.f32.mrf.mxu0
      %v8285 = vadd.f32 %v8236, %v8284
      %v8286 = vpop.f32.mrf.mxu0
      %v8287 = vadd.f32 %v8238, %v8286
      %8288 = vmatmul.bf16.gmra.mxu0 %v7411
      %v8289 = vpop.f32.mrf.mxu0
      %v8290 = vadd.f32 %v8241, %v8289
      %v8291 = vpop.f32.mrf.mxu0
      %v8292 = vadd.f32 %v8243, %v8291
      %8293 = vmatmul.bf16.gmra.mxu0 %v7412
      %v8294 = vpop.f32.mrf.mxu0
      %v8295 = vadd.f32 %v8246, %v8294
      %v8296 = vpop.f32.mrf.mxu0
      %v8297 = vadd.f32 %v8248, %v8296
      %8298 = vmatmul.bf16.gmra.mxu0 %v7413
      %v8299 = vpop.f32.mrf.mxu0
      %v8300 = vadd.f32 %v8251, %v8299
      %v8301 = vpop.f32.mrf.mxu0
      %v8302 = vadd.f32 %v8253, %v8301
      %8303 = vmatmul.bf16.gmra.mxu0 %v7414
      %v8304 = vpop.f32.mrf.mxu0
      %v8305 = vadd.f32 %v8256, %v8304
      %v8306 = vpop.f32.mrf.mxu0
      %v8307 = vadd.f32 %v8258, %v8306
      %8308 = vmatmul.bf16.gmra.mxu0 %v7415
      %v8309 = vpop.f32.mrf.mxu0
      %v8310 = vadd.f32 %v8261, %v8309
      %v8311 = vpop.f32.mrf.mxu0
      %v8312 = vadd.f32 %v8263, %v8311
      %8313 = vmatmul.bf16.gmra.mxu0 %v7416
      %v8314 = vpop.f32.mrf.mxu0
      %v8315 = vadd.f32 %v8266, %v8314
      %v8316 = vpop.f32.mrf.mxu0
      %v8317 = vadd.f32 %v8268, %v8316
      %8318 = vmatmul.bf16.gmra.mxu0 %v7417
      %v8319 = vpop.f32.mrf.mxu0
      %v8320 = vadd.f32 %v8271, %v8319
      %v8321 = vpop.f32.mrf.mxu0
      %v8322 = vadd.f32 %v8273, %v8321
      %8323 = vdwg.mxu0
      %8324 = vmatpush.bf16.msra.mxu0 %v8048
      %8325 = vmatpush.bf16.msra.mxu0 %v8046
      %8326 = vmatpush.bf16.msra.mxu0 %v8044
      %8327 = vmatpush.bf16.msra.mxu0 %v8042
      %8328 = vmatpush.bf16.msra.mxu0 %v8040
      %8329 = vmatpush.bf16.msra.mxu0 %v8038
      %8330 = vmatpush.bf16.msra.mxu0 %v8036
      %8331 = vmatpush.bf16.msra.mxu0 %v8034
      %8332 = vmatmul.bf16.gmra.mxu0 %v7458
      %v8333 = vpop.f32.mrf.mxu0
      %v8334 = vadd.f32 %v8285, %v8333
      %v8335 = vpop.f32.mrf.mxu0
      %v8336 = vadd.f32 %v8287, %v8335
      %8337 = vmatmul.bf16.gmra.mxu0 %v7459
      %v8338 = vpop.f32.mrf.mxu0
      %v8339 = vadd.f32 %v8290, %v8338
      %v8340 = vpop.f32.mrf.mxu0
      %v8341 = vadd.f32 %v8292, %v8340
      %8342 = vmatmul.bf16.gmra.mxu0 %v7460
      %v8343 = vpop.f32.mrf.mxu0
      %v8344 = vadd.f32 %v8295, %v8343
      %v8345 = vpop.f32.mrf.mxu0
      %v8346 = vadd.f32 %v8297, %v8345
      %8347 = vmatmul.bf16.gmra.mxu0 %v7461
      %v8348 = vpop.f32.mrf.mxu0
      %v8349 = vadd.f32 %v8300, %v8348
      %v8350 = vpop.f32.mrf.mxu0
      %v8351 = vadd.f32 %v8302, %v8350
      %8352 = vmatmul.bf16.gmra.mxu0 %v7462
      %v8353 = vpop.f32.mrf.mxu0
      %v8354 = vadd.f32 %v8305, %v8353
      %v8355 = vpop.f32.mrf.mxu0
      %v8356 = vadd.f32 %v8307, %v8355
      %8357 = vmatmul.bf16.gmra.mxu0 %v7463
      %v8358 = vpop.f32.mrf.mxu0
      %v8359 = vadd.f32 %v8310, %v8358
      %v8360 = vpop.f32.mrf.mxu0
      %v8361 = vadd.f32 %v8312, %v8360
      %8362 = vmatmul.bf16.gmra.mxu0 %v7464
      %v8363 = vpop.f32.mrf.mxu0
      %v8364 = vadd.f32 %v8315, %v8363
      %v8365 = vpop.f32.mrf.mxu0
      %v8366 = vadd.f32 %v8317, %v8365
      %8367 = vmatmul.bf16.gmra.mxu0 %v7465
      %v8368 = vpop.f32.mrf.mxu0
      %v8369 = vadd.f32 %v8320, %v8368
      %v8370 = vpop.f32.mrf.mxu0
      %v8371 = vadd.f32 %v8322, %v8370
      %8372 = vdwg.mxu0
      %8373 = vmatpush.bf16.msra.mxu0 %v8064
      %8374 = vmatpush.bf16.msra.mxu0 %v8062
      %8375 = vmatpush.bf16.msra.mxu0 %v8060
      %8376 = vmatpush.bf16.msra.mxu0 %v8058
      %8377 = vmatpush.bf16.msra.mxu0 %v8056
      %8378 = vmatpush.bf16.msra.mxu0 %v8054
      %8379 = vmatpush.bf16.msra.mxu0 %v8052
      %8380 = vmatpush.bf16.msra.mxu0 %v8050
      %8381 = vmatmul.bf16.gmra.mxu0 %v7506
      %v8382 = vpop.f32.mrf.mxu0
      %v8383 = vadd.f32 %v8334, %v8382
      %v8384 = vpop.f32.mrf.mxu0
      %v8385 = vadd.f32 %v8336, %v8384
      %8386 = vmatmul.bf16.gmra.mxu0 %v7507
      %v8387 = vpop.f32.mrf.mxu0
      %v8388 = vadd.f32 %v8339, %v8387
      %v8389 = vpop.f32.mrf.mxu0
      %v8390 = vadd.f32 %v8341, %v8389
      %8391 = vmatmul.bf16.gmra.mxu0 %v7508
      %v8392 = vpop.f32.mrf.mxu0
      %v8393 = vadd.f32 %v8344, %v8392
      %v8394 = vpop.f32.mrf.mxu0
      %v8395 = vadd.f32 %v8346, %v8394
      %8396 = vmatmul.bf16.gmra.mxu0 %v7509
      %v8397 = vpop.f32.mrf.mxu0
      %v8398 = vadd.f32 %v8349, %v8397
      %v8399 = vpop.f32.mrf.mxu0
      %v8400 = vadd.f32 %v8351, %v8399
      %8401 = vmatmul.bf16.gmra.mxu0 %v7510
      %v8402 = vpop.f32.mrf.mxu0
      %v8403 = vadd.f32 %v8354, %v8402
      %v8404 = vpop.f32.mrf.mxu0
      %v8405 = vadd.f32 %v8356, %v8404
      %8406 = vmatmul.bf16.gmra.mxu0 %v7511
      %v8407 = vpop.f32.mrf.mxu0
      %v8408 = vadd.f32 %v8359, %v8407
      %v8409 = vpop.f32.mrf.mxu0
      %v8410 = vadd.f32 %v8361, %v8409
      %8411 = vmatmul.bf16.gmra.mxu0 %v7512
      %v8412 = vpop.f32.mrf.mxu0
      %v8413 = vadd.f32 %v8364, %v8412
      %v8414 = vpop.f32.mrf.mxu0
      %v8415 = vadd.f32 %v8366, %v8414
      %8416 = vmatmul.bf16.gmra.mxu0 %v7513
      %v8417 = vpop.f32.mrf.mxu0
      %v8418 = vadd.f32 %v8369, %v8417
      %v8419 = vpop.f32.mrf.mxu0
      %v8420 = vadd.f32 %v8371, %v8419
      %8421 = vdwg.mxu0
      %8422 = vmatpush.bf16.msra.mxu0 %v8080
      %8423 = vmatpush.bf16.msra.mxu0 %v8078
      %8424 = vmatpush.bf16.msra.mxu0 %v8076
      %8425 = vmatpush.bf16.msra.mxu0 %v8074
      %8426 = vmatpush.bf16.msra.mxu0 %v8072
      %8427 = vmatpush.bf16.msra.mxu0 %v8070
      %8428 = vmatpush.bf16.msra.mxu0 %v8068
      %8429 = vmatpush.bf16.msra.mxu0 %v8066
      %8430 = vmatmul.bf16.gmra.mxu0 %v7554
      %v8431 = vpop.f32.mrf.mxu0
      %v8432 = vadd.f32 %v8383, %v8431
      %v8433 = vpop.f32.mrf.mxu0
      %v8434 = vadd.f32 %v8385, %v8433
      %8435 = vmatmul.bf16.gmra.mxu0 %v7555
      %v8436 = vpop.f32.mrf.mxu0
      %v8437 = vadd.f32 %v8388, %v8436
      %v8438 = vpop.f32.mrf.mxu0
      %v8439 = vadd.f32 %v8390, %v8438
      %8440 = vmatmul.bf16.gmra.mxu0 %v7556
      %v8441 = vpop.f32.mrf.mxu0
      %v8442 = vadd.f32 %v8393, %v8441
      %v8443 = vpop.f32.mrf.mxu0
      %v8444 = vadd.f32 %v8395, %v8443
      %8445 = vmatmul.bf16.gmra.mxu0 %v7557
      %v8446 = vpop.f32.mrf.mxu0
      %v8447 = vadd.f32 %v8398, %v8446
      %v8448 = vpop.f32.mrf.mxu0
      %v8449 = vadd.f32 %v8400, %v8448
      %8450 = vmatmul.bf16.gmra.mxu0 %v7558
      %v8451 = vpop.f32.mrf.mxu0
      %v8452 = vadd.f32 %v8403, %v8451
      %v8453 = vpop.f32.mrf.mxu0
      %v8454 = vadd.f32 %v8405, %v8453
      %8455 = vmatmul.bf16.gmra.mxu0 %v7559
      %v8456 = vpop.f32.mrf.mxu0
      %v8457 = vadd.f32 %v8408, %v8456
      %v8458 = vpop.f32.mrf.mxu0
      %v8459 = vadd.f32 %v8410, %v8458
      %8460 = vmatmul.bf16.gmra.mxu0 %v7560
      %v8461 = vpop.f32.mrf.mxu0
      %v8462 = vadd.f32 %v8413, %v8461
      %v8463 = vpop.f32.mrf.mxu0
      %v8464 = vadd.f32 %v8415, %v8463
      %8465 = vmatmul.bf16.gmra.mxu0 %v7561
      %v8466 = vpop.f32.mrf.mxu0
      %v8467 = vadd.f32 %v8418, %v8466
      %v8468 = vpop.f32.mrf.mxu0
      %v8469 = vadd.f32 %v8420, %v8468
      %8470 = vdwg.mxu0
      %8471 = vmatpush.bf16.msra.mxu0 %v8096
      %8472 = vmatpush.bf16.msra.mxu0 %v8094
      %8473 = vmatpush.bf16.msra.mxu0 %v8092
      %8474 = vmatpush.bf16.msra.mxu0 %v8090
      %8475 = vmatpush.bf16.msra.mxu0 %v8088
      %8476 = vmatpush.bf16.msra.mxu0 %v8086
      %8477 = vmatpush.bf16.msra.mxu0 %v8084
      %8478 = vmatpush.bf16.msra.mxu0 %v8082
      %8479 = vmatmul.bf16.gmra.mxu0 %v7602
      %v8480 = vpop.f32.mrf.mxu0
      %v8481 = vadd.f32 %v8432, %v8480
      %v8482 = vpop.f32.mrf.mxu0
      %v8483 = vadd.f32 %v8434, %v8482
      %8484 = vmatmul.bf16.gmra.mxu0 %v7603
      %v8485 = vpop.f32.mrf.mxu0
      %v8486 = vadd.f32 %v8437, %v8485
      %v8487 = vpop.f32.mrf.mxu0
      %v8488 = vadd.f32 %v8439, %v8487
      %8489 = vmatmul.bf16.gmra.mxu0 %v7604
      %v8490 = vpop.f32.mrf.mxu0
      %v8491 = vadd.f32 %v8442, %v8490
      %v8492 = vpop.f32.mrf.mxu0
      %v8493 = vadd.f32 %v8444, %v8492
      %8494 = vmatmul.bf16.gmra.mxu0 %v7605
      %v8495 = vpop.f32.mrf.mxu0
      %v8496 = vadd.f32 %v8447, %v8495
      %v8497 = vpop.f32.mrf.mxu0
      %v8498 = vadd.f32 %v8449, %v8497
      %8499 = vmatmul.bf16.gmra.mxu0 %v7606
      %v8500 = vpop.f32.mrf.mxu0
      %v8501 = vadd.f32 %v8452, %v8500
      %v8502 = vpop.f32.mrf.mxu0
      %v8503 = vadd.f32 %v8454, %v8502
      %8504 = vmatmul.bf16.gmra.mxu0 %v7607
      %v8505 = vpop.f32.mrf.mxu0
      %v8506 = vadd.f32 %v8457, %v8505
      %v8507 = vpop.f32.mrf.mxu0
      %v8508 = vadd.f32 %v8459, %v8507
      %8509 = vmatmul.bf16.gmra.mxu0 %v7608
      %v8510 = vpop.f32.mrf.mxu0
      %v8511 = vadd.f32 %v8462, %v8510
      %v8512 = vpop.f32.mrf.mxu0
      %v8513 = vadd.f32 %v8464, %v8512
      %8514 = vmatmul.bf16.gmra.mxu0 %v7609
      %v8515 = vpop.f32.mrf.mxu0
      %v8516 = vadd.f32 %v8467, %v8515
      %v8517 = vpop.f32.mrf.mxu0
      %v8518 = vadd.f32 %v8469, %v8517
      %8519 = vdwg.mxu0
      %8520 = vmatpush.bf16.msra.mxu0 %v8112
      %8521 = vmatpush.bf16.msra.mxu0 %v8110
      %8522 = vmatpush.bf16.msra.mxu0 %v8108
      %8523 = vmatpush.bf16.msra.mxu0 %v8106
      %8524 = vmatpush.bf16.msra.mxu0 %v8104
      %8525 = vmatpush.bf16.msra.mxu0 %v8102
      %8526 = vmatpush.bf16.msra.mxu0 %v8100
      %8527 = vmatpush.bf16.msra.mxu0 %v8098
      %8528 = vmatmul.bf16.gmra.mxu0 %v7650
      %v8529 = vpop.f32.mrf.mxu0
      %v8530 = vadd.f32 %v8481, %v8529
      %v8531 = vpop.f32.mrf.mxu0
      %v8532 = vadd.f32 %v8483, %v8531
      %8533 = vmatmul.bf16.gmra.mxu0 %v7651
      %v8534 = vpop.f32.mrf.mxu0
      %v8535 = vadd.f32 %v8486, %v8534
      %v8536 = vpop.f32.mrf.mxu0
      %v8537 = vadd.f32 %v8488, %v8536
      %8538 = vmatmul.bf16.gmra.mxu0 %v7652
      %v8539 = vpop.f32.mrf.mxu0
      %v8540 = vadd.f32 %v8491, %v8539
      %v8541 = vpop.f32.mrf.mxu0
      %v8542 = vadd.f32 %v8493, %v8541
      %8543 = vmatmul.bf16.gmra.mxu0 %v7653
      %v8544 = vpop.f32.mrf.mxu0
      %v8545 = vadd.f32 %v8496, %v8544
      %v8546 = vpop.f32.mrf.mxu0
      %v8547 = vadd.f32 %v8498, %v8546
      %8548 = vmatmul.bf16.gmra.mxu0 %v7654
      %v8549 = vpop.f32.mrf.mxu0
      %v8550 = vadd.f32 %v8501, %v8549
      %v8551 = vpop.f32.mrf.mxu0
      %v8552 = vadd.f32 %v8503, %v8551
      %8553 = vmatmul.bf16.gmra.mxu0 %v7655
      %v8554 = vpop.f32.mrf.mxu0
      %v8555 = vadd.f32 %v8506, %v8554
      %v8556 = vpop.f32.mrf.mxu0
      %v8557 = vadd.f32 %v8508, %v8556
      %8558 = vmatmul.bf16.gmra.mxu0 %v7656
      %v8559 = vpop.f32.mrf.mxu0
      %v8560 = vadd.f32 %v8511, %v8559
      %v8561 = vpop.f32.mrf.mxu0
      %v8562 = vadd.f32 %v8513, %v8561
      %8563 = vmatmul.bf16.gmra.mxu0 %v7657
      %v8564 = vpop.f32.mrf.mxu0
      %v8565 = vadd.f32 %v8516, %v8564
      %v8566 = vpop.f32.mrf.mxu0
      %v8567 = vadd.f32 %v8518, %v8566
      %8568 = vdwg.mxu0
      %8569 = vmatpush.bf16.msra.mxu0 %v8017
      %8570 = vmatpush.bf16.msra.mxu0 %v8015
      %8571 = vmatpush.bf16.msra.mxu0 %v8013
      %8572 = vmatpush.bf16.msra.mxu0 %v8011
      %8573 = vmatpush.bf16.msra.mxu0 %v8009
      %8574 = vmatpush.bf16.msra.mxu0 %v8007
      %8575 = vmatpush.bf16.msra.mxu0 %v8005
      %8576 = vmatpush.bf16.msra.mxu0 %v8003
      %8577 = vmatmul.bf16.gmra.mxu0 %v7362
      %v8578 = vpop.f32.mrf.mxu0
      %v8579 = vadd.f32 0.0, %v8578
      %v8580 = vpop.f32.mrf.mxu0
      %v8581 = vadd.f32 0.0, %v8580
      %8582 = vmatmul.bf16.gmra.mxu0 %v7363
      %v8583 = vpop.f32.mrf.mxu0
      %v8584 = vadd.f32 0.0, %v8583
      %v8585 = vpop.f32.mrf.mxu0
      %v8586 = vadd.f32 0.0, %v8585
      %8587 = vmatmul.bf16.gmra.mxu0 %v7364
      %v8588 = vpop.f32.mrf.mxu0
      %v8589 = vadd.f32 0.0, %v8588
      %v8590 = vpop.f32.mrf.mxu0
      %v8591 = vadd.f32 0.0, %v8590
      %8592 = vmatmul.bf16.gmra.mxu0 %v7365
      %v8593 = vpop.f32.mrf.mxu0
      %v8594 = vadd.f32 0.0, %v8593
      %v8595 = vpop.f32.mrf.mxu0
      %v8596 = vadd.f32 0.0, %v8595
      %8597 = vmatmul.bf16.gmra.mxu0 %v7366
      %v8598 = vpop.f32.mrf.mxu0
      %v8599 = vadd.f32 0.0, %v8598
      %v8600 = vpop.f32.mrf.mxu0
      %v8601 = vadd.f32 0.0, %v8600
      %8602 = vmatmul.bf16.gmra.mxu0 %v7367
      %v8603 = vpop.f32.mrf.mxu0
      %v8604 = vadd.f32 0.0, %v8603
      %v8605 = vpop.f32.mrf.mxu0
      %v8606 = vadd.f32 0.0, %v8605
      %8607 = vmatmul.bf16.gmra.mxu0 %v7368
      %v8608 = vpop.f32.mrf.mxu0
      %v8609 = vadd.f32 0.0, %v8608
      %v8610 = vpop.f32.mrf.mxu0
      %v8611 = vadd.f32 0.0, %v8610
      %8612 = vmatmul.bf16.gmra.mxu0 %v7369
      %v8613 = vpop.f32.mrf.mxu0
      %v8614 = vadd.f32 0.0, %v8613
      %v8615 = vpop.f32.mrf.mxu0
      %v8616 = vadd.f32 0.0, %v8615
      %8617 = vdwg.mxu0
      %8618 = vmatpush.bf16.msra.mxu0 %v8033
      %8619 = vmatpush.bf16.msra.mxu0 %v8031
      %8620 = vmatpush.bf16.msra.mxu0 %v8029
      %8621 = vmatpush.bf16.msra.mxu0 %v8027
      %8622 = vmatpush.bf16.msra.mxu0 %v8025
      %8623 = vmatpush.bf16.msra.mxu0 %v8023
      %8624 = vmatpush.bf16.msra.mxu0 %v8021
      %8625 = vmatpush.bf16.msra.mxu0 %v8019
      %8626 = vmatmul.bf16.gmra.mxu0 %v7410
      %v8627 = vpop.f32.mrf.mxu0
      %v8628 = vadd.f32 %v8579, %v8627
      %v8629 = vpop.f32.mrf.mxu0
      %v8630 = vadd.f32 %v8581, %v8629
      %8631 = vmatmul.bf16.gmra.mxu0 %v7411
      %v8632 = vpop.f32.mrf.mxu0
      %v8633 = vadd.f32 %v8584, %v8632
      %v8634 = vpop.f32.mrf.mxu0
      %v8635 = vadd.f32 %v8586, %v8634
      %8636 = vmatmul.bf16.gmra.mxu0 %v7412
      %v8637 = vpop.f32.mrf.mxu0
      %v8638 = vadd.f32 %v8589, %v8637
      %v8639 = vpop.f32.mrf.mxu0
      %v8640 = vadd.f32 %v8591, %v8639
      %8641 = vmatmul.bf16.gmra.mxu0 %v7413
      %v8642 = vpop.f32.mrf.mxu0
      %v8643 = vadd.f32 %v8594, %v8642
      %v8644 = vpop.f32.mrf.mxu0
      %v8645 = vadd.f32 %v8596, %v8644
      %8646 = vmatmul.bf16.gmra.mxu0 %v7414
      %v8647 = vpop.f32.mrf.mxu0
      %v8648 = vadd.f32 %v8599, %v8647
      %v8649 = vpop.f32.mrf.mxu0
      %v8650 = vadd.f32 %v8601, %v8649
      %8651 = vmatmul.bf16.gmra.mxu0 %v7415
      %v8652 = vpop.f32.mrf.mxu0
      %v8653 = vadd.f32 %v8604, %v8652
      %v8654 = vpop.f32.mrf.mxu0
      %v8655 = vadd.f32 %v8606, %v8654
      %8656 = vmatmul.bf16.gmra.mxu0 %v7416
      %v8657 = vpop.f32.mrf.mxu0
      %v8658 = vadd.f32 %v8609, %v8657
      %v8659 = vpop.f32.mrf.mxu0
      %v8660 = vadd.f32 %v8611, %v8659
      %8661 = vmatmul.bf16.gmra.mxu0 %v7417
      %v8662 = vpop.f32.mrf.mxu0
      %v8663 = vadd.f32 %v8614, %v8662
      %v8664 = vpop.f32.mrf.mxu0
      %v8665 = vadd.f32 %v8616, %v8664
      %8666 = vdwg.mxu0
      %8667 = vmatpush.bf16.msra.mxu0 %v8049
      %8668 = vmatpush.bf16.msra.mxu0 %v8047
      %8669 = vmatpush.bf16.msra.mxu0 %v8045
      %8670 = vmatpush.bf16.msra.mxu0 %v8043
      %8671 = vmatpush.bf16.msra.mxu0 %v8041
      %8672 = vmatpush.bf16.msra.mxu0 %v8039
      %8673 = vmatpush.bf16.msra.mxu0 %v8037
      %8674 = vmatpush.bf16.msra.mxu0 %v8035
      %8675 = vmatmul.bf16.gmra.mxu0 %v7458
      %v8676 = vpop.f32.mrf.mxu0
      %v8677 = vadd.f32 %v8628, %v8676
      %v8678 = vpop.f32.mrf.mxu0
      %v8679 = vadd.f32 %v8630, %v8678
      %8680 = vmatmul.bf16.gmra.mxu0 %v7459
      %v8681 = vpop.f32.mrf.mxu0
      %v8682 = vadd.f32 %v8633, %v8681
      %v8683 = vpop.f32.mrf.mxu0
      %v8684 = vadd.f32 %v8635, %v8683
      %8685 = vmatmul.bf16.gmra.mxu0 %v7460
      %v8686 = vpop.f32.mrf.mxu0
      %v8687 = vadd.f32 %v8638, %v8686
      %v8688 = vpop.f32.mrf.mxu0
      %v8689 = vadd.f32 %v8640, %v8688
      %8690 = vmatmul.bf16.gmra.mxu0 %v7461
      %v8691 = vpop.f32.mrf.mxu0
      %v8692 = vadd.f32 %v8643, %v8691
      %v8693 = vpop.f32.mrf.mxu0
      %v8694 = vadd.f32 %v8645, %v8693
      %8695 = vmatmul.bf16.gmra.mxu0 %v7462
      %v8696 = vpop.f32.mrf.mxu0
      %v8697 = vadd.f32 %v8648, %v8696
      %v8698 = vpop.f32.mrf.mxu0
      %v8699 = vadd.f32 %v8650, %v8698
      %8700 = vmatmul.bf16.gmra.mxu0 %v7463
      %v8701 = vpop.f32.mrf.mxu0
      %v8702 = vadd.f32 %v8653, %v8701
      %v8703 = vpop.f32.mrf.mxu0
      %v8704 = vadd.f32 %v8655, %v8703
      %8705 = vmatmul.bf16.gmra.mxu0 %v7464
      %v8706 = vpop.f32.mrf.mxu0
      %v8707 = vadd.f32 %v8658, %v8706
      %v8708 = vpop.f32.mrf.mxu0
      %v8709 = vadd.f32 %v8660, %v8708
      %8710 = vmatmul.bf16.gmra.mxu0 %v7465
      %v8711 = vpop.f32.mrf.mxu0
      %v8712 = vadd.f32 %v8663, %v8711
      %v8713 = vpop.f32.mrf.mxu0
      %v8714 = vadd.f32 %v8665, %v8713
      %8715 = vdwg.mxu0
      %8716 = vmatpush.bf16.msra.mxu0 %v8065
      %8717 = vmatpush.bf16.msra.mxu0 %v8063
      %8718 = vmatpush.bf16.msra.mxu0 %v8061
      %8719 = vmatpush.bf16.msra.mxu0 %v8059
      %8720 = vmatpush.bf16.msra.mxu0 %v8057
      %8721 = vmatpush.bf16.msra.mxu0 %v8055
      %8722 = vmatpush.bf16.msra.mxu0 %v8053
      %8723 = vmatpush.bf16.msra.mxu0 %v8051
      %8724 = vmatmul.bf16.gmra.mxu0 %v7506
      %v8725 = vpop.f32.mrf.mxu0
      %v8726 = vadd.f32 %v8677, %v8725
      %v8727 = vpop.f32.mrf.mxu0
      %v8728 = vadd.f32 %v8679, %v8727
      %8729 = vmatmul.bf16.gmra.mxu0 %v7507
      %v8730 = vpop.f32.mrf.mxu0
      %v8731 = vadd.f32 %v8682, %v8730
      %v8732 = vpop.f32.mrf.mxu0
      %v8733 = vadd.f32 %v8684, %v8732
      %8734 = vmatmul.bf16.gmra.mxu0 %v7508
      %v8735 = vpop.f32.mrf.mxu0
      %v8736 = vadd.f32 %v8687, %v8735
      %v8737 = vpop.f32.mrf.mxu0
      %v8738 = vadd.f32 %v8689, %v8737
      %8739 = vmatmul.bf16.gmra.mxu0 %v7509
      %v8740 = vpop.f32.mrf.mxu0
      %v8741 = vadd.f32 %v8692, %v8740
      %v8742 = vpop.f32.mrf.mxu0
      %v8743 = vadd.f32 %v8694, %v8742
      %8744 = vmatmul.bf16.gmra.mxu0 %v7510
      %v8745 = vpop.f32.mrf.mxu0
      %v8746 = vadd.f32 %v8697, %v8745
      %v8747 = vpop.f32.mrf.mxu0
      %v8748 = vadd.f32 %v8699, %v8747
      %8749 = vmatmul.bf16.gmra.mxu0 %v7511
      %v8750 = vpop.f32.mrf.mxu0
      %v8751 = vadd.f32 %v8702, %v8750
      %v8752 = vpop.f32.mrf.mxu0
      %v8753 = vadd.f32 %v8704, %v8752
      %8754 = vmatmul.bf16.gmra.mxu0 %v7512
      %v8755 = vpop.f32.mrf.mxu0
      %v8756 = vadd.f32 %v8707, %v8755
      %v8757 = vpop.f32.mrf.mxu0
      %v8758 = vadd.f32 %v8709, %v8757
      %8759 = vmatmul.bf16.gmra.mxu0 %v7513
      %v8760 = vpop.f32.mrf.mxu0
      %v8761 = vadd.f32 %v8712, %v8760
      %v8762 = vpop.f32.mrf.mxu0
      %v8763 = vadd.f32 %v8714, %v8762
      %8764 = vdwg.mxu0
      %8765 = vmatpush.bf16.msra.mxu0 %v8081
      %8766 = vmatpush.bf16.msra.mxu0 %v8079
      %8767 = vmatpush.bf16.msra.mxu0 %v8077
      %8768 = vmatpush.bf16.msra.mxu0 %v8075
      %8769 = vmatpush.bf16.msra.mxu0 %v8073
      %8770 = vmatpush.bf16.msra.mxu0 %v8071
      %8771 = vmatpush.bf16.msra.mxu0 %v8069
      %8772 = vmatpush.bf16.msra.mxu0 %v8067
      %8773 = vmatmul.bf16.gmra.mxu0 %v7554
      %v8774 = vpop.f32.mrf.mxu0
      %v8775 = vadd.f32 %v8726, %v8774
      %v8776 = vpop.f32.mrf.mxu0
      %v8777 = vadd.f32 %v8728, %v8776
      %8778 = vmatmul.bf16.gmra.mxu0 %v7555
      %v8779 = vpop.f32.mrf.mxu0
      %v8780 = vadd.f32 %v8731, %v8779
      %v8781 = vpop.f32.mrf.mxu0
      %v8782 = vadd.f32 %v8733, %v8781
      %8783 = vmatmul.bf16.gmra.mxu0 %v7556
      %v8784 = vpop.f32.mrf.mxu0
      %v8785 = vadd.f32 %v8736, %v8784
      %v8786 = vpop.f32.mrf.mxu0
      %v8787 = vadd.f32 %v8738, %v8786
      %8788 = vmatmul.bf16.gmra.mxu0 %v7557
      %v8789 = vpop.f32.mrf.mxu0
      %v8790 = vadd.f32 %v8741, %v8789
      %v8791 = vpop.f32.mrf.mxu0
      %v8792 = vadd.f32 %v8743, %v8791
      %8793 = vmatmul.bf16.gmra.mxu0 %v7558
      %v8794 = vpop.f32.mrf.mxu0
      %v8795 = vadd.f32 %v8746, %v8794
      %v8796 = vpop.f32.mrf.mxu0
      %v8797 = vadd.f32 %v8748, %v8796
      %8798 = vmatmul.bf16.gmra.mxu0 %v7559
      %v8799 = vpop.f32.mrf.mxu0
      %v8800 = vadd.f32 %v8751, %v8799
      %v8801 = vpop.f32.mrf.mxu0
      %v8802 = vadd.f32 %v8753, %v8801
      %8803 = vmatmul.bf16.gmra.mxu0 %v7560
      %v8804 = vpop.f32.mrf.mxu0
      %v8805 = vadd.f32 %v8756, %v8804
      %v8806 = vpop.f32.mrf.mxu0
      %v8807 = vadd.f32 %v8758, %v8806
      %8808 = vmatmul.bf16.gmra.mxu0 %v7561
      %v8809 = vpop.f32.mrf.mxu0
      %v8810 = vadd.f32 %v8761, %v8809
      %v8811 = vpop.f32.mrf.mxu0
      %v8812 = vadd.f32 %v8763, %v8811
      %8813 = vdwg.mxu0
      %8814 = vmatpush.bf16.msra.mxu0 %v8097
      %8815 = vmatpush.bf16.msra.mxu0 %v8095
      %8816 = vmatpush.bf16.msra.mxu0 %v8093
      %8817 = vmatpush.bf16.msra.mxu0 %v8091
      %8818 = vmatpush.bf16.msra.mxu0 %v8089
      %8819 = vmatpush.bf16.msra.mxu0 %v8087
      %8820 = vmatpush.bf16.msra.mxu0 %v8085
      %8821 = vmatpush.bf16.msra.mxu0 %v8083
      %8822 = vmatmul.bf16.gmra.mxu0 %v7602
      %v8823 = vpop.f32.mrf.mxu0
      %v8824 = vadd.f32 %v8775, %v8823
      %v8825 = vpop.f32.mrf.mxu0
      %v8826 = vadd.f32 %v8777, %v8825
      %8827 = vmatmul.bf16.gmra.mxu0 %v7603
      %v8828 = vpop.f32.mrf.mxu0
      %v8829 = vadd.f32 %v8780, %v8828
      %v8830 = vpop.f32.mrf.mxu0
      %v8831 = vadd.f32 %v8782, %v8830
      %8832 = vmatmul.bf16.gmra.mxu0 %v7604
      %v8833 = vpop.f32.mrf.mxu0
      %v8834 = vadd.f32 %v8785, %v8833
      %v8835 = vpop.f32.mrf.mxu0
      %v8836 = vadd.f32 %v8787, %v8835
      %8837 = vmatmul.bf16.gmra.mxu0 %v7605
      %v8838 = vpop.f32.mrf.mxu0
      %v8839 = vadd.f32 %v8790, %v8838
      %v8840 = vpop.f32.mrf.mxu0
      %v8841 = vadd.f32 %v8792, %v8840
      %8842 = vmatmul.bf16.gmra.mxu0 %v7606
      %v8843 = vpop.f32.mrf.mxu0
      %v8844 = vadd.f32 %v8795, %v8843
      %v8845 = vpop.f32.mrf.mxu0
      %v8846 = vadd.f32 %v8797, %v8845
      %8847 = vmatmul.bf16.gmra.mxu0 %v7607
      %v8848 = vpop.f32.mrf.mxu0
      %v8849 = vadd.f32 %v8800, %v8848
      %v8850 = vpop.f32.mrf.mxu0
      %v8851 = vadd.f32 %v8802, %v8850
      %8852 = vmatmul.bf16.gmra.mxu0 %v7608
      %v8853 = vpop.f32.mrf.mxu0
      %v8854 = vadd.f32 %v8805, %v8853
      %v8855 = vpop.f32.mrf.mxu0
      %v8856 = vadd.f32 %v8807, %v8855
      %8857 = vmatmul.bf16.gmra.mxu0 %v7609
      %v8858 = vpop.f32.mrf.mxu0
      %v8859 = vadd.f32 %v8810, %v8858
      %v8860 = vpop.f32.mrf.mxu0
      %v8861 = vadd.f32 %v8812, %v8860
      %8862 = vdwg.mxu0
      %8863 = vmatpush.bf16.msra.mxu0 %v8113
      %8864 = vmatpush.bf16.msra.mxu0 %v8111
      %8865 = vmatpush.bf16.msra.mxu0 %v8109
      %8866 = vmatpush.bf16.msra.mxu0 %v8107
      %8867 = vmatpush.bf16.msra.mxu0 %v8105
      %8868 = vmatpush.bf16.msra.mxu0 %v8103
      %8869 = vmatpush.bf16.msra.mxu0 %v8101
      %8870 = vmatpush.bf16.msra.mxu0 %v8099
      %8871 = vmatmul.bf16.gmra.mxu0 %v7650
      %v8872 = vpop.f32.mrf.mxu0
      %v8873 = vadd.f32 %v8824, %v8872
      %v8874 = vpop.f32.mrf.mxu0
      %v8875 = vadd.f32 %v8826, %v8874
      %8876 = vmatmul.bf16.gmra.mxu0 %v7651
      %v8877 = vpop.f32.mrf.mxu0
      %v8878 = vadd.f32 %v8829, %v8877
      %v8879 = vpop.f32.mrf.mxu0
      %v8880 = vadd.f32 %v8831, %v8879
      %8881 = vmatmul.bf16.gmra.mxu0 %v7652
      %v8882 = vpop.f32.mrf.mxu0
      %v8883 = vadd.f32 %v8834, %v8882
      %v8884 = vpop.f32.mrf.mxu0
      %v8885 = vadd.f32 %v8836, %v8884
      %8886 = vmatmul.bf16.gmra.mxu0 %v7653
      %v8887 = vpop.f32.mrf.mxu0
      %v8888 = vadd.f32 %v8839, %v8887
      %v8889 = vpop.f32.mrf.mxu0
      %v8890 = vadd.f32 %v8841, %v8889
      %8891 = vmatmul.bf16.gmra.mxu0 %v7654
      %v8892 = vpop.f32.mrf.mxu0
      %v8893 = vadd.f32 %v8844, %v8892
      %v8894 = vpop.f32.mrf.mxu0
      %v8895 = vadd.f32 %v8846, %v8894
      %8896 = vmatmul.bf16.gmra.mxu0 %v7655
      %v8897 = vpop.f32.mrf.mxu0
      %v8898 = vadd.f32 %v8849, %v8897
      %v8899 = vpop.f32.mrf.mxu0
      %v8900 = vadd.f32 %v8851, %v8899
      %8901 = vmatmul.bf16.gmra.mxu0 %v7656
      %v8902 = vpop.f32.mrf.mxu0
      %v8903 = vadd.f32 %v8854, %v8902
      %v8904 = vpop.f32.mrf.mxu0
      %v8905 = vadd.f32 %v8856, %v8904
      %8906 = vmatmul.bf16.gmra.mxu0 %v7657
      %v8907 = vpop.f32.mrf.mxu0
      %v8908 = vadd.f32 %v8859, %v8907
      %v8909 = vpop.f32.mrf.mxu0
      %v8910 = vadd.f32 %v8861, %v8909
      %8911 = vdwg.mxu0
      %v8913 = vperm.slane %v6510, 0
      %v8914 = vperm.slane %v6510, 1
      %v8917 = vmul.f32 %v8530, %v8913
      %v8918 = vmul.f32 %v8873, %v8914
      %v8919 = vmul.f32 %v8532, %v8913
      %v8920 = vmul.f32 %v8875, %v8914
      %v8921 = vmul.f32 %v8535, %v8913
      %v8922 = vmul.f32 %v8878, %v8914
      %v8923 = vmul.f32 %v8537, %v8913
      %v8924 = vmul.f32 %v8880, %v8914
      %v8925 = vmul.f32 %v8540, %v8913
      %v8926 = vmul.f32 %v8883, %v8914
      %v8927 = vmul.f32 %v8542, %v8913
      %v8928 = vmul.f32 %v8885, %v8914
      %v8929 = vmul.f32 %v8545, %v8913
      %v8930 = vmul.f32 %v8888, %v8914
      %v8931 = vmul.f32 %v8547, %v8913
      %v8932 = vmul.f32 %v8890, %v8914
      %v8933 = vmul.f32 %v8550, %v8913
      %v8934 = vmul.f32 %v8893, %v8914
      %v8935 = vmul.f32 %v8552, %v8913
      %v8936 = vmul.f32 %v8895, %v8914
      %v8937 = vmul.f32 %v8555, %v8913
      %v8938 = vmul.f32 %v8898, %v8914
      %v8939 = vmul.f32 %v8557, %v8913
      %v8940 = vmul.f32 %v8900, %v8914
      %v8941 = vmul.f32 %v8560, %v8913
      %v8942 = vmul.f32 %v8903, %v8914
      %v8943 = vmul.f32 %v8562, %v8913
      %v8944 = vmul.f32 %v8905, %v8914
      %v8945 = vmul.f32 %v8565, %v8913
      %v8946 = vmul.f32 %v8908, %v8914
      %v8947 = vmul.f32 %v8567, %v8913
      %v8948 = vmul.f32 %v8910, %v8914
      %v8950 = vperm.slane %v6511, 0
      %v8951 = vperm.slane %v6511, 1
      %v8954 = vadd.f32 %v8917, %v8950
      %v8955 = vadd.f32 %v8918, %v8951
      %v8956 = vadd.f32 %v8919, %v8950
      %v8957 = vadd.f32 %v8920, %v8951
      %v8958 = vadd.f32 %v8921, %v8950
      %v8959 = vadd.f32 %v8922, %v8951
      %v8960 = vadd.f32 %v8923, %v8950
      %v8961 = vadd.f32 %v8924, %v8951
      %v8962 = vadd.f32 %v8925, %v8950
      %v8963 = vadd.f32 %v8926, %v8951
      %v8964 = vadd.f32 %v8927, %v8950
      %v8965 = vadd.f32 %v8928, %v8951
      %v8966 = vadd.f32 %v8929, %v8950
      %v8967 = vadd.f32 %v8930, %v8951
      %v8968 = vadd.f32 %v8931, %v8950
      %v8969 = vadd.f32 %v8932, %v8951
      %v8970 = vadd.f32 %v8933, %v8950
      %v8971 = vadd.f32 %v8934, %v8951
      %v8972 = vadd.f32 %v8935, %v8950
      %v8973 = vadd.f32 %v8936, %v8951
      %v8974 = vadd.f32 %v8937, %v8950
      %v8975 = vadd.f32 %v8938, %v8951
      %v8976 = vadd.f32 %v8939, %v8950
      %v8977 = vadd.f32 %v8940, %v8951
      %v8978 = vadd.f32 %v8941, %v8950
      %v8979 = vadd.f32 %v8942, %v8951
      %v8980 = vadd.f32 %v8943, %v8950
      %v8981 = vadd.f32 %v8944, %v8951
      %v8982 = vadd.f32 %v8945, %v8950
      %v8983 = vadd.f32 %v8946, %v8951
      %v8984 = vadd.f32 %v8947, %v8950
      %v8985 = vadd.f32 %v8948, %v8951
      %v8986 = vmax.f32 %v8954, 0.0
      %v8987 = vmax.f32 %v8955, 0.0
      %v8988 = vmax.f32 %v8956, 0.0
      %v8989 = vmax.f32 %v8957, 0.0
      %v8990 = vmax.f32 %v8958, 0.0
      %v8991 = vmax.f32 %v8959, 0.0
      %v8992 = vmax.f32 %v8960, 0.0
      %v8993 = vmax.f32 %v8961, 0.0
      %v8994 = vmax.f32 %v8962, 0.0
      %v8995 = vmax.f32 %v8963, 0.0
      %v8996 = vmax.f32 %v8964, 0.0
      %v8997 = vmax.f32 %v8965, 0.0
      %v8998 = vmax.f32 %v8966, 0.0
      %v8999 = vmax.f32 %v8967, 0.0
      %v9000 = vmax.f32 %v8968, 0.0
      %v9001 = vmax.f32 %v8969, 0.0
      %v9002 = vmax.f32 %v8970, 0.0
      %v9003 = vmax.f32 %v8971, 0.0
      %v9004 = vmax.f32 %v8972, 0.0
      %v9005 = vmax.f32 %v8973, 0.0
      %v9006 = vmax.f32 %v8974, 0.0
      %v9007 = vmax.f32 %v8975, 0.0
      %v9008 = vmax.f32 %v8976, 0.0
      %v9009 = vmax.f32 %v8977, 0.0
      %v9010 = vmax.f32 %v8978, 0.0
      %v9011 = vmax.f32 %v8979, 0.0
      %v9012 = vmax.f32 %v8980, 0.0
      %v9013 = vmax.f32 %v8981, 0.0
      %v9014 = vmax.f32 %v8982, 0.0
      %v9015 = vmax.f32 %v8983, 0.0
      %v9016 = vmax.f32 %v8984, 0.0
      %v9017 = vmax.f32 %v8985, 0.0
      %v9018 = vld [vmem:[%s15] sm:$0xf]
      %v9019 = vld [vmem:[%s15 + $0x4] sm:$0xf]
      %v9020 = vld [vmem:[%s15 + $0x8] sm:$0xf]
      %v9021 = vld [vmem:[%s15 + $0xc] sm:$0xf]
      %v9022 = vld [vmem:[%s15 + $0x10] sm:$0xf]
      %v9023 = vld [vmem:[%s15 + $0x14] sm:$0xf]
      %v9024 = vld [vmem:[%s15 + $0x18] sm:$0xf]
      %v9025 = vld [vmem:[%s15 + $0x1c] sm:$0xf]
      %v9026 = vrot.slane %v8986, 1
      %v9027 = vrot.slane %v8987, 1
      %v9028 = vrot.slane %v8988, 1
      %v9029 = vrot.slane %v8989, 1
      %v9030 = vrot.slane %v8990, 1
      %v9031 = vrot.slane %v8991, 1
      %v9032 = vrot.slane %v8992, 1
      %v9033 = vrot.slane %v8993, 1
      %v9034 = vrot.slane %v8994, 1
      %v9035 = vrot.slane %v8995, 1
      %v9036 = vrot.slane %v8996, 1
      %v9037 = vrot.slane %v8997, 1
      %v9038 = vrot.slane %v8998, 1
      %v9039 = vrot.slane %v8999, 1
      %v9040 = vrot.slane %v9000, 1
      %v9041 = vrot.slane %v9001, 1
      %v9042 = vrot.slane %v9002, 1
      %v9043 = vrot.slane %v9003, 1
      %v9044 = vrot.slane %v9004, 1
      %v9045 = vrot.slane %v9005, 1
      %v9046 = vrot.slane %v9006, 1
      %v9047 = vrot.slane %v9007, 1
      %v9048 = vrot.slane %v9008, 1
      %v9049 = vrot.slane %v9009, 1
      %v9050 = vrot.slane %v9010, 1
      %v9051 = vrot.slane %v9011, 1
      %v9052 = vrot.slane %v9012, 1
      %v9053 = vrot.slane %v9013, 1
      %v9054 = vrot.slane %v9014, 1
      %v9055 = vrot.slane %v9015, 1
      %v9056 = vrot.slane %v9016, 1
      %v9057 = vrot.slane %v9017, 1
      %v9058 = vsel %vm1176, %v9054, %v9056
      %v9059 = vsel %vm1176, %v9055, %v9057
      %v9060 = vsel %vm1176, %v9052, %v9054
      %v9061 = vsel %vm1176, %v9053, %v9055
      %v9062 = vsel %vm1176, %v9050, %v9052
      %v9063 = vsel %vm1176, %v9051, %v9053
      %v9064 = vsel %vm1176, %v9048, %v9050
      %v9065 = vsel %vm1176, %v9049, %v9051
      %v9066 = vsel %vm1176, %v9046, %v9048
      %v9067 = vsel %vm1176, %v9047, %v9049
      %v9068 = vsel %vm1176, %v9044, %v9046
      %v9069 = vsel %vm1176, %v9045, %v9047
      %v9070 = vsel %vm1176, %v9042, %v9044
      %v9071 = vsel %vm1176, %v9043, %v9045
      %v9072 = vsel %vm1176, %v9040, %v9042
      %v9073 = vsel %vm1176, %v9041, %v9043
      %v9074 = vsel %vm1176, %v9038, %v9040
      %v9075 = vsel %vm1176, %v9039, %v9041
      %v9076 = vsel %vm1176, %v9036, %v9038
      %v9077 = vsel %vm1176, %v9037, %v9039
      %v9078 = vsel %vm1176, %v9034, %v9036
      %v9079 = vsel %vm1176, %v9035, %v9037
      %v9080 = vsel %vm1176, %v9032, %v9034
      %v9081 = vsel %vm1176, %v9033, %v9035
      %v9082 = vsel %vm1176, %v9030, %v9032
      %v9083 = vsel %vm1176, %v9031, %v9033
      %v9084 = vsel %vm1176, %v9028, %v9030
      %v9085 = vsel %vm1176, %v9029, %v9031
      %v9086 = vsel %vm1176, %v9026, %v9028
      %v9087 = vsel %vm1176, %v9027, %v9029
      %v9088 = vsel %vm1176, %v9056, %v9026
      %v9089 = vsel %vm1176, %v9057, %v9027
      %v9090 = vmax.f32 %v8986, %v9086
      %v9091 = vmax.f32 %v8987, %v9087
      %v9092 = vmax.f32 %v8988, %v9084
      %v9093 = vmax.f32 %v8989, %v9085
      %v9094 = vmax.f32 %v8990, %v9082
      %v9095 = vmax.f32 %v8991, %v9083
      %v9096 = vmax.f32 %v8992, %v9080
      %v9097 = vmax.f32 %v8993, %v9081
      %v9098 = vmax.f32 %v8994, %v9078
      %v9099 = vmax.f32 %v8995, %v9079
      %v9100 = vmax.f32 %v8996, %v9076
      %v9101 = vmax.f32 %v8997, %v9077
      %v9102 = vmax.f32 %v8998, %v9074
      %v9103 = vmax.f32 %v8999, %v9075
      %v9104 = vmax.f32 %v9000, %v9072
      %v9105 = vmax.f32 %v9001, %v9073
      %v9106 = vmax.f32 %v9002, %v9070
      %v9107 = vmax.f32 %v9003, %v9071
      %v9108 = vmax.f32 %v9004, %v9068
      %v9109 = vmax.f32 %v9005, %v9069
      %v9110 = vmax.f32 %v9006, %v9066
      %v9111 = vmax.f32 %v9007, %v9067
      %v9112 = vmax.f32 %v9008, %v9064
      %v9113 = vmax.f32 %v9009, %v9065
      %v9114 = vmax.f32 %v9010, %v9062
      %v9115 = vmax.f32 %v9011, %v9063
      %v9116 = vmax.f32 %v9012, %v9060
      %v9117 = vmax.f32 %v9013, %v9061
      %v9118 = vmax.f32 %v9014, %v9058
      %v9119 = vmax.f32 %v9015, %v9059
      %v9120 = vmax.f32 %v9016, %v9088
      %v9121 = vmax.f32 %v9017, %v9089
      %v9122 = vpack.c.bf16 %v9092, %v9090
      %v9123 = vpack.c.bf16 %v9093, %v9091
      %v9124 = vpack.c.bf16 %v9096, %v9094
      %v9125 = vpack.c.bf16 %v9097, %v9095
      %v9126 = vpack.c.bf16 %v9100, %v9098
      %v9127 = vpack.c.bf16 %v9101, %v9099
      %v9128 = vpack.c.bf16 %v9104, %v9102
      %v9129 = vpack.c.bf16 %v9105, %v9103
      %v9130 = vpack.c.bf16 %v9108, %v9106
      %v9131 = vpack.c.bf16 %v9109, %v9107
      %v9132 = vpack.c.bf16 %v9112, %v9110
      %v9133 = vpack.c.bf16 %v9113, %v9111
      %v9134 = vpack.c.bf16 %v9116, %v9114
      %v9135 = vpack.c.bf16 %v9117, %v9115
      %v9136 = vpack.c.bf16 %v9120, %v9118
      %v9137 = vpack.c.bf16 %v9121, %v9119
      %v9146 = vunpack.c.l.b16 %v9018
      %v9147 = vunpack.c.l.b16 %v9019
      %v9148 = vunpack.c.l.b16 %v9020
      %v9149 = vunpack.c.l.b16 %v9021
      %v9150 = vunpack.c.l.b16 %v9022
      %v9151 = vunpack.c.l.b16 %v9023
      %v9152 = vunpack.c.l.b16 %v9024
      %v9153 = vunpack.c.l.b16 %v9025
      %v9154 = vpack.c.b16 %v9147, %v9146
      %v9155 = vpack.c.b16 %v9149, %v9148
      %v9156 = vpack.c.b16 %v9151, %v9150
      %v9157 = vpack.c.b16 %v9153, %v9152
      %9162 = vmatpush.bf16.msra.mxu0 %v9136
      %9163 = vmatpush.bf16.msra.mxu0 %v9134
      %9164 = vmatpush.bf16.msra.mxu0 %v9132
      %9165 = vmatpush.bf16.msra.mxu0 %v9130
      %9166 = vmatpush.bf16.msra.mxu0 %v9128
      %9167 = vmatpush.bf16.msra.mxu0 %v9126
      %9168 = vmatpush.bf16.msra.mxu0 %v9124
      %9169 = vmatpush.bf16.msra.mxu0 %v9122
      %9170 = vmatmul.bf16.gmra.mxu0 %v9154
      %v9171 = vpop.f32.mrf.mxu0
      %v9172 = vadd.f32 0.0, %v9171
      %v9173 = vpop.f32.mrf.mxu0
      %v9174 = vadd.f32 0.0, %v9173
      %9175 = vmatmul.bf16.gmra.mxu0 %v9155
      %v9176 = vpop.f32.mrf.mxu0
      %v9177 = vadd.f32 0.0, %v9176
      %v9178 = vpop.f32.mrf.mxu0
      %v9179 = vadd.f32 0.0, %v9178
      %9180 = vmatmul.bf16.gmra.mxu0 %v9156
      %v9181 = vpop.f32.mrf.mxu0
      %v9182 = vadd.f32 0.0, %v9181
      %v9183 = vpop.f32.mrf.mxu0
      %v9184 = vadd.f32 0.0, %v9183
      %9185 = vmatmul.bf16.gmra.mxu0 %v9157
      %v9186 = vpop.f32.mrf.mxu0
      %v9187 = vadd.f32 0.0, %v9186
      %v9188 = vpop.f32.mrf.mxu0
      %v9189 = vadd.f32 0.0, %v9188
      %9190 = vdwg.mxu0
      %9191 = vmatpush.bf16.msra.mxu0 %v9137
      %9192 = vmatpush.bf16.msra.mxu0 %v9135
      %9193 = vmatpush.bf16.msra.mxu0 %v9133
      %9194 = vmatpush.bf16.msra.mxu0 %v9131
      %9195 = vmatpush.bf16.msra.mxu0 %v9129
      %9196 = vmatpush.bf16.msra.mxu0 %v9127
      %9197 = vmatpush.bf16.msra.mxu0 %v9125
      %9198 = vmatpush.bf16.msra.mxu0 %v9123
      %9199 = vmatmul.bf16.gmra.mxu0 %v9154
      %v9200 = vpop.f32.mrf.mxu0
      %v9201 = vadd.f32 0.0, %v9200
      %v9202 = vpop.f32.mrf.mxu0
      %v9203 = vadd.f32 0.0, %v9202
      %9204 = vmatmul.bf16.gmra.mxu0 %v9155
      %v9205 = vpop.f32.mrf.mxu0
      %v9206 = vadd.f32 0.0, %v9205
      %v9207 = vpop.f32.mrf.mxu0
      %v9208 = vadd.f32 0.0, %v9207
      %9209 = vmatmul.bf16.gmra.mxu0 %v9156
      %v9210 = vpop.f32.mrf.mxu0
      %v9211 = vadd.f32 0.0, %v9210
      %v9212 = vpop.f32.mrf.mxu0
      %v9213 = vadd.f32 0.0, %v9212
      %9214 = vmatmul.bf16.gmra.mxu0 %v9157
      %v9215 = vpop.f32.mrf.mxu0
      %v9216 = vadd.f32 0.0, %v9215
      %v9217 = vpop.f32.mrf.mxu0
      %v9218 = vadd.f32 0.0, %v9217
      %9219 = vdwg.mxu0
      %v9220 = vld [vmem:[%s16] sm:$0xf]
      %v9221 = vpack.c.bf16 %v9174, %v9172
      %v9222 = vpack.c.bf16 %v9203, %v9201
      %v9223 = vpack.c.bf16 %v9179, %v9177
      %v9224 = vpack.c.bf16 %v9208, %v9206
      %v9225 = vpack.c.bf16 %v9184, %v9182
      %v9226 = vpack.c.bf16 %v9213, %v9211
      %v9227 = vpack.c.bf16 %v9189, %v9187
      %v9228 = vpack.c.bf16 %v9218, %v9216
      %v9230 = vsel %vm5426, %v9220, 0
      %9232 = vmatpush.bf16.msra.mxu0 0
      %9233 = vmatpush.bf16.msra.mxu0 0
      %9234 = vmatpush.bf16.msra.mxu0 0
      %9235 = vmatpush.bf16.msra.mxu0 0
      %9236 = vmatpush.bf16.msra.mxu0 %v9227
      %9237 = vmatpush.bf16.msra.mxu0 %v9225
      %9238 = vmatpush.bf16.msra.mxu0 %v9223
      %9239 = vmatpush.bf16.msra.mxu0 %v9221
      %9240 = vmatmul.bf16.gmra.mxu0 %v9230
      %v9241 = vpop.f32.mrf.mxu0
      %v9242 = vadd.f32 0.0, %v9241
      %v9243 = vpop.f32.mrf.mxu0
      %9244 = vdwg.mxu0
      %9245 = vmatpush.bf16.msra.mxu0 0
      %9246 = vmatpush.bf16.msra.mxu0 0
      %9247 = vmatpush.bf16.msra.mxu0 0
      %9248 = vmatpush.bf16.msra.mxu0 0
      %9249 = vmatpush.bf16.msra.mxu0 %v9228
      %9250 = vmatpush.bf16.msra.mxu0 %v9226
      %9251 = vmatpush.bf16.msra.mxu0 %v9224
      %9252 = vmatpush.bf16.msra.mxu0 %v9222
      %9253 = vmatmul.bf16.gmra.mxu0 %v9230
      %v9254 = vpop.f32.mrf.mxu0
      %v9255 = vadd.f32 0.0, %v9254
      %v9256 = vpop.f32.mrf.mxu0
      %9257 = vdwg.mxu0
      %v9258 = vpack.c.bf16 %v9242, %v9242
      %v9259 = vpack.c.bf16 %v9255, %v9255
      %v9260 = vld [vmem:[%s17] sm:$0xf]
      %v9261 = vld [vmem:[%s17 + $0x4] sm:$0xf]
      %v9262 = vld [vmem:[%s17 + $0x8] sm:$0xf]
      %v9263 = vld [vmem:[%s17 + $0xc] sm:$0xf]
      %v9264 = vld [vmem:[%s17 + $0x10] sm:$0xf]
      %v9265 = vld [vmem:[%s17 + $0x14] sm:$0xf]
      %v9266 = vld [vmem:[%s17 + $0x18] sm:$0xf]
      %v9267 = vld [vmem:[%s17 + $0x1c] sm:$0xf]
      %v9268 = vld [vmem:[%s17 + $0x20] sm:$0xf]
      %v9269 = vld [vmem:[%s17 + $0x24] sm:$0xf]
      %v9270 = vld [vmem:[%s17 + $0x28] sm:$0xf]
      %v9271 = vld [vmem:[%s17 + $0x2c] sm:$0xf]
      %v9272 = vld [vmem:[%s17 + $0x30] sm:$0xf]
      %v9273 = vld [vmem:[%s17 + $0x34] sm:$0xf]
      %v9274 = vld [vmem:[%s17 + $0x38] sm:$0xf]
      %v9275 = vld [vmem:[%s17 + $0x3c] sm:$0xf]
      %v9276 = vld [vmem:[%s17 + $0x40] sm:$0xf]
      %v9277 = vld [vmem:[%s17 + $0x44] sm:$0xf]
      %v9278 = vld [vmem:[%s17 + $0x48] sm:$0xf]
      %v9279 = vld [vmem:[%s17 + $0x4c] sm:$0xf]
      %v9280 = vld [vmem:[%s17 + $0x50] sm:$0xf]
      %v9281 = vld [vmem:[%s17 + $0x54] sm:$0xf]
      %v9282 = vld [vmem:[%s17 + $0x58] sm:$0xf]
      %v9283 = vld [vmem:[%s17 + $0x5c] sm:$0xf]
      %v9284 = vld [vmem:[%s17 + $0x60] sm:$0xf]
      %v9285 = vld [vmem:[%s17 + $0x64] sm:$0xf]
      %v9286 = vld [vmem:[%s17 + $0x68] sm:$0xf]
      %v9287 = vld [vmem:[%s17 + $0x6c] sm:$0xf]
      %v9288 = vld [vmem:[%s17 + $0x70] sm:$0xf]
      %v9289 = vld [vmem:[%s17 + $0x74] sm:$0xf]
      %v9290 = vld [vmem:[%s17 + $0x78] sm:$0xf]
      %v9291 = vld [vmem:[%s17 + $0x7c] sm:$0xf]
      %v9292 = vld [vmem:[%s18] sm:$0x1]
      %v9294 = vperm.slane %v9292, 0
      %v9328 = vunpack.c.l.b16 %v9260
      %v9329 = vunpack.c.l.b16 %v9261
      %v9330 = vunpack.c.l.b16 %v9262
      %v9331 = vunpack.c.l.b16 %v9263
      %v9332 = vunpack.c.l.b16 %v9264
      %v9333 = vunpack.c.l.b16 %v9265
      %v9334 = vunpack.c.l.b16 %v9266
      %v9335 = vunpack.c.l.b16 %v9267
      %v9336 = vunpack.c.l.b16 %v9268
      %v9337 = vunpack.c.l.b16 %v9269
      %v9338 = vunpack.c.l.b16 %v9270
      %v9339 = vunpack.c.l.b16 %v9271
      %v9340 = vunpack.c.l.b16 %v9272
      %v9341 = vunpack.c.l.b16 %v9273
      %v9342 = vunpack.c.l.b16 %v9274
      %v9343 = vunpack.c.l.b16 %v9275
      %v9344 = vunpack.c.l.b16 %v9276
      %v9345 = vunpack.c.l.b16 %v9277
      %v9346 = vunpack.c.l.b16 %v9278
      %v9347 = vunpack.c.l.b16 %v9279
      %v9348 = vunpack.c.l.b16 %v9280
      %v9349 = vunpack.c.l.b16 %v9281
      %v9350 = vunpack.c.l.b16 %v9282
      %v9351 = vunpack.c.l.b16 %v9283
      %v9352 = vunpack.c.l.b16 %v9284
      %v9353 = vunpack.c.l.b16 %v9285
      %v9354 = vunpack.c.l.b16 %v9286
      %v9355 = vunpack.c.l.b16 %v9287
      %v9356 = vunpack.c.l.b16 %v9288
      %v9357 = vunpack.c.l.b16 %v9289
      %v9358 = vunpack.c.l.b16 %v9290
      %v9359 = vunpack.c.l.b16 %v9291
      %v9360 = vpack.c.b16 %v9329, %v9328
      %v9361 = vpack.c.b16 %v9331, %v9330
      %v9362 = vpack.c.b16 %v9333, %v9332
      %v9363 = vpack.c.b16 %v9335, %v9334
      %v9364 = vpack.c.b16 %v9337, %v9336
      %v9365 = vpack.c.b16 %v9339, %v9338
      %v9366 = vpack.c.b16 %v9341, %v9340
      %v9367 = vpack.c.b16 %v9343, %v9342
      %v9368 = vpack.c.b16 %v9345, %v9344
      %v9369 = vpack.c.b16 %v9347, %v9346
      %v9370 = vpack.c.b16 %v9349, %v9348
      %v9371 = vpack.c.b16 %v9351, %v9350
      %v9372 = vpack.c.b16 %v9353, %v9352
      %v9373 = vpack.c.b16 %v9355, %v9354
      %v9374 = vpack.c.b16 %v9357, %v9356
      %v9375 = vpack.c.b16 %v9359, %v9358
      %9392 = vmatpush.bf16.msra.mxu0 %v9367
      %9393 = vmatpush.bf16.msra.mxu0 %v9366
      %9394 = vmatpush.bf16.msra.mxu0 %v9365
      %9395 = vmatpush.bf16.msra.mxu0 %v9364
      %9396 = vmatpush.bf16.msra.mxu0 %v9363
      %9397 = vmatpush.bf16.msra.mxu0 %v9362
      %9398 = vmatpush.bf16.msra.mxu0 %v9361
      %9399 = vmatpush.bf16.msra.mxu0 %v9360
      %9400 = vmatmul.bf16.gmra.mxu0 %v9258
      %v9401 = vpop.f32.mrf.mxu0
      %v9402 = vadd.f32 %v9294, %v9401
      %v9403 = vpop.f32.mrf.mxu0
      %9404 = vdwg.mxu0
      %9405 = vmatpush.bf16.msra.mxu0 %v9375
      %9406 = vmatpush.bf16.msra.mxu0 %v9374
      %9407 = vmatpush.bf16.msra.mxu0 %v9373
      %9408 = vmatpush.bf16.msra.mxu0 %v9372
      %9409 = vmatpush.bf16.msra.mxu0 %v9371
      %9410 = vmatpush.bf16.msra.mxu0 %v9370
      %9411 = vmatpush.bf16.msra.mxu0 %v9369
      %9412 = vmatpush.bf16.msra.mxu0 %v9368
      %9413 = vmatmul.bf16.gmra.mxu0 %v9259
      %v9414 = vpop.f32.mrf.mxu0
      %v9415 = vadd.f32 %v9402, %v9414
      %v9416 = vpop.f32.mrf.mxu0
      %9417 = vdwg.mxu0
      %v9418 = vmax.f32 %v9415, 0.0
      %v9419 = vpack.c.bf16 %v9418, %v9418
      %v9420 = vld [vmem:[%s19] sm:$0xf]
      %v9421 = vld [vmem:[%s19 + $0x4] sm:$0xf]
      %v9422 = vld [vmem:[%s19 + $0x8] sm:$0xf]
      %v9423 = vld [vmem:[%s19 + $0xc] sm:$0xf]
      %v9424 = vld [vmem:[%s19 + $0x10] sm:$0xf]
      %v9425 = vld [vmem:[%s19 + $0x14] sm:$0xf]
      %v9426 = vld [vmem:[%s19 + $0x18] sm:$0xf]
      %v9427 = vld [vmem:[%s19 + $0x1c] sm:$0xf]
      %v9428 = vld [vmem:[%s19 + $0x20] sm:$0xf]
      %v9429 = vld [vmem:[%s19 + $0x24] sm:$0xf]
      %v9430 = vld [vmem:[%s19 + $0x28] sm:$0xf]
      %v9431 = vld [vmem:[%s19 + $0x2c] sm:$0xf]
      %v9432 = vld [vmem:[%s19 + $0x30] sm:$0xf]
      %v9433 = vld [vmem:[%s19 + $0x34] sm:$0xf]
      %v9434 = vld [vmem:[%s19 + $0x38] sm:$0xf]
      %v9435 = vld [vmem:[%s19 + $0x3c] sm:$0xf]
      %v9436 = vld [vmem:[%s20] sm:$0x1]
      %v9438 = vperm.slane %v9436, 0
      %v9456 = vunpack.c.l.b16 %v9420
      %v9457 = vunpack.c.l.b16 %v9421
      %v9458 = vunpack.c.l.b16 %v9422
      %v9459 = vunpack.c.l.b16 %v9423
      %v9460 = vunpack.c.l.b16 %v9424
      %v9461 = vunpack.c.l.b16 %v9425
      %v9462 = vunpack.c.l.b16 %v9426
      %v9463 = vunpack.c.l.b16 %v9427
      %v9464 = vunpack.c.l.b16 %v9428
      %v9465 = vunpack.c.l.b16 %v9429
      %v9466 = vunpack.c.l.b16 %v9430
      %v9467 = vunpack.c.l.b16 %v9431
      %v9468 = vunpack.c.l.b16 %v9432
      %v9469 = vunpack.c.l.b16 %v9433
      %v9470 = vunpack.c.l.b16 %v9434
      %v9471 = vunpack.c.l.b16 %v9435
      %v9472 = vpack.c.b16 %v9457, %v9456
      %v9473 = vpack.c.b16 %v9459, %v9458
      %v9474 = vpack.c.b16 %v9461, %v9460
      %v9475 = vpack.c.b16 %v9463, %v9462
      %v9476 = vpack.c.b16 %v9465, %v9464
      %v9477 = vpack.c.b16 %v9467, %v9466
      %v9478 = vpack.c.b16 %v9469, %v9468
      %v9479 = vpack.c.b16 %v9471, %v9470
      %9488 = vmatpush.bf16.msra.mxu0 %v9479
      %9489 = vmatpush.bf16.msra.mxu0 %v9478
      %9490 = vmatpush.bf16.msra.mxu0 %v9477
      %9491 = vmatpush.bf16.msra.mxu0 %v9476
      %9492 = vmatpush.bf16.msra.mxu0 %v9475
      %9493 = vmatpush.bf16.msra.mxu0 %v9474
      %9494 = vmatpush.bf16.msra.mxu0 %v9473
      %9495 = vmatpush.bf16.msra.mxu0 %v9472
      %9496 = vmatmul.bf16.gmra.mxu0 %v9419
      %v9497 = vpop.f32.mrf.mxu0
      %v9498 = vadd.f32 %v9438, %v9497
      %v9499 = vpop.f32.mrf.mxu0
      %9500 = vdwg.mxu0
      %9501 = vst [vmem:[%s656] sm:$0xff] %v9498
      %p9502 = scmp.lt.s32.totalorder %s32, 1
      %s9503 = scalar_select %p9502, %s32, 1
      %s9504 = smul.addr %s9503, 8
      %s9505 = scalar_lea.vmem %s21, %s9504
      // Predicated region
      $region105: #{cnn_classifier_forward.1} parent=103 // pred_check
        %p9506 = pneg %p496
      $region106: #{cnn_classifier_forward.1} parent=103 // pred_check_branch
        %9508 = sbr.rel (%p9506) target = $region108
      $region107: #{cnn_classifier_forward.1} parent=103 // pred_region
        _
      $region108: #{cnn_classifier_forward.1} parent=103 // pred_fallthru
        _
    $region104: #{cnn_classifier_forward.1} parent=5 // pred_fallthru
      _
    %p9509 = scmp.le.s32.totalorder 2, %s27
    // Predicated region
    $region109: #{cnn_classifier_forward.1} parent=5 // pred_check
      %p9510 = pneg %p9509
    $region110: #{cnn_classifier_forward.1} parent=5 // pred_check_branch
      %9512 = sbr.rel (%p9510) target = $region112
    $region111: #{cnn_classifier_forward.1} parent=5 // pred_region
      %s9513 = ssub.s32 %s27, 2
      // Predicated region
      $region113: #{cnn_classifier_forward.1} parent=111 // pred_check
        %p9514 = pneg %p502
      $region114: #{cnn_classifier_forward.1} parent=111 // pred_check_branch
        %9516 = sbr.rel (%p9514) target = $region116
      $region115: #{cnn_classifier_forward.1} parent=111 // pred_region
        %p9517 = scmp.lt.s32.totalorder %s33, 1
        %s9518 = scalar_select %p9517, %s33, 1
        %s9519 = smul.addr %s9518, 8
        %s9520 = scalar_lea.vmem %s21, %s9519
      $region116: #{cnn_classifier_forward.1} parent=111 // pred_fallthru
        _
    $region112: #{cnn_classifier_forward.1} parent=5 // pred_fallthru
      _
  $region6: #{cnn_classifier_forward.1} parent=0 // loop_footer
    %s31 = sadd.s32 1, %s27
  $region7: #{cnn_classifier_forward.1} parent=0 // loop_footer_branch
    %26 = sbr.rel target = $region3
  $region8: #{cnn_classifier_forward.1} parent=0 // loop_exit
    _

</llo_original>
